<compile_context>
chip_gen: v7x
topology: tpu7x:2x2x1
jax: 0.10.0
libtpu: 0.0.40
codegen_flags: <defaults>
</compile_context>

<pallas_src>
import math

import jax
import jax.numpy as jnp
from jax.experimental import pallas as pl
from jax.experimental.pallas import tpu as pltpu  # noqa: F401  (TPU backend assumed)

# ----------------------------- model dimensions -----------------------------
B = 2            # batch
S = 8            # sequence length
H = 32           # hidden size
NH = 4           # attention heads
DH = H // NH     # head dim
I = 64           # FFN intermediate size
VOCAB = 100
MAX_POS = 64
NUM_LABELS = 2
N_TEACHER_LAYERS = 4
COMPRESS_RATIO = 2
N_LAYERS = N_TEACHER_LAYERS // COMPRESS_RATIO   # student keeps last N_LAYERS teacher layers
PAD_ID = 1
LN_EPS = 1e-5
NEG_INF = float(jnp.finfo(jnp.float32).min)
ATTN_SCALE = 1.0 / math.sqrt(DH)


# ------------------------------ kernel helpers ------------------------------
def _layernorm(x, w, b):
    mean = jnp.mean(x, axis=-1, keepdims=True)
    var = jnp.mean(jnp.square(x - mean), axis=-1, keepdims=True)
    return (x - mean) * jax.lax.rsqrt(var + LN_EPS) * w + b


def _gelu_exact(x):
    # HF RoBERTa uses exact (erf-based) GELU
    return 0.5 * x * (1.0 + jax.lax.erf(x * (1.0 / math.sqrt(2.0))))


# ------------------------------ fused Pallas kernel --------------------------
def fused_forward_kernel(emb_ref, mask_ref, embln_ref,
                         qkvw_ref, qkvb_ref, wo_ref,
                         wi_ref, bi_ref, wff_ref, lvec_ref,
                         cw1_ref, cb1_ref, cw2_ref, cb2_ref,
                         out_ref):
    # --- embeddings LayerNorm (dropout = identity in eval) ---
    x = _layernorm(emb_ref[...], embln_ref[0:1, :], embln_ref[1:2, :])      # (B*S, H)

    # key-side additive attention mask, (B, S): 0 for real tokens, finfo.min for pad
    mask_add = (1.0 - mask_ref[...]) * NEG_INF

    for l in range(N_LAYERS):                                 # static unroll, N_LAYERS = 2
        wq = qkvw_ref[(l * 3 + 0) * NH:(l * 3 + 1) * NH]      # (NH, H, DH)
        wk = qkvw_ref[(l * 3 + 1) * NH:(l * 3 + 2) * NH]
        wv = qkvw_ref[(l * 3 + 2) * NH:(l * 3 + 3) * NH]
        bq = qkvb_ref[(l * 3 + 0) * NH:(l * 3 + 1) * NH]      # (NH, 1, DH)
        bk = qkvb_ref[(l * 3 + 1) * NH:(l * 3 + 2) * NH]
        bv = qkvb_ref[(l * 3 + 2) * NH:(l * 3 + 3) * NH]
        wo = wo_ref[l * NH:(l + 1) * NH]                      # (NH, DH, H)
        bo = lvec_ref[l * 6 + 0:l * 6 + 1, :]                 # (1, H)
        ln1w = lvec_ref[l * 6 + 1:l * 6 + 2, :]
        ln1b = lvec_ref[l * 6 + 2:l * 6 + 3, :]
        bff = lvec_ref[l * 6 + 3:l * 6 + 4, :]
        ln2w = lvec_ref[l * 6 + 4:l * 6 + 5, :]
        ln2b = lvec_ref[l * 6 + 5:l * 6 + 6, :]
        wi = wi_ref[l]                                        # (H, I)
        bi = bi_ref[l:l + 1, :]                               # (1, I)
        wff = wff_ref[l]                                      # (I, H)

        # --- multi-head self-attention: heads on a leading batch axis ---
        attn_rows = []
        for b in range(B):                                    # static unroll, B = 2
            xb = x[b * S:(b + 1) * S, :]                      # (S, H)
            xh = jnp.broadcast_to(xb, (NH, S, H))             # (NH, S, H)
            q = jnp.einsum('nsh,nhd->nsd', xh, wq,
                           preferred_element_type=jnp.float32) + bq        # (NH, S, DH)
            k = jnp.einsum('nsh,nhd->nsd', xh, wk,
                           preferred_element_type=jnp.float32) + bk
            v = jnp.einsum('nsh,nhd->nsd', xh, wv,
                           preferred_element_type=jnp.float32) + bv
            s = jnp.einsum('nqd,nkd->nqk', q, k,
                           preferred_element_type=jnp.float32) * ATTN_SCALE  # (NH, S, S)
            s = s + mask_add[b:b + 1, :]                      # key-side broadcast (1, S)
            s = s - jnp.max(s, axis=-1, keepdims=True)        # stable softmax
            p = jnp.exp(s)
            p = p * pl.reciprocal(jnp.sum(p, axis=-1, keepdims=True), approx=True)
            ctx = jnp.einsum('nqk,nkd->nqd', p, v,
                             preferred_element_type=jnp.float32)            # (NH, S, DH)
            # per-head output projection accumulated over heads (no lane-axis concat)
            ab = jnp.einsum('nsd,ndh->nsh', ctx, wo,
                            preferred_element_type=jnp.float32)             # (NH, S, H)
            attn_rows.append(jnp.sum(ab, axis=0))             # (S, H)
        attn = jnp.concatenate(attn_rows, axis=0) + bo        # (B*S, H)

        # --- attention-output LayerNorm + FFN + FFN-output LayerNorm ---
        x1 = _layernorm(x + attn, ln1w, ln1b)
        h = _gelu_exact(jnp.dot(x1, wi, preferred_element_type=jnp.float32) + bi)
        ff = jnp.dot(h, wff, preferred_element_type=jnp.float32) + bff
        x = _layernorm(x1 + ff, ln2w, ln2b)

    # --- classification head on the <s> (CLS) token of each sequence ---
    cls = jnp.concatenate([x[b * S:b * S + 1, :] for b in range(B)], axis=0)  # (B, H)
    h1 = jnp.tanh(jnp.dot(cls, cw1_ref[...], preferred_element_type=jnp.float32) + cb1_ref[...])
    out_ref[...] = jnp.dot(h1, cw2_ref[...], preferred_element_type=jnp.float32) + cb2_ref[...]


# ------------------------------- JAX wrapper ---------------------------------
@jax.jit
def student_cross_encoder_forward(input_ids, attention_mask, packed):
    # --- RoBERTa embeddings: gathers are glue, done in plain JAX ---
    not_pad = (input_ids != PAD_ID).astype(jnp.int32)
    position_ids = jnp.cumsum(not_pad, axis=1) * not_pad + PAD_ID   # RoBERTa position ids
    word_e = packed["word"][input_ids]
    pos_e = packed["pos"][position_ids]
    tok_e = packed["tok"][0]                                        # token_type_ids == 0
    emb = (word_e + pos_e + tok_e).astype(jnp.float32).reshape(B * S, H)
    mask_f = attention_mask.astype(jnp.float32)                     # (B, S)

    # One fused pallas_call: embeddings LN -> N_LAYERS encoder layers -> classifier.
    return pl.pallas_call(
        fused_forward_kernel,
        out_shape=jax.ShapeDtypeStruct((B, NUM_LABELS), jnp.float32),
    )(emb, mask_f, packed["emb_ln"],
      packed["qkv_w"], packed["qkv_b"], packed["attn_out_w"],
      packed["ffn_in_w"], packed["ffn_in_b"], packed["ffn_out_w"], packed["layer_vecs"],
      packed["cls_w1"], packed["cls_b1"], packed["cls_w2"], packed["cls_b2"])


# ------------------------------- param init ----------------------------------
def init_params(key):
    """Initialize in the natural nn.Module layout, then pack into stacked TPU-friendly arrays."""
    def dense(k, fan_in, fan_out):
        return jax.random.normal(k, (fan_in, fan_out), jnp.float32) * 0.02

    keys = iter(jax.random.split(key, 64))

    word = jax.random.normal(next(keys), (VOCAB, H), jnp.float32) * 0.02
    word = word.at[PAD_ID].set(0.0)                    # nn.Embedding padding_idx row is zero
    pos = jax.random.normal(next(keys), (MAX_POS, H), jnp.float32) * 0.02
    pos = pos.at[PAD_ID].set(0.0)
    tok = jax.random.normal(next(keys), (1, H), jnp.float32) * 0.02

    qkv_w, qkv_b, wo_rows = [], [], []
    wi_list, bi_rows, wff_list, vec_rows = [], [], [], []
    for _ in range(N_LAYERS):
        wq, wk, wv = (dense(next(keys), H, H), dense(next(keys), H, H), dense(next(keys), H, H))
        wo = dense(next(keys), H, H)                   # attention output dense
        wi = dense(next(keys), H, I)                   # intermediate dense
        wff = dense(next(keys), I, H)                  # output dense
        bq = bk = bv = jnp.zeros((H,), jnp.float32)
        bo = jnp.zeros((1, H), jnp.float32)
        ln1w, ln1b = jnp.ones((1, H), jnp.float32), jnp.zeros((1, H), jnp.float32)
        bi = jnp.zeros((1, I), jnp.float32)
        bff = jnp.zeros((1, H), jnp.float32)
        ln2w, ln2b = jnp.ones((1, H), jnp.float32), jnp.zeros((1, H), jnp.float32)

        # split Q/K/V per head: W[:, n*DH:(n+1)*DH] -> (NH, H, DH); Wo[n*DH:(n+1)*DH, :] -> (NH, DH, H)
        for w, b_ in ((wq, bq), (wk, bk), (wv, bv)):
            qkv_w.append(jnp.transpose(w.reshape(H, NH, DH), (1, 0, 2)))
            qkv_b.append(b_.reshape(NH, 1, DH))
        wo_rows.append(wo.reshape(NH, DH, H))
        wi_list.append(wi)
        bi_rows.append(bi)
        wff_list.append(wff)
        vec_rows.extend([bo, ln1w, ln1b, bff, ln2w, ln2b])

    packed = dict(
        word=word, pos=pos, tok=tok,
        emb_ln=jnp.concatenate([jnp.ones((1, H), jnp.float32),
                                jnp.zeros((1, H), jnp.float32)], axis=0),   # rows: [ln_w, ln_b]
        qkv_w=jnp.concatenate(qkv_w, axis=0),          # (N_LAYERS*3*NH, H, DH)
        qkv_b=jnp.concatenate(qkv_b, axis=0),          # (N_LAYERS*3*NH, 1, DH)
        attn_out_w=jnp.concatenate(wo_rows, axis=0),   # (N_LAYERS*NH, DH, H)
        ffn_in_w=jnp.stack(wi_list, axis=0),           # (N_LAYERS, H, I)
        ffn_in_b=jnp.concatenate(bi_rows, axis=0),     # (N_LAYERS, I)
        ffn_out_w=jnp.stack(wff_list, axis=0),         # (N_LAYERS, I, H)
        layer_vecs=jnp.concatenate(vec_rows, axis=0),  # (N_LAYERS*6, H): bo,ln1w,ln1b,bff,ln2w,ln2b
        cls_w1=dense(next(keys), H, H),
        cls_b1=jnp.zeros((1, H), jnp.float32),
        cls_w2=dense(next(keys), H, NUM_LABELS),
        cls_b2=jnp.zeros((1, NUM_LABELS), jnp.float32),
    )
    return packed


# ---------------------------------- main --------------------------------------
if __name__ == "__main__":
    key = jax.random.PRNGKey(0)
    k_params, k_ids = jax.random.split(key)

    packed = init_params(k_params)

    # deterministic inputs; second example has 2 padded positions at the end
    input_ids = jax.random.randint(k_ids, (B, S), 2, VOCAB, dtype=jnp.int32)
    input_ids = input_ids.at[1, -2:].set(PAD_ID)
    attention_mask = jnp.ones((B, S), dtype=jnp.int32).at[1, -2:].set(0)

    logits = student_cross_encoder_forward(input_ids, attention_mask, packed)
    jax.block_until_ready(logits)
    assert logits.shape == (B, NUM_LABELS) and logits.dtype == jnp.float32
    print("KERNEL_OK")
</pallas_src>

<mosaic_0001>
module attributes {stable_mosaic.version = 11 : i64} {
  func.func @fused_forward_kernel(%arg0: memref<16x32xf32, #tpu.memory_space<vmem>>, %arg1: memref<2x8xf32, #tpu.memory_space<vmem>>, %arg2: memref<2x32xf32, #tpu.memory_space<vmem>>, %arg3: memref<24x32x8xf32, #tpu.memory_space<vmem>>, %arg4: memref<24x1x8xf32, #tpu.memory_space<vmem>>, %arg5: memref<8x8x32xf32, #tpu.memory_space<vmem>>, %arg6: memref<2x32x64xf32, #tpu.memory_space<vmem>>, %arg7: memref<2x64xf32, #tpu.memory_space<vmem>>, %arg8: memref<2x64x32xf32, #tpu.memory_space<vmem>>, %arg9: memref<12x32xf32, #tpu.memory_space<vmem>>, %arg10: memref<32x32xf32, #tpu.memory_space<vmem>>, %arg11: memref<1x32xf32, #tpu.memory_space<vmem>>, %arg12: memref<32x2xf32, #tpu.memory_space<vmem>>, %arg13: memref<1x2xf32, #tpu.memory_space<vmem>>, %arg14: memref<2x2xf32, #tpu.memory_space<vmem>>) attributes {dimension_semantics = [], scalar_prefetch = 0 : i64, scratch_operands = 0 : i64, tpu.core_type = #tpu.core_type<tc>} {
    %c0 = arith.constant 0 : index
    %c0_0 = arith.constant 0 : index
    %0 = vector.load %arg0[%c0, %c0_0] : memref<16x32xf32, #tpu.memory_space<vmem>>, vector<16x32xf32>
    %c0_1 = arith.constant 0 : index
    %c0_2 = arith.constant 0 : index
    %1 = vector.load %arg2[%c0_1, %c0_2] : memref<2x32xf32, #tpu.memory_space<vmem>>, vector<1x32xf32>
    %c1 = arith.constant 1 : index
    %c0_3 = arith.constant 0 : index
    %2 = vector.load %arg2[%c1, %c0_3] : memref<2x32xf32, #tpu.memory_space<vmem>>, vector<1x32xf32>
    %cst = arith.constant dense<0.000000e+00> : vector<16xf32>
    %3 = vector.multi_reduction <add>, %0, %cst [1] : vector<16x32xf32> to vector<16xf32>
    %4 = vector.shape_cast %3 : vector<16xf32> to vector<16x1xf32>
    %cst_4 = arith.constant 3.200000e+01 : f32
    %5 = vector.broadcast %cst_4 : f32 to vector<16x1xf32>
    %6 = arith.divf %4, %5 : vector<16x1xf32>
    %7 = vector.broadcast %6 : vector<16x1xf32> to vector<16x32xf32>
    %8 = arith.subf %0, %7 : vector<16x32xf32>
    %9 = arith.mulf %8, %8 : vector<16x32xf32>
    %cst_5 = arith.constant dense<0.000000e+00> : vector<16xf32>
    %10 = vector.multi_reduction <add>, %9, %cst_5 [1] : vector<16x32xf32> to vector<16xf32>
    %11 = vector.shape_cast %10 : vector<16xf32> to vector<16x1xf32>
    %cst_6 = arith.constant 3.200000e+01 : f32
    %12 = vector.broadcast %cst_6 : f32 to vector<16x1xf32>
    %13 = arith.divf %11, %12 : vector<16x1xf32>
    %14 = vector.broadcast %6 : vector<16x1xf32> to vector<16x32xf32>
    %15 = arith.subf %0, %14 : vector<16x32xf32>
    %cst_7 = arith.constant 9.99999974E-6 : f32
    %16 = vector.broadcast %cst_7 : f32 to vector<16x1xf32>
    %17 = arith.addf %13, %16 : vector<16x1xf32>
    %18 = math.rsqrt %17 : vector<16x1xf32>
    %19 = vector.broadcast %18 : vector<16x1xf32> to vector<16x32xf32>
    %20 = arith.mulf %15, %19 : vector<16x32xf32>
    %21 = vector.broadcast %1 : vector<1x32xf32> to vector<16x32xf32>
    %22 = arith.mulf %20, %21 : vector<16x32xf32>
    %23 = vector.broadcast %2 : vector<1x32xf32> to vector<16x32xf32>
    %24 = arith.addf %22, %23 : vector<16x32xf32>
    %c0_8 = arith.constant 0 : index
    %c0_9 = arith.constant 0 : index
    %25 = vector.load %arg1[%c0_8, %c0_9] : memref<2x8xf32, #tpu.memory_space<vmem>>, vector<2x8xf32>
    %cst_10 = arith.constant 1.000000e+00 : f32
    %26 = vector.broadcast %cst_10 : f32 to vector<2x8xf32>
    %27 = arith.subf %26, %25 : vector<2x8xf32>
    %cst_11 = arith.constant -3.40282347E+38 : f32
    %28 = vector.broadcast %cst_11 : f32 to vector<2x8xf32>
    %29 = arith.mulf %27, %28 : vector<2x8xf32>
    %c0_12 = arith.constant 0 : index
    %c0_13 = arith.constant 0 : index
    %c0_14 = arith.constant 0 : index
    %30 = vector.load %arg3[%c0_12, %c0_13, %c0_14] : memref<24x32x8xf32, #tpu.memory_space<vmem>>, vector<4x32x8xf32>
    %c4 = arith.constant 4 : index
    %c0_15 = arith.constant 0 : index
    %c0_16 = arith.constant 0 : index
    %31 = vector.load %arg3[%c4, %c0_15, %c0_16] : memref<24x32x8xf32, #tpu.memory_space<vmem>>, vector<4x32x8xf32>
    %c8 = arith.constant 8 : index
    %c0_17 = arith.constant 0 : index
    %c0_18 = arith.constant 0 : index
    %32 = vector.load %arg3[%c8, %c0_17, %c0_18] : memref<24x32x8xf32, #tpu.memory_space<vmem>>, vector<4x32x8xf32>
    %c0_19 = arith.constant 0 : index
    %c0_20 = arith.constant 0 : index
    %c0_21 = arith.constant 0 : index
    %33 = vector.load %arg4[%c0_19, %c0_20, %c0_21] : memref<24x1x8xf32, #tpu.memory_space<vmem>>, vector<4x1x8xf32>
    %c4_22 = arith.constant 4 : index
    %c0_23 = arith.constant 0 : index
    %c0_24 = arith.constant 0 : index
    %34 = vector.load %arg4[%c4_22, %c0_23, %c0_24] : memref<24x1x8xf32, #tpu.memory_space<vmem>>, vector<4x1x8xf32>
    %c8_25 = arith.constant 8 : index
    %c0_26 = arith.constant 0 : index
    %c0_27 = arith.constant 0 : index
    %35 = vector.load %arg4[%c8_25, %c0_26, %c0_27] : memref<24x1x8xf32, #tpu.memory_space<vmem>>, vector<4x1x8xf32>
    %c0_28 = arith.constant 0 : index
    %c0_29 = arith.constant 0 : index
    %c0_30 = arith.constant 0 : index
    %36 = vector.load %arg5[%c0_28, %c0_29, %c0_30] : memref<8x8x32xf32, #tpu.memory_space<vmem>>, vector<4x8x32xf32>
    %c0_31 = arith.constant 0 : index
    %c0_32 = arith.constant 0 : index
    %37 = vector.load %arg9[%c0_31, %c0_32] : memref<12x32xf32, #tpu.memory_space<vmem>>, vector<1x32xf32>
    %c1_33 = arith.constant 1 : index
    %c0_34 = arith.constant 0 : index
    %38 = vector.load %arg9[%c1_33, %c0_34] : memref<12x32xf32, #tpu.memory_space<vmem>>, vector<1x32xf32>
    %c2 = arith.constant 2 : index
    %c0_35 = arith.constant 0 : index
    %39 = vector.load %arg9[%c2, %c0_35] : memref<12x32xf32, #tpu.memory_space<vmem>>, vector<1x32xf32>
    %c3 = arith.constant 3 : index
    %c0_36 = arith.constant 0 : index
    %40 = vector.load %arg9[%c3, %c0_36] : memref<12x32xf32, #tpu.memory_space<vmem>>, vector<1x32xf32>
    %c4_37 = arith.constant 4 : index
    %c0_38 = arith.constant 0 : index
    %41 = vector.load %arg9[%c4_37, %c0_38] : memref<12x32xf32, #tpu.memory_space<vmem>>, vector<1x32xf32>
    %c5 = arith.constant 5 : index
    %c0_39 = arith.constant 0 : index
    %42 = vector.load %arg9[%c5, %c0_39] : memref<12x32xf32, #tpu.memory_space<vmem>>, vector<1x32xf32>
    %c0_40 = arith.constant 0 : index
    %c0_41 = arith.constant 0 : index
    %c0_42 = arith.constant 0 : index
    %43 = vector.load %arg6[%c0_40, %c0_41, %c0_42] : memref<2x32x64xf32, #tpu.memory_space<vmem>>, vector<1x32x64xf32>
    %44 = vector.shape_cast %43 : vector<1x32x64xf32> to vector<32x64xf32>
    %c0_43 = arith.constant 0 : index
    %c0_44 = arith.constant 0 : index
    %45 = vector.load %arg7[%c0_43, %c0_44] : memref<2x64xf32, #tpu.memory_space<vmem>>, vector<1x64xf32>
    %c0_45 = arith.constant 0 : index
    %c0_46 = arith.constant 0 : index
    %c0_47 = arith.constant 0 : index
    %46 = vector.load %arg8[%c0_45, %c0_46, %c0_47] : memref<2x64x32xf32, #tpu.memory_space<vmem>>, vector<1x64x32xf32>
    %47 = vector.shape_cast %46 : vector<1x64x32xf32> to vector<64x32xf32>
    %48 = vector.extract_strided_slice %24 {offsets = [0, 0], sizes = [8, 32], strides = [1, 1]} : vector<16x32xf32> to vector<8x32xf32>
    %49 = vector.shape_cast %48 : vector<8x32xf32> to vector<1x8x32xf32>
    %50 = vector.broadcast %49 : vector<1x8x32xf32> to vector<4x8x32xf32>
    "tpu.trace_start"() <{level = 10 : i32, message = "nsh,nhd->nsd"}> : () -> ()
    %cst_48 = arith.constant dense<0.000000e+00> : vector<4x8x8xf32>
    %51 = tpu.matmul %50, %30, %cst_48 {dimension_numbers = #tpu.dot_dimension_numbers<[2], [1], [1], [2], [0, 0, 0, 1, 1, 2], [0], [0]>} : vector<4x8x32xf32>, vector<4x32x8xf32>, vector<4x8x8xf32> -> vector<4x8x8xf32>
    "tpu.trace_stop"() : () -> ()
    %52 = vector.broadcast %33 : vector<4x1x8xf32> to vector<4x8x8xf32>
    %53 = arith.addf %51, %52 : vector<4x8x8xf32>
    "tpu.trace_start"() <{level = 10 : i32, message = "nsh,nhd->nsd"}> : () -> ()
    %cst_49 = arith.constant dense<0.000000e+00> : vector<4x8x8xf32>
    %54 = tpu.matmul %50, %31, %cst_49 {dimension_numbers = #tpu.dot_dimension_numbers<[2], [1], [1], [2], [0, 0, 0, 1, 1, 2], [0], [0]>} : vector<4x8x32xf32>, vector<4x32x8xf32>, vector<4x8x8xf32> -> vector<4x8x8xf32>
    "tpu.trace_stop"() : () -> ()
    %55 = vector.broadcast %34 : vector<4x1x8xf32> to vector<4x8x8xf32>
    %56 = arith.addf %54, %55 : vector<4x8x8xf32>
    "tpu.trace_start"() <{level = 10 : i32, message = "nsh,nhd->nsd"}> : () -> ()
    %cst_50 = arith.constant dense<0.000000e+00> : vector<4x8x8xf32>
    %57 = tpu.matmul %50, %32, %cst_50 {dimension_numbers = #tpu.dot_dimension_numbers<[2], [1], [1], [2], [0, 0, 0, 1, 1, 2], [0], [0]>} : vector<4x8x32xf32>, vector<4x32x8xf32>, vector<4x8x8xf32> -> vector<4x8x8xf32>
    "tpu.trace_stop"() : () -> ()
    %58 = vector.broadcast %35 : vector<4x1x8xf32> to vector<4x8x8xf32>
    %59 = arith.addf %57, %58 : vector<4x8x8xf32>
    "tpu.trace_start"() <{level = 10 : i32, message = "nqd,nkd->nqk"}> : () -> ()
    %cst_51 = arith.constant dense<0.000000e+00> : vector<4x8x8xf32>
    %60 = tpu.matmul %53, %56, %cst_51 {dimension_numbers = #tpu.dot_dimension_numbers<[2], [2], [1], [1], [0, 0, 0, 1, 1, 1], [0], [0]>} : vector<4x8x8xf32>, vector<4x8x8xf32>, vector<4x8x8xf32> -> vector<4x8x8xf32>
    "tpu.trace_stop"() : () -> ()
    %cst_52 = arith.constant 0.353553385 : f32
    %61 = vector.broadcast %cst_52 : f32 to vector<4x8x8xf32>
    %62 = arith.mulf %60, %61 : vector<4x8x8xf32>
    %63 = vector.extract_strided_slice %29 {offsets = [0, 0], sizes = [1, 8], strides = [1, 1]} : vector<2x8xf32> to vector<1x8xf32>
    %64 = vector.shape_cast %63 : vector<1x8xf32> to vector<1x1x8xf32>
    %65 = vector.broadcast %64 : vector<1x1x8xf32> to vector<4x8x8xf32>
    %66 = arith.addf %62, %65 : vector<4x8x8xf32>
    %cst_53 = arith.constant dense<0xFF800000> : vector<4x8xf32>
    %67 = vector.multi_reduction <maximumf>, %66, %cst_53 [2] : vector<4x8x8xf32> to vector<4x8xf32>
    %68 = vector.shape_cast %67 : vector<4x8xf32> to vector<4x8x1xf32>
    %69 = vector.broadcast %68 : vector<4x8x1xf32> to vector<4x8x8xf32>
    %70 = arith.subf %66, %69 : vector<4x8x8xf32>
    %71 = math.exp %70 : vector<4x8x8xf32>
    %cst_54 = arith.constant dense<0.000000e+00> : vector<4x8xf32>
    %72 = vector.multi_reduction <add>, %71, %cst_54 [2] : vector<4x8x8xf32> to vector<4x8xf32>
    %73 = vector.shape_cast %72 : vector<4x8xf32> to vector<4x8x1xf32>
    %74 = tpu.reciprocal %73 {approx = true} : vector<4x8x1xf32> -> vector<4x8x1xf32>
    %75 = vector.broadcast %74 : vector<4x8x1xf32> to vector<4x8x8xf32>
    %76 = arith.mulf %71, %75 : vector<4x8x8xf32>
    "tpu.trace_start"() <{level = 10 : i32, message = "nqk,nkd->nqd"}> : () -> ()
    %cst_55 = arith.constant dense<0.000000e+00> : vector<4x8x8xf32>
    %77 = tpu.matmul %76, %59, %cst_55 {dimension_numbers = #tpu.dot_dimension_numbers<[2], [1], [1], [2], [0, 0, 0, 1, 1, 2], [0], [0]>} : vector<4x8x8xf32>, vector<4x8x8xf32>, vector<4x8x8xf32> -> vector<4x8x8xf32>
    "tpu.trace_stop"() : () -> ()
    "tpu.trace_start"() <{level = 10 : i32, message = "nsd,ndh->nsh"}> : () -> ()
    %cst_56 = arith.constant dense<0.000000e+00> : vector<4x8x32xf32>
    %78 = tpu.matmul %77, %36, %cst_56 {dimension_numbers = #tpu.dot_dimension_numbers<[2], [1], [1], [2], [0, 0, 0, 1, 1, 2], [0], [0]>} : vector<4x8x8xf32>, vector<4x8x32xf32>, vector<4x8x32xf32> -> vector<4x8x32xf32>
    "tpu.trace_stop"() : () -> ()
    %cst_57 = arith.constant dense<0.000000e+00> : vector<8x32xf32>
    %79 = vector.multi_reduction <add>, %78, %cst_57 [0] : vector<4x8x32xf32> to vector<8x32xf32>
    %80 = vector.extract_strided_slice %24 {offsets = [8, 0], sizes = [8, 32], strides = [1, 1]} : vector<16x32xf32> to vector<8x32xf32>
    %81 = vector.shape_cast %80 : vector<8x32xf32> to vector<1x8x32xf32>
    %82 = vector.broadcast %81 : vector<1x8x32xf32> to vector<4x8x32xf32>
    "tpu.trace_start"() <{level = 10 : i32, message = "nsh,nhd->nsd"}> : () -> ()
    %cst_58 = arith.constant dense<0.000000e+00> : vector<4x8x8xf32>
    %83 = tpu.matmul %82, %30, %cst_58 {dimension_numbers = #tpu.dot_dimension_numbers<[2], [1], [1], [2], [0, 0, 0, 1, 1, 2], [0], [0]>} : vector<4x8x32xf32>, vector<4x32x8xf32>, vector<4x8x8xf32> -> vector<4x8x8xf32>
    "tpu.trace_stop"() : () -> ()
    %84 = vector.broadcast %33 : vector<4x1x8xf32> to vector<4x8x8xf32>
    %85 = arith.addf %83, %84 : vector<4x8x8xf32>
    "tpu.trace_start"() <{level = 10 : i32, message = "nsh,nhd->nsd"}> : () -> ()
    %cst_59 = arith.constant dense<0.000000e+00> : vector<4x8x8xf32>
    %86 = tpu.matmul %82, %31, %cst_59 {dimension_numbers = #tpu.dot_dimension_numbers<[2], [1], [1], [2], [0, 0, 0, 1, 1, 2], [0], [0]>} : vector<4x8x32xf32>, vector<4x32x8xf32>, vector<4x8x8xf32> -> vector<4x8x8xf32>
    "tpu.trace_stop"() : () -> ()
    %87 = vector.broadcast %34 : vector<4x1x8xf32> to vector<4x8x8xf32>
    %88 = arith.addf %86, %87 : vector<4x8x8xf32>
    "tpu.trace_start"() <{level = 10 : i32, message = "nsh,nhd->nsd"}> : () -> ()
    %cst_60 = arith.constant dense<0.000000e+00> : vector<4x8x8xf32>
    %89 = tpu.matmul %82, %32, %cst_60 {dimension_numbers = #tpu.dot_dimension_numbers<[2], [1], [1], [2], [0, 0, 0, 1, 1, 2], [0], [0]>} : vector<4x8x32xf32>, vector<4x32x8xf32>, vector<4x8x8xf32> -> vector<4x8x8xf32>
    "tpu.trace_stop"() : () -> ()
    %90 = vector.broadcast %35 : vector<4x1x8xf32> to vector<4x8x8xf32>
    %91 = arith.addf %89, %90 : vector<4x8x8xf32>
    "tpu.trace_start"() <{level = 10 : i32, message = "nqd,nkd->nqk"}> : () -> ()
    %cst_61 = arith.constant dense<0.000000e+00> : vector<4x8x8xf32>
    %92 = tpu.matmul %85, %88, %cst_61 {dimension_numbers = #tpu.dot_dimension_numbers<[2], [2], [1], [1], [0, 0, 0, 1, 1, 1], [0], [0]>} : vector<4x8x8xf32>, vector<4x8x8xf32>, vector<4x8x8xf32> -> vector<4x8x8xf32>
    "tpu.trace_stop"() : () -> ()
    %cst_62 = arith.constant 0.353553385 : f32
    %93 = vector.broadcast %cst_62 : f32 to vector<4x8x8xf32>
    %94 = arith.mulf %92, %93 : vector<4x8x8xf32>
    %95 = vector.extract_strided_slice %29 {offsets = [1, 0], sizes = [1, 8], strides = [1, 1]} : vector<2x8xf32> to vector<1x8xf32>
    %96 = vector.shape_cast %95 : vector<1x8xf32> to vector<1x1x8xf32>
    %97 = vector.broadcast %96 : vector<1x1x8xf32> to vector<4x8x8xf32>
    %98 = arith.addf %94, %97 : vector<4x8x8xf32>
    %cst_63 = arith.constant dense<0xFF800000> : vector<4x8xf32>
    %99 = vector.multi_reduction <maximumf>, %98, %cst_63 [2] : vector<4x8x8xf32> to vector<4x8xf32>
    %100 = vector.shape_cast %99 : vector<4x8xf32> to vector<4x8x1xf32>
    %101 = vector.broadcast %100 : vector<4x8x1xf32> to vector<4x8x8xf32>
    %102 = arith.subf %98, %101 : vector<4x8x8xf32>
    %103 = math.exp %102 : vector<4x8x8xf32>
    %cst_64 = arith.constant dense<0.000000e+00> : vector<4x8xf32>
    %104 = vector.multi_reduction <add>, %103, %cst_64 [2] : vector<4x8x8xf32> to vector<4x8xf32>
    %105 = vector.shape_cast %104 : vector<4x8xf32> to vector<4x8x1xf32>
    %106 = tpu.reciprocal %105 {approx = true} : vector<4x8x1xf32> -> vector<4x8x1xf32>
    %107 = vector.broadcast %106 : vector<4x8x1xf32> to vector<4x8x8xf32>
    %108 = arith.mulf %103, %107 : vector<4x8x8xf32>
    "tpu.trace_start"() <{level = 10 : i32, message = "nqk,nkd->nqd"}> : () -> ()
    %cst_65 = arith.constant dense<0.000000e+00> : vector<4x8x8xf32>
    %109 = tpu.matmul %108, %91, %cst_65 {dimension_numbers = #tpu.dot_dimension_numbers<[2], [1], [1], [2], [0, 0, 0, 1, 1, 2], [0], [0]>} : vector<4x8x8xf32>, vector<4x8x8xf32>, vector<4x8x8xf32> -> vector<4x8x8xf32>
    "tpu.trace_stop"() : () -> ()
    "tpu.trace_start"() <{level = 10 : i32, message = "nsd,ndh->nsh"}> : () -> ()
    %cst_66 = arith.constant dense<0.000000e+00> : vector<4x8x32xf32>
    %110 = tpu.matmul %109, %36, %cst_66 {dimension_numbers = #tpu.dot_dimension_numbers<[2], [1], [1], [2], [0, 0, 0, 1, 1, 2], [0], [0]>} : vector<4x8x8xf32>, vector<4x8x32xf32>, vector<4x8x32xf32> -> vector<4x8x32xf32>
    "tpu.trace_stop"() : () -> ()
    %cst_67 = arith.constant dense<0.000000e+00> : vector<8x32xf32>
    %111 = vector.multi_reduction <add>, %110, %cst_67 [0] : vector<4x8x32xf32> to vector<8x32xf32>
    %112 = tpu.concatenate %79, %111 in 0 : vector<8x32xf32>, vector<8x32xf32> -> vector<16x32xf32>
    %113 = vector.broadcast %37 : vector<1x32xf32> to vector<16x32xf32>
    %114 = arith.addf %112, %113 : vector<16x32xf32>
    %115 = arith.addf %24, %114 : vector<16x32xf32>
    %cst_68 = arith.constant dense<0.000000e+00> : vector<16xf32>
    %116 = vector.multi_reduction <add>, %115, %cst_68 [1] : vector<16x32xf32> to vector<16xf32>
    %117 = vector.shape_cast %116 : vector<16xf32> to vector<16x1xf32>
    %cst_69 = arith.constant 3.200000e+01 : f32
    %118 = vector.broadcast %cst_69 : f32 to vector<16x1xf32>
    %119 = arith.divf %117, %118 : vector<16x1xf32>
    %120 = vector.broadcast %119 : vector<16x1xf32> to vector<16x32xf32>
    %121 = arith.subf %115, %120 : vector<16x32xf32>
    %122 = arith.mulf %121, %121 : vector<16x32xf32>
    %cst_70 = arith.constant dense<0.000000e+00> : vector<16xf32>
    %123 = vector.multi_reduction <add>, %122, %cst_70 [1] : vector<16x32xf32> to vector<16xf32>
    %124 = vector.shape_cast %123 : vector<16xf32> to vector<16x1xf32>
    %cst_71 = arith.constant 3.200000e+01 : f32
    %125 = vector.broadcast %cst_71 : f32 to vector<16x1xf32>
    %126 = arith.divf %124, %125 : vector<16x1xf32>
    %127 = vector.broadcast %119 : vector<16x1xf32> to vector<16x32xf32>
    %128 = arith.subf %115, %127 : vector<16x32xf32>
    %cst_72 = arith.constant 9.99999974E-6 : f32
    %129 = vector.broadcast %cst_72 : f32 to vector<16x1xf32>
    %130 = arith.addf %126, %129 : vector<16x1xf32>
    %131 = math.rsqrt %130 : vector<16x1xf32>
    %132 = vector.broadcast %131 : vector<16x1xf32> to vector<16x32xf32>
    %133 = arith.mulf %128, %132 : vector<16x32xf32>
    %134 = vector.broadcast %38 : vector<1x32xf32> to vector<16x32xf32>
    %135 = arith.mulf %133, %134 : vector<16x32xf32>
    %136 = vector.broadcast %39 : vector<1x32xf32> to vector<16x32xf32>
    %137 = arith.addf %135, %136 : vector<16x32xf32>
    %cst_73 = arith.constant dense<0.000000e+00> : vector<16x64xf32>
    %138 = tpu.matmul %137, %44, %cst_73 {dimension_numbers = #tpu.dot_dimension_numbers<[1], [0], [0], [1], [0, 0, 1, 1], [], []>} : vector<16x32xf32>, vector<32x64xf32>, vector<16x64xf32> -> vector<16x64xf32>
    %139 = vector.broadcast %45 : vector<1x64xf32> to vector<16x64xf32>
    %140 = arith.addf %138, %139 : vector<16x64xf32>
    %cst_74 = arith.constant 5.000000e-01 : f32
    %141 = vector.broadcast %cst_74 : f32 to vector<16x64xf32>
    %142 = arith.mulf %141, %140 : vector<16x64xf32>
    %cst_75 = arith.constant 0.707106769 : f32
    %143 = vector.broadcast %cst_75 : f32 to vector<16x64xf32>
    %144 = arith.mulf %140, %143 : vector<16x64xf32>
    %145 = math.erf %144 : vector<16x64xf32>
    %cst_76 = arith.constant 1.000000e+00 : f32
    %146 = vector.broadcast %cst_76 : f32 to vector<16x64xf32>
    %147 = arith.addf %146, %145 : vector<16x64xf32>
    %148 = arith.mulf %142, %147 : vector<16x64xf32>
    %cst_77 = arith.constant dense<0.000000e+00> : vector<16x32xf32>
    %149 = tpu.matmul %148, %47, %cst_77 {dimension_numbers = #tpu.dot_dimension_numbers<[1], [0], [0], [1], [0, 0, 1, 1], [], []>} : vector<16x64xf32>, vector<64x32xf32>, vector<16x32xf32> -> vector<16x32xf32>
    %150 = vector.broadcast %40 : vector<1x32xf32> to vector<16x32xf32>
    %151 = arith.addf %149, %150 : vector<16x32xf32>
    %152 = arith.addf %137, %151 : vector<16x32xf32>
    %cst_78 = arith.constant dense<0.000000e+00> : vector<16xf32>
    %153 = vector.multi_reduction <add>, %152, %cst_78 [1] : vector<16x32xf32> to vector<16xf32>
    %154 = vector.shape_cast %153 : vector<16xf32> to vector<16x1xf32>
    %cst_79 = arith.constant 3.200000e+01 : f32
    %155 = vector.broadcast %cst_79 : f32 to vector<16x1xf32>
    %156 = arith.divf %154, %155 : vector<16x1xf32>
    %157 = vector.broadcast %156 : vector<16x1xf32> to vector<16x32xf32>
    %158 = arith.subf %152, %157 : vector<16x32xf32>
    %159 = arith.mulf %158, %158 : vector<16x32xf32>
    %cst_80 = arith.constant dense<0.000000e+00> : vector<16xf32>
    %160 = vector.multi_reduction <add>, %159, %cst_80 [1] : vector<16x32xf32> to vector<16xf32>
    %161 = vector.shape_cast %160 : vector<16xf32> to vector<16x1xf32>
    %cst_81 = arith.constant 3.200000e+01 : f32
    %162 = vector.broadcast %cst_81 : f32 to vector<16x1xf32>
    %163 = arith.divf %161, %162 : vector<16x1xf32>
    %164 = vector.broadcast %156 : vector<16x1xf32> to vector<16x32xf32>
    %165 = arith.subf %152, %164 : vector<16x32xf32>
    %cst_82 = arith.constant 9.99999974E-6 : f32
    %166 = vector.broadcast %cst_82 : f32 to vector<16x1xf32>
    %167 = arith.addf %163, %166 : vector<16x1xf32>
    %168 = math.rsqrt %167 : vector<16x1xf32>
    %169 = vector.broadcast %168 : vector<16x1xf32> to vector<16x32xf32>
    %170 = arith.mulf %165, %169 : vector<16x32xf32>
    %171 = vector.broadcast %41 : vector<1x32xf32> to vector<16x32xf32>
    %172 = arith.mulf %170, %171 : vector<16x32xf32>
    %173 = vector.broadcast %42 : vector<1x32xf32> to vector<16x32xf32>
    %174 = arith.addf %172, %173 : vector<16x32xf32>
    %c12 = arith.constant 12 : index
    %c0_83 = arith.constant 0 : index
    %c0_84 = arith.constant 0 : index
    %175 = vector.load %arg3[%c12, %c0_83, %c0_84] : memref<24x32x8xf32, #tpu.memory_space<vmem>>, vector<4x32x8xf32>
    %c16 = arith.constant 16 : index
    %c0_85 = arith.constant 0 : index
    %c0_86 = arith.constant 0 : index
    %176 = vector.load %arg3[%c16, %c0_85, %c0_86] : memref<24x32x8xf32, #tpu.memory_space<vmem>>, vector<4x32x8xf32>
    %c20 = arith.constant 20 : index
    %c0_87 = arith.constant 0 : index
    %c0_88 = arith.constant 0 : index
    %177 = vector.load %arg3[%c20, %c0_87, %c0_88] : memref<24x32x8xf32, #tpu.memory_space<vmem>>, vector<4x32x8xf32>
    %c12_89 = arith.constant 12 : index
    %c0_90 = arith.constant 0 : index
    %c0_91 = arith.constant 0 : index
    %178 = vector.load %arg4[%c12_89, %c0_90, %c0_91] : memref<24x1x8xf32, #tpu.memory_space<vmem>>, vector<4x1x8xf32>
    %c16_92 = arith.constant 16 : index
    %c0_93 = arith.constant 0 : index
    %c0_94 = arith.constant 0 : index
    %179 = vector.load %arg4[%c16_92, %c0_93, %c0_94] : memref<24x1x8xf32, #tpu.memory_space<vmem>>, vector<4x1x8xf32>
    %c20_95 = arith.constant 20 : index
    %c0_96 = arith.constant 0 : index
    %c0_97 = arith.constant 0 : index
    %180 = vector.load %arg4[%c20_95, %c0_96, %c0_97] : memref<24x1x8xf32, #tpu.memory_space<vmem>>, vector<4x1x8xf32>
    %c4_98 = arith.constant 4 : index
    %c0_99 = arith.constant 0 : index
    %c0_100 = arith.constant 0 : index
    %181 = vector.load %arg5[%c4_98, %c0_99, %c0_100] : memref<8x8x32xf32, #tpu.memory_space<vmem>>, vector<4x8x32xf32>
    %c6 = arith.constant 6 : index
    %c0_101 = arith.constant 0 : index
    %182 = vector.load %arg9[%c6, %c0_101] : memref<12x32xf32, #tpu.memory_space<vmem>>, vector<1x32xf32>
    %c7 = arith.constant 7 : index
    %c0_102 = arith.constant 0 : index
    %183 = vector.load %arg9[%c7, %c0_102] : memref<12x32xf32, #tpu.memory_space<vmem>>, vector<1x32xf32>
    %c8_103 = arith.constant 8 : index
    %c0_104 = arith.constant 0 : index
    %184 = vector.load %arg9[%c8_103, %c0_104] : memref<12x32xf32, #tpu.memory_space<vmem>>, vector<1x32xf32>
    %c9 = arith.constant 9 : index
    %c0_105 = arith.constant 0 : index
    %185 = vector.load %arg9[%c9, %c0_105] : memref<12x32xf32, #tpu.memory_space<vmem>>, vector<1x32xf32>
    %c10 = arith.constant 10 : index
    %c0_106 = arith.constant 0 : index
    %186 = vector.load %arg9[%c10, %c0_106] : memref<12x32xf32, #tpu.memory_space<vmem>>, vector<1x32xf32>
    %c11 = arith.constant 11 : index
    %c0_107 = arith.constant 0 : index
    %187 = vector.load %arg9[%c11, %c0_107] : memref<12x32xf32, #tpu.memory_space<vmem>>, vector<1x32xf32>
    %c1_108 = arith.constant 1 : index
    %c0_109 = arith.constant 0 : index
    %c0_110 = arith.constant 0 : index
    %188 = vector.load %arg6[%c1_108, %c0_109, %c0_110] : memref<2x32x64xf32, #tpu.memory_space<vmem>>, vector<1x32x64xf32>
    %189 = vector.shape_cast %188 : vector<1x32x64xf32> to vector<32x64xf32>
    %c1_111 = arith.constant 1 : index
    %c0_112 = arith.constant 0 : index
    %190 = vector.load %arg7[%c1_111, %c0_112] : memref<2x64xf32, #tpu.memory_space<vmem>>, vector<1x64xf32>
    %c1_113 = arith.constant 1 : index
    %c0_114 = arith.constant 0 : index
    %c0_115 = arith.constant 0 : index
    %191 = vector.load %arg8[%c1_113, %c0_114, %c0_115] : memref<2x64x32xf32, #tpu.memory_space<vmem>>, vector<1x64x32xf32>
    %192 = vector.shape_cast %191 : vector<1x64x32xf32> to vector<64x32xf32>
    %193 = vector.extract_strided_slice %174 {offsets = [0, 0], sizes = [8, 32], strides = [1, 1]} : vector<16x32xf32> to vector<8x32xf32>
    %194 = vector.shape_cast %193 : vector<8x32xf32> to vector<1x8x32xf32>
    %195 = vector.broadcast %194 : vector<1x8x32xf32> to vector<4x8x32xf32>
    "tpu.trace_start"() <{level = 10 : i32, message = "nsh,nhd->nsd"}> : () -> ()
    %cst_116 = arith.constant dense<0.000000e+00> : vector<4x8x8xf32>
    %196 = tpu.matmul %195, %175, %cst_116 {dimension_numbers = #tpu.dot_dimension_numbers<[2], [1], [1], [2], [0, 0, 0, 1, 1, 2], [0], [0]>} : vector<4x8x32xf32>, vector<4x32x8xf32>, vector<4x8x8xf32> -> vector<4x8x8xf32>
    "tpu.trace_stop"() : () -> ()
    %197 = vector.broadcast %178 : vector<4x1x8xf32> to vector<4x8x8xf32>
    %198 = arith.addf %196, %197 : vector<4x8x8xf32>
    "tpu.trace_start"() <{level = 10 : i32, message = "nsh,nhd->nsd"}> : () -> ()
    %cst_117 = arith.constant dense<0.000000e+00> : vector<4x8x8xf32>
    %199 = tpu.matmul %195, %176, %cst_117 {dimension_numbers = #tpu.dot_dimension_numbers<[2], [1], [1], [2], [0, 0, 0, 1, 1, 2], [0], [0]>} : vector<4x8x32xf32>, vector<4x32x8xf32>, vector<4x8x8xf32> -> vector<4x8x8xf32>
    "tpu.trace_stop"() : () -> ()
    %200 = vector.broadcast %179 : vector<4x1x8xf32> to vector<4x8x8xf32>
    %201 = arith.addf %199, %200 : vector<4x8x8xf32>
    "tpu.trace_start"() <{level = 10 : i32, message = "nsh,nhd->nsd"}> : () -> ()
    %cst_118 = arith.constant dense<0.000000e+00> : vector<4x8x8xf32>
    %202 = tpu.matmul %195, %177, %cst_118 {dimension_numbers = #tpu.dot_dimension_numbers<[2], [1], [1], [2], [0, 0, 0, 1, 1, 2], [0], [0]>} : vector<4x8x32xf32>, vector<4x32x8xf32>, vector<4x8x8xf32> -> vector<4x8x8xf32>
    "tpu.trace_stop"() : () -> ()
    %203 = vector.broadcast %180 : vector<4x1x8xf32> to vector<4x8x8xf32>
    %204 = arith.addf %202, %203 : vector<4x8x8xf32>
    "tpu.trace_start"() <{level = 10 : i32, message = "nqd,nkd->nqk"}> : () -> ()
    %cst_119 = arith.constant dense<0.000000e+00> : vector<4x8x8xf32>
    %205 = tpu.matmul %198, %201, %cst_119 {dimension_numbers = #tpu.dot_dimension_numbers<[2], [2], [1], [1], [0, 0, 0, 1, 1, 1], [0], [0]>} : vector<4x8x8xf32>, vector<4x8x8xf32>, vector<4x8x8xf32> -> vector<4x8x8xf32>
    "tpu.trace_stop"() : () -> ()
    %cst_120 = arith.constant 0.353553385 : f32
    %206 = vector.broadcast %cst_120 : f32 to vector<4x8x8xf32>
    %207 = arith.mulf %205, %206 : vector<4x8x8xf32>
    %208 = vector.extract_strided_slice %29 {offsets = [0, 0], sizes = [1, 8], strides = [1, 1]} : vector<2x8xf32> to vector<1x8xf32>
    %209 = vector.shape_cast %208 : vector<1x8xf32> to vector<1x1x8xf32>
    %210 = vector.broadcast %209 : vector<1x1x8xf32> to vector<4x8x8xf32>
    %211 = arith.addf %207, %210 : vector<4x8x8xf32>
    %cst_121 = arith.constant dense<0xFF800000> : vector<4x8xf32>
    %212 = vector.multi_reduction <maximumf>, %211, %cst_121 [2] : vector<4x8x8xf32> to vector<4x8xf32>
    %213 = vector.shape_cast %212 : vector<4x8xf32> to vector<4x8x1xf32>
    %214 = vector.broadcast %213 : vector<4x8x1xf32> to vector<4x8x8xf32>
    %215 = arith.subf %211, %214 : vector<4x8x8xf32>
    %216 = math.exp %215 : vector<4x8x8xf32>
    %cst_122 = arith.constant dense<0.000000e+00> : vector<4x8xf32>
    %217 = vector.multi_reduction <add>, %216, %cst_122 [2] : vector<4x8x8xf32> to vector<4x8xf32>
    %218 = vector.shape_cast %217 : vector<4x8xf32> to vector<4x8x1xf32>
    %219 = tpu.reciprocal %218 {approx = true} : vector<4x8x1xf32> -> vector<4x8x1xf32>
    %220 = vector.broadcast %219 : vector<4x8x1xf32> to vector<4x8x8xf32>
    %221 = arith.mulf %216, %220 : vector<4x8x8xf32>
    "tpu.trace_start"() <{level = 10 : i32, message = "nqk,nkd->nqd"}> : () -> ()
    %cst_123 = arith.constant dense<0.000000e+00> : vector<4x8x8xf32>
    %222 = tpu.matmul %221, %204, %cst_123 {dimension_numbers = #tpu.dot_dimension_numbers<[2], [1], [1], [2], [0, 0, 0, 1, 1, 2], [0], [0]>} : vector<4x8x8xf32>, vector<4x8x8xf32>, vector<4x8x8xf32> -> vector<4x8x8xf32>
    "tpu.trace_stop"() : () -> ()
    "tpu.trace_start"() <{level = 10 : i32, message = "nsd,ndh->nsh"}> : () -> ()
    %cst_124 = arith.constant dense<0.000000e+00> : vector<4x8x32xf32>
    %223 = tpu.matmul %222, %181, %cst_124 {dimension_numbers = #tpu.dot_dimension_numbers<[2], [1], [1], [2], [0, 0, 0, 1, 1, 2], [0], [0]>} : vector<4x8x8xf32>, vector<4x8x32xf32>, vector<4x8x32xf32> -> vector<4x8x32xf32>
    "tpu.trace_stop"() : () -> ()
    %cst_125 = arith.constant dense<0.000000e+00> : vector<8x32xf32>
    %224 = vector.multi_reduction <add>, %223, %cst_125 [0] : vector<4x8x32xf32> to vector<8x32xf32>
    %225 = vector.extract_strided_slice %174 {offsets = [8, 0], sizes = [8, 32], strides = [1, 1]} : vector<16x32xf32> to vector<8x32xf32>
    %226 = vector.shape_cast %225 : vector<8x32xf32> to vector<1x8x32xf32>
    %227 = vector.broadcast %226 : vector<1x8x32xf32> to vector<4x8x32xf32>
    "tpu.trace_start"() <{level = 10 : i32, message = "nsh,nhd->nsd"}> : () -> ()
    %cst_126 = arith.constant dense<0.000000e+00> : vector<4x8x8xf32>
    %228 = tpu.matmul %227, %175, %cst_126 {dimension_numbers = #tpu.dot_dimension_numbers<[2], [1], [1], [2], [0, 0, 0, 1, 1, 2], [0], [0]>} : vector<4x8x32xf32>, vector<4x32x8xf32>, vector<4x8x8xf32> -> vector<4x8x8xf32>
    "tpu.trace_stop"() : () -> ()
    %229 = vector.broadcast %178 : vector<4x1x8xf32> to vector<4x8x8xf32>
    %230 = arith.addf %228, %229 : vector<4x8x8xf32>
    "tpu.trace_start"() <{level = 10 : i32, message = "nsh,nhd->nsd"}> : () -> ()
    %cst_127 = arith.constant dense<0.000000e+00> : vector<4x8x8xf32>
    %231 = tpu.matmul %227, %176, %cst_127 {dimension_numbers = #tpu.dot_dimension_numbers<[2], [1], [1], [2], [0, 0, 0, 1, 1, 2], [0], [0]>} : vector<4x8x32xf32>, vector<4x32x8xf32>, vector<4x8x8xf32> -> vector<4x8x8xf32>
    "tpu.trace_stop"() : () -> ()
    %232 = vector.broadcast %179 : vector<4x1x8xf32> to vector<4x8x8xf32>
    %233 = arith.addf %231, %232 : vector<4x8x8xf32>
    "tpu.trace_start"() <{level = 10 : i32, message = "nsh,nhd->nsd"}> : () -> ()
    %cst_128 = arith.constant dense<0.000000e+00> : vector<4x8x8xf32>
    %234 = tpu.matmul %227, %177, %cst_128 {dimension_numbers = #tpu.dot_dimension_numbers<[2], [1], [1], [2], [0, 0, 0, 1, 1, 2], [0], [0]>} : vector<4x8x32xf32>, vector<4x32x8xf32>, vector<4x8x8xf32> -> vector<4x8x8xf32>
    "tpu.trace_stop"() : () -> ()
    %235 = vector.broadcast %180 : vector<4x1x8xf32> to vector<4x8x8xf32>
    %236 = arith.addf %234, %235 : vector<4x8x8xf32>
    "tpu.trace_start"() <{level = 10 : i32, message = "nqd,nkd->nqk"}> : () -> ()
    %cst_129 = arith.constant dense<0.000000e+00> : vector<4x8x8xf32>
    %237 = tpu.matmul %230, %233, %cst_129 {dimension_numbers = #tpu.dot_dimension_numbers<[2], [2], [1], [1], [0, 0, 0, 1, 1, 1], [0], [0]>} : vector<4x8x8xf32>, vector<4x8x8xf32>, vector<4x8x8xf32> -> vector<4x8x8xf32>
    "tpu.trace_stop"() : () -> ()
    %cst_130 = arith.constant 0.353553385 : f32
    %238 = vector.broadcast %cst_130 : f32 to vector<4x8x8xf32>
    %239 = arith.mulf %237, %238 : vector<4x8x8xf32>
    %240 = vector.extract_strided_slice %29 {offsets = [1, 0], sizes = [1, 8], strides = [1, 1]} : vector<2x8xf32> to vector<1x8xf32>
    %241 = vector.shape_cast %240 : vector<1x8xf32> to vector<1x1x8xf32>
    %242 = vector.broadcast %241 : vector<1x1x8xf32> to vector<4x8x8xf32>
    %243 = arith.addf %239, %242 : vector<4x8x8xf32>
    %cst_131 = arith.constant dense<0xFF800000> : vector<4x8xf32>
    %244 = vector.multi_reduction <maximumf>, %243, %cst_131 [2] : vector<4x8x8xf32> to vector<4x8xf32>
    %245 = vector.shape_cast %244 : vector<4x8xf32> to vector<4x8x1xf32>
    %246 = vector.broadcast %245 : vector<4x8x1xf32> to vector<4x8x8xf32>
    %247 = arith.subf %243, %246 : vector<4x8x8xf32>
    %248 = math.exp %247 : vector<4x8x8xf32>
    %cst_132 = arith.constant dense<0.000000e+00> : vector<4x8xf32>
    %249 = vector.multi_reduction <add>, %248, %cst_132 [2] : vector<4x8x8xf32> to vector<4x8xf32>
    %250 = vector.shape_cast %249 : vector<4x8xf32> to vector<4x8x1xf32>
    %251 = tpu.reciprocal %250 {approx = true} : vector<4x8x1xf32> -> vector<4x8x1xf32>
    %252 = vector.broadcast %251 : vector<4x8x1xf32> to vector<4x8x8xf32>
    %253 = arith.mulf %248, %252 : vector<4x8x8xf32>
    "tpu.trace_start"() <{level = 10 : i32, message = "nqk,nkd->nqd"}> : () -> ()
    %cst_133 = arith.constant dense<0.000000e+00> : vector<4x8x8xf32>
    %254 = tpu.matmul %253, %236, %cst_133 {dimension_numbers = #tpu.dot_dimension_numbers<[2], [1], [1], [2], [0, 0, 0, 1, 1, 2], [0], [0]>} : vector<4x8x8xf32>, vector<4x8x8xf32>, vector<4x8x8xf32> -> vector<4x8x8xf32>
    "tpu.trace_stop"() : () -> ()
    "tpu.trace_start"() <{level = 10 : i32, message = "nsd,ndh->nsh"}> : () -> ()
    %cst_134 = arith.constant dense<0.000000e+00> : vector<4x8x32xf32>
    %255 = tpu.matmul %254, %181, %cst_134 {dimension_numbers = #tpu.dot_dimension_numbers<[2], [1], [1], [2], [0, 0, 0, 1, 1, 2], [0], [0]>} : vector<4x8x8xf32>, vector<4x8x32xf32>, vector<4x8x32xf32> -> vector<4x8x32xf32>
    "tpu.trace_stop"() : () -> ()
    %cst_135 = arith.constant dense<0.000000e+00> : vector<8x32xf32>
    %256 = vector.multi_reduction <add>, %255, %cst_135 [0] : vector<4x8x32xf32> to vector<8x32xf32>
    %257 = tpu.concatenate %224, %256 in 0 : vector<8x32xf32>, vector<8x32xf32> -> vector<16x32xf32>
    %258 = vector.broadcast %182 : vector<1x32xf32> to vector<16x32xf32>
    %259 = arith.addf %257, %258 : vector<16x32xf32>
    %260 = arith.addf %174, %259 : vector<16x32xf32>
    %cst_136 = arith.constant dense<0.000000e+00> : vector<16xf32>
    %261 = vector.multi_reduction <add>, %260, %cst_136 [1] : vector<16x32xf32> to vector<16xf32>
    %262 = vector.shape_cast %261 : vector<16xf32> to vector<16x1xf32>
    %cst_137 = arith.constant 3.200000e+01 : f32
    %263 = vector.broadcast %cst_137 : f32 to vector<16x1xf32>
    %264 = arith.divf %262, %263 : vector<16x1xf32>
    %265 = vector.broadcast %264 : vector<16x1xf32> to vector<16x32xf32>
    %266 = arith.subf %260, %265 : vector<16x32xf32>
    %267 = arith.mulf %266, %266 : vector<16x32xf32>
    %cst_138 = arith.constant dense<0.000000e+00> : vector<16xf32>
    %268 = vector.multi_reduction <add>, %267, %cst_138 [1] : vector<16x32xf32> to vector<16xf32>
    %269 = vector.shape_cast %268 : vector<16xf32> to vector<16x1xf32>
    %cst_139 = arith.constant 3.200000e+01 : f32
    %270 = vector.broadcast %cst_139 : f32 to vector<16x1xf32>
    %271 = arith.divf %269, %270 : vector<16x1xf32>
    %272 = vector.broadcast %264 : vector<16x1xf32> to vector<16x32xf32>
    %273 = arith.subf %260, %272 : vector<16x32xf32>
    %cst_140 = arith.constant 9.99999974E-6 : f32
    %274 = vector.broadcast %cst_140 : f32 to vector<16x1xf32>
    %275 = arith.addf %271, %274 : vector<16x1xf32>
    %276 = math.rsqrt %275 : vector<16x1xf32>
    %277 = vector.broadcast %276 : vector<16x1xf32> to vector<16x32xf32>
    %278 = arith.mulf %273, %277 : vector<16x32xf32>
    %279 = vector.broadcast %183 : vector<1x32xf32> to vector<16x32xf32>
    %280 = arith.mulf %278, %279 : vector<16x32xf32>
    %281 = vector.broadcast %184 : vector<1x32xf32> to vector<16x32xf32>
    %282 = arith.addf %280, %281 : vector<16x32xf32>
    %cst_141 = arith.constant dense<0.000000e+00> : vector<16x64xf32>
    %283 = tpu.matmul %282, %189, %cst_141 {dimension_numbers = #tpu.dot_dimension_numbers<[1], [0], [0], [1], [0, 0, 1, 1], [], []>} : vector<16x32xf32>, vector<32x64xf32>, vector<16x64xf32> -> vector<16x64xf32>
    %284 = vector.broadcast %190 : vector<1x64xf32> to vector<16x64xf32>
    %285 = arith.addf %283, %284 : vector<16x64xf32>
    %cst_142 = arith.constant 5.000000e-01 : f32
    %286 = vector.broadcast %cst_142 : f32 to vector<16x64xf32>
    %287 = arith.mulf %286, %285 : vector<16x64xf32>
    %cst_143 = arith.constant 0.707106769 : f32
    %288 = vector.broadcast %cst_143 : f32 to vector<16x64xf32>
    %289 = arith.mulf %285, %288 : vector<16x64xf32>
    %290 = math.erf %289 : vector<16x64xf32>
    %cst_144 = arith.constant 1.000000e+00 : f32
    %291 = vector.broadcast %cst_144 : f32 to vector<16x64xf32>
    %292 = arith.addf %291, %290 : vector<16x64xf32>
    %293 = arith.mulf %287, %292 : vector<16x64xf32>
    %cst_145 = arith.constant dense<0.000000e+00> : vector<16x32xf32>
    %294 = tpu.matmul %293, %192, %cst_145 {dimension_numbers = #tpu.dot_dimension_numbers<[1], [0], [0], [1], [0, 0, 1, 1], [], []>} : vector<16x64xf32>, vector<64x32xf32>, vector<16x32xf32> -> vector<16x32xf32>
    %295 = vector.broadcast %185 : vector<1x32xf32> to vector<16x32xf32>
    %296 = arith.addf %294, %295 : vector<16x32xf32>
    %297 = arith.addf %282, %296 : vector<16x32xf32>
    %cst_146 = arith.constant dense<0.000000e+00> : vector<16xf32>
    %298 = vector.multi_reduction <add>, %297, %cst_146 [1] : vector<16x32xf32> to vector<16xf32>
    %299 = vector.shape_cast %298 : vector<16xf32> to vector<16x1xf32>
    %cst_147 = arith.constant 3.200000e+01 : f32
    %300 = vector.broadcast %cst_147 : f32 to vector<16x1xf32>
    %301 = arith.divf %299, %300 : vector<16x1xf32>
    %302 = vector.broadcast %301 : vector<16x1xf32> to vector<16x32xf32>
    %303 = arith.subf %297, %302 : vector<16x32xf32>
    %304 = arith.mulf %303, %303 : vector<16x32xf32>
    %cst_148 = arith.constant dense<0.000000e+00> : vector<16xf32>
    %305 = vector.multi_reduction <add>, %304, %cst_148 [1] : vector<16x32xf32> to vector<16xf32>
    %306 = vector.shape_cast %305 : vector<16xf32> to vector<16x1xf32>
    %cst_149 = arith.constant 3.200000e+01 : f32
    %307 = vector.broadcast %cst_149 : f32 to vector<16x1xf32>
    %308 = arith.divf %306, %307 : vector<16x1xf32>
    %309 = vector.broadcast %301 : vector<16x1xf32> to vector<16x32xf32>
    %310 = arith.subf %297, %309 : vector<16x32xf32>
    %cst_150 = arith.constant 9.99999974E-6 : f32
    %311 = vector.broadcast %cst_150 : f32 to vector<16x1xf32>
    %312 = arith.addf %308, %311 : vector<16x1xf32>
    %313 = math.rsqrt %312 : vector<16x1xf32>
    %314 = vector.broadcast %313 : vector<16x1xf32> to vector<16x32xf32>
    %315 = arith.mulf %310, %314 : vector<16x32xf32>
    %316 = vector.broadcast %186 : vector<1x32xf32> to vector<16x32xf32>
    %317 = arith.mulf %315, %316 : vector<16x32xf32>
    %318 = vector.broadcast %187 : vector<1x32xf32> to vector<16x32xf32>
    %319 = arith.addf %317, %318 : vector<16x32xf32>
    %320 = vector.extract_strided_slice %319 {offsets = [0, 0], sizes = [1, 32], strides = [1, 1]} : vector<16x32xf32> to vector<1x32xf32>
    %321 = vector.extract_strided_slice %319 {offsets = [8, 0], sizes = [1, 32], strides = [1, 1]} : vector<16x32xf32> to vector<1x32xf32>
    %322 = tpu.concatenate %320, %321 in 0 : vector<1x32xf32>, vector<1x32xf32> -> vector<2x32xf32>
    %c0_151 = arith.constant 0 : index
    %c0_152 = arith.constant 0 : index
    %323 = vector.load %arg10[%c0_151, %c0_152] : memref<32x32xf32, #tpu.memory_space<vmem>>, vector<32x32xf32>
    %cst_153 = arith.constant dense<0.000000e+00> : vector<2x32xf32>
    %324 = tpu.matmul %322, %323, %cst_153 {dimension_numbers = #tpu.dot_dimension_numbers<[1], [0], [0], [1], [0, 0, 1, 1], [], []>} : vector<2x32xf32>, vector<32x32xf32>, vector<2x32xf32> -> vector<2x32xf32>
    %c0_154 = arith.constant 0 : index
    %c0_155 = arith.constant 0 : index
    %325 = vector.load %arg11[%c0_154, %c0_155] : memref<1x32xf32, #tpu.memory_space<vmem>>, vector<1x32xf32>
    %326 = vector.broadcast %325 : vector<1x32xf32> to vector<2x32xf32>
    %327 = arith.addf %324, %326 : vector<2x32xf32>
    %328 = math.tanh %327 : vector<2x32xf32>
    %c0_156 = arith.constant 0 : index
    %c0_157 = arith.constant 0 : index
    %329 = vector.load %arg12[%c0_156, %c0_157] : memref<32x2xf32, #tpu.memory_space<vmem>>, vector<32x2xf32>
    %cst_158 = arith.constant dense<0.000000e+00> : vector<2x2xf32>
    %330 = tpu.matmul %328, %329, %cst_158 {dimension_numbers = #tpu.dot_dimension_numbers<[1], [0], [0], [1], [0, 0, 1, 1], [], []>} : vector<2x32xf32>, vector<32x2xf32>, vector<2x2xf32> -> vector<2x2xf32>
    %c0_159 = arith.constant 0 : index
    %c0_160 = arith.constant 0 : index
    %331 = vector.load %arg13[%c0_159, %c0_160] : memref<1x2xf32, #tpu.memory_space<vmem>>, vector<1x2xf32>
    %332 = vector.broadcast %331 : vector<1x2xf32> to vector<2x2xf32>
    %333 = arith.addf %330, %332 : vector<2x2xf32>
    %c0_161 = arith.constant 0 : index
    %c0_162 = arith.constant 0 : index
    %334 = vector.load %arg14[%c0_161, %c0_162] : memref<2x2xf32, #tpu.memory_space<vmem>>, vector<2x2xf32>
    tpu.vector_store %arg14[%c0_161, %c0_162], %333 {strides = array<i32>} : memref<2x2xf32, #tpu.memory_space<vmem>>, vector<2x2xf32>,
    return
  }
}

</mosaic_0001>

<llo_original>
// kernel: student_cross_encoder_forward.1
$region0: #{student_cross_encoder_forward.1}
  #allocation0 [shape = 'u32[]', space=smem, size = 0x4, offset = 0x4, fixed_abs, tag = 'smem constant byte address 0x4 - core index']
  #allocation1 [shape = 'u32[144,128]{1,0:T(1,128)}', space=vmem, size = 0x12000, scoped, tag = 'internal scratch']
  %s0 = inlined_call_operand.vmem [shape: f32[16,32], index: 0, kind: input, shape index: {}]
  %s1 = inlined_call_operand.vmem [shape: f32[2,8], index: 1, kind: input, shape index: {}]
  %s2 = inlined_call_operand.vmem [shape: f32[2,32], index: 2, kind: input, shape index: {}]
  %s3 = inlined_call_operand.vmem [shape: f32[24,32,8], index: 3, kind: input, shape index: {}]
  %s4 = inlined_call_operand.vmem [shape: f32[24,1,8], index: 4, kind: input, shape index: {}]
  %s5 = inlined_call_operand.vmem [shape: f32[8,8,32], index: 5, kind: input, shape index: {}]
  %s6 = inlined_call_operand.vmem [shape: f32[2,32,64], index: 6, kind: input, shape index: {}]
  %s7 = inlined_call_operand.vmem [shape: f32[2,64], index: 7, kind: input, shape index: {}]
  %s8 = inlined_call_operand.vmem [shape: f32[2,64,32], index: 8, kind: input, shape index: {}]
  %s9 = inlined_call_operand.vmem [shape: f32[12,32], index: 9, kind: input, shape index: {}]
  %s10 = inlined_call_operand.vmem [shape: f32[32,32], index: 10, kind: input, shape index: {}]
  %s11 = inlined_call_operand.vmem [shape: f32[1,32], index: 11, kind: input, shape index: {}]
  %s12 = inlined_call_operand.vmem [shape: f32[32,2], index: 12, kind: input, shape index: {}]
  %s13 = inlined_call_operand.vmem [shape: f32[1,2], index: 13, kind: input, shape index: {}]
  %s14 = inlined_call_operand.hbm [shape: f32[2,2], index: 14, kind: output, shape index: {}]
  %s15 = sld [smem:[#allocation0]]
  $region66: #{student_cross_encoder_forward.1} parent=0
    _
  %s17 = ssub.s32 1, %s15
  %s18 = scalar_select 0, %s17, %s15
  $region1: #{student_cross_encoder_forward.1} parent=0
    #allocation2 [shape = 'u8[1024]{0}', space=vmem, size = 0x400, scoped, tag = 'output window, operand 0, single buffered']
    #allocation3 [shape = 's32[1]{0}', space=sflag, size = 0x4, scoped, tag = 'scoped memory for student_cross_encoder_forward.1']
    %19 = vsyncpa [#allocation3], 0
    // Predicated region
    $region2: #{student_cross_encoder_forward.1} parent=1 // pred_check
      _
    $region3: #{student_cross_encoder_forward.1} parent=1 // pred_check_branch
      %21 = sbr.rel (0) target = $region5
    $region4: #{student_cross_encoder_forward.1} parent=1 // pred_region
      _
    $region5: #{student_cross_encoder_forward.1} parent=1 // pred_fallthru
      _
    // Predicated region
    $region6: #{student_cross_encoder_forward.1} parent=1 // pred_check
      _
    $region7: #{student_cross_encoder_forward.1} parent=1 // pred_check_branch
      %23 = sbr.rel (0) target = $region9
    $region8: #{student_cross_encoder_forward.1} parent=1 // pred_region
      _
    $region9: #{student_cross_encoder_forward.1} parent=1 // pred_fallthru
      _
    // Predicated region
    $region10: #{student_cross_encoder_forward.1} parent=1 // pred_check
      _
    $region11: #{student_cross_encoder_forward.1} parent=1 // pred_check_branch
      %25 = sbr.rel (0) target = $region13
    $region12: #{student_cross_encoder_forward.1} parent=1 // pred_region
      _
    $region13: #{student_cross_encoder_forward.1} parent=1 // pred_fallthru
      _
    // Predicated region
    $region14: #{student_cross_encoder_forward.1} parent=1 // pred_check
      _
    $region15: #{student_cross_encoder_forward.1} parent=1 // pred_check_branch
      %27 = sbr.rel (0) target = $region17
    $region16: #{student_cross_encoder_forward.1} parent=1 // pred_region
      _
    $region17: #{student_cross_encoder_forward.1} parent=1 // pred_fallthru
      _
    // Predicated region
    $region18: #{student_cross_encoder_forward.1} parent=1 // pred_check
      _
    $region19: #{student_cross_encoder_forward.1} parent=1 // pred_check_branch
      %29 = sbr.rel (0) target = $region21
    $region20: #{student_cross_encoder_forward.1} parent=1 // pred_region
      _
    $region21: #{student_cross_encoder_forward.1} parent=1 // pred_fallthru
      _
    // Predicated region
    $region22: #{student_cross_encoder_forward.1} parent=1 // pred_check
      _
    $region23: #{student_cross_encoder_forward.1} parent=1 // pred_check_branch
      %31 = sbr.rel (0) target = $region25
    $region24: #{student_cross_encoder_forward.1} parent=1 // pred_region
      _
    $region25: #{student_cross_encoder_forward.1} parent=1 // pred_fallthru
      _
    // Predicated region
    $region26: #{student_cross_encoder_forward.1} parent=1 // pred_check
      _
    $region27: #{student_cross_encoder_forward.1} parent=1 // pred_check_branch
      %33 = sbr.rel (0) target = $region29
    $region28: #{student_cross_encoder_forward.1} parent=1 // pred_region
      _
    $region29: #{student_cross_encoder_forward.1} parent=1 // pred_fallthru
      _
    // Predicated region
    $region30: #{student_cross_encoder_forward.1} parent=1 // pred_check
      _
    $region31: #{student_cross_encoder_forward.1} parent=1 // pred_check_branch
      %35 = sbr.rel (0) target = $region33
    $region32: #{student_cross_encoder_forward.1} parent=1 // pred_region
      _
    $region33: #{student_cross_encoder_forward.1} parent=1 // pred_fallthru
      _
    // Predicated region
    $region34: #{student_cross_encoder_forward.1} parent=1 // pred_check
      _
    $region35: #{student_cross_encoder_forward.1} parent=1 // pred_check_branch
      %37 = sbr.rel (0) target = $region37
    $region36: #{student_cross_encoder_forward.1} parent=1 // pred_region
      _
    $region37: #{student_cross_encoder_forward.1} parent=1 // pred_fallthru
      _
    // Predicated region
    $region38: #{student_cross_encoder_forward.1} parent=1 // pred_check
      _
    $region39: #{student_cross_encoder_forward.1} parent=1 // pred_check_branch
      %39 = sbr.rel (0) target = $region41
    $region40: #{student_cross_encoder_forward.1} parent=1 // pred_region
      _
    $region41: #{student_cross_encoder_forward.1} parent=1 // pred_fallthru
      _
    // Predicated region
    $region42: #{student_cross_encoder_forward.1} parent=1 // pred_check
      _
    $region43: #{student_cross_encoder_forward.1} parent=1 // pred_check_branch
      %41 = sbr.rel (0) target = $region45
    $region44: #{student_cross_encoder_forward.1} parent=1 // pred_region
      _
    $region45: #{student_cross_encoder_forward.1} parent=1 // pred_fallthru
      _
    // Predicated region
    $region46: #{student_cross_encoder_forward.1} parent=1 // pred_check
      _
    $region47: #{student_cross_encoder_forward.1} parent=1 // pred_check_branch
      %43 = sbr.rel (0) target = $region49
    $region48: #{student_cross_encoder_forward.1} parent=1 // pred_region
      _
    $region49: #{student_cross_encoder_forward.1} parent=1 // pred_fallthru
      _
    // Predicated region
    $region50: #{student_cross_encoder_forward.1} parent=1 // pred_check
      _
    $region51: #{student_cross_encoder_forward.1} parent=1 // pred_check_branch
      %45 = sbr.rel (0) target = $region53
    $region52: #{student_cross_encoder_forward.1} parent=1 // pred_region
      _
    $region53: #{student_cross_encoder_forward.1} parent=1 // pred_fallthru
      _
    // Predicated region
    $region54: #{student_cross_encoder_forward.1} parent=1 // pred_check
      _
    $region55: #{student_cross_encoder_forward.1} parent=1 // pred_check_branch
      %47 = sbr.rel (0) target = $region57
    $region56: #{student_cross_encoder_forward.1} parent=1 // pred_region
      _
    $region57: #{student_cross_encoder_forward.1} parent=1 // pred_fallthru
      _
    %v48 = vld [vmem:[%s0] sm:$0xff]
    %v49 = vld [vmem:[%s0 + $0x8] sm:$0xff]
    %v50 = vld [vmem:[%s2] sm:$0x1]
    %v51 = vld [vmem:[%s2 + $0x1] sm:$0x1]
    %vm52 = vcmask 261120
    %v53 = vsel %vm52, %v48, 0.0
    %54 = vadd.xlane.f32.xlu0 %v53
    %v55 = vpop.xlane.xlu0 %54
    %v56 = vsel %vm52, %v49, 0.0
    %57 = vadd.xlane.f32.xlu0 %v56
    %v58 = vpop.xlane.xlu0 %57
    %v59 = vrcp.pop 32.0
    %v60 = vmul.f32 %v55, %v59
    %v61 = vmul.f32 %v58, %v59
    %v62 = vsub.f32 %v48, %v60
    %v63 = vsub.f32 %v49, %v61
    %v64 = vmul.f32 %v62, %v62
    %v65 = vmul.f32 %v63, %v63
    %v66 = vsel %vm52, %v64, 0.0
    %67 = vadd.xlane.f32.xlu0 %v66
    %v68 = vpop.xlane.xlu0 %67
    %v69 = vsel %vm52, %v65, 0.0
    %70 = vadd.xlane.f32.xlu0 %v69
    %v71 = vpop.xlane.xlu0 %70
    %v72 = vmul.f32 %v68, %v59
    %v73 = vmul.f32 %v71, %v59
    %v74 = vadd.f32 %v72, 1e-05
    %v75 = vadd.f32 %v73, 1e-05
    %v76 = vrsqrt.pop %v74
    %v77 = vrsqrt.pop %v75
    %v78 = vmul.f32 %v62, %v76
    %v79 = vmul.f32 %v63, %v77
    %v80 = vlaneseq
    %v81 = vshrl.u32 %v80, 7
    %v82 = vsub.s32 0, %v81
    %v83 = vrot.slane %v50, %v82
    %v84 = vmul.f32 %v78, %v83
    %v85 = vmul.f32 %v79, %v83
    %v86 = vlaneseq
    %v87 = vshrl.u32 %v86, 7
    %v88 = vsub.s32 0, %v87
    %v89 = vrot.slane %v51, %v88
    %v90 = vadd.f32 %v84, %v89
    %v91 = vadd.f32 %v85, %v89
    %v92 = vld [vmem:[%s1] sm:$0x3]
    %v93 = vsub.f32 1.0, %v92
    %v94 = vmul.f32 %v93, -3.4028235e+38
    %v95 = vld [vmem:[%s3] sm:$0xff]
    %v96 = vld [vmem:[%s3 + $0x8] sm:$0xff]
    %v97 = vld [vmem:[%s3 + $0x10] sm:$0xff]
    %v98 = vld [vmem:[%s3 + $0x18] sm:$0xff]
    %v99 = vld [vmem:[%s3 + $0x20] sm:$0xff]
    %v100 = vld [vmem:[%s3 + $0x28] sm:$0xff]
    %v101 = vld [vmem:[%s3 + $0x30] sm:$0xff]
    %v102 = vld [vmem:[%s3 + $0x38] sm:$0xff]
    %v103 = vld [vmem:[%s3 + $0x40] sm:$0xff]
    %v104 = vld [vmem:[%s3 + $0x48] sm:$0xff]
    %v105 = vld [vmem:[%s3 + $0x50] sm:$0xff]
    %v106 = vld [vmem:[%s3 + $0x58] sm:$0xff]
    %v107 = vld [vmem:[%s3 + $0x60] sm:$0xff]
    %v108 = vld [vmem:[%s3 + $0x68] sm:$0xff]
    %v109 = vld [vmem:[%s3 + $0x70] sm:$0xff]
    %v110 = vld [vmem:[%s3 + $0x78] sm:$0xff]
    %s111 = scalar_lea.vmem %s3, 128
    %v112 = vld [vmem:[%s111] sm:$0xff]
    %v113 = vld [vmem:[%s111 + $0x8] sm:$0xff]
    %v114 = vld [vmem:[%s111 + $0x10] sm:$0xff]
    %v115 = vld [vmem:[%s111 + $0x18] sm:$0xff]
    %v116 = vld [vmem:[%s111 + $0x20] sm:$0xff]
    %v117 = vld [vmem:[%s111 + $0x28] sm:$0xff]
    %v118 = vld [vmem:[%s111 + $0x30] sm:$0xff]
    %v119 = vld [vmem:[%s111 + $0x38] sm:$0xff]
    %v120 = vld [vmem:[%s111 + $0x40] sm:$0xff]
    %v121 = vld [vmem:[%s111 + $0x48] sm:$0xff]
    %v122 = vld [vmem:[%s111 + $0x50] sm:$0xff]
    %v123 = vld [vmem:[%s111 + $0x58] sm:$0xff]
    %v124 = vld [vmem:[%s111 + $0x60] sm:$0xff]
    %v125 = vld [vmem:[%s111 + $0x68] sm:$0xff]
    %v126 = vld [vmem:[%s111 + $0x70] sm:$0xff]
    %v127 = vld [vmem:[%s111 + $0x78] sm:$0xff]
    %s128 = scalar_lea.vmem %s3, 256
    %v129 = vld [vmem:[%s128] sm:$0xff]
    %v130 = vld [vmem:[%s128 + $0x8] sm:$0xff]
    %v131 = vld [vmem:[%s128 + $0x10] sm:$0xff]
    %v132 = vld [vmem:[%s128 + $0x18] sm:$0xff]
    %v133 = vld [vmem:[%s128 + $0x20] sm:$0xff]
    %v134 = vld [vmem:[%s128 + $0x28] sm:$0xff]
    %v135 = vld [vmem:[%s128 + $0x30] sm:$0xff]
    %v136 = vld [vmem:[%s128 + $0x38] sm:$0xff]
    %v137 = vld [vmem:[%s128 + $0x40] sm:$0xff]
    %v138 = vld [vmem:[%s128 + $0x48] sm:$0xff]
    %v139 = vld [vmem:[%s128 + $0x50] sm:$0xff]
    %v140 = vld [vmem:[%s128 + $0x58] sm:$0xff]
    %v141 = vld [vmem:[%s128 + $0x60] sm:$0xff]
    %v142 = vld [vmem:[%s128 + $0x68] sm:$0xff]
    %v143 = vld [vmem:[%s128 + $0x70] sm:$0xff]
    %v144 = vld [vmem:[%s128 + $0x78] sm:$0xff]
    %v145 = vld [vmem:[%s4] sm:$0x1]
    %v146 = vld [vmem:[%s4 + $0x1] sm:$0x1]
    %v147 = vld [vmem:[%s4 + $0x2] sm:$0x1]
    %v148 = vld [vmem:[%s4 + $0x3] sm:$0x1]
    %s149 = scalar_lea.vmem %s4, 4
    %v150 = vld [vmem:[%s149] sm:$0x1]
    %v151 = vld [vmem:[%s149 + $0x1] sm:$0x1]
    %v152 = vld [vmem:[%s149 + $0x2] sm:$0x1]
    %v153 = vld [vmem:[%s149 + $0x3] sm:$0x1]
    %s154 = scalar_lea.vmem %s4, 8
    %v155 = vld [vmem:[%s154] sm:$0x1]
    %v156 = vld [vmem:[%s154 + $0x1] sm:$0x1]
    %v157 = vld [vmem:[%s154 + $0x2] sm:$0x1]
    %v158 = vld [vmem:[%s154 + $0x3] sm:$0x1]
    %v159 = vld [vmem:[%s5] sm:$0xff]
    %v160 = vld [vmem:[%s5 + $0x8] sm:$0xff]
    %v161 = vld [vmem:[%s5 + $0x10] sm:$0xff]
    %v162 = vld [vmem:[%s5 + $0x18] sm:$0xff]
    %v163 = vld [vmem:[%s9] sm:$0x1]
    %v164 = vld [vmem:[%s9 + $0x1] sm:$0x1]
    %v165 = vld [vmem:[%s9 + $0x2] sm:$0x1]
    %v166 = vld [vmem:[%s9 + $0x3] sm:$0x1]
    %v167 = vld [vmem:[%s9 + $0x4] sm:$0x1]
    %v168 = vld [vmem:[%s9 + $0x5] sm:$0x1]
    %v169 = vld [vmem:[%s6] sm:$0xff]
    %v170 = vld [vmem:[%s6 + $0x8] sm:$0xff]
    %v171 = vld [vmem:[%s6 + $0x10] sm:$0xff]
    %v172 = vld [vmem:[%s6 + $0x18] sm:$0xff]
    %v173 = vld [vmem:[%s7] sm:$0x1]
    %v174 = vld [vmem:[%s8] sm:$0xff]
    %v175 = vld [vmem:[%s8 + $0x8] sm:$0xff]
    %v176 = vld [vmem:[%s8 + $0x10] sm:$0xff]
    %v177 = vld [vmem:[%s8 + $0x18] sm:$0xff]
    %v178 = vld [vmem:[%s8 + $0x20] sm:$0xff]
    %v179 = vld [vmem:[%s8 + $0x28] sm:$0xff]
    %v180 = vld [vmem:[%s8 + $0x30] sm:$0xff]
    %v181 = vld [vmem:[%s8 + $0x38] sm:$0xff]
    %v186 = vlaneseq
    %v187 = vshrl.u32 %v186, 7
    %v188 = vsub.s32 0, %v187
    %v189 = vrot.slane %v145, %v188
    %v190 = vlaneseq
    %v191 = vshrl.u32 %v190, 7
    %v192 = vsub.s32 0, %v191
    %v193 = vrot.slane %v146, %v192
    %v194 = vlaneseq
    %v195 = vshrl.u32 %v194, 7
    %v196 = vsub.s32 0, %v195
    %v197 = vrot.slane %v147, %v196
    %v198 = vlaneseq
    %v199 = vshrl.u32 %v198, 7
    %v200 = vsub.s32 0, %v199
    %v201 = vrot.slane %v148, %v200
    %v207 = vsel %vm52, %v90, 0
    %209 = vmatprep.subr.mxu0 0.0
    %210 = vmatpush1.msra.mxu0 %v95
    %211 = vmatprep.subr.mxu0 0.0
    %212 = vmatpush1.msra.mxu0 %v96
    %213 = vmatprep.subr.mxu0 0.0
    %214 = vmatpush1.msra.mxu0 %v97
    %215 = vmatprep.subr.mxu0 0.0
    %216 = vmatpush1.msra.mxu0 %v98
    %217 = vmatprep.subr.mxu0 0.0
    %218 = vmatpush1.msra.mxu0 0.0
    %219 = vmatprep.subr.mxu0 0.0
    %220 = vmatpush1.msra.mxu0 0.0
    %221 = vmatprep.subr.mxu0 0.0
    %222 = vmatpush1.msra.mxu0 0.0
    %223 = vmatprep.subr.mxu0 0.0
    %224 = vmatpush1.msra.mxu0 0.0
    %225 = vmatprep.subr.mxu0 0.0
    %226 = vmatpush1.msra.mxu0 0.0
    %227 = vmatprep.subr.mxu0 0.0
    %228 = vmatpush1.msra.mxu0 0.0
    %229 = vmatprep.subr.mxu0 0.0
    %230 = vmatpush1.msra.mxu0 0.0
    %231 = vmatprep.subr.mxu0 0.0
    %232 = vmatpush1.msra.mxu0 0.0
    %233 = vmatprep.subr.mxu0 0.0
    %234 = vmatpush1.msra.mxu0 0.0
    %235 = vmatprep.subr.mxu0 0.0
    %236 = vmatpush1.msra.mxu0 0.0
    %237 = vmatprep.subr.mxu0 0.0
    %238 = vmatpush1.msra.mxu0 0.0
    %239 = vmatprep.subr.mxu0 0.0
    %240 = vmatpush1.msra.mxu0 0.0
    %241 = vmatprep.subr.mxu0 0.0
    %242 = vmatpush1.msra.mxu0 0.0
    %243 = vmatprep.subr.mxu0 0.0
    %244 = vmatpush1.msra.mxu0 0.0
    %245 = vmatprep.subr.mxu0 0.0
    %246 = vmatpush1.msra.mxu0 0.0
    %247 = vmatprep.subr.mxu0 0.0
    %248 = vmatpush1.msra.mxu0 0.0
    %249 = vmatprep.subr.mxu0 0.0
    %250 = vmatpush1.msra.mxu0 0.0
    %251 = vmatprep.subr.mxu0 0.0
    %252 = vmatpush1.msra.mxu0 0.0
    %253 = vmatprep.subr.mxu0 0.0
    %254 = vmatpush1.msra.mxu0 0.0
    %255 = vmatprep.subr.mxu0 0.0
    %256 = vmatpush1.msra.mxu0 0.0
    %257 = vmatprep.subr.mxu0 0.0
    %258 = vmatpush1.msra.mxu0 0.0
    %259 = vmatprep.subr.mxu0 0.0
    %260 = vmatpush1.msra.mxu0 0.0
    %261 = vmatprep.subr.mxu0 0.0
    %262 = vmatpush1.msra.mxu0 0.0
    %263 = vmatprep.subr.mxu0 0.0
    %264 = vmatpush1.msra.mxu0 0.0
    %265 = vmatprep.subr.mxu0 0.0
    %266 = vmatpush1.msra.mxu0 0.0
    %267 = vmatprep.subr.mxu0 0.0
    %268 = vmatpush1.msra.mxu0 0.0
    %269 = vmatprep.subr.mxu0 0.0
    %270 = vmatpush1.msra.mxu0 0.0
    %271 = vmatprep.subr.mxu0 0.0
    %272 = vmatpush1.msra.mxu0 0.0
    %273 = vmatprep.mubr.f32.mxu0 0.0
    %274 = vmatmul.mubr.f32.gmra.mrb[0].mxu0 %v207
    %v275 = vpop.f32.mrb[0].mxu0
    %v276 = vadd.f32 %v189, %v275
    %v277 = vpop.f32.mrb[0].mxu0
    %278 = vdwg.mxu0
    %279 = vmatprep.subr.mxu0 0.0
    %280 = vmatpush1.msra.mxu0 %v99
    %281 = vmatprep.subr.mxu0 0.0
    %282 = vmatpush1.msra.mxu0 %v100
    %283 = vmatprep.subr.mxu0 0.0
    %284 = vmatpush1.msra.mxu0 %v101
    %285 = vmatprep.subr.mxu0 0.0
    %286 = vmatpush1.msra.mxu0 %v102
    %287 = vmatprep.subr.mxu0 0.0
    %288 = vmatpush1.msra.mxu0 0.0
    %289 = vmatprep.subr.mxu0 0.0
    %290 = vmatpush1.msra.mxu0 0.0
    %291 = vmatprep.subr.mxu0 0.0
    %292 = vmatpush1.msra.mxu0 0.0
    %293 = vmatprep.subr.mxu0 0.0
    %294 = vmatpush1.msra.mxu0 0.0
    %295 = vmatprep.subr.mxu0 0.0
    %296 = vmatpush1.msra.mxu0 0.0
    %297 = vmatprep.subr.mxu0 0.0
    %298 = vmatpush1.msra.mxu0 0.0
    %299 = vmatprep.subr.mxu0 0.0
    %300 = vmatpush1.msra.mxu0 0.0
    %301 = vmatprep.subr.mxu0 0.0
    %302 = vmatpush1.msra.mxu0 0.0
    %303 = vmatprep.subr.mxu0 0.0
    %304 = vmatpush1.msra.mxu0 0.0
    %305 = vmatprep.subr.mxu0 0.0
    %306 = vmatpush1.msra.mxu0 0.0
    %307 = vmatprep.subr.mxu0 0.0
    %308 = vmatpush1.msra.mxu0 0.0
    %309 = vmatprep.subr.mxu0 0.0
    %310 = vmatpush1.msra.mxu0 0.0
    %311 = vmatprep.subr.mxu0 0.0
    %312 = vmatpush1.msra.mxu0 0.0
    %313 = vmatprep.subr.mxu0 0.0
    %314 = vmatpush1.msra.mxu0 0.0
    %315 = vmatprep.subr.mxu0 0.0
    %316 = vmatpush1.msra.mxu0 0.0
    %317 = vmatprep.subr.mxu0 0.0
    %318 = vmatpush1.msra.mxu0 0.0
    %319 = vmatprep.subr.mxu0 0.0
    %320 = vmatpush1.msra.mxu0 0.0
    %321 = vmatprep.subr.mxu0 0.0
    %322 = vmatpush1.msra.mxu0 0.0
    %323 = vmatprep.subr.mxu0 0.0
    %324 = vmatpush1.msra.mxu0 0.0
    %325 = vmatprep.subr.mxu0 0.0
    %326 = vmatpush1.msra.mxu0 0.0
    %327 = vmatprep.subr.mxu0 0.0
    %328 = vmatpush1.msra.mxu0 0.0
    %329 = vmatprep.subr.mxu0 0.0
    %330 = vmatpush1.msra.mxu0 0.0
    %331 = vmatprep.subr.mxu0 0.0
    %332 = vmatpush1.msra.mxu0 0.0
    %333 = vmatprep.subr.mxu0 0.0
    %334 = vmatpush1.msra.mxu0 0.0
    %335 = vmatprep.subr.mxu0 0.0
    %336 = vmatpush1.msra.mxu0 0.0
    %337 = vmatprep.subr.mxu0 0.0
    %338 = vmatpush1.msra.mxu0 0.0
    %339 = vmatprep.subr.mxu0 0.0
    %340 = vmatpush1.msra.mxu0 0.0
    %341 = vmatprep.subr.mxu0 0.0
    %342 = vmatpush1.msra.mxu0 0.0
    %343 = vmatprep.mubr.f32.mxu0 0.0
    %344 = vmatmul.mubr.f32.gmra.mrb[0].mxu0 %v207
    %v345 = vpop.f32.mrb[0].mxu0
    %v346 = vadd.f32 %v193, %v345
    %v347 = vpop.f32.mrb[0].mxu0
    %348 = vdwg.mxu0
    %349 = vmatprep.subr.mxu0 0.0
    %350 = vmatpush1.msra.mxu0 %v103
    %351 = vmatprep.subr.mxu0 0.0
    %352 = vmatpush1.msra.mxu0 %v104
    %353 = vmatprep.subr.mxu0 0.0
    %354 = vmatpush1.msra.mxu0 %v105
    %355 = vmatprep.subr.mxu0 0.0
    %356 = vmatpush1.msra.mxu0 %v106
    %357 = vmatprep.subr.mxu0 0.0
    %358 = vmatpush1.msra.mxu0 0.0
    %359 = vmatprep.subr.mxu0 0.0
    %360 = vmatpush1.msra.mxu0 0.0
    %361 = vmatprep.subr.mxu0 0.0
    %362 = vmatpush1.msra.mxu0 0.0
    %363 = vmatprep.subr.mxu0 0.0
    %364 = vmatpush1.msra.mxu0 0.0
    %365 = vmatprep.subr.mxu0 0.0
    %366 = vmatpush1.msra.mxu0 0.0
    %367 = vmatprep.subr.mxu0 0.0
    %368 = vmatpush1.msra.mxu0 0.0
    %369 = vmatprep.subr.mxu0 0.0
    %370 = vmatpush1.msra.mxu0 0.0
    %371 = vmatprep.subr.mxu0 0.0
    %372 = vmatpush1.msra.mxu0 0.0
    %373 = vmatprep.subr.mxu0 0.0
    %374 = vmatpush1.msra.mxu0 0.0
    %375 = vmatprep.subr.mxu0 0.0
    %376 = vmatpush1.msra.mxu0 0.0
    %377 = vmatprep.subr.mxu0 0.0
    %378 = vmatpush1.msra.mxu0 0.0
    %379 = vmatprep.subr.mxu0 0.0
    %380 = vmatpush1.msra.mxu0 0.0
    %381 = vmatprep.subr.mxu0 0.0
    %382 = vmatpush1.msra.mxu0 0.0
    %383 = vmatprep.subr.mxu0 0.0
    %384 = vmatpush1.msra.mxu0 0.0
    %385 = vmatprep.subr.mxu0 0.0
    %386 = vmatpush1.msra.mxu0 0.0
    %387 = vmatprep.subr.mxu0 0.0
    %388 = vmatpush1.msra.mxu0 0.0
    %389 = vmatprep.subr.mxu0 0.0
    %390 = vmatpush1.msra.mxu0 0.0
    %391 = vmatprep.subr.mxu0 0.0
    %392 = vmatpush1.msra.mxu0 0.0
    %393 = vmatprep.subr.mxu0 0.0
    %394 = vmatpush1.msra.mxu0 0.0
    %395 = vmatprep.subr.mxu0 0.0
    %396 = vmatpush1.msra.mxu0 0.0
    %397 = vmatprep.subr.mxu0 0.0
    %398 = vmatpush1.msra.mxu0 0.0
    %399 = vmatprep.subr.mxu0 0.0
    %400 = vmatpush1.msra.mxu0 0.0
    %401 = vmatprep.subr.mxu0 0.0
    %402 = vmatpush1.msra.mxu0 0.0
    %403 = vmatprep.subr.mxu0 0.0
    %404 = vmatpush1.msra.mxu0 0.0
    %405 = vmatprep.subr.mxu0 0.0
    %406 = vmatpush1.msra.mxu0 0.0
    %407 = vmatprep.subr.mxu0 0.0
    %408 = vmatpush1.msra.mxu0 0.0
    %409 = vmatprep.subr.mxu0 0.0
    %410 = vmatpush1.msra.mxu0 0.0
    %411 = vmatprep.subr.mxu0 0.0
    %412 = vmatpush1.msra.mxu0 0.0
    %413 = vmatprep.mubr.f32.mxu0 0.0
    %414 = vmatmul.mubr.f32.gmra.mrb[0].mxu0 %v207
    %v415 = vpop.f32.mrb[0].mxu0
    %v416 = vadd.f32 %v197, %v415
    %v417 = vpop.f32.mrb[0].mxu0
    %418 = vdwg.mxu0
    %419 = vmatprep.subr.mxu0 0.0
    %420 = vmatpush1.msra.mxu0 %v107
    %421 = vmatprep.subr.mxu0 0.0
    %422 = vmatpush1.msra.mxu0 %v108
    %423 = vmatprep.subr.mxu0 0.0
    %424 = vmatpush1.msra.mxu0 %v109
    %425 = vmatprep.subr.mxu0 0.0
    %426 = vmatpush1.msra.mxu0 %v110
    %427 = vmatprep.subr.mxu0 0.0
    %428 = vmatpush1.msra.mxu0 0.0
    %429 = vmatprep.subr.mxu0 0.0
    %430 = vmatpush1.msra.mxu0 0.0
    %431 = vmatprep.subr.mxu0 0.0
    %432 = vmatpush1.msra.mxu0 0.0
    %433 = vmatprep.subr.mxu0 0.0
    %434 = vmatpush1.msra.mxu0 0.0
    %435 = vmatprep.subr.mxu0 0.0
    %436 = vmatpush1.msra.mxu0 0.0
    %437 = vmatprep.subr.mxu0 0.0
    %438 = vmatpush1.msra.mxu0 0.0
    %439 = vmatprep.subr.mxu0 0.0
    %440 = vmatpush1.msra.mxu0 0.0
    %441 = vmatprep.subr.mxu0 0.0
    %442 = vmatpush1.msra.mxu0 0.0
    %443 = vmatprep.subr.mxu0 0.0
    %444 = vmatpush1.msra.mxu0 0.0
    %445 = vmatprep.subr.mxu0 0.0
    %446 = vmatpush1.msra.mxu0 0.0
    %447 = vmatprep.subr.mxu0 0.0
    %448 = vmatpush1.msra.mxu0 0.0
    %449 = vmatprep.subr.mxu0 0.0
    %450 = vmatpush1.msra.mxu0 0.0
    %451 = vmatprep.subr.mxu0 0.0
    %452 = vmatpush1.msra.mxu0 0.0
    %453 = vmatprep.subr.mxu0 0.0
    %454 = vmatpush1.msra.mxu0 0.0
    %455 = vmatprep.subr.mxu0 0.0
    %456 = vmatpush1.msra.mxu0 0.0
    %457 = vmatprep.subr.mxu0 0.0
    %458 = vmatpush1.msra.mxu0 0.0
    %459 = vmatprep.subr.mxu0 0.0
    %460 = vmatpush1.msra.mxu0 0.0
    %461 = vmatprep.subr.mxu0 0.0
    %462 = vmatpush1.msra.mxu0 0.0
    %463 = vmatprep.subr.mxu0 0.0
    %464 = vmatpush1.msra.mxu0 0.0
    %465 = vmatprep.subr.mxu0 0.0
    %466 = vmatpush1.msra.mxu0 0.0
    %467 = vmatprep.subr.mxu0 0.0
    %468 = vmatpush1.msra.mxu0 0.0
    %469 = vmatprep.subr.mxu0 0.0
    %470 = vmatpush1.msra.mxu0 0.0
    %471 = vmatprep.subr.mxu0 0.0
    %472 = vmatpush1.msra.mxu0 0.0
    %473 = vmatprep.subr.mxu0 0.0
    %474 = vmatpush1.msra.mxu0 0.0
    %475 = vmatprep.subr.mxu0 0.0
    %476 = vmatpush1.msra.mxu0 0.0
    %477 = vmatprep.subr.mxu0 0.0
    %478 = vmatpush1.msra.mxu0 0.0
    %479 = vmatprep.subr.mxu0 0.0
    %480 = vmatpush1.msra.mxu0 0.0
    %481 = vmatprep.subr.mxu0 0.0
    %482 = vmatpush1.msra.mxu0 0.0
    %483 = vmatprep.mubr.f32.mxu0 0.0
    %484 = vmatmul.mubr.f32.gmra.mrb[0].mxu0 %v207
    %v485 = vpop.f32.mrb[0].mxu0
    %v486 = vadd.f32 %v201, %v485
    %v487 = vpop.f32.mrb[0].mxu0
    %488 = vdwg.mxu0
    %v493 = vlaneseq
    %v494 = vshrl.u32 %v493, 7
    %v495 = vsub.s32 0, %v494
    %v496 = vrot.slane %v150, %v495
    %v497 = vlaneseq
    %v498 = vshrl.u32 %v497, 7
    %v499 = vsub.s32 0, %v498
    %v500 = vrot.slane %v151, %v499
    %v501 = vlaneseq
    %v502 = vshrl.u32 %v501, 7
    %v503 = vsub.s32 0, %v502
    %v504 = vrot.slane %v152, %v503
    %v505 = vlaneseq
    %v506 = vshrl.u32 %v505, 7
    %v507 = vsub.s32 0, %v506
    %v508 = vrot.slane %v153, %v507
    %513 = vmatprep.subr.mxu0 0.0
    %514 = vmatpush1.msra.mxu0 %v112
    %515 = vmatprep.subr.mxu0 0.0
    %516 = vmatpush1.msra.mxu0 %v113
    %517 = vmatprep.subr.mxu0 0.0
    %518 = vmatpush1.msra.mxu0 %v114
    %519 = vmatprep.subr.mxu0 0.0
    %520 = vmatpush1.msra.mxu0 %v115
    %521 = vmatprep.subr.mxu0 0.0
    %522 = vmatpush1.msra.mxu0 0.0
    %523 = vmatprep.subr.mxu0 0.0
    %524 = vmatpush1.msra.mxu0 0.0
    %525 = vmatprep.subr.mxu0 0.0
    %526 = vmatpush1.msra.mxu0 0.0
    %527 = vmatprep.subr.mxu0 0.0
    %528 = vmatpush1.msra.mxu0 0.0
    %529 = vmatprep.subr.mxu0 0.0
    %530 = vmatpush1.msra.mxu0 0.0
    %531 = vmatprep.subr.mxu0 0.0
    %532 = vmatpush1.msra.mxu0 0.0
    %533 = vmatprep.subr.mxu0 0.0
    %534 = vmatpush1.msra.mxu0 0.0
    %535 = vmatprep.subr.mxu0 0.0
    %536 = vmatpush1.msra.mxu0 0.0
    %537 = vmatprep.subr.mxu0 0.0
    %538 = vmatpush1.msra.mxu0 0.0
    %539 = vmatprep.subr.mxu0 0.0
    %540 = vmatpush1.msra.mxu0 0.0
    %541 = vmatprep.subr.mxu0 0.0
    %542 = vmatpush1.msra.mxu0 0.0
    %543 = vmatprep.subr.mxu0 0.0
    %544 = vmatpush1.msra.mxu0 0.0
    %545 = vmatprep.subr.mxu0 0.0
    %546 = vmatpush1.msra.mxu0 0.0
    %547 = vmatprep.subr.mxu0 0.0
    %548 = vmatpush1.msra.mxu0 0.0
    %549 = vmatprep.subr.mxu0 0.0
    %550 = vmatpush1.msra.mxu0 0.0
    %551 = vmatprep.subr.mxu0 0.0
    %552 = vmatpush1.msra.mxu0 0.0
    %553 = vmatprep.subr.mxu0 0.0
    %554 = vmatpush1.msra.mxu0 0.0
    %555 = vmatprep.subr.mxu0 0.0
    %556 = vmatpush1.msra.mxu0 0.0
    %557 = vmatprep.subr.mxu0 0.0
    %558 = vmatpush1.msra.mxu0 0.0
    %559 = vmatprep.subr.mxu0 0.0
    %560 = vmatpush1.msra.mxu0 0.0
    %561 = vmatprep.subr.mxu0 0.0
    %562 = vmatpush1.msra.mxu0 0.0
    %563 = vmatprep.subr.mxu0 0.0
    %564 = vmatpush1.msra.mxu0 0.0
    %565 = vmatprep.subr.mxu0 0.0
    %566 = vmatpush1.msra.mxu0 0.0
    %567 = vmatprep.subr.mxu0 0.0
    %568 = vmatpush1.msra.mxu0 0.0
    %569 = vmatprep.subr.mxu0 0.0
    %570 = vmatpush1.msra.mxu0 0.0
    %571 = vmatprep.subr.mxu0 0.0
    %572 = vmatpush1.msra.mxu0 0.0
    %573 = vmatprep.subr.mxu0 0.0
    %574 = vmatpush1.msra.mxu0 0.0
    %575 = vmatprep.subr.mxu0 0.0
    %576 = vmatpush1.msra.mxu0 0.0
    %577 = vmatprep.mubr.f32.mxu0 0.0
    %578 = vmatmul.mubr.f32.gmra.mrb[0].mxu0 %v207
    %v579 = vpop.f32.mrb[0].mxu0
    %v580 = vadd.f32 %v496, %v579
    %v581 = vpop.f32.mrb[0].mxu0
    %582 = vdwg.mxu0
    %583 = vmatprep.subr.mxu0 0.0
    %584 = vmatpush1.msra.mxu0 %v116
    %585 = vmatprep.subr.mxu0 0.0
    %586 = vmatpush1.msra.mxu0 %v117
    %587 = vmatprep.subr.mxu0 0.0
    %588 = vmatpush1.msra.mxu0 %v118
    %589 = vmatprep.subr.mxu0 0.0
    %590 = vmatpush1.msra.mxu0 %v119
    %591 = vmatprep.subr.mxu0 0.0
    %592 = vmatpush1.msra.mxu0 0.0
    %593 = vmatprep.subr.mxu0 0.0
    %594 = vmatpush1.msra.mxu0 0.0
    %595 = vmatprep.subr.mxu0 0.0
    %596 = vmatpush1.msra.mxu0 0.0
    %597 = vmatprep.subr.mxu0 0.0
    %598 = vmatpush1.msra.mxu0 0.0
    %599 = vmatprep.subr.mxu0 0.0
    %600 = vmatpush1.msra.mxu0 0.0
    %601 = vmatprep.subr.mxu0 0.0
    %602 = vmatpush1.msra.mxu0 0.0
    %603 = vmatprep.subr.mxu0 0.0
    %604 = vmatpush1.msra.mxu0 0.0
    %605 = vmatprep.subr.mxu0 0.0
    %606 = vmatpush1.msra.mxu0 0.0
    %607 = vmatprep.subr.mxu0 0.0
    %608 = vmatpush1.msra.mxu0 0.0
    %609 = vmatprep.subr.mxu0 0.0
    %610 = vmatpush1.msra.mxu0 0.0
    %611 = vmatprep.subr.mxu0 0.0
    %612 = vmatpush1.msra.mxu0 0.0
    %613 = vmatprep.subr.mxu0 0.0
    %614 = vmatpush1.msra.mxu0 0.0
    %615 = vmatprep.subr.mxu0 0.0
    %616 = vmatpush1.msra.mxu0 0.0
    %617 = vmatprep.subr.mxu0 0.0
    %618 = vmatpush1.msra.mxu0 0.0
    %619 = vmatprep.subr.mxu0 0.0
    %620 = vmatpush1.msra.mxu0 0.0
    %621 = vmatprep.subr.mxu0 0.0
    %622 = vmatpush1.msra.mxu0 0.0
    %623 = vmatprep.subr.mxu0 0.0
    %624 = vmatpush1.msra.mxu0 0.0
    %625 = vmatprep.subr.mxu0 0.0
    %626 = vmatpush1.msra.mxu0 0.0
    %627 = vmatprep.subr.mxu0 0.0
    %628 = vmatpush1.msra.mxu0 0.0
    %629 = vmatprep.subr.mxu0 0.0
    %630 = vmatpush1.msra.mxu0 0.0
    %631 = vmatprep.subr.mxu0 0.0
    %632 = vmatpush1.msra.mxu0 0.0
    %633 = vmatprep.subr.mxu0 0.0
    %634 = vmatpush1.msra.mxu0 0.0
    %635 = vmatprep.subr.mxu0 0.0
    %636 = vmatpush1.msra.mxu0 0.0
    %637 = vmatprep.subr.mxu0 0.0
    %638 = vmatpush1.msra.mxu0 0.0
    %639 = vmatprep.subr.mxu0 0.0
    %640 = vmatpush1.msra.mxu0 0.0
    %641 = vmatprep.subr.mxu0 0.0
    %642 = vmatpush1.msra.mxu0 0.0
    %643 = vmatprep.subr.mxu0 0.0
    %644 = vmatpush1.msra.mxu0 0.0
    %645 = vmatprep.subr.mxu0 0.0
    %646 = vmatpush1.msra.mxu0 0.0
    %647 = vmatprep.mubr.f32.mxu0 0.0
    %648 = vmatmul.mubr.f32.gmra.mrb[0].mxu0 %v207
    %v649 = vpop.f32.mrb[0].mxu0
    %v650 = vadd.f32 %v500, %v649
    %v651 = vpop.f32.mrb[0].mxu0
    %652 = vdwg.mxu0
    %653 = vmatprep.subr.mxu0 0.0
    %654 = vmatpush1.msra.mxu0 %v120
    %655 = vmatprep.subr.mxu0 0.0
    %656 = vmatpush1.msra.mxu0 %v121
    %657 = vmatprep.subr.mxu0 0.0
    %658 = vmatpush1.msra.mxu0 %v122
    %659 = vmatprep.subr.mxu0 0.0
    %660 = vmatpush1.msra.mxu0 %v123
    %661 = vmatprep.subr.mxu0 0.0
    %662 = vmatpush1.msra.mxu0 0.0
    %663 = vmatprep.subr.mxu0 0.0
    %664 = vmatpush1.msra.mxu0 0.0
    %665 = vmatprep.subr.mxu0 0.0
    %666 = vmatpush1.msra.mxu0 0.0
    %667 = vmatprep.subr.mxu0 0.0
    %668 = vmatpush1.msra.mxu0 0.0
    %669 = vmatprep.subr.mxu0 0.0
    %670 = vmatpush1.msra.mxu0 0.0
    %671 = vmatprep.subr.mxu0 0.0
    %672 = vmatpush1.msra.mxu0 0.0
    %673 = vmatprep.subr.mxu0 0.0
    %674 = vmatpush1.msra.mxu0 0.0
    %675 = vmatprep.subr.mxu0 0.0
    %676 = vmatpush1.msra.mxu0 0.0
    %677 = vmatprep.subr.mxu0 0.0
    %678 = vmatpush1.msra.mxu0 0.0
    %679 = vmatprep.subr.mxu0 0.0
    %680 = vmatpush1.msra.mxu0 0.0
    %681 = vmatprep.subr.mxu0 0.0
    %682 = vmatpush1.msra.mxu0 0.0
    %683 = vmatprep.subr.mxu0 0.0
    %684 = vmatpush1.msra.mxu0 0.0
    %685 = vmatprep.subr.mxu0 0.0
    %686 = vmatpush1.msra.mxu0 0.0
    %687 = vmatprep.subr.mxu0 0.0
    %688 = vmatpush1.msra.mxu0 0.0
    %689 = vmatprep.subr.mxu0 0.0
    %690 = vmatpush1.msra.mxu0 0.0
    %691 = vmatprep.subr.mxu0 0.0
    %692 = vmatpush1.msra.mxu0 0.0
    %693 = vmatprep.subr.mxu0 0.0
    %694 = vmatpush1.msra.mxu0 0.0
    %695 = vmatprep.subr.mxu0 0.0
    %696 = vmatpush1.msra.mxu0 0.0
    %697 = vmatprep.subr.mxu0 0.0
    %698 = vmatpush1.msra.mxu0 0.0
    %699 = vmatprep.subr.mxu0 0.0
    %700 = vmatpush1.msra.mxu0 0.0
    %701 = vmatprep.subr.mxu0 0.0
    %702 = vmatpush1.msra.mxu0 0.0
    %703 = vmatprep.subr.mxu0 0.0
    %704 = vmatpush1.msra.mxu0 0.0
    %705 = vmatprep.subr.mxu0 0.0
    %706 = vmatpush1.msra.mxu0 0.0
    %707 = vmatprep.subr.mxu0 0.0
    %708 = vmatpush1.msra.mxu0 0.0
    %709 = vmatprep.subr.mxu0 0.0
    %710 = vmatpush1.msra.mxu0 0.0
    %711 = vmatprep.subr.mxu0 0.0
    %712 = vmatpush1.msra.mxu0 0.0
    %713 = vmatprep.subr.mxu0 0.0
    %714 = vmatpush1.msra.mxu0 0.0
    %715 = vmatprep.subr.mxu0 0.0
    %716 = vmatpush1.msra.mxu0 0.0
    %717 = vmatprep.mubr.f32.mxu0 0.0
    %718 = vmatmul.mubr.f32.gmra.mrb[0].mxu0 %v207
    %v719 = vpop.f32.mrb[0].mxu0
    %v720 = vadd.f32 %v504, %v719
    %v721 = vpop.f32.mrb[0].mxu0
    %722 = vdwg.mxu0
    %723 = vmatprep.subr.mxu0 0.0
    %724 = vmatpush1.msra.mxu0 %v124
    %725 = vmatprep.subr.mxu0 0.0
    %726 = vmatpush1.msra.mxu0 %v125
    %727 = vmatprep.subr.mxu0 0.0
    %728 = vmatpush1.msra.mxu0 %v126
    %729 = vmatprep.subr.mxu0 0.0
    %730 = vmatpush1.msra.mxu0 %v127
    %731 = vmatprep.subr.mxu0 0.0
    %732 = vmatpush1.msra.mxu0 0.0
    %733 = vmatprep.subr.mxu0 0.0
    %734 = vmatpush1.msra.mxu0 0.0
    %735 = vmatprep.subr.mxu0 0.0
    %736 = vmatpush1.msra.mxu0 0.0
    %737 = vmatprep.subr.mxu0 0.0
    %738 = vmatpush1.msra.mxu0 0.0
    %739 = vmatprep.subr.mxu0 0.0
    %740 = vmatpush1.msra.mxu0 0.0
    %741 = vmatprep.subr.mxu0 0.0
    %742 = vmatpush1.msra.mxu0 0.0
    %743 = vmatprep.subr.mxu0 0.0
    %744 = vmatpush1.msra.mxu0 0.0
    %745 = vmatprep.subr.mxu0 0.0
    %746 = vmatpush1.msra.mxu0 0.0
    %747 = vmatprep.subr.mxu0 0.0
    %748 = vmatpush1.msra.mxu0 0.0
    %749 = vmatprep.subr.mxu0 0.0
    %750 = vmatpush1.msra.mxu0 0.0
    %751 = vmatprep.subr.mxu0 0.0
    %752 = vmatpush1.msra.mxu0 0.0
    %753 = vmatprep.subr.mxu0 0.0
    %754 = vmatpush1.msra.mxu0 0.0
    %755 = vmatprep.subr.mxu0 0.0
    %756 = vmatpush1.msra.mxu0 0.0
    %757 = vmatprep.subr.mxu0 0.0
    %758 = vmatpush1.msra.mxu0 0.0
    %759 = vmatprep.subr.mxu0 0.0
    %760 = vmatpush1.msra.mxu0 0.0
    %761 = vmatprep.subr.mxu0 0.0
    %762 = vmatpush1.msra.mxu0 0.0
    %763 = vmatprep.subr.mxu0 0.0
    %764 = vmatpush1.msra.mxu0 0.0
    %765 = vmatprep.subr.mxu0 0.0
    %766 = vmatpush1.msra.mxu0 0.0
    %767 = vmatprep.subr.mxu0 0.0
    %768 = vmatpush1.msra.mxu0 0.0
    %769 = vmatprep.subr.mxu0 0.0
    %770 = vmatpush1.msra.mxu0 0.0
    %771 = vmatprep.subr.mxu0 0.0
    %772 = vmatpush1.msra.mxu0 0.0
    %773 = vmatprep.subr.mxu0 0.0
    %774 = vmatpush1.msra.mxu0 0.0
    %775 = vmatprep.subr.mxu0 0.0
    %776 = vmatpush1.msra.mxu0 0.0
    %777 = vmatprep.subr.mxu0 0.0
    %778 = vmatpush1.msra.mxu0 0.0
    %779 = vmatprep.subr.mxu0 0.0
    %780 = vmatpush1.msra.mxu0 0.0
    %781 = vmatprep.subr.mxu0 0.0
    %782 = vmatpush1.msra.mxu0 0.0
    %783 = vmatprep.subr.mxu0 0.0
    %784 = vmatpush1.msra.mxu0 0.0
    %785 = vmatprep.subr.mxu0 0.0
    %786 = vmatpush1.msra.mxu0 0.0
    %787 = vmatprep.mubr.f32.mxu0 0.0
    %788 = vmatmul.mubr.f32.gmra.mrb[0].mxu0 %v207
    %v789 = vpop.f32.mrb[0].mxu0
    %v790 = vadd.f32 %v508, %v789
    %v791 = vpop.f32.mrb[0].mxu0
    %792 = vdwg.mxu0
    %v797 = vlaneseq
    %v798 = vshrl.u32 %v797, 7
    %v799 = vsub.s32 0, %v798
    %v800 = vrot.slane %v155, %v799
    %v801 = vlaneseq
    %v802 = vshrl.u32 %v801, 7
    %v803 = vsub.s32 0, %v802
    %v804 = vrot.slane %v156, %v803
    %v805 = vlaneseq
    %v806 = vshrl.u32 %v805, 7
    %v807 = vsub.s32 0, %v806
    %v808 = vrot.slane %v157, %v807
    %v809 = vlaneseq
    %v810 = vshrl.u32 %v809, 7
    %v811 = vsub.s32 0, %v810
    %v812 = vrot.slane %v158, %v811
    %817 = vmatprep.subr.mxu0 0.0
    %818 = vmatpush1.msra.mxu0 %v129
    %819 = vmatprep.subr.mxu0 0.0
    %820 = vmatpush1.msra.mxu0 %v130
    %821 = vmatprep.subr.mxu0 0.0
    %822 = vmatpush1.msra.mxu0 %v131
    %823 = vmatprep.subr.mxu0 0.0
    %824 = vmatpush1.msra.mxu0 %v132
    %825 = vmatprep.subr.mxu0 0.0
    %826 = vmatpush1.msra.mxu0 0.0
    %827 = vmatprep.subr.mxu0 0.0
    %828 = vmatpush1.msra.mxu0 0.0
    %829 = vmatprep.subr.mxu0 0.0
    %830 = vmatpush1.msra.mxu0 0.0
    %831 = vmatprep.subr.mxu0 0.0
    %832 = vmatpush1.msra.mxu0 0.0
    %833 = vmatprep.subr.mxu0 0.0
    %834 = vmatpush1.msra.mxu0 0.0
    %835 = vmatprep.subr.mxu0 0.0
    %836 = vmatpush1.msra.mxu0 0.0
    %837 = vmatprep.subr.mxu0 0.0
    %838 = vmatpush1.msra.mxu0 0.0
    %839 = vmatprep.subr.mxu0 0.0
    %840 = vmatpush1.msra.mxu0 0.0
    %841 = vmatprep.subr.mxu0 0.0
    %842 = vmatpush1.msra.mxu0 0.0
    %843 = vmatprep.subr.mxu0 0.0
    %844 = vmatpush1.msra.mxu0 0.0
    %845 = vmatprep.subr.mxu0 0.0
    %846 = vmatpush1.msra.mxu0 0.0
    %847 = vmatprep.subr.mxu0 0.0
    %848 = vmatpush1.msra.mxu0 0.0
    %849 = vmatprep.subr.mxu0 0.0
    %850 = vmatpush1.msra.mxu0 0.0
    %851 = vmatprep.subr.mxu0 0.0
    %852 = vmatpush1.msra.mxu0 0.0
    %853 = vmatprep.subr.mxu0 0.0
    %854 = vmatpush1.msra.mxu0 0.0
    %855 = vmatprep.subr.mxu0 0.0
    %856 = vmatpush1.msra.mxu0 0.0
    %857 = vmatprep.subr.mxu0 0.0
    %858 = vmatpush1.msra.mxu0 0.0
    %859 = vmatprep.subr.mxu0 0.0
    %860 = vmatpush1.msra.mxu0 0.0
    %861 = vmatprep.subr.mxu0 0.0
    %862 = vmatpush1.msra.mxu0 0.0
    %863 = vmatprep.subr.mxu0 0.0
    %864 = vmatpush1.msra.mxu0 0.0
    %865 = vmatprep.subr.mxu0 0.0
    %866 = vmatpush1.msra.mxu0 0.0
    %867 = vmatprep.subr.mxu0 0.0
    %868 = vmatpush1.msra.mxu0 0.0
    %869 = vmatprep.subr.mxu0 0.0
    %870 = vmatpush1.msra.mxu0 0.0
    %871 = vmatprep.subr.mxu0 0.0
    %872 = vmatpush1.msra.mxu0 0.0
    %873 = vmatprep.subr.mxu0 0.0
    %874 = vmatpush1.msra.mxu0 0.0
    %875 = vmatprep.subr.mxu0 0.0
    %876 = vmatpush1.msra.mxu0 0.0
    %877 = vmatprep.subr.mxu0 0.0
    %878 = vmatpush1.msra.mxu0 0.0
    %879 = vmatprep.subr.mxu0 0.0
    %880 = vmatpush1.msra.mxu0 0.0
    %881 = vmatprep.mubr.f32.mxu0 0.0
    %882 = vmatmul.mubr.f32.gmra.mrb[0].mxu0 %v207
    %v883 = vpop.f32.mrb[0].mxu0
    %v884 = vadd.f32 %v800, %v883
    %v885 = vpop.f32.mrb[0].mxu0
    %886 = vdwg.mxu0
    %887 = vmatprep.subr.mxu0 0.0
    %888 = vmatpush1.msra.mxu0 %v133
    %889 = vmatprep.subr.mxu0 0.0
    %890 = vmatpush1.msra.mxu0 %v134
    %891 = vmatprep.subr.mxu0 0.0
    %892 = vmatpush1.msra.mxu0 %v135
    %893 = vmatprep.subr.mxu0 0.0
    %894 = vmatpush1.msra.mxu0 %v136
    %895 = vmatprep.subr.mxu0 0.0
    %896 = vmatpush1.msra.mxu0 0.0
    %897 = vmatprep.subr.mxu0 0.0
    %898 = vmatpush1.msra.mxu0 0.0
    %899 = vmatprep.subr.mxu0 0.0
    %900 = vmatpush1.msra.mxu0 0.0
    %901 = vmatprep.subr.mxu0 0.0
    %902 = vmatpush1.msra.mxu0 0.0
    %903 = vmatprep.subr.mxu0 0.0
    %904 = vmatpush1.msra.mxu0 0.0
    %905 = vmatprep.subr.mxu0 0.0
    %906 = vmatpush1.msra.mxu0 0.0
    %907 = vmatprep.subr.mxu0 0.0
    %908 = vmatpush1.msra.mxu0 0.0
    %909 = vmatprep.subr.mxu0 0.0
    %910 = vmatpush1.msra.mxu0 0.0
    %911 = vmatprep.subr.mxu0 0.0
    %912 = vmatpush1.msra.mxu0 0.0
    %913 = vmatprep.subr.mxu0 0.0
    %914 = vmatpush1.msra.mxu0 0.0
    %915 = vmatprep.subr.mxu0 0.0
    %916 = vmatpush1.msra.mxu0 0.0
    %917 = vmatprep.subr.mxu0 0.0
    %918 = vmatpush1.msra.mxu0 0.0
    %919 = vmatprep.subr.mxu0 0.0
    %920 = vmatpush1.msra.mxu0 0.0
    %921 = vmatprep.subr.mxu0 0.0
    %922 = vmatpush1.msra.mxu0 0.0
    %923 = vmatprep.subr.mxu0 0.0
    %924 = vmatpush1.msra.mxu0 0.0
    %925 = vmatprep.subr.mxu0 0.0
    %926 = vmatpush1.msra.mxu0 0.0
    %927 = vmatprep.subr.mxu0 0.0
    %928 = vmatpush1.msra.mxu0 0.0
    %929 = vmatprep.subr.mxu0 0.0
    %930 = vmatpush1.msra.mxu0 0.0
    %931 = vmatprep.subr.mxu0 0.0
    %932 = vmatpush1.msra.mxu0 0.0
    %933 = vmatprep.subr.mxu0 0.0
    %934 = vmatpush1.msra.mxu0 0.0
    %935 = vmatprep.subr.mxu0 0.0
    %936 = vmatpush1.msra.mxu0 0.0
    %937 = vmatprep.subr.mxu0 0.0
    %938 = vmatpush1.msra.mxu0 0.0
    %939 = vmatprep.subr.mxu0 0.0
    %940 = vmatpush1.msra.mxu0 0.0
    %941 = vmatprep.subr.mxu0 0.0
    %942 = vmatpush1.msra.mxu0 0.0
    %943 = vmatprep.subr.mxu0 0.0
    %944 = vmatpush1.msra.mxu0 0.0
    %945 = vmatprep.subr.mxu0 0.0
    %946 = vmatpush1.msra.mxu0 0.0
    %947 = vmatprep.subr.mxu0 0.0
    %948 = vmatpush1.msra.mxu0 0.0
    %949 = vmatprep.subr.mxu0 0.0
    %950 = vmatpush1.msra.mxu0 0.0
    %951 = vmatprep.mubr.f32.mxu0 0.0
    %952 = vmatmul.mubr.f32.gmra.mrb[0].mxu0 %v207
    %v953 = vpop.f32.mrb[0].mxu0
    %v954 = vadd.f32 %v804, %v953
    %v955 = vpop.f32.mrb[0].mxu0
    %956 = vdwg.mxu0
    %957 = vmatprep.subr.mxu0 0.0
    %958 = vmatpush1.msra.mxu0 %v137
    %959 = vmatprep.subr.mxu0 0.0
    %960 = vmatpush1.msra.mxu0 %v138
    %961 = vmatprep.subr.mxu0 0.0
    %962 = vmatpush1.msra.mxu0 %v139
    %963 = vmatprep.subr.mxu0 0.0
    %964 = vmatpush1.msra.mxu0 %v140
    %965 = vmatprep.subr.mxu0 0.0
    %966 = vmatpush1.msra.mxu0 0.0
    %967 = vmatprep.subr.mxu0 0.0
    %968 = vmatpush1.msra.mxu0 0.0
    %969 = vmatprep.subr.mxu0 0.0
    %970 = vmatpush1.msra.mxu0 0.0
    %971 = vmatprep.subr.mxu0 0.0
    %972 = vmatpush1.msra.mxu0 0.0
    %973 = vmatprep.subr.mxu0 0.0
    %974 = vmatpush1.msra.mxu0 0.0
    %975 = vmatprep.subr.mxu0 0.0
    %976 = vmatpush1.msra.mxu0 0.0
    %977 = vmatprep.subr.mxu0 0.0
    %978 = vmatpush1.msra.mxu0 0.0
    %979 = vmatprep.subr.mxu0 0.0
    %980 = vmatpush1.msra.mxu0 0.0
    %981 = vmatprep.subr.mxu0 0.0
    %982 = vmatpush1.msra.mxu0 0.0
    %983 = vmatprep.subr.mxu0 0.0
    %984 = vmatpush1.msra.mxu0 0.0
    %985 = vmatprep.subr.mxu0 0.0
    %986 = vmatpush1.msra.mxu0 0.0
    %987 = vmatprep.subr.mxu0 0.0
    %988 = vmatpush1.msra.mxu0 0.0
    %989 = vmatprep.subr.mxu0 0.0
    %990 = vmatpush1.msra.mxu0 0.0
    %991 = vmatprep.subr.mxu0 0.0
    %992 = vmatpush1.msra.mxu0 0.0
    %993 = vmatprep.subr.mxu0 0.0
    %994 = vmatpush1.msra.mxu0 0.0
    %995 = vmatprep.subr.mxu0 0.0
    %996 = vmatpush1.msra.mxu0 0.0
    %997 = vmatprep.subr.mxu0 0.0
    %998 = vmatpush1.msra.mxu0 0.0
    %999 = vmatprep.subr.mxu0 0.0
    %1000 = vmatpush1.msra.mxu0 0.0
    %1001 = vmatprep.subr.mxu0 0.0
    %1002 = vmatpush1.msra.mxu0 0.0
    %1003 = vmatprep.subr.mxu0 0.0
    %1004 = vmatpush1.msra.mxu0 0.0
    %1005 = vmatprep.subr.mxu0 0.0
    %1006 = vmatpush1.msra.mxu0 0.0
    %1007 = vmatprep.subr.mxu0 0.0
    %1008 = vmatpush1.msra.mxu0 0.0
    %1009 = vmatprep.subr.mxu0 0.0
    %1010 = vmatpush1.msra.mxu0 0.0
    %1011 = vmatprep.subr.mxu0 0.0
    %1012 = vmatpush1.msra.mxu0 0.0
    %1013 = vmatprep.subr.mxu0 0.0
    %1014 = vmatpush1.msra.mxu0 0.0
    %1015 = vmatprep.subr.mxu0 0.0
    %1016 = vmatpush1.msra.mxu0 0.0
    %1017 = vmatprep.subr.mxu0 0.0
    %1018 = vmatpush1.msra.mxu0 0.0
    %1019 = vmatprep.subr.mxu0 0.0
    %1020 = vmatpush1.msra.mxu0 0.0
    %1021 = vmatprep.mubr.f32.mxu0 0.0
    %1022 = vmatmul.mubr.f32.gmra.mrb[0].mxu0 %v207
    %v1023 = vpop.f32.mrb[0].mxu0
    %v1024 = vadd.f32 %v808, %v1023
    %v1025 = vpop.f32.mrb[0].mxu0
    %1026 = vdwg.mxu0
    %1027 = vmatprep.subr.mxu0 0.0
    %1028 = vmatpush1.msra.mxu0 %v141
    %1029 = vmatprep.subr.mxu0 0.0
    %1030 = vmatpush1.msra.mxu0 %v142
    %1031 = vmatprep.subr.mxu0 0.0
    %1032 = vmatpush1.msra.mxu0 %v143
    %1033 = vmatprep.subr.mxu0 0.0
    %1034 = vmatpush1.msra.mxu0 %v144
    %1035 = vmatprep.subr.mxu0 0.0
    %1036 = vmatpush1.msra.mxu0 0.0
    %1037 = vmatprep.subr.mxu0 0.0
    %1038 = vmatpush1.msra.mxu0 0.0
    %1039 = vmatprep.subr.mxu0 0.0
    %1040 = vmatpush1.msra.mxu0 0.0
    %1041 = vmatprep.subr.mxu0 0.0
    %1042 = vmatpush1.msra.mxu0 0.0
    %1043 = vmatprep.subr.mxu0 0.0
    %1044 = vmatpush1.msra.mxu0 0.0
    %1045 = vmatprep.subr.mxu0 0.0
    %1046 = vmatpush1.msra.mxu0 0.0
    %1047 = vmatprep.subr.mxu0 0.0
    %1048 = vmatpush1.msra.mxu0 0.0
    %1049 = vmatprep.subr.mxu0 0.0
    %1050 = vmatpush1.msra.mxu0 0.0
    %1051 = vmatprep.subr.mxu0 0.0
    %1052 = vmatpush1.msra.mxu0 0.0
    %1053 = vmatprep.subr.mxu0 0.0
    %1054 = vmatpush1.msra.mxu0 0.0
    %1055 = vmatprep.subr.mxu0 0.0
    %1056 = vmatpush1.msra.mxu0 0.0
    %1057 = vmatprep.subr.mxu0 0.0
    %1058 = vmatpush1.msra.mxu0 0.0
    %1059 = vmatprep.subr.mxu0 0.0
    %1060 = vmatpush1.msra.mxu0 0.0
    %1061 = vmatprep.subr.mxu0 0.0
    %1062 = vmatpush1.msra.mxu0 0.0
    %1063 = vmatprep.subr.mxu0 0.0
    %1064 = vmatpush1.msra.mxu0 0.0
    %1065 = vmatprep.subr.mxu0 0.0
    %1066 = vmatpush1.msra.mxu0 0.0
    %1067 = vmatprep.subr.mxu0 0.0
    %1068 = vmatpush1.msra.mxu0 0.0
    %1069 = vmatprep.subr.mxu0 0.0
    %1070 = vmatpush1.msra.mxu0 0.0
    %1071 = vmatprep.subr.mxu0 0.0
    %1072 = vmatpush1.msra.mxu0 0.0
    %1073 = vmatprep.subr.mxu0 0.0
    %1074 = vmatpush1.msra.mxu0 0.0
    %1075 = vmatprep.subr.mxu0 0.0
    %1076 = vmatpush1.msra.mxu0 0.0
    %1077 = vmatprep.subr.mxu0 0.0
    %1078 = vmatpush1.msra.mxu0 0.0
    %1079 = vmatprep.subr.mxu0 0.0
    %1080 = vmatpush1.msra.mxu0 0.0
    %1081 = vmatprep.subr.mxu0 0.0
    %1082 = vmatpush1.msra.mxu0 0.0
    %1083 = vmatprep.subr.mxu0 0.0
    %1084 = vmatpush1.msra.mxu0 0.0
    %1085 = vmatprep.subr.mxu0 0.0
    %1086 = vmatpush1.msra.mxu0 0.0
    %1087 = vmatprep.subr.mxu0 0.0
    %1088 = vmatpush1.msra.mxu0 0.0
    %1089 = vmatprep.subr.mxu0 0.0
    %1090 = vmatpush1.msra.mxu0 0.0
    %1091 = vmatprep.mubr.f32.mxu0 0.0
    %1092 = vmatmul.mubr.f32.gmra.mrb[0].mxu0 %v207
    %v1093 = vpop.f32.mrb[0].mxu0
    %v1094 = vadd.f32 %v812, %v1093
    %v1095 = vpop.f32.mrb[0].mxu0
    %1096 = vdwg.mxu0
    %vm1097 = vcmask 64512
    %v1099 = vsel %vm1097, %v276, 0
    %v1102 = vsel %vm1097, %v580, 0
    %1104 = vmatprep.subr.mxu0 0.0
    %1105 = vmatpush1.xpose.msra.mxu0 %v1102
    %1106 = vmatprep.subr.mxu0 0.0
    %1107 = vmatpush1.xpose.msra.mxu0 0.0
    %1108 = vmatprep.subr.mxu0 0.0
    %1109 = vmatpush1.xpose.msra.mxu0 0.0
    %1110 = vmatprep.subr.mxu0 0.0
    %1111 = vmatpush1.xpose.msra.mxu0 0.0
    %1112 = vmatprep.subr.mxu0 0.0
    %1113 = vmatpush1.xpose.msra.mxu0 0.0
    %1114 = vmatprep.subr.mxu0 0.0
    %1115 = vmatpush1.xpose.msra.mxu0 0.0
    %1116 = vmatprep.subr.mxu0 0.0
    %1117 = vmatpush1.xpose.msra.mxu0 0.0
    %1118 = vmatprep.subr.mxu0 0.0
    %1119 = vmatpush1.xpose.msra.mxu0 0.0
    %1120 = vmatprep.subr.mxu0 0.0
    %1121 = vmatpush1.xpose.msra.mxu0 0.0
    %1122 = vmatprep.subr.mxu0 0.0
    %1123 = vmatpush1.xpose.msra.mxu0 0.0
    %1124 = vmatprep.subr.mxu0 0.0
    %1125 = vmatpush1.xpose.msra.mxu0 0.0
    %1126 = vmatprep.subr.mxu0 0.0
    %1127 = vmatpush1.xpose.msra.mxu0 0.0
    %1128 = vmatprep.subr.mxu0 0.0
    %1129 = vmatpush1.xpose.msra.mxu0 0.0
    %1130 = vmatprep.subr.mxu0 0.0
    %1131 = vmatpush1.xpose.msra.mxu0 0.0
    %1132 = vmatprep.subr.mxu0 0.0
    %1133 = vmatpush1.xpose.msra.mxu0 0.0
    %1134 = vmatprep.subr.mxu0 0.0
    %1135 = vmatpush1.xpose.msra.mxu0 0.0
    %1136 = vmatprep.subr.mxu0 0.0
    %1137 = vmatpush1.xpose.msra.mxu0 0.0
    %1138 = vmatprep.subr.mxu0 0.0
    %1139 = vmatpush1.xpose.msra.mxu0 0.0
    %1140 = vmatprep.subr.mxu0 0.0
    %1141 = vmatpush1.xpose.msra.mxu0 0.0
    %1142 = vmatprep.subr.mxu0 0.0
    %1143 = vmatpush1.xpose.msra.mxu0 0.0
    %1144 = vmatprep.subr.mxu0 0.0
    %1145 = vmatpush1.xpose.msra.mxu0 0.0
    %1146 = vmatprep.subr.mxu0 0.0
    %1147 = vmatpush1.xpose.msra.mxu0 0.0
    %1148 = vmatprep.subr.mxu0 0.0
    %1149 = vmatpush1.xpose.msra.mxu0 0.0
    %1150 = vmatprep.subr.mxu0 0.0
    %1151 = vmatpush1.xpose.msra.mxu0 0.0
    %1152 = vmatprep.subr.mxu0 0.0
    %1153 = vmatpush1.xpose.msra.mxu0 0.0
    %1154 = vmatprep.subr.mxu0 0.0
    %1155 = vmatpush1.xpose.msra.mxu0 0.0
    %1156 = vmatprep.subr.mxu0 0.0
    %1157 = vmatpush1.xpose.msra.mxu0 0.0
    %1158 = vmatprep.subr.mxu0 0.0
    %1159 = vmatpush1.xpose.msra.mxu0 0.0
    %1160 = vmatprep.subr.mxu0 0.0
    %1161 = vmatpush1.xpose.msra.mxu0 0.0
    %1162 = vmatprep.subr.mxu0 0.0
    %1163 = vmatpush1.xpose.msra.mxu0 0.0
    %1164 = vmatprep.subr.mxu0 0.0
    %1165 = vmatpush1.xpose.msra.mxu0 0.0
    %1166 = vmatprep.subr.mxu0 0.0
    %1167 = vmatpush1.xpose.msra.mxu0 0.0
    %1168 = vmatprep.mubr.f32.mxu0 0.0
    %1169 = vmatmul.mubr.f32.gmra.mrb[0].mxu0 %v1099
    %v1170 = vpop.f32.mrb[0].mxu0
    %v1171 = vadd.f32 0.0, %v1170
    %v1172 = vpop.f32.mrb[0].mxu0
    %1173 = vdwg.mxu0
    %v1175 = vsel %vm1097, %v346, 0
    %v1178 = vsel %vm1097, %v650, 0
    %1180 = vmatprep.subr.mxu0 0.0
    %1181 = vmatpush1.xpose.msra.mxu0 %v1178
    %1182 = vmatprep.subr.mxu0 0.0
    %1183 = vmatpush1.xpose.msra.mxu0 0.0
    %1184 = vmatprep.subr.mxu0 0.0
    %1185 = vmatpush1.xpose.msra.mxu0 0.0
    %1186 = vmatprep.subr.mxu0 0.0
    %1187 = vmatpush1.xpose.msra.mxu0 0.0
    %1188 = vmatprep.subr.mxu0 0.0
    %1189 = vmatpush1.xpose.msra.mxu0 0.0
    %1190 = vmatprep.subr.mxu0 0.0
    %1191 = vmatpush1.xpose.msra.mxu0 0.0
    %1192 = vmatprep.subr.mxu0 0.0
    %1193 = vmatpush1.xpose.msra.mxu0 0.0
    %1194 = vmatprep.subr.mxu0 0.0
    %1195 = vmatpush1.xpose.msra.mxu0 0.0
    %1196 = vmatprep.subr.mxu0 0.0
    %1197 = vmatpush1.xpose.msra.mxu0 0.0
    %1198 = vmatprep.subr.mxu0 0.0
    %1199 = vmatpush1.xpose.msra.mxu0 0.0
    %1200 = vmatprep.subr.mxu0 0.0
    %1201 = vmatpush1.xpose.msra.mxu0 0.0
    %1202 = vmatprep.subr.mxu0 0.0
    %1203 = vmatpush1.xpose.msra.mxu0 0.0
    %1204 = vmatprep.subr.mxu0 0.0
    %1205 = vmatpush1.xpose.msra.mxu0 0.0
    %1206 = vmatprep.subr.mxu0 0.0
    %1207 = vmatpush1.xpose.msra.mxu0 0.0
    %1208 = vmatprep.subr.mxu0 0.0
    %1209 = vmatpush1.xpose.msra.mxu0 0.0
    %1210 = vmatprep.subr.mxu0 0.0
    %1211 = vmatpush1.xpose.msra.mxu0 0.0
    %1212 = vmatprep.subr.mxu0 0.0
    %1213 = vmatpush1.xpose.msra.mxu0 0.0
    %1214 = vmatprep.subr.mxu0 0.0
    %1215 = vmatpush1.xpose.msra.mxu0 0.0
    %1216 = vmatprep.subr.mxu0 0.0
    %1217 = vmatpush1.xpose.msra.mxu0 0.0
    %1218 = vmatprep.subr.mxu0 0.0
    %1219 = vmatpush1.xpose.msra.mxu0 0.0
    %1220 = vmatprep.subr.mxu0 0.0
    %1221 = vmatpush1.xpose.msra.mxu0 0.0
    %1222 = vmatprep.subr.mxu0 0.0
    %1223 = vmatpush1.xpose.msra.mxu0 0.0
    %1224 = vmatprep.subr.mxu0 0.0
    %1225 = vmatpush1.xpose.msra.mxu0 0.0
    %1226 = vmatprep.subr.mxu0 0.0
    %1227 = vmatpush1.xpose.msra.mxu0 0.0
    %1228 = vmatprep.subr.mxu0 0.0
    %1229 = vmatpush1.xpose.msra.mxu0 0.0
    %1230 = vmatprep.subr.mxu0 0.0
    %1231 = vmatpush1.xpose.msra.mxu0 0.0
    %1232 = vmatprep.subr.mxu0 0.0
    %1233 = vmatpush1.xpose.msra.mxu0 0.0
    %1234 = vmatprep.subr.mxu0 0.0
    %1235 = vmatpush1.xpose.msra.mxu0 0.0
    %1236 = vmatprep.subr.mxu0 0.0
    %1237 = vmatpush1.xpose.msra.mxu0 0.0
    %1238 = vmatprep.subr.mxu0 0.0
    %1239 = vmatpush1.xpose.msra.mxu0 0.0
    %1240 = vmatprep.subr.mxu0 0.0
    %1241 = vmatpush1.xpose.msra.mxu0 0.0
    %1242 = vmatprep.subr.mxu0 0.0
    %1243 = vmatpush1.xpose.msra.mxu0 0.0
    %1244 = vmatprep.mubr.f32.mxu0 0.0
    %1245 = vmatmul.mubr.f32.gmra.mrb[0].mxu0 %v1175
    %v1246 = vpop.f32.mrb[0].mxu0
    %v1247 = vadd.f32 0.0, %v1246
    %v1248 = vpop.f32.mrb[0].mxu0
    %1249 = vdwg.mxu0
    %v1251 = vsel %vm1097, %v416, 0
    %v1254 = vsel %vm1097, %v720, 0
    %1256 = vmatprep.subr.mxu0 0.0
    %1257 = vmatpush1.xpose.msra.mxu0 %v1254
    %1258 = vmatprep.subr.mxu0 0.0
    %1259 = vmatpush1.xpose.msra.mxu0 0.0
    %1260 = vmatprep.subr.mxu0 0.0
    %1261 = vmatpush1.xpose.msra.mxu0 0.0
    %1262 = vmatprep.subr.mxu0 0.0
    %1263 = vmatpush1.xpose.msra.mxu0 0.0
    %1264 = vmatprep.subr.mxu0 0.0
    %1265 = vmatpush1.xpose.msra.mxu0 0.0
    %1266 = vmatprep.subr.mxu0 0.0
    %1267 = vmatpush1.xpose.msra.mxu0 0.0
    %1268 = vmatprep.subr.mxu0 0.0
    %1269 = vmatpush1.xpose.msra.mxu0 0.0
    %1270 = vmatprep.subr.mxu0 0.0
    %1271 = vmatpush1.xpose.msra.mxu0 0.0
    %1272 = vmatprep.subr.mxu0 0.0
    %1273 = vmatpush1.xpose.msra.mxu0 0.0
    %1274 = vmatprep.subr.mxu0 0.0
    %1275 = vmatpush1.xpose.msra.mxu0 0.0
    %1276 = vmatprep.subr.mxu0 0.0
    %1277 = vmatpush1.xpose.msra.mxu0 0.0
    %1278 = vmatprep.subr.mxu0 0.0
    %1279 = vmatpush1.xpose.msra.mxu0 0.0
    %1280 = vmatprep.subr.mxu0 0.0
    %1281 = vmatpush1.xpose.msra.mxu0 0.0
    %1282 = vmatprep.subr.mxu0 0.0
    %1283 = vmatpush1.xpose.msra.mxu0 0.0
    %1284 = vmatprep.subr.mxu0 0.0
    %1285 = vmatpush1.xpose.msra.mxu0 0.0
    %1286 = vmatprep.subr.mxu0 0.0
    %1287 = vmatpush1.xpose.msra.mxu0 0.0
    %1288 = vmatprep.subr.mxu0 0.0
    %1289 = vmatpush1.xpose.msra.mxu0 0.0
    %1290 = vmatprep.subr.mxu0 0.0
    %1291 = vmatpush1.xpose.msra.mxu0 0.0
    %1292 = vmatprep.subr.mxu0 0.0
    %1293 = vmatpush1.xpose.msra.mxu0 0.0
    %1294 = vmatprep.subr.mxu0 0.0
    %1295 = vmatpush1.xpose.msra.mxu0 0.0
    %1296 = vmatprep.subr.mxu0 0.0
    %1297 = vmatpush1.xpose.msra.mxu0 0.0
    %1298 = vmatprep.subr.mxu0 0.0
    %1299 = vmatpush1.xpose.msra.mxu0 0.0
    %1300 = vmatprep.subr.mxu0 0.0
    %1301 = vmatpush1.xpose.msra.mxu0 0.0
    %1302 = vmatprep.subr.mxu0 0.0
    %1303 = vmatpush1.xpose.msra.mxu0 0.0
    %1304 = vmatprep.subr.mxu0 0.0
    %1305 = vmatpush1.xpose.msra.mxu0 0.0
    %1306 = vmatprep.subr.mxu0 0.0
    %1307 = vmatpush1.xpose.msra.mxu0 0.0
    %1308 = vmatprep.subr.mxu0 0.0
    %1309 = vmatpush1.xpose.msra.mxu0 0.0
    %1310 = vmatprep.subr.mxu0 0.0
    %1311 = vmatpush1.xpose.msra.mxu0 0.0
    %1312 = vmatprep.subr.mxu0 0.0
    %1313 = vmatpush1.xpose.msra.mxu0 0.0
    %1314 = vmatprep.subr.mxu0 0.0
    %1315 = vmatpush1.xpose.msra.mxu0 0.0
    %1316 = vmatprep.subr.mxu0 0.0
    %1317 = vmatpush1.xpose.msra.mxu0 0.0
    %1318 = vmatprep.subr.mxu0 0.0
    %1319 = vmatpush1.xpose.msra.mxu0 0.0
    %1320 = vmatprep.mubr.f32.mxu0 0.0
    %1321 = vmatmul.mubr.f32.gmra.mrb[0].mxu0 %v1251
    %v1322 = vpop.f32.mrb[0].mxu0
    %v1323 = vadd.f32 0.0, %v1322
    %v1324 = vpop.f32.mrb[0].mxu0
    %1325 = vdwg.mxu0
    %v1327 = vsel %vm1097, %v486, 0
    %v1330 = vsel %vm1097, %v790, 0
    %1332 = vmatprep.subr.mxu0 0.0
    %1333 = vmatpush1.xpose.msra.mxu0 %v1330
    %1334 = vmatprep.subr.mxu0 0.0
    %1335 = vmatpush1.xpose.msra.mxu0 0.0
    %1336 = vmatprep.subr.mxu0 0.0
    %1337 = vmatpush1.xpose.msra.mxu0 0.0
    %1338 = vmatprep.subr.mxu0 0.0
    %1339 = vmatpush1.xpose.msra.mxu0 0.0
    %1340 = vmatprep.subr.mxu0 0.0
    %1341 = vmatpush1.xpose.msra.mxu0 0.0
    %1342 = vmatprep.subr.mxu0 0.0
    %1343 = vmatpush1.xpose.msra.mxu0 0.0
    %1344 = vmatprep.subr.mxu0 0.0
    %1345 = vmatpush1.xpose.msra.mxu0 0.0
    %1346 = vmatprep.subr.mxu0 0.0
    %1347 = vmatpush1.xpose.msra.mxu0 0.0
    %1348 = vmatprep.subr.mxu0 0.0
    %1349 = vmatpush1.xpose.msra.mxu0 0.0
    %1350 = vmatprep.subr.mxu0 0.0
    %1351 = vmatpush1.xpose.msra.mxu0 0.0
    %1352 = vmatprep.subr.mxu0 0.0
    %1353 = vmatpush1.xpose.msra.mxu0 0.0
    %1354 = vmatprep.subr.mxu0 0.0
    %1355 = vmatpush1.xpose.msra.mxu0 0.0
    %1356 = vmatprep.subr.mxu0 0.0
    %1357 = vmatpush1.xpose.msra.mxu0 0.0
    %1358 = vmatprep.subr.mxu0 0.0
    %1359 = vmatpush1.xpose.msra.mxu0 0.0
    %1360 = vmatprep.subr.mxu0 0.0
    %1361 = vmatpush1.xpose.msra.mxu0 0.0
    %1362 = vmatprep.subr.mxu0 0.0
    %1363 = vmatpush1.xpose.msra.mxu0 0.0
    %1364 = vmatprep.subr.mxu0 0.0
    %1365 = vmatpush1.xpose.msra.mxu0 0.0
    %1366 = vmatprep.subr.mxu0 0.0
    %1367 = vmatpush1.xpose.msra.mxu0 0.0
    %1368 = vmatprep.subr.mxu0 0.0
    %1369 = vmatpush1.xpose.msra.mxu0 0.0
    %1370 = vmatprep.subr.mxu0 0.0
    %1371 = vmatpush1.xpose.msra.mxu0 0.0
    %1372 = vmatprep.subr.mxu0 0.0
    %1373 = vmatpush1.xpose.msra.mxu0 0.0
    %1374 = vmatprep.subr.mxu0 0.0
    %1375 = vmatpush1.xpose.msra.mxu0 0.0
    %1376 = vmatprep.subr.mxu0 0.0
    %1377 = vmatpush1.xpose.msra.mxu0 0.0
    %1378 = vmatprep.subr.mxu0 0.0
    %1379 = vmatpush1.xpose.msra.mxu0 0.0
    %1380 = vmatprep.subr.mxu0 0.0
    %1381 = vmatpush1.xpose.msra.mxu0 0.0
    %1382 = vmatprep.subr.mxu0 0.0
    %1383 = vmatpush1.xpose.msra.mxu0 0.0
    %1384 = vmatprep.subr.mxu0 0.0
    %1385 = vmatpush1.xpose.msra.mxu0 0.0
    %1386 = vmatprep.subr.mxu0 0.0
    %1387 = vmatpush1.xpose.msra.mxu0 0.0
    %1388 = vmatprep.subr.mxu0 0.0
    %1389 = vmatpush1.xpose.msra.mxu0 0.0
    %1390 = vmatprep.subr.mxu0 0.0
    %1391 = vmatpush1.xpose.msra.mxu0 0.0
    %1392 = vmatprep.subr.mxu0 0.0
    %1393 = vmatpush1.xpose.msra.mxu0 0.0
    %1394 = vmatprep.subr.mxu0 0.0
    %1395 = vmatpush1.xpose.msra.mxu0 0.0
    %1396 = vmatprep.mubr.f32.mxu0 0.0
    %1397 = vmatmul.mubr.f32.gmra.mrb[0].mxu0 %v1327
    %v1398 = vpop.f32.mrb[0].mxu0
    %v1399 = vadd.f32 0.0, %v1398
    %v1400 = vpop.f32.mrb[0].mxu0
    %1401 = vdwg.mxu0
    %v1402 = vmul.f32 %v1171, 0.35355338
    %v1403 = vmul.f32 %v1247, 0.35355338
    %v1404 = vmul.f32 %v1323, 0.35355338
    %v1405 = vmul.f32 %v1399, 0.35355338
    %v1406 = vlaneseq
    %v1407 = vshrl.u32 %v1406, 7
    %v1408 = vsub.s32 0, %v1407
    %v1409 = vrot.slane %v94, %v1408
    %v1410 = vadd.f32 %v1402, %v1409
    %v1411 = vadd.f32 %v1403, %v1409
    %v1412 = vadd.f32 %v1404, %v1409
    %v1413 = vadd.f32 %v1405, %v1409
    %v1414 = vsel %vm1097, %v1410, -inf
    %1415 = vmax.xlane.f32.xlu0 %v1414
    %v1416 = vpop.xlane.xlu0 %1415
    %v1417 = vsel %vm1097, %v1411, -inf
    %1418 = vmax.xlane.f32.xlu0 %v1417
    %v1419 = vpop.xlane.xlu0 %1418
    %v1420 = vsel %vm1097, %v1412, -inf
    %1421 = vmax.xlane.f32.xlu0 %v1420
    %v1422 = vpop.xlane.xlu0 %1421
    %v1423 = vsel %vm1097, %v1413, -inf
    %1424 = vmax.xlane.f32.xlu0 %v1423
    %v1425 = vpop.xlane.xlu0 %1424
    %v1426 = vsub.f32 %v1410, %v1416
    %v1427 = vsub.f32 %v1411, %v1419
    %v1428 = vsub.f32 %v1412, %v1422
    %v1429 = vsub.f32 %v1413, %v1425
    %v1430 = vmul.f32 %v1426, 1.442695
    %v1431 = vpow.pop %v1430
    %v1432 = vmul.f32 %v1427, 1.442695
    %v1433 = vpow.pop %v1432
    %v1434 = vmul.f32 %v1428, 1.442695
    %v1435 = vpow.pop %v1434
    %v1436 = vmul.f32 %v1429, 1.442695
    %v1437 = vpow.pop %v1436
    %v1438 = vsel %vm1097, %v1431, 0.0
    %1439 = vadd.xlane.f32.xlu0 %v1438
    %v1440 = vpop.xlane.xlu0 %1439
    %v1441 = vsel %vm1097, %v1433, 0.0
    %1442 = vadd.xlane.f32.xlu0 %v1441
    %v1443 = vpop.xlane.xlu0 %1442
    %v1444 = vsel %vm1097, %v1435, 0.0
    %1445 = vadd.xlane.f32.xlu0 %v1444
    %v1446 = vpop.xlane.xlu0 %1445
    %v1447 = vsel %vm1097, %v1437, 0.0
    %1448 = vadd.xlane.f32.xlu0 %v1447
    %v1449 = vpop.xlane.xlu0 %1448
    %v1450 = vrcp.pop %v1440
    %v1451 = vrcp.pop %v1443
    %v1452 = vrcp.pop %v1446
    %v1453 = vrcp.pop %v1449
    %v1454 = vmul.f32 %v1431, %v1450
    %v1455 = vmul.f32 %v1433, %v1451
    %v1456 = vmul.f32 %v1435, %v1452
    %v1457 = vmul.f32 %v1437, %v1453
    %v1459 = vsel %vm1097, %v1454, 0
    %1461 = vmatprep.subr.mxu0 0.0
    %1462 = vmatpush1.msra.mxu0 %v884
    %1463 = vmatprep.subr.mxu0 0.0
    %1464 = vmatpush1.msra.mxu0 0.0
    %1465 = vmatprep.subr.mxu0 0.0
    %1466 = vmatpush1.msra.mxu0 0.0
    %1467 = vmatprep.subr.mxu0 0.0
    %1468 = vmatpush1.msra.mxu0 0.0
    %1469 = vmatprep.subr.mxu0 0.0
    %1470 = vmatpush1.msra.mxu0 0.0
    %1471 = vmatprep.subr.mxu0 0.0
    %1472 = vmatpush1.msra.mxu0 0.0
    %1473 = vmatprep.subr.mxu0 0.0
    %1474 = vmatpush1.msra.mxu0 0.0
    %1475 = vmatprep.subr.mxu0 0.0
    %1476 = vmatpush1.msra.mxu0 0.0
    %1477 = vmatprep.subr.mxu0 0.0
    %1478 = vmatpush1.msra.mxu0 0.0
    %1479 = vmatprep.subr.mxu0 0.0
    %1480 = vmatpush1.msra.mxu0 0.0
    %1481 = vmatprep.subr.mxu0 0.0
    %1482 = vmatpush1.msra.mxu0 0.0
    %1483 = vmatprep.subr.mxu0 0.0
    %1484 = vmatpush1.msra.mxu0 0.0
    %1485 = vmatprep.subr.mxu0 0.0
    %1486 = vmatpush1.msra.mxu0 0.0
    %1487 = vmatprep.subr.mxu0 0.0
    %1488 = vmatpush1.msra.mxu0 0.0
    %1489 = vmatprep.subr.mxu0 0.0
    %1490 = vmatpush1.msra.mxu0 0.0
    %1491 = vmatprep.subr.mxu0 0.0
    %1492 = vmatpush1.msra.mxu0 0.0
    %1493 = vmatprep.subr.mxu0 0.0
    %1494 = vmatpush1.msra.mxu0 0.0
    %1495 = vmatprep.subr.mxu0 0.0
    %1496 = vmatpush1.msra.mxu0 0.0
    %1497 = vmatprep.subr.mxu0 0.0
    %1498 = vmatpush1.msra.mxu0 0.0
    %1499 = vmatprep.subr.mxu0 0.0
    %1500 = vmatpush1.msra.mxu0 0.0
    %1501 = vmatprep.subr.mxu0 0.0
    %1502 = vmatpush1.msra.mxu0 0.0
    %1503 = vmatprep.subr.mxu0 0.0
    %1504 = vmatpush1.msra.mxu0 0.0
    %1505 = vmatprep.subr.mxu0 0.0
    %1506 = vmatpush1.msra.mxu0 0.0
    %1507 = vmatprep.subr.mxu0 0.0
    %1508 = vmatpush1.msra.mxu0 0.0
    %1509 = vmatprep.subr.mxu0 0.0
    %1510 = vmatpush1.msra.mxu0 0.0
    %1511 = vmatprep.subr.mxu0 0.0
    %1512 = vmatpush1.msra.mxu0 0.0
    %1513 = vmatprep.subr.mxu0 0.0
    %1514 = vmatpush1.msra.mxu0 0.0
    %1515 = vmatprep.subr.mxu0 0.0
    %1516 = vmatpush1.msra.mxu0 0.0
    %1517 = vmatprep.subr.mxu0 0.0
    %1518 = vmatpush1.msra.mxu0 0.0
    %1519 = vmatprep.subr.mxu0 0.0
    %1520 = vmatpush1.msra.mxu0 0.0
    %1521 = vmatprep.subr.mxu0 0.0
    %1522 = vmatpush1.msra.mxu0 0.0
    %1523 = vmatprep.subr.mxu0 0.0
    %1524 = vmatpush1.msra.mxu0 0.0
    %1525 = vmatprep.mubr.f32.mxu0 0.0
    %1526 = vmatmul.mubr.f32.gmra.mrb[0].mxu0 %v1459
    %v1527 = vpop.f32.mrb[0].mxu0
    %v1528 = vadd.f32 0.0, %v1527
    %v1529 = vpop.f32.mrb[0].mxu0
    %1530 = vdwg.mxu0
    %v1532 = vsel %vm1097, %v1455, 0
    %1534 = vmatprep.subr.mxu0 0.0
    %1535 = vmatpush1.msra.mxu0 %v954
    %1536 = vmatprep.subr.mxu0 0.0
    %1537 = vmatpush1.msra.mxu0 0.0
    %1538 = vmatprep.subr.mxu0 0.0
    %1539 = vmatpush1.msra.mxu0 0.0
    %1540 = vmatprep.subr.mxu0 0.0
    %1541 = vmatpush1.msra.mxu0 0.0
    %1542 = vmatprep.subr.mxu0 0.0
    %1543 = vmatpush1.msra.mxu0 0.0
    %1544 = vmatprep.subr.mxu0 0.0
    %1545 = vmatpush1.msra.mxu0 0.0
    %1546 = vmatprep.subr.mxu0 0.0
    %1547 = vmatpush1.msra.mxu0 0.0
    %1548 = vmatprep.subr.mxu0 0.0
    %1549 = vmatpush1.msra.mxu0 0.0
    %1550 = vmatprep.subr.mxu0 0.0
    %1551 = vmatpush1.msra.mxu0 0.0
    %1552 = vmatprep.subr.mxu0 0.0
    %1553 = vmatpush1.msra.mxu0 0.0
    %1554 = vmatprep.subr.mxu0 0.0
    %1555 = vmatpush1.msra.mxu0 0.0
    %1556 = vmatprep.subr.mxu0 0.0
    %1557 = vmatpush1.msra.mxu0 0.0
    %1558 = vmatprep.subr.mxu0 0.0
    %1559 = vmatpush1.msra.mxu0 0.0
    %1560 = vmatprep.subr.mxu0 0.0
    %1561 = vmatpush1.msra.mxu0 0.0
    %1562 = vmatprep.subr.mxu0 0.0
    %1563 = vmatpush1.msra.mxu0 0.0
    %1564 = vmatprep.subr.mxu0 0.0
    %1565 = vmatpush1.msra.mxu0 0.0
    %1566 = vmatprep.subr.mxu0 0.0
    %1567 = vmatpush1.msra.mxu0 0.0
    %1568 = vmatprep.subr.mxu0 0.0
    %1569 = vmatpush1.msra.mxu0 0.0
    %1570 = vmatprep.subr.mxu0 0.0
    %1571 = vmatpush1.msra.mxu0 0.0
    %1572 = vmatprep.subr.mxu0 0.0
    %1573 = vmatpush1.msra.mxu0 0.0
    %1574 = vmatprep.subr.mxu0 0.0
    %1575 = vmatpush1.msra.mxu0 0.0
    %1576 = vmatprep.subr.mxu0 0.0
    %1577 = vmatpush1.msra.mxu0 0.0
    %1578 = vmatprep.subr.mxu0 0.0
    %1579 = vmatpush1.msra.mxu0 0.0
    %1580 = vmatprep.subr.mxu0 0.0
    %1581 = vmatpush1.msra.mxu0 0.0
    %1582 = vmatprep.subr.mxu0 0.0
    %1583 = vmatpush1.msra.mxu0 0.0
    %1584 = vmatprep.subr.mxu0 0.0
    %1585 = vmatpush1.msra.mxu0 0.0
    %1586 = vmatprep.subr.mxu0 0.0
    %1587 = vmatpush1.msra.mxu0 0.0
    %1588 = vmatprep.subr.mxu0 0.0
    %1589 = vmatpush1.msra.mxu0 0.0
    %1590 = vmatprep.subr.mxu0 0.0
    %1591 = vmatpush1.msra.mxu0 0.0
    %1592 = vmatprep.subr.mxu0 0.0
    %1593 = vmatpush1.msra.mxu0 0.0
    %1594 = vmatprep.subr.mxu0 0.0
    %1595 = vmatpush1.msra.mxu0 0.0
    %1596 = vmatprep.subr.mxu0 0.0
    %1597 = vmatpush1.msra.mxu0 0.0
    %1598 = vmatprep.mubr.f32.mxu0 0.0
    %1599 = vmatmul.mubr.f32.gmra.mrb[0].mxu0 %v1532
    %v1600 = vpop.f32.mrb[0].mxu0
    %v1601 = vadd.f32 0.0, %v1600
    %v1602 = vpop.f32.mrb[0].mxu0
    %1603 = vdwg.mxu0
    %v1605 = vsel %vm1097, %v1456, 0
    %1607 = vmatprep.subr.mxu0 0.0
    %1608 = vmatpush1.msra.mxu0 %v1024
    %1609 = vmatprep.subr.mxu0 0.0
    %1610 = vmatpush1.msra.mxu0 0.0
    %1611 = vmatprep.subr.mxu0 0.0
    %1612 = vmatpush1.msra.mxu0 0.0
    %1613 = vmatprep.subr.mxu0 0.0
    %1614 = vmatpush1.msra.mxu0 0.0
    %1615 = vmatprep.subr.mxu0 0.0
    %1616 = vmatpush1.msra.mxu0 0.0
    %1617 = vmatprep.subr.mxu0 0.0
    %1618 = vmatpush1.msra.mxu0 0.0
    %1619 = vmatprep.subr.mxu0 0.0
    %1620 = vmatpush1.msra.mxu0 0.0
    %1621 = vmatprep.subr.mxu0 0.0
    %1622 = vmatpush1.msra.mxu0 0.0
    %1623 = vmatprep.subr.mxu0 0.0
    %1624 = vmatpush1.msra.mxu0 0.0
    %1625 = vmatprep.subr.mxu0 0.0
    %1626 = vmatpush1.msra.mxu0 0.0
    %1627 = vmatprep.subr.mxu0 0.0
    %1628 = vmatpush1.msra.mxu0 0.0
    %1629 = vmatprep.subr.mxu0 0.0
    %1630 = vmatpush1.msra.mxu0 0.0
    %1631 = vmatprep.subr.mxu0 0.0
    %1632 = vmatpush1.msra.mxu0 0.0
    %1633 = vmatprep.subr.mxu0 0.0
    %1634 = vmatpush1.msra.mxu0 0.0
    %1635 = vmatprep.subr.mxu0 0.0
    %1636 = vmatpush1.msra.mxu0 0.0
    %1637 = vmatprep.subr.mxu0 0.0
    %1638 = vmatpush1.msra.mxu0 0.0
    %1639 = vmatprep.subr.mxu0 0.0
    %1640 = vmatpush1.msra.mxu0 0.0
    %1641 = vmatprep.subr.mxu0 0.0
    %1642 = vmatpush1.msra.mxu0 0.0
    %1643 = vmatprep.subr.mxu0 0.0
    %1644 = vmatpush1.msra.mxu0 0.0
    %1645 = vmatprep.subr.mxu0 0.0
    %1646 = vmatpush1.msra.mxu0 0.0
    %1647 = vmatprep.subr.mxu0 0.0
    %1648 = vmatpush1.msra.mxu0 0.0
    %1649 = vmatprep.subr.mxu0 0.0
    %1650 = vmatpush1.msra.mxu0 0.0
    %1651 = vmatprep.subr.mxu0 0.0
    %1652 = vmatpush1.msra.mxu0 0.0
    %1653 = vmatprep.subr.mxu0 0.0
    %1654 = vmatpush1.msra.mxu0 0.0
    %1655 = vmatprep.subr.mxu0 0.0
    %1656 = vmatpush1.msra.mxu0 0.0
    %1657 = vmatprep.subr.mxu0 0.0
    %1658 = vmatpush1.msra.mxu0 0.0
    %1659 = vmatprep.subr.mxu0 0.0
    %1660 = vmatpush1.msra.mxu0 0.0
    %1661 = vmatprep.subr.mxu0 0.0
    %1662 = vmatpush1.msra.mxu0 0.0
    %1663 = vmatprep.subr.mxu0 0.0
    %1664 = vmatpush1.msra.mxu0 0.0
    %1665 = vmatprep.subr.mxu0 0.0
    %1666 = vmatpush1.msra.mxu0 0.0
    %1667 = vmatprep.subr.mxu0 0.0
    %1668 = vmatpush1.msra.mxu0 0.0
    %1669 = vmatprep.subr.mxu0 0.0
    %1670 = vmatpush1.msra.mxu0 0.0
    %1671 = vmatprep.mubr.f32.mxu0 0.0
    %1672 = vmatmul.mubr.f32.gmra.mrb[0].mxu0 %v1605
    %v1673 = vpop.f32.mrb[0].mxu0
    %v1674 = vadd.f32 0.0, %v1673
    %v1675 = vpop.f32.mrb[0].mxu0
    %1676 = vdwg.mxu0
    %v1678 = vsel %vm1097, %v1457, 0
    %1680 = vmatprep.subr.mxu0 0.0
    %1681 = vmatpush1.msra.mxu0 %v1094
    %1682 = vmatprep.subr.mxu0 0.0
    %1683 = vmatpush1.msra.mxu0 0.0
    %1684 = vmatprep.subr.mxu0 0.0
    %1685 = vmatpush1.msra.mxu0 0.0
    %1686 = vmatprep.subr.mxu0 0.0
    %1687 = vmatpush1.msra.mxu0 0.0
    %1688 = vmatprep.subr.mxu0 0.0
    %1689 = vmatpush1.msra.mxu0 0.0
    %1690 = vmatprep.subr.mxu0 0.0
    %1691 = vmatpush1.msra.mxu0 0.0
    %1692 = vmatprep.subr.mxu0 0.0
    %1693 = vmatpush1.msra.mxu0 0.0
    %1694 = vmatprep.subr.mxu0 0.0
    %1695 = vmatpush1.msra.mxu0 0.0
    %1696 = vmatprep.subr.mxu0 0.0
    %1697 = vmatpush1.msra.mxu0 0.0
    %1698 = vmatprep.subr.mxu0 0.0
    %1699 = vmatpush1.msra.mxu0 0.0
    %1700 = vmatprep.subr.mxu0 0.0
    %1701 = vmatpush1.msra.mxu0 0.0
    %1702 = vmatprep.subr.mxu0 0.0
    %1703 = vmatpush1.msra.mxu0 0.0
    %1704 = vmatprep.subr.mxu0 0.0
    %1705 = vmatpush1.msra.mxu0 0.0
    %1706 = vmatprep.subr.mxu0 0.0
    %1707 = vmatpush1.msra.mxu0 0.0
    %1708 = vmatprep.subr.mxu0 0.0
    %1709 = vmatpush1.msra.mxu0 0.0
    %1710 = vmatprep.subr.mxu0 0.0
    %1711 = vmatpush1.msra.mxu0 0.0
    %1712 = vmatprep.subr.mxu0 0.0
    %1713 = vmatpush1.msra.mxu0 0.0
    %1714 = vmatprep.subr.mxu0 0.0
    %1715 = vmatpush1.msra.mxu0 0.0
    %1716 = vmatprep.subr.mxu0 0.0
    %1717 = vmatpush1.msra.mxu0 0.0
    %1718 = vmatprep.subr.mxu0 0.0
    %1719 = vmatpush1.msra.mxu0 0.0
    %1720 = vmatprep.subr.mxu0 0.0
    %1721 = vmatpush1.msra.mxu0 0.0
    %1722 = vmatprep.subr.mxu0 0.0
    %1723 = vmatpush1.msra.mxu0 0.0
    %1724 = vmatprep.subr.mxu0 0.0
    %1725 = vmatpush1.msra.mxu0 0.0
    %1726 = vmatprep.subr.mxu0 0.0
    %1727 = vmatpush1.msra.mxu0 0.0
    %1728 = vmatprep.subr.mxu0 0.0
    %1729 = vmatpush1.msra.mxu0 0.0
    %1730 = vmatprep.subr.mxu0 0.0
    %1731 = vmatpush1.msra.mxu0 0.0
    %1732 = vmatprep.subr.mxu0 0.0
    %1733 = vmatpush1.msra.mxu0 0.0
    %1734 = vmatprep.subr.mxu0 0.0
    %1735 = vmatpush1.msra.mxu0 0.0
    %1736 = vmatprep.subr.mxu0 0.0
    %1737 = vmatpush1.msra.mxu0 0.0
    %1738 = vmatprep.subr.mxu0 0.0
    %1739 = vmatpush1.msra.mxu0 0.0
    %1740 = vmatprep.subr.mxu0 0.0
    %1741 = vmatpush1.msra.mxu0 0.0
    %1742 = vmatprep.subr.mxu0 0.0
    %1743 = vmatpush1.msra.mxu0 0.0
    %1744 = vmatprep.mubr.f32.mxu0 0.0
    %1745 = vmatmul.mubr.f32.gmra.mrb[0].mxu0 %v1678
    %v1746 = vpop.f32.mrb[0].mxu0
    %v1747 = vadd.f32 0.0, %v1746
    %v1748 = vpop.f32.mrb[0].mxu0
    %1749 = vdwg.mxu0
    %v1751 = vsel %vm1097, %v1528, 0
    %1753 = vmatprep.subr.mxu0 0.0
    %1754 = vmatpush1.msra.mxu0 %v159
    %1755 = vmatprep.subr.mxu0 0.0
    %1756 = vmatpush1.msra.mxu0 0.0
    %1757 = vmatprep.subr.mxu0 0.0
    %1758 = vmatpush1.msra.mxu0 0.0
    %1759 = vmatprep.subr.mxu0 0.0
    %1760 = vmatpush1.msra.mxu0 0.0
    %1761 = vmatprep.subr.mxu0 0.0
    %1762 = vmatpush1.msra.mxu0 0.0
    %1763 = vmatprep.subr.mxu0 0.0
    %1764 = vmatpush1.msra.mxu0 0.0
    %1765 = vmatprep.subr.mxu0 0.0
    %1766 = vmatpush1.msra.mxu0 0.0
    %1767 = vmatprep.subr.mxu0 0.0
    %1768 = vmatpush1.msra.mxu0 0.0
    %1769 = vmatprep.subr.mxu0 0.0
    %1770 = vmatpush1.msra.mxu0 0.0
    %1771 = vmatprep.subr.mxu0 0.0
    %1772 = vmatpush1.msra.mxu0 0.0
    %1773 = vmatprep.subr.mxu0 0.0
    %1774 = vmatpush1.msra.mxu0 0.0
    %1775 = vmatprep.subr.mxu0 0.0
    %1776 = vmatpush1.msra.mxu0 0.0
    %1777 = vmatprep.subr.mxu0 0.0
    %1778 = vmatpush1.msra.mxu0 0.0
    %1779 = vmatprep.subr.mxu0 0.0
    %1780 = vmatpush1.msra.mxu0 0.0
    %1781 = vmatprep.subr.mxu0 0.0
    %1782 = vmatpush1.msra.mxu0 0.0
    %1783 = vmatprep.subr.mxu0 0.0
    %1784 = vmatpush1.msra.mxu0 0.0
    %1785 = vmatprep.subr.mxu0 0.0
    %1786 = vmatpush1.msra.mxu0 0.0
    %1787 = vmatprep.subr.mxu0 0.0
    %1788 = vmatpush1.msra.mxu0 0.0
    %1789 = vmatprep.subr.mxu0 0.0
    %1790 = vmatpush1.msra.mxu0 0.0
    %1791 = vmatprep.subr.mxu0 0.0
    %1792 = vmatpush1.msra.mxu0 0.0
    %1793 = vmatprep.subr.mxu0 0.0
    %1794 = vmatpush1.msra.mxu0 0.0
    %1795 = vmatprep.subr.mxu0 0.0
    %1796 = vmatpush1.msra.mxu0 0.0
    %1797 = vmatprep.subr.mxu0 0.0
    %1798 = vmatpush1.msra.mxu0 0.0
    %1799 = vmatprep.subr.mxu0 0.0
    %1800 = vmatpush1.msra.mxu0 0.0
    %1801 = vmatprep.subr.mxu0 0.0
    %1802 = vmatpush1.msra.mxu0 0.0
    %1803 = vmatprep.subr.mxu0 0.0
    %1804 = vmatpush1.msra.mxu0 0.0
    %1805 = vmatprep.subr.mxu0 0.0
    %1806 = vmatpush1.msra.mxu0 0.0
    %1807 = vmatprep.subr.mxu0 0.0
    %1808 = vmatpush1.msra.mxu0 0.0
    %1809 = vmatprep.subr.mxu0 0.0
    %1810 = vmatpush1.msra.mxu0 0.0
    %1811 = vmatprep.subr.mxu0 0.0
    %1812 = vmatpush1.msra.mxu0 0.0
    %1813 = vmatprep.subr.mxu0 0.0
    %1814 = vmatpush1.msra.mxu0 0.0
    %1815 = vmatprep.subr.mxu0 0.0
    %1816 = vmatpush1.msra.mxu0 0.0
    %1817 = vmatprep.mubr.f32.mxu0 0.0
    %1818 = vmatmul.mubr.f32.gmra.mrb[0].mxu0 %v1751
    %v1819 = vpop.f32.mrb[0].mxu0
    %v1820 = vadd.f32 0.0, %v1819
    %v1821 = vpop.f32.mrb[0].mxu0
    %1822 = vdwg.mxu0
    %v1824 = vsel %vm1097, %v1601, 0
    %1826 = vmatprep.subr.mxu0 0.0
    %1827 = vmatpush1.msra.mxu0 %v160
    %1828 = vmatprep.subr.mxu0 0.0
    %1829 = vmatpush1.msra.mxu0 0.0
    %1830 = vmatprep.subr.mxu0 0.0
    %1831 = vmatpush1.msra.mxu0 0.0
    %1832 = vmatprep.subr.mxu0 0.0
    %1833 = vmatpush1.msra.mxu0 0.0
    %1834 = vmatprep.subr.mxu0 0.0
    %1835 = vmatpush1.msra.mxu0 0.0
    %1836 = vmatprep.subr.mxu0 0.0
    %1837 = vmatpush1.msra.mxu0 0.0
    %1838 = vmatprep.subr.mxu0 0.0
    %1839 = vmatpush1.msra.mxu0 0.0
    %1840 = vmatprep.subr.mxu0 0.0
    %1841 = vmatpush1.msra.mxu0 0.0
    %1842 = vmatprep.subr.mxu0 0.0
    %1843 = vmatpush1.msra.mxu0 0.0
    %1844 = vmatprep.subr.mxu0 0.0
    %1845 = vmatpush1.msra.mxu0 0.0
    %1846 = vmatprep.subr.mxu0 0.0
    %1847 = vmatpush1.msra.mxu0 0.0
    %1848 = vmatprep.subr.mxu0 0.0
    %1849 = vmatpush1.msra.mxu0 0.0
    %1850 = vmatprep.subr.mxu0 0.0
    %1851 = vmatpush1.msra.mxu0 0.0
    %1852 = vmatprep.subr.mxu0 0.0
    %1853 = vmatpush1.msra.mxu0 0.0
    %1854 = vmatprep.subr.mxu0 0.0
    %1855 = vmatpush1.msra.mxu0 0.0
    %1856 = vmatprep.subr.mxu0 0.0
    %1857 = vmatpush1.msra.mxu0 0.0
    %1858 = vmatprep.subr.mxu0 0.0
    %1859 = vmatpush1.msra.mxu0 0.0
    %1860 = vmatprep.subr.mxu0 0.0
    %1861 = vmatpush1.msra.mxu0 0.0
    %1862 = vmatprep.subr.mxu0 0.0
    %1863 = vmatpush1.msra.mxu0 0.0
    %1864 = vmatprep.subr.mxu0 0.0
    %1865 = vmatpush1.msra.mxu0 0.0
    %1866 = vmatprep.subr.mxu0 0.0
    %1867 = vmatpush1.msra.mxu0 0.0
    %1868 = vmatprep.subr.mxu0 0.0
    %1869 = vmatpush1.msra.mxu0 0.0
    %1870 = vmatprep.subr.mxu0 0.0
    %1871 = vmatpush1.msra.mxu0 0.0
    %1872 = vmatprep.subr.mxu0 0.0
    %1873 = vmatpush1.msra.mxu0 0.0
    %1874 = vmatprep.subr.mxu0 0.0
    %1875 = vmatpush1.msra.mxu0 0.0
    %1876 = vmatprep.subr.mxu0 0.0
    %1877 = vmatpush1.msra.mxu0 0.0
    %1878 = vmatprep.subr.mxu0 0.0
    %1879 = vmatpush1.msra.mxu0 0.0
    %1880 = vmatprep.subr.mxu0 0.0
    %1881 = vmatpush1.msra.mxu0 0.0
    %1882 = vmatprep.subr.mxu0 0.0
    %1883 = vmatpush1.msra.mxu0 0.0
    %1884 = vmatprep.subr.mxu0 0.0
    %1885 = vmatpush1.msra.mxu0 0.0
    %1886 = vmatprep.subr.mxu0 0.0
    %1887 = vmatpush1.msra.mxu0 0.0
    %1888 = vmatprep.subr.mxu0 0.0
    %1889 = vmatpush1.msra.mxu0 0.0
    %1890 = vmatprep.mubr.f32.mxu0 0.0
    %1891 = vmatmul.mubr.f32.gmra.mrb[0].mxu0 %v1824
    %v1892 = vpop.f32.mrb[0].mxu0
    %v1893 = vadd.f32 0.0, %v1892
    %v1894 = vpop.f32.mrb[0].mxu0
    %1895 = vdwg.mxu0
    %v1897 = vsel %vm1097, %v1674, 0
    %1899 = vmatprep.subr.mxu0 0.0
    %1900 = vmatpush1.msra.mxu0 %v161
    %1901 = vmatprep.subr.mxu0 0.0
    %1902 = vmatpush1.msra.mxu0 0.0
    %1903 = vmatprep.subr.mxu0 0.0
    %1904 = vmatpush1.msra.mxu0 0.0
    %1905 = vmatprep.subr.mxu0 0.0
    %1906 = vmatpush1.msra.mxu0 0.0
    %1907 = vmatprep.subr.mxu0 0.0
    %1908 = vmatpush1.msra.mxu0 0.0
    %1909 = vmatprep.subr.mxu0 0.0
    %1910 = vmatpush1.msra.mxu0 0.0
    %1911 = vmatprep.subr.mxu0 0.0
    %1912 = vmatpush1.msra.mxu0 0.0
    %1913 = vmatprep.subr.mxu0 0.0
    %1914 = vmatpush1.msra.mxu0 0.0
    %1915 = vmatprep.subr.mxu0 0.0
    %1916 = vmatpush1.msra.mxu0 0.0
    %1917 = vmatprep.subr.mxu0 0.0
    %1918 = vmatpush1.msra.mxu0 0.0
    %1919 = vmatprep.subr.mxu0 0.0
    %1920 = vmatpush1.msra.mxu0 0.0
    %1921 = vmatprep.subr.mxu0 0.0
    %1922 = vmatpush1.msra.mxu0 0.0
    %1923 = vmatprep.subr.mxu0 0.0
    %1924 = vmatpush1.msra.mxu0 0.0
    %1925 = vmatprep.subr.mxu0 0.0
    %1926 = vmatpush1.msra.mxu0 0.0
    %1927 = vmatprep.subr.mxu0 0.0
    %1928 = vmatpush1.msra.mxu0 0.0
    %1929 = vmatprep.subr.mxu0 0.0
    %1930 = vmatpush1.msra.mxu0 0.0
    %1931 = vmatprep.subr.mxu0 0.0
    %1932 = vmatpush1.msra.mxu0 0.0
    %1933 = vmatprep.subr.mxu0 0.0
    %1934 = vmatpush1.msra.mxu0 0.0
    %1935 = vmatprep.subr.mxu0 0.0
    %1936 = vmatpush1.msra.mxu0 0.0
    %1937 = vmatprep.subr.mxu0 0.0
    %1938 = vmatpush1.msra.mxu0 0.0
    %1939 = vmatprep.subr.mxu0 0.0
    %1940 = vmatpush1.msra.mxu0 0.0
    %1941 = vmatprep.subr.mxu0 0.0
    %1942 = vmatpush1.msra.mxu0 0.0
    %1943 = vmatprep.subr.mxu0 0.0
    %1944 = vmatpush1.msra.mxu0 0.0
    %1945 = vmatprep.subr.mxu0 0.0
    %1946 = vmatpush1.msra.mxu0 0.0
    %1947 = vmatprep.subr.mxu0 0.0
    %1948 = vmatpush1.msra.mxu0 0.0
    %1949 = vmatprep.subr.mxu0 0.0
    %1950 = vmatpush1.msra.mxu0 0.0
    %1951 = vmatprep.subr.mxu0 0.0
    %1952 = vmatpush1.msra.mxu0 0.0
    %1953 = vmatprep.subr.mxu0 0.0
    %1954 = vmatpush1.msra.mxu0 0.0
    %1955 = vmatprep.subr.mxu0 0.0
    %1956 = vmatpush1.msra.mxu0 0.0
    %1957 = vmatprep.subr.mxu0 0.0
    %1958 = vmatpush1.msra.mxu0 0.0
    %1959 = vmatprep.subr.mxu0 0.0
    %1960 = vmatpush1.msra.mxu0 0.0
    %1961 = vmatprep.subr.mxu0 0.0
    %1962 = vmatpush1.msra.mxu0 0.0
    %1963 = vmatprep.mubr.f32.mxu0 0.0
    %1964 = vmatmul.mubr.f32.gmra.mrb[0].mxu0 %v1897
    %v1965 = vpop.f32.mrb[0].mxu0
    %v1966 = vadd.f32 0.0, %v1965
    %v1967 = vpop.f32.mrb[0].mxu0
    %1968 = vdwg.mxu0
    %v1970 = vsel %vm1097, %v1747, 0
    %1972 = vmatprep.subr.mxu0 0.0
    %1973 = vmatpush1.msra.mxu0 %v162
    %1974 = vmatprep.subr.mxu0 0.0
    %1975 = vmatpush1.msra.mxu0 0.0
    %1976 = vmatprep.subr.mxu0 0.0
    %1977 = vmatpush1.msra.mxu0 0.0
    %1978 = vmatprep.subr.mxu0 0.0
    %1979 = vmatpush1.msra.mxu0 0.0
    %1980 = vmatprep.subr.mxu0 0.0
    %1981 = vmatpush1.msra.mxu0 0.0
    %1982 = vmatprep.subr.mxu0 0.0
    %1983 = vmatpush1.msra.mxu0 0.0
    %1984 = vmatprep.subr.mxu0 0.0
    %1985 = vmatpush1.msra.mxu0 0.0
    %1986 = vmatprep.subr.mxu0 0.0
    %1987 = vmatpush1.msra.mxu0 0.0
    %1988 = vmatprep.subr.mxu0 0.0
    %1989 = vmatpush1.msra.mxu0 0.0
    %1990 = vmatprep.subr.mxu0 0.0
    %1991 = vmatpush1.msra.mxu0 0.0
    %1992 = vmatprep.subr.mxu0 0.0
    %1993 = vmatpush1.msra.mxu0 0.0
    %1994 = vmatprep.subr.mxu0 0.0
    %1995 = vmatpush1.msra.mxu0 0.0
    %1996 = vmatprep.subr.mxu0 0.0
    %1997 = vmatpush1.msra.mxu0 0.0
    %1998 = vmatprep.subr.mxu0 0.0
    %1999 = vmatpush1.msra.mxu0 0.0
    %2000 = vmatprep.subr.mxu0 0.0
    %2001 = vmatpush1.msra.mxu0 0.0
    %2002 = vmatprep.subr.mxu0 0.0
    %2003 = vmatpush1.msra.mxu0 0.0
    %2004 = vmatprep.subr.mxu0 0.0
    %2005 = vmatpush1.msra.mxu0 0.0
    %2006 = vmatprep.subr.mxu0 0.0
    %2007 = vmatpush1.msra.mxu0 0.0
    %2008 = vmatprep.subr.mxu0 0.0
    %2009 = vmatpush1.msra.mxu0 0.0
    %2010 = vmatprep.subr.mxu0 0.0
    %2011 = vmatpush1.msra.mxu0 0.0
    %2012 = vmatprep.subr.mxu0 0.0
    %2013 = vmatpush1.msra.mxu0 0.0
    %2014 = vmatprep.subr.mxu0 0.0
    %2015 = vmatpush1.msra.mxu0 0.0
    %2016 = vmatprep.subr.mxu0 0.0
    %2017 = vmatpush1.msra.mxu0 0.0
    %2018 = vmatprep.subr.mxu0 0.0
    %2019 = vmatpush1.msra.mxu0 0.0
    %2020 = vmatprep.subr.mxu0 0.0
    %2021 = vmatpush1.msra.mxu0 0.0
    %2022 = vmatprep.subr.mxu0 0.0
    %2023 = vmatpush1.msra.mxu0 0.0
    %2024 = vmatprep.subr.mxu0 0.0
    %2025 = vmatpush1.msra.mxu0 0.0
    %2026 = vmatprep.subr.mxu0 0.0
    %2027 = vmatpush1.msra.mxu0 0.0
    %2028 = vmatprep.subr.mxu0 0.0
    %2029 = vmatpush1.msra.mxu0 0.0
    %2030 = vmatprep.subr.mxu0 0.0
    %2031 = vmatpush1.msra.mxu0 0.0
    %2032 = vmatprep.subr.mxu0 0.0
    %2033 = vmatpush1.msra.mxu0 0.0
    %2034 = vmatprep.subr.mxu0 0.0
    %2035 = vmatpush1.msra.mxu0 0.0
    %2036 = vmatprep.mubr.f32.mxu0 0.0
    %2037 = vmatmul.mubr.f32.gmra.mrb[0].mxu0 %v1970
    %v2038 = vpop.f32.mrb[0].mxu0
    %v2039 = vadd.f32 0.0, %v2038
    %v2040 = vpop.f32.mrb[0].mxu0
    %2041 = vdwg.mxu0
    %v2042 = vsel %vm52, %v1820, 0.0
    %v2043 = vsel %vm52, %v1893, 0.0
    %v2044 = vadd.f32 %v2042, %v2043
    %v2045 = vsel %vm52, %v1966, 0.0
    %v2046 = vadd.f32 %v2044, %v2045
    %v2047 = vsel %vm52, %v2039, 0.0
    %v2048 = vadd.f32 %v2046, %v2047
    %v2050 = vsel %vm52, %v91, 0
    %2052 = vmatprep.subr.mxu0 0.0
    %2053 = vmatpush1.msra.mxu0 %v95
    %2054 = vmatprep.subr.mxu0 0.0
    %2055 = vmatpush1.msra.mxu0 %v96
    %2056 = vmatprep.subr.mxu0 0.0
    %2057 = vmatpush1.msra.mxu0 %v97
    %2058 = vmatprep.subr.mxu0 0.0
    %2059 = vmatpush1.msra.mxu0 %v98
    %2060 = vmatprep.subr.mxu0 0.0
    %2061 = vmatpush1.msra.mxu0 0.0
    %2062 = vmatprep.subr.mxu0 0.0
    %2063 = vmatpush1.msra.mxu0 0.0
    %2064 = vmatprep.subr.mxu0 0.0
    %2065 = vmatpush1.msra.mxu0 0.0
    %2066 = vmatprep.subr.mxu0 0.0
    %2067 = vmatpush1.msra.mxu0 0.0
    %2068 = vmatprep.subr.mxu0 0.0
    %2069 = vmatpush1.msra.mxu0 0.0
    %2070 = vmatprep.subr.mxu0 0.0
    %2071 = vmatpush1.msra.mxu0 0.0
    %2072 = vmatprep.subr.mxu0 0.0
    %2073 = vmatpush1.msra.mxu0 0.0
    %2074 = vmatprep.subr.mxu0 0.0
    %2075 = vmatpush1.msra.mxu0 0.0
    %2076 = vmatprep.subr.mxu0 0.0
    %2077 = vmatpush1.msra.mxu0 0.0
    %2078 = vmatprep.subr.mxu0 0.0
    %2079 = vmatpush1.msra.mxu0 0.0
    %2080 = vmatprep.subr.mxu0 0.0
    %2081 = vmatpush1.msra.mxu0 0.0
    %2082 = vmatprep.subr.mxu0 0.0
    %2083 = vmatpush1.msra.mxu0 0.0
    %2084 = vmatprep.subr.mxu0 0.0
    %2085 = vmatpush1.msra.mxu0 0.0
    %2086 = vmatprep.subr.mxu0 0.0
    %2087 = vmatpush1.msra.mxu0 0.0
    %2088 = vmatprep.subr.mxu0 0.0
    %2089 = vmatpush1.msra.mxu0 0.0
    %2090 = vmatprep.subr.mxu0 0.0
    %2091 = vmatpush1.msra.mxu0 0.0
    %2092 = vmatprep.subr.mxu0 0.0
    %2093 = vmatpush1.msra.mxu0 0.0
    %2094 = vmatprep.subr.mxu0 0.0
    %2095 = vmatpush1.msra.mxu0 0.0
    %2096 = vmatprep.subr.mxu0 0.0
    %2097 = vmatpush1.msra.mxu0 0.0
    %2098 = vmatprep.subr.mxu0 0.0
    %2099 = vmatpush1.msra.mxu0 0.0
    %2100 = vmatprep.subr.mxu0 0.0
    %2101 = vmatpush1.msra.mxu0 0.0
    %2102 = vmatprep.subr.mxu0 0.0
    %2103 = vmatpush1.msra.mxu0 0.0
    %2104 = vmatprep.subr.mxu0 0.0
    %2105 = vmatpush1.msra.mxu0 0.0
    %2106 = vmatprep.subr.mxu0 0.0
    %2107 = vmatpush1.msra.mxu0 0.0
    %2108 = vmatprep.subr.mxu0 0.0
    %2109 = vmatpush1.msra.mxu0 0.0
    %2110 = vmatprep.subr.mxu0 0.0
    %2111 = vmatpush1.msra.mxu0 0.0
    %2112 = vmatprep.subr.mxu0 0.0
    %2113 = vmatpush1.msra.mxu0 0.0
    %2114 = vmatprep.subr.mxu0 0.0
    %2115 = vmatpush1.msra.mxu0 0.0
    %2116 = vmatprep.mubr.f32.mxu0 0.0
    %2117 = vmatmul.mubr.f32.gmra.mrb[0].mxu0 %v2050
    %v2118 = vpop.f32.mrb[0].mxu0
    %v2119 = vadd.f32 %v189, %v2118
    %v2120 = vpop.f32.mrb[0].mxu0
    %2121 = vdwg.mxu0
    %2122 = vmatprep.subr.mxu0 0.0
    %2123 = vmatpush1.msra.mxu0 %v99
    %2124 = vmatprep.subr.mxu0 0.0
    %2125 = vmatpush1.msra.mxu0 %v100
    %2126 = vmatprep.subr.mxu0 0.0
    %2127 = vmatpush1.msra.mxu0 %v101
    %2128 = vmatprep.subr.mxu0 0.0
    %2129 = vmatpush1.msra.mxu0 %v102
    %2130 = vmatprep.subr.mxu0 0.0
    %2131 = vmatpush1.msra.mxu0 0.0
    %2132 = vmatprep.subr.mxu0 0.0
    %2133 = vmatpush1.msra.mxu0 0.0
    %2134 = vmatprep.subr.mxu0 0.0
    %2135 = vmatpush1.msra.mxu0 0.0
    %2136 = vmatprep.subr.mxu0 0.0
    %2137 = vmatpush1.msra.mxu0 0.0
    %2138 = vmatprep.subr.mxu0 0.0
    %2139 = vmatpush1.msra.mxu0 0.0
    %2140 = vmatprep.subr.mxu0 0.0
    %2141 = vmatpush1.msra.mxu0 0.0
    %2142 = vmatprep.subr.mxu0 0.0
    %2143 = vmatpush1.msra.mxu0 0.0
    %2144 = vmatprep.subr.mxu0 0.0
    %2145 = vmatpush1.msra.mxu0 0.0
    %2146 = vmatprep.subr.mxu0 0.0
    %2147 = vmatpush1.msra.mxu0 0.0
    %2148 = vmatprep.subr.mxu0 0.0
    %2149 = vmatpush1.msra.mxu0 0.0
    %2150 = vmatprep.subr.mxu0 0.0
    %2151 = vmatpush1.msra.mxu0 0.0
    %2152 = vmatprep.subr.mxu0 0.0
    %2153 = vmatpush1.msra.mxu0 0.0
    %2154 = vmatprep.subr.mxu0 0.0
    %2155 = vmatpush1.msra.mxu0 0.0
    %2156 = vmatprep.subr.mxu0 0.0
    %2157 = vmatpush1.msra.mxu0 0.0
    %2158 = vmatprep.subr.mxu0 0.0
    %2159 = vmatpush1.msra.mxu0 0.0
    %2160 = vmatprep.subr.mxu0 0.0
    %2161 = vmatpush1.msra.mxu0 0.0
    %2162 = vmatprep.subr.mxu0 0.0
    %2163 = vmatpush1.msra.mxu0 0.0
    %2164 = vmatprep.subr.mxu0 0.0
    %2165 = vmatpush1.msra.mxu0 0.0
    %2166 = vmatprep.subr.mxu0 0.0
    %2167 = vmatpush1.msra.mxu0 0.0
    %2168 = vmatprep.subr.mxu0 0.0
    %2169 = vmatpush1.msra.mxu0 0.0
    %2170 = vmatprep.subr.mxu0 0.0
    %2171 = vmatpush1.msra.mxu0 0.0
    %2172 = vmatprep.subr.mxu0 0.0
    %2173 = vmatpush1.msra.mxu0 0.0
    %2174 = vmatprep.subr.mxu0 0.0
    %2175 = vmatpush1.msra.mxu0 0.0
    %2176 = vmatprep.subr.mxu0 0.0
    %2177 = vmatpush1.msra.mxu0 0.0
    %2178 = vmatprep.subr.mxu0 0.0
    %2179 = vmatpush1.msra.mxu0 0.0
    %2180 = vmatprep.subr.mxu0 0.0
    %2181 = vmatpush1.msra.mxu0 0.0
    %2182 = vmatprep.subr.mxu0 0.0
    %2183 = vmatpush1.msra.mxu0 0.0
    %2184 = vmatprep.subr.mxu0 0.0
    %2185 = vmatpush1.msra.mxu0 0.0
    %2186 = vmatprep.mubr.f32.mxu0 0.0
    %2187 = vmatmul.mubr.f32.gmra.mrb[0].mxu0 %v2050
    %v2188 = vpop.f32.mrb[0].mxu0
    %v2189 = vadd.f32 %v193, %v2188
    %v2190 = vpop.f32.mrb[0].mxu0
    %2191 = vdwg.mxu0
    %2192 = vmatprep.subr.mxu0 0.0
    %2193 = vmatpush1.msra.mxu0 %v103
    %2194 = vmatprep.subr.mxu0 0.0
    %2195 = vmatpush1.msra.mxu0 %v104
    %2196 = vmatprep.subr.mxu0 0.0
    %2197 = vmatpush1.msra.mxu0 %v105
    %2198 = vmatprep.subr.mxu0 0.0
    %2199 = vmatpush1.msra.mxu0 %v106
    %2200 = vmatprep.subr.mxu0 0.0
    %2201 = vmatpush1.msra.mxu0 0.0
    %2202 = vmatprep.subr.mxu0 0.0
    %2203 = vmatpush1.msra.mxu0 0.0
    %2204 = vmatprep.subr.mxu0 0.0
    %2205 = vmatpush1.msra.mxu0 0.0
    %2206 = vmatprep.subr.mxu0 0.0
    %2207 = vmatpush1.msra.mxu0 0.0
    %2208 = vmatprep.subr.mxu0 0.0
    %2209 = vmatpush1.msra.mxu0 0.0
    %2210 = vmatprep.subr.mxu0 0.0
    %2211 = vmatpush1.msra.mxu0 0.0
    %2212 = vmatprep.subr.mxu0 0.0
    %2213 = vmatpush1.msra.mxu0 0.0
    %2214 = vmatprep.subr.mxu0 0.0
    %2215 = vmatpush1.msra.mxu0 0.0
    %2216 = vmatprep.subr.mxu0 0.0
    %2217 = vmatpush1.msra.mxu0 0.0
    %2218 = vmatprep.subr.mxu0 0.0
    %2219 = vmatpush1.msra.mxu0 0.0
    %2220 = vmatprep.subr.mxu0 0.0
    %2221 = vmatpush1.msra.mxu0 0.0
    %2222 = vmatprep.subr.mxu0 0.0
    %2223 = vmatpush1.msra.mxu0 0.0
    %2224 = vmatprep.subr.mxu0 0.0
    %2225 = vmatpush1.msra.mxu0 0.0
    %2226 = vmatprep.subr.mxu0 0.0
    %2227 = vmatpush1.msra.mxu0 0.0
    %2228 = vmatprep.subr.mxu0 0.0
    %2229 = vmatpush1.msra.mxu0 0.0
    %2230 = vmatprep.subr.mxu0 0.0
    %2231 = vmatpush1.msra.mxu0 0.0
    %2232 = vmatprep.subr.mxu0 0.0
    %2233 = vmatpush1.msra.mxu0 0.0
    %2234 = vmatprep.subr.mxu0 0.0
    %2235 = vmatpush1.msra.mxu0 0.0
    %2236 = vmatprep.subr.mxu0 0.0
    %2237 = vmatpush1.msra.mxu0 0.0
    %2238 = vmatprep.subr.mxu0 0.0
    %2239 = vmatpush1.msra.mxu0 0.0
    %2240 = vmatprep.subr.mxu0 0.0
    %2241 = vmatpush1.msra.mxu0 0.0
    %2242 = vmatprep.subr.mxu0 0.0
    %2243 = vmatpush1.msra.mxu0 0.0
    %2244 = vmatprep.subr.mxu0 0.0
    %2245 = vmatpush1.msra.mxu0 0.0
    %2246 = vmatprep.subr.mxu0 0.0
    %2247 = vmatpush1.msra.mxu0 0.0
    %2248 = vmatprep.subr.mxu0 0.0
    %2249 = vmatpush1.msra.mxu0 0.0
    %2250 = vmatprep.subr.mxu0 0.0
    %2251 = vmatpush1.msra.mxu0 0.0
    %2252 = vmatprep.subr.mxu0 0.0
    %2253 = vmatpush1.msra.mxu0 0.0
    %2254 = vmatprep.subr.mxu0 0.0
    %2255 = vmatpush1.msra.mxu0 0.0
    %2256 = vmatprep.mubr.f32.mxu0 0.0
    %2257 = vmatmul.mubr.f32.gmra.mrb[0].mxu0 %v2050
    %v2258 = vpop.f32.mrb[0].mxu0
    %v2259 = vadd.f32 %v197, %v2258
    %v2260 = vpop.f32.mrb[0].mxu0
    %2261 = vdwg.mxu0
    %2262 = vmatprep.subr.mxu0 0.0
    %2263 = vmatpush1.msra.mxu0 %v107
    %2264 = vmatprep.subr.mxu0 0.0
    %2265 = vmatpush1.msra.mxu0 %v108
    %2266 = vmatprep.subr.mxu0 0.0
    %2267 = vmatpush1.msra.mxu0 %v109
    %2268 = vmatprep.subr.mxu0 0.0
    %2269 = vmatpush1.msra.mxu0 %v110
    %2270 = vmatprep.subr.mxu0 0.0
    %2271 = vmatpush1.msra.mxu0 0.0
    %2272 = vmatprep.subr.mxu0 0.0
    %2273 = vmatpush1.msra.mxu0 0.0
    %2274 = vmatprep.subr.mxu0 0.0
    %2275 = vmatpush1.msra.mxu0 0.0
    %2276 = vmatprep.subr.mxu0 0.0
    %2277 = vmatpush1.msra.mxu0 0.0
    %2278 = vmatprep.subr.mxu0 0.0
    %2279 = vmatpush1.msra.mxu0 0.0
    %2280 = vmatprep.subr.mxu0 0.0
    %2281 = vmatpush1.msra.mxu0 0.0
    %2282 = vmatprep.subr.mxu0 0.0
    %2283 = vmatpush1.msra.mxu0 0.0
    %2284 = vmatprep.subr.mxu0 0.0
    %2285 = vmatpush1.msra.mxu0 0.0
    %2286 = vmatprep.subr.mxu0 0.0
    %2287 = vmatpush1.msra.mxu0 0.0
    %2288 = vmatprep.subr.mxu0 0.0
    %2289 = vmatpush1.msra.mxu0 0.0
    %2290 = vmatprep.subr.mxu0 0.0
    %2291 = vmatpush1.msra.mxu0 0.0
    %2292 = vmatprep.subr.mxu0 0.0
    %2293 = vmatpush1.msra.mxu0 0.0
    %2294 = vmatprep.subr.mxu0 0.0
    %2295 = vmatpush1.msra.mxu0 0.0
    %2296 = vmatprep.subr.mxu0 0.0
    %2297 = vmatpush1.msra.mxu0 0.0
    %2298 = vmatprep.subr.mxu0 0.0
    %2299 = vmatpush1.msra.mxu0 0.0
    %2300 = vmatprep.subr.mxu0 0.0
    %2301 = vmatpush1.msra.mxu0 0.0
    %2302 = vmatprep.subr.mxu0 0.0
    %2303 = vmatpush1.msra.mxu0 0.0
    %2304 = vmatprep.subr.mxu0 0.0
    %2305 = vmatpush1.msra.mxu0 0.0
    %2306 = vmatprep.subr.mxu0 0.0
    %2307 = vmatpush1.msra.mxu0 0.0
    %2308 = vmatprep.subr.mxu0 0.0
    %2309 = vmatpush1.msra.mxu0 0.0
    %2310 = vmatprep.subr.mxu0 0.0
    %2311 = vmatpush1.msra.mxu0 0.0
    %2312 = vmatprep.subr.mxu0 0.0
    %2313 = vmatpush1.msra.mxu0 0.0
    %2314 = vmatprep.subr.mxu0 0.0
    %2315 = vmatpush1.msra.mxu0 0.0
    %2316 = vmatprep.subr.mxu0 0.0
    %2317 = vmatpush1.msra.mxu0 0.0
    %2318 = vmatprep.subr.mxu0 0.0
    %2319 = vmatpush1.msra.mxu0 0.0
    %2320 = vmatprep.subr.mxu0 0.0
    %2321 = vmatpush1.msra.mxu0 0.0
    %2322 = vmatprep.subr.mxu0 0.0
    %2323 = vmatpush1.msra.mxu0 0.0
    %2324 = vmatprep.subr.mxu0 0.0
    %2325 = vmatpush1.msra.mxu0 0.0
    %2326 = vmatprep.mubr.f32.mxu0 0.0
    %2327 = vmatmul.mubr.f32.gmra.mrb[0].mxu0 %v2050
    %v2328 = vpop.f32.mrb[0].mxu0
    %v2329 = vadd.f32 %v201, %v2328
    %v2330 = vpop.f32.mrb[0].mxu0
    %2331 = vdwg.mxu0
    %2332 = vmatprep.subr.mxu0 0.0
    %2333 = vmatpush1.msra.mxu0 %v112
    %2334 = vmatprep.subr.mxu0 0.0
    %2335 = vmatpush1.msra.mxu0 %v113
    %2336 = vmatprep.subr.mxu0 0.0
    %2337 = vmatpush1.msra.mxu0 %v114
    %2338 = vmatprep.subr.mxu0 0.0
    %2339 = vmatpush1.msra.mxu0 %v115
    %2340 = vmatprep.subr.mxu0 0.0
    %2341 = vmatpush1.msra.mxu0 0.0
    %2342 = vmatprep.subr.mxu0 0.0
    %2343 = vmatpush1.msra.mxu0 0.0
    %2344 = vmatprep.subr.mxu0 0.0
    %2345 = vmatpush1.msra.mxu0 0.0
    %2346 = vmatprep.subr.mxu0 0.0
    %2347 = vmatpush1.msra.mxu0 0.0
    %2348 = vmatprep.subr.mxu0 0.0
    %2349 = vmatpush1.msra.mxu0 0.0
    %2350 = vmatprep.subr.mxu0 0.0
    %2351 = vmatpush1.msra.mxu0 0.0
    %2352 = vmatprep.subr.mxu0 0.0
    %2353 = vmatpush1.msra.mxu0 0.0
    %2354 = vmatprep.subr.mxu0 0.0
    %2355 = vmatpush1.msra.mxu0 0.0
    %2356 = vmatprep.subr.mxu0 0.0
    %2357 = vmatpush1.msra.mxu0 0.0
    %2358 = vmatprep.subr.mxu0 0.0
    %2359 = vmatpush1.msra.mxu0 0.0
    %2360 = vmatprep.subr.mxu0 0.0
    %2361 = vmatpush1.msra.mxu0 0.0
    %2362 = vmatprep.subr.mxu0 0.0
    %2363 = vmatpush1.msra.mxu0 0.0
    %2364 = vmatprep.subr.mxu0 0.0
    %2365 = vmatpush1.msra.mxu0 0.0
    %2366 = vmatprep.subr.mxu0 0.0
    %2367 = vmatpush1.msra.mxu0 0.0
    %2368 = vmatprep.subr.mxu0 0.0
    %2369 = vmatpush1.msra.mxu0 0.0
    %2370 = vmatprep.subr.mxu0 0.0
    %2371 = vmatpush1.msra.mxu0 0.0
    %2372 = vmatprep.subr.mxu0 0.0
    %2373 = vmatpush1.msra.mxu0 0.0
    %2374 = vmatprep.subr.mxu0 0.0
    %2375 = vmatpush1.msra.mxu0 0.0
    %2376 = vmatprep.subr.mxu0 0.0
    %2377 = vmatpush1.msra.mxu0 0.0
    %2378 = vmatprep.subr.mxu0 0.0
    %2379 = vmatpush1.msra.mxu0 0.0
    %2380 = vmatprep.subr.mxu0 0.0
    %2381 = vmatpush1.msra.mxu0 0.0
    %2382 = vmatprep.subr.mxu0 0.0
    %2383 = vmatpush1.msra.mxu0 0.0
    %2384 = vmatprep.subr.mxu0 0.0
    %2385 = vmatpush1.msra.mxu0 0.0
    %2386 = vmatprep.subr.mxu0 0.0
    %2387 = vmatpush1.msra.mxu0 0.0
    %2388 = vmatprep.subr.mxu0 0.0
    %2389 = vmatpush1.msra.mxu0 0.0
    %2390 = vmatprep.subr.mxu0 0.0
    %2391 = vmatpush1.msra.mxu0 0.0
    %2392 = vmatprep.subr.mxu0 0.0
    %2393 = vmatpush1.msra.mxu0 0.0
    %2394 = vmatprep.subr.mxu0 0.0
    %2395 = vmatpush1.msra.mxu0 0.0
    %2396 = vmatprep.mubr.f32.mxu0 0.0
    %2397 = vmatmul.mubr.f32.gmra.mrb[0].mxu0 %v2050
    %v2398 = vpop.f32.mrb[0].mxu0
    %v2399 = vadd.f32 %v496, %v2398
    %v2400 = vpop.f32.mrb[0].mxu0
    %2401 = vdwg.mxu0
    %2402 = vmatprep.subr.mxu0 0.0
    %2403 = vmatpush1.msra.mxu0 %v116
    %2404 = vmatprep.subr.mxu0 0.0
    %2405 = vmatpush1.msra.mxu0 %v117
    %2406 = vmatprep.subr.mxu0 0.0
    %2407 = vmatpush1.msra.mxu0 %v118
    %2408 = vmatprep.subr.mxu0 0.0
    %2409 = vmatpush1.msra.mxu0 %v119
    %2410 = vmatprep.subr.mxu0 0.0
    %2411 = vmatpush1.msra.mxu0 0.0
    %2412 = vmatprep.subr.mxu0 0.0
    %2413 = vmatpush1.msra.mxu0 0.0
    %2414 = vmatprep.subr.mxu0 0.0
    %2415 = vmatpush1.msra.mxu0 0.0
    %2416 = vmatprep.subr.mxu0 0.0
    %2417 = vmatpush1.msra.mxu0 0.0
    %2418 = vmatprep.subr.mxu0 0.0
    %2419 = vmatpush1.msra.mxu0 0.0
    %2420 = vmatprep.subr.mxu0 0.0
    %2421 = vmatpush1.msra.mxu0 0.0
    %2422 = vmatprep.subr.mxu0 0.0
    %2423 = vmatpush1.msra.mxu0 0.0
    %2424 = vmatprep.subr.mxu0 0.0
    %2425 = vmatpush1.msra.mxu0 0.0
    %2426 = vmatprep.subr.mxu0 0.0
    %2427 = vmatpush1.msra.mxu0 0.0
    %2428 = vmatprep.subr.mxu0 0.0
    %2429 = vmatpush1.msra.mxu0 0.0
    %2430 = vmatprep.subr.mxu0 0.0
    %2431 = vmatpush1.msra.mxu0 0.0
    %2432 = vmatprep.subr.mxu0 0.0
    %2433 = vmatpush1.msra.mxu0 0.0
    %2434 = vmatprep.subr.mxu0 0.0
    %2435 = vmatpush1.msra.mxu0 0.0
    %2436 = vmatprep.subr.mxu0 0.0
    %2437 = vmatpush1.msra.mxu0 0.0
    %2438 = vmatprep.subr.mxu0 0.0
    %2439 = vmatpush1.msra.mxu0 0.0
    %2440 = vmatprep.subr.mxu0 0.0
    %2441 = vmatpush1.msra.mxu0 0.0
    %2442 = vmatprep.subr.mxu0 0.0
    %2443 = vmatpush1.msra.mxu0 0.0
    %2444 = vmatprep.subr.mxu0 0.0
    %2445 = vmatpush1.msra.mxu0 0.0
    %2446 = vmatprep.subr.mxu0 0.0
    %2447 = vmatpush1.msra.mxu0 0.0
    %2448 = vmatprep.subr.mxu0 0.0
    %2449 = vmatpush1.msra.mxu0 0.0
    %2450 = vmatprep.subr.mxu0 0.0
    %2451 = vmatpush1.msra.mxu0 0.0
    %2452 = vmatprep.subr.mxu0 0.0
    %2453 = vmatpush1.msra.mxu0 0.0
    %2454 = vmatprep.subr.mxu0 0.0
    %2455 = vmatpush1.msra.mxu0 0.0
    %2456 = vmatprep.subr.mxu0 0.0
    %2457 = vmatpush1.msra.mxu0 0.0
    %2458 = vmatprep.subr.mxu0 0.0
    %2459 = vmatpush1.msra.mxu0 0.0
    %2460 = vmatprep.subr.mxu0 0.0
    %2461 = vmatpush1.msra.mxu0 0.0
    %2462 = vmatprep.subr.mxu0 0.0
    %2463 = vmatpush1.msra.mxu0 0.0
    %2464 = vmatprep.subr.mxu0 0.0
    %2465 = vmatpush1.msra.mxu0 0.0
    %2466 = vmatprep.mubr.f32.mxu0 0.0
    %2467 = vmatmul.mubr.f32.gmra.mrb[0].mxu0 %v2050
    %v2468 = vpop.f32.mrb[0].mxu0
    %v2469 = vadd.f32 %v500, %v2468
    %v2470 = vpop.f32.mrb[0].mxu0
    %2471 = vdwg.mxu0
    %2472 = vmatprep.subr.mxu0 0.0
    %2473 = vmatpush1.msra.mxu0 %v120
    %2474 = vmatprep.subr.mxu0 0.0
    %2475 = vmatpush1.msra.mxu0 %v121
    %2476 = vmatprep.subr.mxu0 0.0
    %2477 = vmatpush1.msra.mxu0 %v122
    %2478 = vmatprep.subr.mxu0 0.0
    %2479 = vmatpush1.msra.mxu0 %v123
    %2480 = vmatprep.subr.mxu0 0.0
    %2481 = vmatpush1.msra.mxu0 0.0
    %2482 = vmatprep.subr.mxu0 0.0
    %2483 = vmatpush1.msra.mxu0 0.0
    %2484 = vmatprep.subr.mxu0 0.0
    %2485 = vmatpush1.msra.mxu0 0.0
    %2486 = vmatprep.subr.mxu0 0.0
    %2487 = vmatpush1.msra.mxu0 0.0
    %2488 = vmatprep.subr.mxu0 0.0
    %2489 = vmatpush1.msra.mxu0 0.0
    %2490 = vmatprep.subr.mxu0 0.0
    %2491 = vmatpush1.msra.mxu0 0.0
    %2492 = vmatprep.subr.mxu0 0.0
    %2493 = vmatpush1.msra.mxu0 0.0
    %2494 = vmatprep.subr.mxu0 0.0
    %2495 = vmatpush1.msra.mxu0 0.0
    %2496 = vmatprep.subr.mxu0 0.0
    %2497 = vmatpush1.msra.mxu0 0.0
    %2498 = vmatprep.subr.mxu0 0.0
    %2499 = vmatpush1.msra.mxu0 0.0
    %2500 = vmatprep.subr.mxu0 0.0
    %2501 = vmatpush1.msra.mxu0 0.0
    %2502 = vmatprep.subr.mxu0 0.0
    %2503 = vmatpush1.msra.mxu0 0.0
    %2504 = vmatprep.subr.mxu0 0.0
    %2505 = vmatpush1.msra.mxu0 0.0
    %2506 = vmatprep.subr.mxu0 0.0
    %2507 = vmatpush1.msra.mxu0 0.0
    %2508 = vmatprep.subr.mxu0 0.0
    %2509 = vmatpush1.msra.mxu0 0.0
    %2510 = vmatprep.subr.mxu0 0.0
    %2511 = vmatpush1.msra.mxu0 0.0
    %2512 = vmatprep.subr.mxu0 0.0
    %2513 = vmatpush1.msra.mxu0 0.0
    %2514 = vmatprep.subr.mxu0 0.0
    %2515 = vmatpush1.msra.mxu0 0.0
    %2516 = vmatprep.subr.mxu0 0.0
    %2517 = vmatpush1.msra.mxu0 0.0
    %2518 = vmatprep.subr.mxu0 0.0
    %2519 = vmatpush1.msra.mxu0 0.0
    %2520 = vmatprep.subr.mxu0 0.0
    %2521 = vmatpush1.msra.mxu0 0.0
    %2522 = vmatprep.subr.mxu0 0.0
    %2523 = vmatpush1.msra.mxu0 0.0
    %2524 = vmatprep.subr.mxu0 0.0
    %2525 = vmatpush1.msra.mxu0 0.0
    %2526 = vmatprep.subr.mxu0 0.0
    %2527 = vmatpush1.msra.mxu0 0.0
    %2528 = vmatprep.subr.mxu0 0.0
    %2529 = vmatpush1.msra.mxu0 0.0
    %2530 = vmatprep.subr.mxu0 0.0
    %2531 = vmatpush1.msra.mxu0 0.0
    %2532 = vmatprep.subr.mxu0 0.0
    %2533 = vmatpush1.msra.mxu0 0.0
    %2534 = vmatprep.subr.mxu0 0.0
    %2535 = vmatpush1.msra.mxu0 0.0
    %2536 = vmatprep.mubr.f32.mxu0 0.0
    %2537 = vmatmul.mubr.f32.gmra.mrb[0].mxu0 %v2050
    %v2538 = vpop.f32.mrb[0].mxu0
    %v2539 = vadd.f32 %v504, %v2538
    %v2540 = vpop.f32.mrb[0].mxu0
    %2541 = vdwg.mxu0
    %2542 = vmatprep.subr.mxu0 0.0
    %2543 = vmatpush1.msra.mxu0 %v124
    %2544 = vmatprep.subr.mxu0 0.0
    %2545 = vmatpush1.msra.mxu0 %v125
    %2546 = vmatprep.subr.mxu0 0.0
    %2547 = vmatpush1.msra.mxu0 %v126
    %2548 = vmatprep.subr.mxu0 0.0
    %2549 = vmatpush1.msra.mxu0 %v127
    %2550 = vmatprep.subr.mxu0 0.0
    %2551 = vmatpush1.msra.mxu0 0.0
    %2552 = vmatprep.subr.mxu0 0.0
    %2553 = vmatpush1.msra.mxu0 0.0
    %2554 = vmatprep.subr.mxu0 0.0
    %2555 = vmatpush1.msra.mxu0 0.0
    %2556 = vmatprep.subr.mxu0 0.0
    %2557 = vmatpush1.msra.mxu0 0.0
    %2558 = vmatprep.subr.mxu0 0.0
    %2559 = vmatpush1.msra.mxu0 0.0
    %2560 = vmatprep.subr.mxu0 0.0
    %2561 = vmatpush1.msra.mxu0 0.0
    %2562 = vmatprep.subr.mxu0 0.0
    %2563 = vmatpush1.msra.mxu0 0.0
    %2564 = vmatprep.subr.mxu0 0.0
    %2565 = vmatpush1.msra.mxu0 0.0
    %2566 = vmatprep.subr.mxu0 0.0
    %2567 = vmatpush1.msra.mxu0 0.0
    %2568 = vmatprep.subr.mxu0 0.0
    %2569 = vmatpush1.msra.mxu0 0.0
    %2570 = vmatprep.subr.mxu0 0.0
    %2571 = vmatpush1.msra.mxu0 0.0
    %2572 = vmatprep.subr.mxu0 0.0
    %2573 = vmatpush1.msra.mxu0 0.0
    %2574 = vmatprep.subr.mxu0 0.0
    %2575 = vmatpush1.msra.mxu0 0.0
    %2576 = vmatprep.subr.mxu0 0.0
    %2577 = vmatpush1.msra.mxu0 0.0
    %2578 = vmatprep.subr.mxu0 0.0
    %2579 = vmatpush1.msra.mxu0 0.0
    %2580 = vmatprep.subr.mxu0 0.0
    %2581 = vmatpush1.msra.mxu0 0.0
    %2582 = vmatprep.subr.mxu0 0.0
    %2583 = vmatpush1.msra.mxu0 0.0
    %2584 = vmatprep.subr.mxu0 0.0
    %2585 = vmatpush1.msra.mxu0 0.0
    %2586 = vmatprep.subr.mxu0 0.0
    %2587 = vmatpush1.msra.mxu0 0.0
    %2588 = vmatprep.subr.mxu0 0.0
    %2589 = vmatpush1.msra.mxu0 0.0
    %2590 = vmatprep.subr.mxu0 0.0
    %2591 = vmatpush1.msra.mxu0 0.0
    %2592 = vmatprep.subr.mxu0 0.0
    %2593 = vmatpush1.msra.mxu0 0.0
    %2594 = vmatprep.subr.mxu0 0.0
    %2595 = vmatpush1.msra.mxu0 0.0
    %2596 = vmatprep.subr.mxu0 0.0
    %2597 = vmatpush1.msra.mxu0 0.0
    %2598 = vmatprep.subr.mxu0 0.0
    %2599 = vmatpush1.msra.mxu0 0.0
    %2600 = vmatprep.subr.mxu0 0.0
    %2601 = vmatpush1.msra.mxu0 0.0
    %2602 = vmatprep.subr.mxu0 0.0
    %2603 = vmatpush1.msra.mxu0 0.0
    %2604 = vmatprep.subr.mxu0 0.0
    %2605 = vmatpush1.msra.mxu0 0.0
    %2606 = vmatprep.mubr.f32.mxu0 0.0
    %2607 = vmatmul.mubr.f32.gmra.mrb[0].mxu0 %v2050
    %v2608 = vpop.f32.mrb[0].mxu0
    %v2609 = vadd.f32 %v508, %v2608
    %v2610 = vpop.f32.mrb[0].mxu0
    %2611 = vdwg.mxu0
    %2612 = vmatprep.subr.mxu0 0.0
    %2613 = vmatpush1.msra.mxu0 %v129
    %2614 = vmatprep.subr.mxu0 0.0
    %2615 = vmatpush1.msra.mxu0 %v130
    %2616 = vmatprep.subr.mxu0 0.0
    %2617 = vmatpush1.msra.mxu0 %v131
    %2618 = vmatprep.subr.mxu0 0.0
    %2619 = vmatpush1.msra.mxu0 %v132
    %2620 = vmatprep.subr.mxu0 0.0
    %2621 = vmatpush1.msra.mxu0 0.0
    %2622 = vmatprep.subr.mxu0 0.0
    %2623 = vmatpush1.msra.mxu0 0.0
    %2624 = vmatprep.subr.mxu0 0.0
    %2625 = vmatpush1.msra.mxu0 0.0
    %2626 = vmatprep.subr.mxu0 0.0
    %2627 = vmatpush1.msra.mxu0 0.0
    %2628 = vmatprep.subr.mxu0 0.0
    %2629 = vmatpush1.msra.mxu0 0.0
    %2630 = vmatprep.subr.mxu0 0.0
    %2631 = vmatpush1.msra.mxu0 0.0
    %2632 = vmatprep.subr.mxu0 0.0
    %2633 = vmatpush1.msra.mxu0 0.0
    %2634 = vmatprep.subr.mxu0 0.0
    %2635 = vmatpush1.msra.mxu0 0.0
    %2636 = vmatprep.subr.mxu0 0.0
    %2637 = vmatpush1.msra.mxu0 0.0
    %2638 = vmatprep.subr.mxu0 0.0
    %2639 = vmatpush1.msra.mxu0 0.0
    %2640 = vmatprep.subr.mxu0 0.0
    %2641 = vmatpush1.msra.mxu0 0.0
    %2642 = vmatprep.subr.mxu0 0.0
    %2643 = vmatpush1.msra.mxu0 0.0
    %2644 = vmatprep.subr.mxu0 0.0
    %2645 = vmatpush1.msra.mxu0 0.0
    %2646 = vmatprep.subr.mxu0 0.0
    %2647 = vmatpush1.msra.mxu0 0.0
    %2648 = vmatprep.subr.mxu0 0.0
    %2649 = vmatpush1.msra.mxu0 0.0
    %2650 = vmatprep.subr.mxu0 0.0
    %2651 = vmatpush1.msra.mxu0 0.0
    %2652 = vmatprep.subr.mxu0 0.0
    %2653 = vmatpush1.msra.mxu0 0.0
    %2654 = vmatprep.subr.mxu0 0.0
    %2655 = vmatpush1.msra.mxu0 0.0
    %2656 = vmatprep.subr.mxu0 0.0
    %2657 = vmatpush1.msra.mxu0 0.0
    %2658 = vmatprep.subr.mxu0 0.0
    %2659 = vmatpush1.msra.mxu0 0.0
    %2660 = vmatprep.subr.mxu0 0.0
    %2661 = vmatpush1.msra.mxu0 0.0
    %2662 = vmatprep.subr.mxu0 0.0
    %2663 = vmatpush1.msra.mxu0 0.0
    %2664 = vmatprep.subr.mxu0 0.0
    %2665 = vmatpush1.msra.mxu0 0.0
    %2666 = vmatprep.subr.mxu0 0.0
    %2667 = vmatpush1.msra.mxu0 0.0
    %2668 = vmatprep.subr.mxu0 0.0
    %2669 = vmatpush1.msra.mxu0 0.0
    %2670 = vmatprep.subr.mxu0 0.0
    %2671 = vmatpush1.msra.mxu0 0.0
    %2672 = vmatprep.subr.mxu0 0.0
    %2673 = vmatpush1.msra.mxu0 0.0
    %2674 = vmatprep.subr.mxu0 0.0
    %2675 = vmatpush1.msra.mxu0 0.0
    %2676 = vmatprep.mubr.f32.mxu0 0.0
    %2677 = vmatmul.mubr.f32.gmra.mrb[0].mxu0 %v2050
    %v2678 = vpop.f32.mrb[0].mxu0
    %v2679 = vadd.f32 %v800, %v2678
    %v2680 = vpop.f32.mrb[0].mxu0
    %2681 = vdwg.mxu0
    %2682 = vmatprep.subr.mxu0 0.0
    %2683 = vmatpush1.msra.mxu0 %v133
    %2684 = vmatprep.subr.mxu0 0.0
    %2685 = vmatpush1.msra.mxu0 %v134
    %2686 = vmatprep.subr.mxu0 0.0
    %2687 = vmatpush1.msra.mxu0 %v135
    %2688 = vmatprep.subr.mxu0 0.0
    %2689 = vmatpush1.msra.mxu0 %v136
    %2690 = vmatprep.subr.mxu0 0.0
    %2691 = vmatpush1.msra.mxu0 0.0
    %2692 = vmatprep.subr.mxu0 0.0
    %2693 = vmatpush1.msra.mxu0 0.0
    %2694 = vmatprep.subr.mxu0 0.0
    %2695 = vmatpush1.msra.mxu0 0.0
    %2696 = vmatprep.subr.mxu0 0.0
    %2697 = vmatpush1.msra.mxu0 0.0
    %2698 = vmatprep.subr.mxu0 0.0
    %2699 = vmatpush1.msra.mxu0 0.0
    %2700 = vmatprep.subr.mxu0 0.0
    %2701 = vmatpush1.msra.mxu0 0.0
    %2702 = vmatprep.subr.mxu0 0.0
    %2703 = vmatpush1.msra.mxu0 0.0
    %2704 = vmatprep.subr.mxu0 0.0
    %2705 = vmatpush1.msra.mxu0 0.0
    %2706 = vmatprep.subr.mxu0 0.0
    %2707 = vmatpush1.msra.mxu0 0.0
    %2708 = vmatprep.subr.mxu0 0.0
    %2709 = vmatpush1.msra.mxu0 0.0
    %2710 = vmatprep.subr.mxu0 0.0
    %2711 = vmatpush1.msra.mxu0 0.0
    %2712 = vmatprep.subr.mxu0 0.0
    %2713 = vmatpush1.msra.mxu0 0.0
    %2714 = vmatprep.subr.mxu0 0.0
    %2715 = vmatpush1.msra.mxu0 0.0
    %2716 = vmatprep.subr.mxu0 0.0
    %2717 = vmatpush1.msra.mxu0 0.0
    %2718 = vmatprep.subr.mxu0 0.0
    %2719 = vmatpush1.msra.mxu0 0.0
    %2720 = vmatprep.subr.mxu0 0.0
    %2721 = vmatpush1.msra.mxu0 0.0
    %2722 = vmatprep.subr.mxu0 0.0
    %2723 = vmatpush1.msra.mxu0 0.0
    %2724 = vmatprep.subr.mxu0 0.0
    %2725 = vmatpush1.msra.mxu0 0.0
    %2726 = vmatprep.subr.mxu0 0.0
    %2727 = vmatpush1.msra.mxu0 0.0
    %2728 = vmatprep.subr.mxu0 0.0
    %2729 = vmatpush1.msra.mxu0 0.0
    %2730 = vmatprep.subr.mxu0 0.0
    %2731 = vmatpush1.msra.mxu0 0.0
    %2732 = vmatprep.subr.mxu0 0.0
    %2733 = vmatpush1.msra.mxu0 0.0
    %2734 = vmatprep.subr.mxu0 0.0
    %2735 = vmatpush1.msra.mxu0 0.0
    %2736 = vmatprep.subr.mxu0 0.0
    %2737 = vmatpush1.msra.mxu0 0.0
    %2738 = vmatprep.subr.mxu0 0.0
    %2739 = vmatpush1.msra.mxu0 0.0
    %2740 = vmatprep.subr.mxu0 0.0
    %2741 = vmatpush1.msra.mxu0 0.0
    %2742 = vmatprep.subr.mxu0 0.0
    %2743 = vmatpush1.msra.mxu0 0.0
    %2744 = vmatprep.subr.mxu0 0.0
    %2745 = vmatpush1.msra.mxu0 0.0
    %2746 = vmatprep.mubr.f32.mxu0 0.0
    %2747 = vmatmul.mubr.f32.gmra.mrb[0].mxu0 %v2050
    %v2748 = vpop.f32.mrb[0].mxu0
    %v2749 = vadd.f32 %v804, %v2748
    %v2750 = vpop.f32.mrb[0].mxu0
    %2751 = vdwg.mxu0
    %2752 = vmatprep.subr.mxu0 0.0
    %2753 = vmatpush1.msra.mxu0 %v137
    %2754 = vmatprep.subr.mxu0 0.0
    %2755 = vmatpush1.msra.mxu0 %v138
    %2756 = vmatprep.subr.mxu0 0.0
    %2757 = vmatpush1.msra.mxu0 %v139
    %2758 = vmatprep.subr.mxu0 0.0
    %2759 = vmatpush1.msra.mxu0 %v140
    %2760 = vmatprep.subr.mxu0 0.0
    %2761 = vmatpush1.msra.mxu0 0.0
    %2762 = vmatprep.subr.mxu0 0.0
    %2763 = vmatpush1.msra.mxu0 0.0
    %2764 = vmatprep.subr.mxu0 0.0
    %2765 = vmatpush1.msra.mxu0 0.0
    %2766 = vmatprep.subr.mxu0 0.0
    %2767 = vmatpush1.msra.mxu0 0.0
    %2768 = vmatprep.subr.mxu0 0.0
    %2769 = vmatpush1.msra.mxu0 0.0
    %2770 = vmatprep.subr.mxu0 0.0
    %2771 = vmatpush1.msra.mxu0 0.0
    %2772 = vmatprep.subr.mxu0 0.0
    %2773 = vmatpush1.msra.mxu0 0.0
    %2774 = vmatprep.subr.mxu0 0.0
    %2775 = vmatpush1.msra.mxu0 0.0
    %2776 = vmatprep.subr.mxu0 0.0
    %2777 = vmatpush1.msra.mxu0 0.0
    %2778 = vmatprep.subr.mxu0 0.0
    %2779 = vmatpush1.msra.mxu0 0.0
    %2780 = vmatprep.subr.mxu0 0.0
    %2781 = vmatpush1.msra.mxu0 0.0
    %2782 = vmatprep.subr.mxu0 0.0
    %2783 = vmatpush1.msra.mxu0 0.0
    %2784 = vmatprep.subr.mxu0 0.0
    %2785 = vmatpush1.msra.mxu0 0.0
    %2786 = vmatprep.subr.mxu0 0.0
    %2787 = vmatpush1.msra.mxu0 0.0
    %2788 = vmatprep.subr.mxu0 0.0
    %2789 = vmatpush1.msra.mxu0 0.0
    %2790 = vmatprep.subr.mxu0 0.0
    %2791 = vmatpush1.msra.mxu0 0.0
    %2792 = vmatprep.subr.mxu0 0.0
    %2793 = vmatpush1.msra.mxu0 0.0
    %2794 = vmatprep.subr.mxu0 0.0
    %2795 = vmatpush1.msra.mxu0 0.0
    %2796 = vmatprep.subr.mxu0 0.0
    %2797 = vmatpush1.msra.mxu0 0.0
    %2798 = vmatprep.subr.mxu0 0.0
    %2799 = vmatpush1.msra.mxu0 0.0
    %2800 = vmatprep.subr.mxu0 0.0
    %2801 = vmatpush1.msra.mxu0 0.0
    %2802 = vmatprep.subr.mxu0 0.0
    %2803 = vmatpush1.msra.mxu0 0.0
    %2804 = vmatprep.subr.mxu0 0.0
    %2805 = vmatpush1.msra.mxu0 0.0
    %2806 = vmatprep.subr.mxu0 0.0
    %2807 = vmatpush1.msra.mxu0 0.0
    %2808 = vmatprep.subr.mxu0 0.0
    %2809 = vmatpush1.msra.mxu0 0.0
    %2810 = vmatprep.subr.mxu0 0.0
    %2811 = vmatpush1.msra.mxu0 0.0
    %2812 = vmatprep.subr.mxu0 0.0
    %2813 = vmatpush1.msra.mxu0 0.0
    %2814 = vmatprep.subr.mxu0 0.0
    %2815 = vmatpush1.msra.mxu0 0.0
    %2816 = vmatprep.mubr.f32.mxu0 0.0
    %2817 = vmatmul.mubr.f32.gmra.mrb[0].mxu0 %v2050
    %v2818 = vpop.f32.mrb[0].mxu0
    %v2819 = vadd.f32 %v808, %v2818
    %v2820 = vpop.f32.mrb[0].mxu0
    %2821 = vdwg.mxu0
    %2822 = vmatprep.subr.mxu0 0.0
    %2823 = vmatpush1.msra.mxu0 %v141
    %2824 = vmatprep.subr.mxu0 0.0
    %2825 = vmatpush1.msra.mxu0 %v142
    %2826 = vmatprep.subr.mxu0 0.0
    %2827 = vmatpush1.msra.mxu0 %v143
    %2828 = vmatprep.subr.mxu0 0.0
    %2829 = vmatpush1.msra.mxu0 %v144
    %2830 = vmatprep.subr.mxu0 0.0
    %2831 = vmatpush1.msra.mxu0 0.0
    %2832 = vmatprep.subr.mxu0 0.0
    %2833 = vmatpush1.msra.mxu0 0.0
    %2834 = vmatprep.subr.mxu0 0.0
    %2835 = vmatpush1.msra.mxu0 0.0
    %2836 = vmatprep.subr.mxu0 0.0
    %2837 = vmatpush1.msra.mxu0 0.0
    %2838 = vmatprep.subr.mxu0 0.0
    %2839 = vmatpush1.msra.mxu0 0.0
    %2840 = vmatprep.subr.mxu0 0.0
    %2841 = vmatpush1.msra.mxu0 0.0
    %2842 = vmatprep.subr.mxu0 0.0
    %2843 = vmatpush1.msra.mxu0 0.0
    %2844 = vmatprep.subr.mxu0 0.0
    %2845 = vmatpush1.msra.mxu0 0.0
    %2846 = vmatprep.subr.mxu0 0.0
    %2847 = vmatpush1.msra.mxu0 0.0
    %2848 = vmatprep.subr.mxu0 0.0
    %2849 = vmatpush1.msra.mxu0 0.0
    %2850 = vmatprep.subr.mxu0 0.0
    %2851 = vmatpush1.msra.mxu0 0.0
    %2852 = vmatprep.subr.mxu0 0.0
    %2853 = vmatpush1.msra.mxu0 0.0
    %2854 = vmatprep.subr.mxu0 0.0
    %2855 = vmatpush1.msra.mxu0 0.0
    %2856 = vmatprep.subr.mxu0 0.0
    %2857 = vmatpush1.msra.mxu0 0.0
    %2858 = vmatprep.subr.mxu0 0.0
    %2859 = vmatpush1.msra.mxu0 0.0
    %2860 = vmatprep.subr.mxu0 0.0
    %2861 = vmatpush1.msra.mxu0 0.0
    %2862 = vmatprep.subr.mxu0 0.0
    %2863 = vmatpush1.msra.mxu0 0.0
    %2864 = vmatprep.subr.mxu0 0.0
    %2865 = vmatpush1.msra.mxu0 0.0
    %2866 = vmatprep.subr.mxu0 0.0
    %2867 = vmatpush1.msra.mxu0 0.0
    %2868 = vmatprep.subr.mxu0 0.0
    %2869 = vmatpush1.msra.mxu0 0.0
    %2870 = vmatprep.subr.mxu0 0.0
    %2871 = vmatpush1.msra.mxu0 0.0
    %2872 = vmatprep.subr.mxu0 0.0
    %2873 = vmatpush1.msra.mxu0 0.0
    %2874 = vmatprep.subr.mxu0 0.0
    %2875 = vmatpush1.msra.mxu0 0.0
    %2876 = vmatprep.subr.mxu0 0.0
    %2877 = vmatpush1.msra.mxu0 0.0
    %2878 = vmatprep.subr.mxu0 0.0
    %2879 = vmatpush1.msra.mxu0 0.0
    %2880 = vmatprep.subr.mxu0 0.0
    %2881 = vmatpush1.msra.mxu0 0.0
    %2882 = vmatprep.subr.mxu0 0.0
    %2883 = vmatpush1.msra.mxu0 0.0
    %2884 = vmatprep.subr.mxu0 0.0
    %2885 = vmatpush1.msra.mxu0 0.0
    %2886 = vmatprep.mubr.f32.mxu0 0.0
    %2887 = vmatmul.mubr.f32.gmra.mrb[0].mxu0 %v2050
    %v2888 = vpop.f32.mrb[0].mxu0
    %v2889 = vadd.f32 %v812, %v2888
    %v2890 = vpop.f32.mrb[0].mxu0
    %2891 = vdwg.mxu0
    %v2893 = vsel %vm1097, %v2119, 0
    %v2896 = vsel %vm1097, %v2399, 0
    %2898 = vmatprep.subr.mxu0 0.0
    %2899 = vmatpush1.xpose.msra.mxu0 %v2896
    %2900 = vmatprep.subr.mxu0 0.0
    %2901 = vmatpush1.xpose.msra.mxu0 0.0
    %2902 = vmatprep.subr.mxu0 0.0
    %2903 = vmatpush1.xpose.msra.mxu0 0.0
    %2904 = vmatprep.subr.mxu0 0.0
    %2905 = vmatpush1.xpose.msra.mxu0 0.0
    %2906 = vmatprep.subr.mxu0 0.0
    %2907 = vmatpush1.xpose.msra.mxu0 0.0
    %2908 = vmatprep.subr.mxu0 0.0
    %2909 = vmatpush1.xpose.msra.mxu0 0.0
    %2910 = vmatprep.subr.mxu0 0.0
    %2911 = vmatpush1.xpose.msra.mxu0 0.0
    %2912 = vmatprep.subr.mxu0 0.0
    %2913 = vmatpush1.xpose.msra.mxu0 0.0
    %2914 = vmatprep.subr.mxu0 0.0
    %2915 = vmatpush1.xpose.msra.mxu0 0.0
    %2916 = vmatprep.subr.mxu0 0.0
    %2917 = vmatpush1.xpose.msra.mxu0 0.0
    %2918 = vmatprep.subr.mxu0 0.0
    %2919 = vmatpush1.xpose.msra.mxu0 0.0
    %2920 = vmatprep.subr.mxu0 0.0
    %2921 = vmatpush1.xpose.msra.mxu0 0.0
    %2922 = vmatprep.subr.mxu0 0.0
    %2923 = vmatpush1.xpose.msra.mxu0 0.0
    %2924 = vmatprep.subr.mxu0 0.0
    %2925 = vmatpush1.xpose.msra.mxu0 0.0
    %2926 = vmatprep.subr.mxu0 0.0
    %2927 = vmatpush1.xpose.msra.mxu0 0.0
    %2928 = vmatprep.subr.mxu0 0.0
    %2929 = vmatpush1.xpose.msra.mxu0 0.0
    %2930 = vmatprep.subr.mxu0 0.0
    %2931 = vmatpush1.xpose.msra.mxu0 0.0
    %2932 = vmatprep.subr.mxu0 0.0
    %2933 = vmatpush1.xpose.msra.mxu0 0.0
    %2934 = vmatprep.subr.mxu0 0.0
    %2935 = vmatpush1.xpose.msra.mxu0 0.0
    %2936 = vmatprep.subr.mxu0 0.0
    %2937 = vmatpush1.xpose.msra.mxu0 0.0
    %2938 = vmatprep.subr.mxu0 0.0
    %2939 = vmatpush1.xpose.msra.mxu0 0.0
    %2940 = vmatprep.subr.mxu0 0.0
    %2941 = vmatpush1.xpose.msra.mxu0 0.0
    %2942 = vmatprep.subr.mxu0 0.0
    %2943 = vmatpush1.xpose.msra.mxu0 0.0
    %2944 = vmatprep.subr.mxu0 0.0
    %2945 = vmatpush1.xpose.msra.mxu0 0.0
    %2946 = vmatprep.subr.mxu0 0.0
    %2947 = vmatpush1.xpose.msra.mxu0 0.0
    %2948 = vmatprep.subr.mxu0 0.0
    %2949 = vmatpush1.xpose.msra.mxu0 0.0
    %2950 = vmatprep.subr.mxu0 0.0
    %2951 = vmatpush1.xpose.msra.mxu0 0.0
    %2952 = vmatprep.subr.mxu0 0.0
    %2953 = vmatpush1.xpose.msra.mxu0 0.0
    %2954 = vmatprep.subr.mxu0 0.0
    %2955 = vmatpush1.xpose.msra.mxu0 0.0
    %2956 = vmatprep.subr.mxu0 0.0
    %2957 = vmatpush1.xpose.msra.mxu0 0.0
    %2958 = vmatprep.subr.mxu0 0.0
    %2959 = vmatpush1.xpose.msra.mxu0 0.0
    %2960 = vmatprep.subr.mxu0 0.0
    %2961 = vmatpush1.xpose.msra.mxu0 0.0
    %2962 = vmatprep.mubr.f32.mxu0 0.0
    %2963 = vmatmul.mubr.f32.gmra.mrb[0].mxu0 %v2893
    %v2964 = vpop.f32.mrb[0].mxu0
    %v2965 = vadd.f32 0.0, %v2964
    %v2966 = vpop.f32.mrb[0].mxu0
    %2967 = vdwg.mxu0
    %v2969 = vsel %vm1097, %v2189, 0
    %v2972 = vsel %vm1097, %v2469, 0
    %2974 = vmatprep.subr.mxu0 0.0
    %2975 = vmatpush1.xpose.msra.mxu0 %v2972
    %2976 = vmatprep.subr.mxu0 0.0
    %2977 = vmatpush1.xpose.msra.mxu0 0.0
    %2978 = vmatprep.subr.mxu0 0.0
    %2979 = vmatpush1.xpose.msra.mxu0 0.0
    %2980 = vmatprep.subr.mxu0 0.0
    %2981 = vmatpush1.xpose.msra.mxu0 0.0
    %2982 = vmatprep.subr.mxu0 0.0
    %2983 = vmatpush1.xpose.msra.mxu0 0.0
    %2984 = vmatprep.subr.mxu0 0.0
    %2985 = vmatpush1.xpose.msra.mxu0 0.0
    %2986 = vmatprep.subr.mxu0 0.0
    %2987 = vmatpush1.xpose.msra.mxu0 0.0
    %2988 = vmatprep.subr.mxu0 0.0
    %2989 = vmatpush1.xpose.msra.mxu0 0.0
    %2990 = vmatprep.subr.mxu0 0.0
    %2991 = vmatpush1.xpose.msra.mxu0 0.0
    %2992 = vmatprep.subr.mxu0 0.0
    %2993 = vmatpush1.xpose.msra.mxu0 0.0
    %2994 = vmatprep.subr.mxu0 0.0
    %2995 = vmatpush1.xpose.msra.mxu0 0.0
    %2996 = vmatprep.subr.mxu0 0.0
    %2997 = vmatpush1.xpose.msra.mxu0 0.0
    %2998 = vmatprep.subr.mxu0 0.0
    %2999 = vmatpush1.xpose.msra.mxu0 0.0
    %3000 = vmatprep.subr.mxu0 0.0
    %3001 = vmatpush1.xpose.msra.mxu0 0.0
    %3002 = vmatprep.subr.mxu0 0.0
    %3003 = vmatpush1.xpose.msra.mxu0 0.0
    %3004 = vmatprep.subr.mxu0 0.0
    %3005 = vmatpush1.xpose.msra.mxu0 0.0
    %3006 = vmatprep.subr.mxu0 0.0
    %3007 = vmatpush1.xpose.msra.mxu0 0.0
    %3008 = vmatprep.subr.mxu0 0.0
    %3009 = vmatpush1.xpose.msra.mxu0 0.0
    %3010 = vmatprep.subr.mxu0 0.0
    %3011 = vmatpush1.xpose.msra.mxu0 0.0
    %3012 = vmatprep.subr.mxu0 0.0
    %3013 = vmatpush1.xpose.msra.mxu0 0.0
    %3014 = vmatprep.subr.mxu0 0.0
    %3015 = vmatpush1.xpose.msra.mxu0 0.0
    %3016 = vmatprep.subr.mxu0 0.0
    %3017 = vmatpush1.xpose.msra.mxu0 0.0
    %3018 = vmatprep.subr.mxu0 0.0
    %3019 = vmatpush1.xpose.msra.mxu0 0.0
    %3020 = vmatprep.subr.mxu0 0.0
    %3021 = vmatpush1.xpose.msra.mxu0 0.0
    %3022 = vmatprep.subr.mxu0 0.0
    %3023 = vmatpush1.xpose.msra.mxu0 0.0
    %3024 = vmatprep.subr.mxu0 0.0
    %3025 = vmatpush1.xpose.msra.mxu0 0.0
    %3026 = vmatprep.subr.mxu0 0.0
    %3027 = vmatpush1.xpose.msra.mxu0 0.0
    %3028 = vmatprep.subr.mxu0 0.0
    %3029 = vmatpush1.xpose.msra.mxu0 0.0
    %3030 = vmatprep.subr.mxu0 0.0
    %3031 = vmatpush1.xpose.msra.mxu0 0.0
    %3032 = vmatprep.subr.mxu0 0.0
    %3033 = vmatpush1.xpose.msra.mxu0 0.0
    %3034 = vmatprep.subr.mxu0 0.0
    %3035 = vmatpush1.xpose.msra.mxu0 0.0
    %3036 = vmatprep.subr.mxu0 0.0
    %3037 = vmatpush1.xpose.msra.mxu0 0.0
    %3038 = vmatprep.mubr.f32.mxu0 0.0
    %3039 = vmatmul.mubr.f32.gmra.mrb[0].mxu0 %v2969
    %v3040 = vpop.f32.mrb[0].mxu0
    %v3041 = vadd.f32 0.0, %v3040
    %v3042 = vpop.f32.mrb[0].mxu0
    %3043 = vdwg.mxu0
    %v3045 = vsel %vm1097, %v2259, 0
    %v3048 = vsel %vm1097, %v2539, 0
    %3050 = vmatprep.subr.mxu0 0.0
    %3051 = vmatpush1.xpose.msra.mxu0 %v3048
    %3052 = vmatprep.subr.mxu0 0.0
    %3053 = vmatpush1.xpose.msra.mxu0 0.0
    %3054 = vmatprep.subr.mxu0 0.0
    %3055 = vmatpush1.xpose.msra.mxu0 0.0
    %3056 = vmatprep.subr.mxu0 0.0
    %3057 = vmatpush1.xpose.msra.mxu0 0.0
    %3058 = vmatprep.subr.mxu0 0.0
    %3059 = vmatpush1.xpose.msra.mxu0 0.0
    %3060 = vmatprep.subr.mxu0 0.0
    %3061 = vmatpush1.xpose.msra.mxu0 0.0
    %3062 = vmatprep.subr.mxu0 0.0
    %3063 = vmatpush1.xpose.msra.mxu0 0.0
    %3064 = vmatprep.subr.mxu0 0.0
    %3065 = vmatpush1.xpose.msra.mxu0 0.0
    %3066 = vmatprep.subr.mxu0 0.0
    %3067 = vmatpush1.xpose.msra.mxu0 0.0
    %3068 = vmatprep.subr.mxu0 0.0
    %3069 = vmatpush1.xpose.msra.mxu0 0.0
    %3070 = vmatprep.subr.mxu0 0.0
    %3071 = vmatpush1.xpose.msra.mxu0 0.0
    %3072 = vmatprep.subr.mxu0 0.0
    %3073 = vmatpush1.xpose.msra.mxu0 0.0
    %3074 = vmatprep.subr.mxu0 0.0
    %3075 = vmatpush1.xpose.msra.mxu0 0.0
    %3076 = vmatprep.subr.mxu0 0.0
    %3077 = vmatpush1.xpose.msra.mxu0 0.0
    %3078 = vmatprep.subr.mxu0 0.0
    %3079 = vmatpush1.xpose.msra.mxu0 0.0
    %3080 = vmatprep.subr.mxu0 0.0
    %3081 = vmatpush1.xpose.msra.mxu0 0.0
    %3082 = vmatprep.subr.mxu0 0.0
    %3083 = vmatpush1.xpose.msra.mxu0 0.0
    %3084 = vmatprep.subr.mxu0 0.0
    %3085 = vmatpush1.xpose.msra.mxu0 0.0
    %3086 = vmatprep.subr.mxu0 0.0
    %3087 = vmatpush1.xpose.msra.mxu0 0.0
    %3088 = vmatprep.subr.mxu0 0.0
    %3089 = vmatpush1.xpose.msra.mxu0 0.0
    %3090 = vmatprep.subr.mxu0 0.0
    %3091 = vmatpush1.xpose.msra.mxu0 0.0
    %3092 = vmatprep.subr.mxu0 0.0
    %3093 = vmatpush1.xpose.msra.mxu0 0.0
    %3094 = vmatprep.subr.mxu0 0.0
    %3095 = vmatpush1.xpose.msra.mxu0 0.0
    %3096 = vmatprep.subr.mxu0 0.0
    %3097 = vmatpush1.xpose.msra.mxu0 0.0
    %3098 = vmatprep.subr.mxu0 0.0
    %3099 = vmatpush1.xpose.msra.mxu0 0.0
    %3100 = vmatprep.subr.mxu0 0.0
    %3101 = vmatpush1.xpose.msra.mxu0 0.0
    %3102 = vmatprep.subr.mxu0 0.0
    %3103 = vmatpush1.xpose.msra.mxu0 0.0
    %3104 = vmatprep.subr.mxu0 0.0
    %3105 = vmatpush1.xpose.msra.mxu0 0.0
    %3106 = vmatprep.subr.mxu0 0.0
    %3107 = vmatpush1.xpose.msra.mxu0 0.0
    %3108 = vmatprep.subr.mxu0 0.0
    %3109 = vmatpush1.xpose.msra.mxu0 0.0
    %3110 = vmatprep.subr.mxu0 0.0
    %3111 = vmatpush1.xpose.msra.mxu0 0.0
    %3112 = vmatprep.subr.mxu0 0.0
    %3113 = vmatpush1.xpose.msra.mxu0 0.0
    %3114 = vmatprep.mubr.f32.mxu0 0.0
    %3115 = vmatmul.mubr.f32.gmra.mrb[0].mxu0 %v3045
    %v3116 = vpop.f32.mrb[0].mxu0
    %v3117 = vadd.f32 0.0, %v3116
    %v3118 = vpop.f32.mrb[0].mxu0
    %3119 = vdwg.mxu0
    %v3121 = vsel %vm1097, %v2329, 0
    %v3124 = vsel %vm1097, %v2609, 0
    %3126 = vmatprep.subr.mxu0 0.0
    %3127 = vmatpush1.xpose.msra.mxu0 %v3124
    %3128 = vmatprep.subr.mxu0 0.0
    %3129 = vmatpush1.xpose.msra.mxu0 0.0
    %3130 = vmatprep.subr.mxu0 0.0
    %3131 = vmatpush1.xpose.msra.mxu0 0.0
    %3132 = vmatprep.subr.mxu0 0.0
    %3133 = vmatpush1.xpose.msra.mxu0 0.0
    %3134 = vmatprep.subr.mxu0 0.0
    %3135 = vmatpush1.xpose.msra.mxu0 0.0
    %3136 = vmatprep.subr.mxu0 0.0
    %3137 = vmatpush1.xpose.msra.mxu0 0.0
    %3138 = vmatprep.subr.mxu0 0.0
    %3139 = vmatpush1.xpose.msra.mxu0 0.0
    %3140 = vmatprep.subr.mxu0 0.0
    %3141 = vmatpush1.xpose.msra.mxu0 0.0
    %3142 = vmatprep.subr.mxu0 0.0
    %3143 = vmatpush1.xpose.msra.mxu0 0.0
    %3144 = vmatprep.subr.mxu0 0.0
    %3145 = vmatpush1.xpose.msra.mxu0 0.0
    %3146 = vmatprep.subr.mxu0 0.0
    %3147 = vmatpush1.xpose.msra.mxu0 0.0
    %3148 = vmatprep.subr.mxu0 0.0
    %3149 = vmatpush1.xpose.msra.mxu0 0.0
    %3150 = vmatprep.subr.mxu0 0.0
    %3151 = vmatpush1.xpose.msra.mxu0 0.0
    %3152 = vmatprep.subr.mxu0 0.0
    %3153 = vmatpush1.xpose.msra.mxu0 0.0
    %3154 = vmatprep.subr.mxu0 0.0
    %3155 = vmatpush1.xpose.msra.mxu0 0.0
    %3156 = vmatprep.subr.mxu0 0.0
    %3157 = vmatpush1.xpose.msra.mxu0 0.0
    %3158 = vmatprep.subr.mxu0 0.0
    %3159 = vmatpush1.xpose.msra.mxu0 0.0
    %3160 = vmatprep.subr.mxu0 0.0
    %3161 = vmatpush1.xpose.msra.mxu0 0.0
    %3162 = vmatprep.subr.mxu0 0.0
    %3163 = vmatpush1.xpose.msra.mxu0 0.0
    %3164 = vmatprep.subr.mxu0 0.0
    %3165 = vmatpush1.xpose.msra.mxu0 0.0
    %3166 = vmatprep.subr.mxu0 0.0
    %3167 = vmatpush1.xpose.msra.mxu0 0.0
    %3168 = vmatprep.subr.mxu0 0.0
    %3169 = vmatpush1.xpose.msra.mxu0 0.0
    %3170 = vmatprep.subr.mxu0 0.0
    %3171 = vmatpush1.xpose.msra.mxu0 0.0
    %3172 = vmatprep.subr.mxu0 0.0
    %3173 = vmatpush1.xpose.msra.mxu0 0.0
    %3174 = vmatprep.subr.mxu0 0.0
    %3175 = vmatpush1.xpose.msra.mxu0 0.0
    %3176 = vmatprep.subr.mxu0 0.0
    %3177 = vmatpush1.xpose.msra.mxu0 0.0
    %3178 = vmatprep.subr.mxu0 0.0
    %3179 = vmatpush1.xpose.msra.mxu0 0.0
    %3180 = vmatprep.subr.mxu0 0.0
    %3181 = vmatpush1.xpose.msra.mxu0 0.0
    %3182 = vmatprep.subr.mxu0 0.0
    %3183 = vmatpush1.xpose.msra.mxu0 0.0
    %3184 = vmatprep.subr.mxu0 0.0
    %3185 = vmatpush1.xpose.msra.mxu0 0.0
    %3186 = vmatprep.subr.mxu0 0.0
    %3187 = vmatpush1.xpose.msra.mxu0 0.0
    %3188 = vmatprep.subr.mxu0 0.0
    %3189 = vmatpush1.xpose.msra.mxu0 0.0
    %3190 = vmatprep.mubr.f32.mxu0 0.0
    %3191 = vmatmul.mubr.f32.gmra.mrb[0].mxu0 %v3121
    %v3192 = vpop.f32.mrb[0].mxu0
    %v3193 = vadd.f32 0.0, %v3192
    %v3194 = vpop.f32.mrb[0].mxu0
    %3195 = vdwg.mxu0
    %v3196 = vmul.f32 %v2965, 0.35355338
    %v3197 = vmul.f32 %v3041, 0.35355338
    %v3198 = vmul.f32 %v3117, 0.35355338
    %v3199 = vmul.f32 %v3193, 0.35355338
    %v3200 = vlaneseq
    %v3201 = vshrl.u32 %v3200, 7
    %v3202 = vsub.s32 1, %v3201
    %v3203 = vrot.slane %v94, %v3202
    %v3204 = vadd.f32 %v3196, %v3203
    %v3205 = vadd.f32 %v3197, %v3203
    %v3206 = vadd.f32 %v3198, %v3203
    %v3207 = vadd.f32 %v3199, %v3203
    %v3208 = vsel %vm1097, %v3204, -inf
    %3209 = vmax.xlane.f32.xlu0 %v3208
    %v3210 = vpop.xlane.xlu0 %3209
    %v3211 = vsel %vm1097, %v3205, -inf
    %3212 = vmax.xlane.f32.xlu0 %v3211
    %v3213 = vpop.xlane.xlu0 %3212
    %v3214 = vsel %vm1097, %v3206, -inf
    %3215 = vmax.xlane.f32.xlu0 %v3214
    %v3216 = vpop.xlane.xlu0 %3215
    %v3217 = vsel %vm1097, %v3207, -inf
    %3218 = vmax.xlane.f32.xlu0 %v3217
    %v3219 = vpop.xlane.xlu0 %3218
    %v3220 = vsub.f32 %v3204, %v3210
    %v3221 = vsub.f32 %v3205, %v3213
    %v3222 = vsub.f32 %v3206, %v3216
    %v3223 = vsub.f32 %v3207, %v3219
    %v3224 = vmul.f32 %v3220, 1.442695
    %v3225 = vpow.pop %v3224
    %v3226 = vmul.f32 %v3221, 1.442695
    %v3227 = vpow.pop %v3226
    %v3228 = vmul.f32 %v3222, 1.442695
    %v3229 = vpow.pop %v3228
    %v3230 = vmul.f32 %v3223, 1.442695
    %v3231 = vpow.pop %v3230
    %v3232 = vsel %vm1097, %v3225, 0.0
    %3233 = vadd.xlane.f32.xlu0 %v3232
    %v3234 = vpop.xlane.xlu0 %3233
    %v3235 = vsel %vm1097, %v3227, 0.0
    %3236 = vadd.xlane.f32.xlu0 %v3235
    %v3237 = vpop.xlane.xlu0 %3236
    %v3238 = vsel %vm1097, %v3229, 0.0
    %3239 = vadd.xlane.f32.xlu0 %v3238
    %v3240 = vpop.xlane.xlu0 %3239
    %v3241 = vsel %vm1097, %v3231, 0.0
    %3242 = vadd.xlane.f32.xlu0 %v3241
    %v3243 = vpop.xlane.xlu0 %3242
    %v3244 = vrcp.pop %v3234
    %v3245 = vrcp.pop %v3237
    %v3246 = vrcp.pop %v3240
    %v3247 = vrcp.pop %v3243
    %v3248 = vmul.f32 %v3225, %v3244
    %v3249 = vmul.f32 %v3227, %v3245
    %v3250 = vmul.f32 %v3229, %v3246
    %v3251 = vmul.f32 %v3231, %v3247
    %v3253 = vsel %vm1097, %v3248, 0
    %3255 = vmatprep.subr.mxu0 0.0
    %3256 = vmatpush1.msra.mxu0 %v2679
    %3257 = vmatprep.subr.mxu0 0.0
    %3258 = vmatpush1.msra.mxu0 0.0
    %3259 = vmatprep.subr.mxu0 0.0
    %3260 = vmatpush1.msra.mxu0 0.0
    %3261 = vmatprep.subr.mxu0 0.0
    %3262 = vmatpush1.msra.mxu0 0.0
    %3263 = vmatprep.subr.mxu0 0.0
    %3264 = vmatpush1.msra.mxu0 0.0
    %3265 = vmatprep.subr.mxu0 0.0
    %3266 = vmatpush1.msra.mxu0 0.0
    %3267 = vmatprep.subr.mxu0 0.0
    %3268 = vmatpush1.msra.mxu0 0.0
    %3269 = vmatprep.subr.mxu0 0.0
    %3270 = vmatpush1.msra.mxu0 0.0
    %3271 = vmatprep.subr.mxu0 0.0
    %3272 = vmatpush1.msra.mxu0 0.0
    %3273 = vmatprep.subr.mxu0 0.0
    %3274 = vmatpush1.msra.mxu0 0.0
    %3275 = vmatprep.subr.mxu0 0.0
    %3276 = vmatpush1.msra.mxu0 0.0
    %3277 = vmatprep.subr.mxu0 0.0
    %3278 = vmatpush1.msra.mxu0 0.0
    %3279 = vmatprep.subr.mxu0 0.0
    %3280 = vmatpush1.msra.mxu0 0.0
    %3281 = vmatprep.subr.mxu0 0.0
    %3282 = vmatpush1.msra.mxu0 0.0
    %3283 = vmatprep.subr.mxu0 0.0
    %3284 = vmatpush1.msra.mxu0 0.0
    %3285 = vmatprep.subr.mxu0 0.0
    %3286 = vmatpush1.msra.mxu0 0.0
    %3287 = vmatprep.subr.mxu0 0.0
    %3288 = vmatpush1.msra.mxu0 0.0
    %3289 = vmatprep.subr.mxu0 0.0
    %3290 = vmatpush1.msra.mxu0 0.0
    %3291 = vmatprep.subr.mxu0 0.0
    %3292 = vmatpush1.msra.mxu0 0.0
    %3293 = vmatprep.subr.mxu0 0.0
    %3294 = vmatpush1.msra.mxu0 0.0
    %3295 = vmatprep.subr.mxu0 0.0
    %3296 = vmatpush1.msra.mxu0 0.0
    %3297 = vmatprep.subr.mxu0 0.0
    %3298 = vmatpush1.msra.mxu0 0.0
    %3299 = vmatprep.subr.mxu0 0.0
    %3300 = vmatpush1.msra.mxu0 0.0
    %3301 = vmatprep.subr.mxu0 0.0
    %3302 = vmatpush1.msra.mxu0 0.0
    %3303 = vmatprep.subr.mxu0 0.0
    %3304 = vmatpush1.msra.mxu0 0.0
    %3305 = vmatprep.subr.mxu0 0.0
    %3306 = vmatpush1.msra.mxu0 0.0
    %3307 = vmatprep.subr.mxu0 0.0
    %3308 = vmatpush1.msra.mxu0 0.0
    %3309 = vmatprep.subr.mxu0 0.0
    %3310 = vmatpush1.msra.mxu0 0.0
    %3311 = vmatprep.subr.mxu0 0.0
    %3312 = vmatpush1.msra.mxu0 0.0
    %3313 = vmatprep.subr.mxu0 0.0
    %3314 = vmatpush1.msra.mxu0 0.0
    %3315 = vmatprep.subr.mxu0 0.0
    %3316 = vmatpush1.msra.mxu0 0.0
    %3317 = vmatprep.subr.mxu0 0.0
    %3318 = vmatpush1.msra.mxu0 0.0
    %3319 = vmatprep.mubr.f32.mxu0 0.0
    %3320 = vmatmul.mubr.f32.gmra.mrb[0].mxu0 %v3253
    %v3321 = vpop.f32.mrb[0].mxu0
    %v3322 = vadd.f32 0.0, %v3321
    %v3323 = vpop.f32.mrb[0].mxu0
    %3324 = vdwg.mxu0
    %v3326 = vsel %vm1097, %v3249, 0
    %3328 = vmatprep.subr.mxu0 0.0
    %3329 = vmatpush1.msra.mxu0 %v2749
    %3330 = vmatprep.subr.mxu0 0.0
    %3331 = vmatpush1.msra.mxu0 0.0
    %3332 = vmatprep.subr.mxu0 0.0
    %3333 = vmatpush1.msra.mxu0 0.0
    %3334 = vmatprep.subr.mxu0 0.0
    %3335 = vmatpush1.msra.mxu0 0.0
    %3336 = vmatprep.subr.mxu0 0.0
    %3337 = vmatpush1.msra.mxu0 0.0
    %3338 = vmatprep.subr.mxu0 0.0
    %3339 = vmatpush1.msra.mxu0 0.0
    %3340 = vmatprep.subr.mxu0 0.0
    %3341 = vmatpush1.msra.mxu0 0.0
    %3342 = vmatprep.subr.mxu0 0.0
    %3343 = vmatpush1.msra.mxu0 0.0
    %3344 = vmatprep.subr.mxu0 0.0
    %3345 = vmatpush1.msra.mxu0 0.0
    %3346 = vmatprep.subr.mxu0 0.0
    %3347 = vmatpush1.msra.mxu0 0.0
    %3348 = vmatprep.subr.mxu0 0.0
    %3349 = vmatpush1.msra.mxu0 0.0
    %3350 = vmatprep.subr.mxu0 0.0
    %3351 = vmatpush1.msra.mxu0 0.0
    %3352 = vmatprep.subr.mxu0 0.0
    %3353 = vmatpush1.msra.mxu0 0.0
    %3354 = vmatprep.subr.mxu0 0.0
    %3355 = vmatpush1.msra.mxu0 0.0
    %3356 = vmatprep.subr.mxu0 0.0
    %3357 = vmatpush1.msra.mxu0 0.0
    %3358 = vmatprep.subr.mxu0 0.0
    %3359 = vmatpush1.msra.mxu0 0.0
    %3360 = vmatprep.subr.mxu0 0.0
    %3361 = vmatpush1.msra.mxu0 0.0
    %3362 = vmatprep.subr.mxu0 0.0
    %3363 = vmatpush1.msra.mxu0 0.0
    %3364 = vmatprep.subr.mxu0 0.0
    %3365 = vmatpush1.msra.mxu0 0.0
    %3366 = vmatprep.subr.mxu0 0.0
    %3367 = vmatpush1.msra.mxu0 0.0
    %3368 = vmatprep.subr.mxu0 0.0
    %3369 = vmatpush1.msra.mxu0 0.0
    %3370 = vmatprep.subr.mxu0 0.0
    %3371 = vmatpush1.msra.mxu0 0.0
    %3372 = vmatprep.subr.mxu0 0.0
    %3373 = vmatpush1.msra.mxu0 0.0
    %3374 = vmatprep.subr.mxu0 0.0
    %3375 = vmatpush1.msra.mxu0 0.0
    %3376 = vmatprep.subr.mxu0 0.0
    %3377 = vmatpush1.msra.mxu0 0.0
    %3378 = vmatprep.subr.mxu0 0.0
    %3379 = vmatpush1.msra.mxu0 0.0
    %3380 = vmatprep.subr.mxu0 0.0
    %3381 = vmatpush1.msra.mxu0 0.0
    %3382 = vmatprep.subr.mxu0 0.0
    %3383 = vmatpush1.msra.mxu0 0.0
    %3384 = vmatprep.subr.mxu0 0.0
    %3385 = vmatpush1.msra.mxu0 0.0
    %3386 = vmatprep.subr.mxu0 0.0
    %3387 = vmatpush1.msra.mxu0 0.0
    %3388 = vmatprep.subr.mxu0 0.0
    %3389 = vmatpush1.msra.mxu0 0.0
    %3390 = vmatprep.subr.mxu0 0.0
    %3391 = vmatpush1.msra.mxu0 0.0
    %3392 = vmatprep.mubr.f32.mxu0 0.0
    %3393 = vmatmul.mubr.f32.gmra.mrb[0].mxu0 %v3326
    %v3394 = vpop.f32.mrb[0].mxu0
    %v3395 = vadd.f32 0.0, %v3394
    %v3396 = vpop.f32.mrb[0].mxu0
    %3397 = vdwg.mxu0
    %v3399 = vsel %vm1097, %v3250, 0
    %3401 = vmatprep.subr.mxu0 0.0
    %3402 = vmatpush1.msra.mxu0 %v2819
    %3403 = vmatprep.subr.mxu0 0.0
    %3404 = vmatpush1.msra.mxu0 0.0
    %3405 = vmatprep.subr.mxu0 0.0
    %3406 = vmatpush1.msra.mxu0 0.0
    %3407 = vmatprep.subr.mxu0 0.0
    %3408 = vmatpush1.msra.mxu0 0.0
    %3409 = vmatprep.subr.mxu0 0.0
    %3410 = vmatpush1.msra.mxu0 0.0
    %3411 = vmatprep.subr.mxu0 0.0
    %3412 = vmatpush1.msra.mxu0 0.0
    %3413 = vmatprep.subr.mxu0 0.0
    %3414 = vmatpush1.msra.mxu0 0.0
    %3415 = vmatprep.subr.mxu0 0.0
    %3416 = vmatpush1.msra.mxu0 0.0
    %3417 = vmatprep.subr.mxu0 0.0
    %3418 = vmatpush1.msra.mxu0 0.0
    %3419 = vmatprep.subr.mxu0 0.0
    %3420 = vmatpush1.msra.mxu0 0.0
    %3421 = vmatprep.subr.mxu0 0.0
    %3422 = vmatpush1.msra.mxu0 0.0
    %3423 = vmatprep.subr.mxu0 0.0
    %3424 = vmatpush1.msra.mxu0 0.0
    %3425 = vmatprep.subr.mxu0 0.0
    %3426 = vmatpush1.msra.mxu0 0.0
    %3427 = vmatprep.subr.mxu0 0.0
    %3428 = vmatpush1.msra.mxu0 0.0
    %3429 = vmatprep.subr.mxu0 0.0
    %3430 = vmatpush1.msra.mxu0 0.0
    %3431 = vmatprep.subr.mxu0 0.0
    %3432 = vmatpush1.msra.mxu0 0.0
    %3433 = vmatprep.subr.mxu0 0.0
    %3434 = vmatpush1.msra.mxu0 0.0
    %3435 = vmatprep.subr.mxu0 0.0
    %3436 = vmatpush1.msra.mxu0 0.0
    %3437 = vmatprep.subr.mxu0 0.0
    %3438 = vmatpush1.msra.mxu0 0.0
    %3439 = vmatprep.subr.mxu0 0.0
    %3440 = vmatpush1.msra.mxu0 0.0
    %3441 = vmatprep.subr.mxu0 0.0
    %3442 = vmatpush1.msra.mxu0 0.0
    %3443 = vmatprep.subr.mxu0 0.0
    %3444 = vmatpush1.msra.mxu0 0.0
    %3445 = vmatprep.subr.mxu0 0.0
    %3446 = vmatpush1.msra.mxu0 0.0
    %3447 = vmatprep.subr.mxu0 0.0
    %3448 = vmatpush1.msra.mxu0 0.0
    %3449 = vmatprep.subr.mxu0 0.0
    %3450 = vmatpush1.msra.mxu0 0.0
    %3451 = vmatprep.subr.mxu0 0.0
    %3452 = vmatpush1.msra.mxu0 0.0
    %3453 = vmatprep.subr.mxu0 0.0
    %3454 = vmatpush1.msra.mxu0 0.0
    %3455 = vmatprep.subr.mxu0 0.0
    %3456 = vmatpush1.msra.mxu0 0.0
    %3457 = vmatprep.subr.mxu0 0.0
    %3458 = vmatpush1.msra.mxu0 0.0
    %3459 = vmatprep.subr.mxu0 0.0
    %3460 = vmatpush1.msra.mxu0 0.0
    %3461 = vmatprep.subr.mxu0 0.0
    %3462 = vmatpush1.msra.mxu0 0.0
    %3463 = vmatprep.subr.mxu0 0.0
    %3464 = vmatpush1.msra.mxu0 0.0
    %3465 = vmatprep.mubr.f32.mxu0 0.0
    %3466 = vmatmul.mubr.f32.gmra.mrb[0].mxu0 %v3399
    %v3467 = vpop.f32.mrb[0].mxu0
    %v3468 = vadd.f32 0.0, %v3467
    %v3469 = vpop.f32.mrb[0].mxu0
    %3470 = vdwg.mxu0
    %v3472 = vsel %vm1097, %v3251, 0
    %3474 = vmatprep.subr.mxu0 0.0
    %3475 = vmatpush1.msra.mxu0 %v2889
    %3476 = vmatprep.subr.mxu0 0.0
    %3477 = vmatpush1.msra.mxu0 0.0
    %3478 = vmatprep.subr.mxu0 0.0
    %3479 = vmatpush1.msra.mxu0 0.0
    %3480 = vmatprep.subr.mxu0 0.0
    %3481 = vmatpush1.msra.mxu0 0.0
    %3482 = vmatprep.subr.mxu0 0.0
    %3483 = vmatpush1.msra.mxu0 0.0
    %3484 = vmatprep.subr.mxu0 0.0
    %3485 = vmatpush1.msra.mxu0 0.0
    %3486 = vmatprep.subr.mxu0 0.0
    %3487 = vmatpush1.msra.mxu0 0.0
    %3488 = vmatprep.subr.mxu0 0.0
    %3489 = vmatpush1.msra.mxu0 0.0
    %3490 = vmatprep.subr.mxu0 0.0
    %3491 = vmatpush1.msra.mxu0 0.0
    %3492 = vmatprep.subr.mxu0 0.0
    %3493 = vmatpush1.msra.mxu0 0.0
    %3494 = vmatprep.subr.mxu0 0.0
    %3495 = vmatpush1.msra.mxu0 0.0
    %3496 = vmatprep.subr.mxu0 0.0
    %3497 = vmatpush1.msra.mxu0 0.0
    %3498 = vmatprep.subr.mxu0 0.0
    %3499 = vmatpush1.msra.mxu0 0.0
    %3500 = vmatprep.subr.mxu0 0.0
    %3501 = vmatpush1.msra.mxu0 0.0
    %3502 = vmatprep.subr.mxu0 0.0
    %3503 = vmatpush1.msra.mxu0 0.0
    %3504 = vmatprep.subr.mxu0 0.0
    %3505 = vmatpush1.msra.mxu0 0.0
    %3506 = vmatprep.subr.mxu0 0.0
    %3507 = vmatpush1.msra.mxu0 0.0
    %3508 = vmatprep.subr.mxu0 0.0
    %3509 = vmatpush1.msra.mxu0 0.0
    %3510 = vmatprep.subr.mxu0 0.0
    %3511 = vmatpush1.msra.mxu0 0.0
    %3512 = vmatprep.subr.mxu0 0.0
    %3513 = vmatpush1.msra.mxu0 0.0
    %3514 = vmatprep.subr.mxu0 0.0
    %3515 = vmatpush1.msra.mxu0 0.0
    %3516 = vmatprep.subr.mxu0 0.0
    %3517 = vmatpush1.msra.mxu0 0.0
    %3518 = vmatprep.subr.mxu0 0.0
    %3519 = vmatpush1.msra.mxu0 0.0
    %3520 = vmatprep.subr.mxu0 0.0
    %3521 = vmatpush1.msra.mxu0 0.0
    %3522 = vmatprep.subr.mxu0 0.0
    %3523 = vmatpush1.msra.mxu0 0.0
    %3524 = vmatprep.subr.mxu0 0.0
    %3525 = vmatpush1.msra.mxu0 0.0
    %3526 = vmatprep.subr.mxu0 0.0
    %3527 = vmatpush1.msra.mxu0 0.0
    %3528 = vmatprep.subr.mxu0 0.0
    %3529 = vmatpush1.msra.mxu0 0.0
    %3530 = vmatprep.subr.mxu0 0.0
    %3531 = vmatpush1.msra.mxu0 0.0
    %3532 = vmatprep.subr.mxu0 0.0
    %3533 = vmatpush1.msra.mxu0 0.0
    %3534 = vmatprep.subr.mxu0 0.0
    %3535 = vmatpush1.msra.mxu0 0.0
    %3536 = vmatprep.subr.mxu0 0.0
    %3537 = vmatpush1.msra.mxu0 0.0
    %3538 = vmatprep.mubr.f32.mxu0 0.0
    %3539 = vmatmul.mubr.f32.gmra.mrb[0].mxu0 %v3472
    %v3540 = vpop.f32.mrb[0].mxu0
    %v3541 = vadd.f32 0.0, %v3540
    %v3542 = vpop.f32.mrb[0].mxu0
    %3543 = vdwg.mxu0
    %v3545 = vsel %vm1097, %v3322, 0
    %3547 = vmatprep.subr.mxu0 0.0
    %3548 = vmatpush1.msra.mxu0 %v159
    %3549 = vmatprep.subr.mxu0 0.0
    %3550 = vmatpush1.msra.mxu0 0.0
    %3551 = vmatprep.subr.mxu0 0.0
    %3552 = vmatpush1.msra.mxu0 0.0
    %3553 = vmatprep.subr.mxu0 0.0
    %3554 = vmatpush1.msra.mxu0 0.0
    %3555 = vmatprep.subr.mxu0 0.0
    %3556 = vmatpush1.msra.mxu0 0.0
    %3557 = vmatprep.subr.mxu0 0.0
    %3558 = vmatpush1.msra.mxu0 0.0
    %3559 = vmatprep.subr.mxu0 0.0
    %3560 = vmatpush1.msra.mxu0 0.0
    %3561 = vmatprep.subr.mxu0 0.0
    %3562 = vmatpush1.msra.mxu0 0.0
    %3563 = vmatprep.subr.mxu0 0.0
    %3564 = vmatpush1.msra.mxu0 0.0
    %3565 = vmatprep.subr.mxu0 0.0
    %3566 = vmatpush1.msra.mxu0 0.0
    %3567 = vmatprep.subr.mxu0 0.0
    %3568 = vmatpush1.msra.mxu0 0.0
    %3569 = vmatprep.subr.mxu0 0.0
    %3570 = vmatpush1.msra.mxu0 0.0
    %3571 = vmatprep.subr.mxu0 0.0
    %3572 = vmatpush1.msra.mxu0 0.0
    %3573 = vmatprep.subr.mxu0 0.0
    %3574 = vmatpush1.msra.mxu0 0.0
    %3575 = vmatprep.subr.mxu0 0.0
    %3576 = vmatpush1.msra.mxu0 0.0
    %3577 = vmatprep.subr.mxu0 0.0
    %3578 = vmatpush1.msra.mxu0 0.0
    %3579 = vmatprep.subr.mxu0 0.0
    %3580 = vmatpush1.msra.mxu0 0.0
    %3581 = vmatprep.subr.mxu0 0.0
    %3582 = vmatpush1.msra.mxu0 0.0
    %3583 = vmatprep.subr.mxu0 0.0
    %3584 = vmatpush1.msra.mxu0 0.0
    %3585 = vmatprep.subr.mxu0 0.0
    %3586 = vmatpush1.msra.mxu0 0.0
    %3587 = vmatprep.subr.mxu0 0.0
    %3588 = vmatpush1.msra.mxu0 0.0
    %3589 = vmatprep.subr.mxu0 0.0
    %3590 = vmatpush1.msra.mxu0 0.0
    %3591 = vmatprep.subr.mxu0 0.0
    %3592 = vmatpush1.msra.mxu0 0.0
    %3593 = vmatprep.subr.mxu0 0.0
    %3594 = vmatpush1.msra.mxu0 0.0
    %3595 = vmatprep.subr.mxu0 0.0
    %3596 = vmatpush1.msra.mxu0 0.0
    %3597 = vmatprep.subr.mxu0 0.0
    %3598 = vmatpush1.msra.mxu0 0.0
    %3599 = vmatprep.subr.mxu0 0.0
    %3600 = vmatpush1.msra.mxu0 0.0
    %3601 = vmatprep.subr.mxu0 0.0
    %3602 = vmatpush1.msra.mxu0 0.0
    %3603 = vmatprep.subr.mxu0 0.0
    %3604 = vmatpush1.msra.mxu0 0.0
    %3605 = vmatprep.subr.mxu0 0.0
    %3606 = vmatpush1.msra.mxu0 0.0
    %3607 = vmatprep.subr.mxu0 0.0
    %3608 = vmatpush1.msra.mxu0 0.0
    %3609 = vmatprep.subr.mxu0 0.0
    %3610 = vmatpush1.msra.mxu0 0.0
    %3611 = vmatprep.mubr.f32.mxu0 0.0
    %3612 = vmatmul.mubr.f32.gmra.mrb[0].mxu0 %v3545
    %v3613 = vpop.f32.mrb[0].mxu0
    %v3614 = vadd.f32 0.0, %v3613
    %v3615 = vpop.f32.mrb[0].mxu0
    %3616 = vdwg.mxu0
    %v3618 = vsel %vm1097, %v3395, 0
    %3620 = vmatprep.subr.mxu0 0.0
    %3621 = vmatpush1.msra.mxu0 %v160
    %3622 = vmatprep.subr.mxu0 0.0
    %3623 = vmatpush1.msra.mxu0 0.0
    %3624 = vmatprep.subr.mxu0 0.0
    %3625 = vmatpush1.msra.mxu0 0.0
    %3626 = vmatprep.subr.mxu0 0.0
    %3627 = vmatpush1.msra.mxu0 0.0
    %3628 = vmatprep.subr.mxu0 0.0
    %3629 = vmatpush1.msra.mxu0 0.0
    %3630 = vmatprep.subr.mxu0 0.0
    %3631 = vmatpush1.msra.mxu0 0.0
    %3632 = vmatprep.subr.mxu0 0.0
    %3633 = vmatpush1.msra.mxu0 0.0
    %3634 = vmatprep.subr.mxu0 0.0
    %3635 = vmatpush1.msra.mxu0 0.0
    %3636 = vmatprep.subr.mxu0 0.0
    %3637 = vmatpush1.msra.mxu0 0.0
    %3638 = vmatprep.subr.mxu0 0.0
    %3639 = vmatpush1.msra.mxu0 0.0
    %3640 = vmatprep.subr.mxu0 0.0
    %3641 = vmatpush1.msra.mxu0 0.0
    %3642 = vmatprep.subr.mxu0 0.0
    %3643 = vmatpush1.msra.mxu0 0.0
    %3644 = vmatprep.subr.mxu0 0.0
    %3645 = vmatpush1.msra.mxu0 0.0
    %3646 = vmatprep.subr.mxu0 0.0
    %3647 = vmatpush1.msra.mxu0 0.0
    %3648 = vmatprep.subr.mxu0 0.0
    %3649 = vmatpush1.msra.mxu0 0.0
    %3650 = vmatprep.subr.mxu0 0.0
    %3651 = vmatpush1.msra.mxu0 0.0
    %3652 = vmatprep.subr.mxu0 0.0
    %3653 = vmatpush1.msra.mxu0 0.0
    %3654 = vmatprep.subr.mxu0 0.0
    %3655 = vmatpush1.msra.mxu0 0.0
    %3656 = vmatprep.subr.mxu0 0.0
    %3657 = vmatpush1.msra.mxu0 0.0
    %3658 = vmatprep.subr.mxu0 0.0
    %3659 = vmatpush1.msra.mxu0 0.0
    %3660 = vmatprep.subr.mxu0 0.0
    %3661 = vmatpush1.msra.mxu0 0.0
    %3662 = vmatprep.subr.mxu0 0.0
    %3663 = vmatpush1.msra.mxu0 0.0
    %3664 = vmatprep.subr.mxu0 0.0
    %3665 = vmatpush1.msra.mxu0 0.0
    %3666 = vmatprep.subr.mxu0 0.0
    %3667 = vmatpush1.msra.mxu0 0.0
    %3668 = vmatprep.subr.mxu0 0.0
    %3669 = vmatpush1.msra.mxu0 0.0
    %3670 = vmatprep.subr.mxu0 0.0
    %3671 = vmatpush1.msra.mxu0 0.0
    %3672 = vmatprep.subr.mxu0 0.0
    %3673 = vmatpush1.msra.mxu0 0.0
    %3674 = vmatprep.subr.mxu0 0.0
    %3675 = vmatpush1.msra.mxu0 0.0
    %3676 = vmatprep.subr.mxu0 0.0
    %3677 = vmatpush1.msra.mxu0 0.0
    %3678 = vmatprep.subr.mxu0 0.0
    %3679 = vmatpush1.msra.mxu0 0.0
    %3680 = vmatprep.subr.mxu0 0.0
    %3681 = vmatpush1.msra.mxu0 0.0
    %3682 = vmatprep.subr.mxu0 0.0
    %3683 = vmatpush1.msra.mxu0 0.0
    %3684 = vmatprep.mubr.f32.mxu0 0.0
    %3685 = vmatmul.mubr.f32.gmra.mrb[0].mxu0 %v3618
    %v3686 = vpop.f32.mrb[0].mxu0
    %v3687 = vadd.f32 0.0, %v3686
    %v3688 = vpop.f32.mrb[0].mxu0
    %3689 = vdwg.mxu0
    %v3691 = vsel %vm1097, %v3468, 0
    %3693 = vmatprep.subr.mxu0 0.0
    %3694 = vmatpush1.msra.mxu0 %v161
    %3695 = vmatprep.subr.mxu0 0.0
    %3696 = vmatpush1.msra.mxu0 0.0
    %3697 = vmatprep.subr.mxu0 0.0
    %3698 = vmatpush1.msra.mxu0 0.0
    %3699 = vmatprep.subr.mxu0 0.0
    %3700 = vmatpush1.msra.mxu0 0.0
    %3701 = vmatprep.subr.mxu0 0.0
    %3702 = vmatpush1.msra.mxu0 0.0
    %3703 = vmatprep.subr.mxu0 0.0
    %3704 = vmatpush1.msra.mxu0 0.0
    %3705 = vmatprep.subr.mxu0 0.0
    %3706 = vmatpush1.msra.mxu0 0.0
    %3707 = vmatprep.subr.mxu0 0.0
    %3708 = vmatpush1.msra.mxu0 0.0
    %3709 = vmatprep.subr.mxu0 0.0
    %3710 = vmatpush1.msra.mxu0 0.0
    %3711 = vmatprep.subr.mxu0 0.0
    %3712 = vmatpush1.msra.mxu0 0.0
    %3713 = vmatprep.subr.mxu0 0.0
    %3714 = vmatpush1.msra.mxu0 0.0
    %3715 = vmatprep.subr.mxu0 0.0
    %3716 = vmatpush1.msra.mxu0 0.0
    %3717 = vmatprep.subr.mxu0 0.0
    %3718 = vmatpush1.msra.mxu0 0.0
    %3719 = vmatprep.subr.mxu0 0.0
    %3720 = vmatpush1.msra.mxu0 0.0
    %3721 = vmatprep.subr.mxu0 0.0
    %3722 = vmatpush1.msra.mxu0 0.0
    %3723 = vmatprep.subr.mxu0 0.0
    %3724 = vmatpush1.msra.mxu0 0.0
    %3725 = vmatprep.subr.mxu0 0.0
    %3726 = vmatpush1.msra.mxu0 0.0
    %3727 = vmatprep.subr.mxu0 0.0
    %3728 = vmatpush1.msra.mxu0 0.0
    %3729 = vmatprep.subr.mxu0 0.0
    %3730 = vmatpush1.msra.mxu0 0.0
    %3731 = vmatprep.subr.mxu0 0.0
    %3732 = vmatpush1.msra.mxu0 0.0
    %3733 = vmatprep.subr.mxu0 0.0
    %3734 = vmatpush1.msra.mxu0 0.0
    %3735 = vmatprep.subr.mxu0 0.0
    %3736 = vmatpush1.msra.mxu0 0.0
    %3737 = vmatprep.subr.mxu0 0.0
    %3738 = vmatpush1.msra.mxu0 0.0
    %3739 = vmatprep.subr.mxu0 0.0
    %3740 = vmatpush1.msra.mxu0 0.0
    %3741 = vmatprep.subr.mxu0 0.0
    %3742 = vmatpush1.msra.mxu0 0.0
    %3743 = vmatprep.subr.mxu0 0.0
    %3744 = vmatpush1.msra.mxu0 0.0
    %3745 = vmatprep.subr.mxu0 0.0
    %3746 = vmatpush1.msra.mxu0 0.0
    %3747 = vmatprep.subr.mxu0 0.0
    %3748 = vmatpush1.msra.mxu0 0.0
    %3749 = vmatprep.subr.mxu0 0.0
    %3750 = vmatpush1.msra.mxu0 0.0
    %3751 = vmatprep.subr.mxu0 0.0
    %3752 = vmatpush1.msra.mxu0 0.0
    %3753 = vmatprep.subr.mxu0 0.0
    %3754 = vmatpush1.msra.mxu0 0.0
    %3755 = vmatprep.subr.mxu0 0.0
    %3756 = vmatpush1.msra.mxu0 0.0
    %3757 = vmatprep.mubr.f32.mxu0 0.0
    %3758 = vmatmul.mubr.f32.gmra.mrb[0].mxu0 %v3691
    %v3759 = vpop.f32.mrb[0].mxu0
    %v3760 = vadd.f32 0.0, %v3759
    %v3761 = vpop.f32.mrb[0].mxu0
    %3762 = vdwg.mxu0
    %v3764 = vsel %vm1097, %v3541, 0
    %3766 = vmatprep.subr.mxu0 0.0
    %3767 = vmatpush1.msra.mxu0 %v162
    %3768 = vmatprep.subr.mxu0 0.0
    %3769 = vmatpush1.msra.mxu0 0.0
    %3770 = vmatprep.subr.mxu0 0.0
    %3771 = vmatpush1.msra.mxu0 0.0
    %3772 = vmatprep.subr.mxu0 0.0
    %3773 = vmatpush1.msra.mxu0 0.0
    %3774 = vmatprep.subr.mxu0 0.0
    %3775 = vmatpush1.msra.mxu0 0.0
    %3776 = vmatprep.subr.mxu0 0.0
    %3777 = vmatpush1.msra.mxu0 0.0
    %3778 = vmatprep.subr.mxu0 0.0
    %3779 = vmatpush1.msra.mxu0 0.0
    %3780 = vmatprep.subr.mxu0 0.0
    %3781 = vmatpush1.msra.mxu0 0.0
    %3782 = vmatprep.subr.mxu0 0.0
    %3783 = vmatpush1.msra.mxu0 0.0
    %3784 = vmatprep.subr.mxu0 0.0
    %3785 = vmatpush1.msra.mxu0 0.0
    %3786 = vmatprep.subr.mxu0 0.0
    %3787 = vmatpush1.msra.mxu0 0.0
    %3788 = vmatprep.subr.mxu0 0.0
    %3789 = vmatpush1.msra.mxu0 0.0
    %3790 = vmatprep.subr.mxu0 0.0
    %3791 = vmatpush1.msra.mxu0 0.0
    %3792 = vmatprep.subr.mxu0 0.0
    %3793 = vmatpush1.msra.mxu0 0.0
    %3794 = vmatprep.subr.mxu0 0.0
    %3795 = vmatpush1.msra.mxu0 0.0
    %3796 = vmatprep.subr.mxu0 0.0
    %3797 = vmatpush1.msra.mxu0 0.0
    %3798 = vmatprep.subr.mxu0 0.0
    %3799 = vmatpush1.msra.mxu0 0.0
    %3800 = vmatprep.subr.mxu0 0.0
    %3801 = vmatpush1.msra.mxu0 0.0
    %3802 = vmatprep.subr.mxu0 0.0
    %3803 = vmatpush1.msra.mxu0 0.0
    %3804 = vmatprep.subr.mxu0 0.0
    %3805 = vmatpush1.msra.mxu0 0.0
    %3806 = vmatprep.subr.mxu0 0.0
    %3807 = vmatpush1.msra.mxu0 0.0
    %3808 = vmatprep.subr.mxu0 0.0
    %3809 = vmatpush1.msra.mxu0 0.0
    %3810 = vmatprep.subr.mxu0 0.0
    %3811 = vmatpush1.msra.mxu0 0.0
    %3812 = vmatprep.subr.mxu0 0.0
    %3813 = vmatpush1.msra.mxu0 0.0
    %3814 = vmatprep.subr.mxu0 0.0
    %3815 = vmatpush1.msra.mxu0 0.0
    %3816 = vmatprep.subr.mxu0 0.0
    %3817 = vmatpush1.msra.mxu0 0.0
    %3818 = vmatprep.subr.mxu0 0.0
    %3819 = vmatpush1.msra.mxu0 0.0
    %3820 = vmatprep.subr.mxu0 0.0
    %3821 = vmatpush1.msra.mxu0 0.0
    %3822 = vmatprep.subr.mxu0 0.0
    %3823 = vmatpush1.msra.mxu0 0.0
    %3824 = vmatprep.subr.mxu0 0.0
    %3825 = vmatpush1.msra.mxu0 0.0
    %3826 = vmatprep.subr.mxu0 0.0
    %3827 = vmatpush1.msra.mxu0 0.0
    %3828 = vmatprep.subr.mxu0 0.0
    %3829 = vmatpush1.msra.mxu0 0.0
    %3830 = vmatprep.mubr.f32.mxu0 0.0
    %3831 = vmatmul.mubr.f32.gmra.mrb[0].mxu0 %v3764
    %v3832 = vpop.f32.mrb[0].mxu0
    %v3833 = vadd.f32 0.0, %v3832
    %v3834 = vpop.f32.mrb[0].mxu0
    %3835 = vdwg.mxu0
    %v3836 = vsel %vm52, %v3614, 0.0
    %v3837 = vsel %vm52, %v3687, 0.0
    %v3838 = vadd.f32 %v3836, %v3837
    %v3839 = vsel %vm52, %v3760, 0.0
    %v3840 = vadd.f32 %v3838, %v3839
    %v3841 = vsel %vm52, %v3833, 0.0
    %v3842 = vadd.f32 %v3840, %v3841
    %v3843 = vlaneseq
    %v3844 = vshrl.u32 %v3843, 7
    %v3845 = vsub.s32 0, %v3844
    %v3846 = vrot.slane %v163, %v3845
    %v3847 = vadd.f32 %v2048, %v3846
    %v3848 = vadd.f32 %v3842, %v3846
    %v3849 = vadd.f32 %v90, %v3847
    %v3850 = vadd.f32 %v91, %v3848
    %v3851 = vsel %vm52, %v3849, 0.0
    %3852 = vadd.xlane.f32.xlu0 %v3851
    %v3853 = vpop.xlane.xlu0 %3852
    %v3854 = vsel %vm52, %v3850, 0.0
    %3855 = vadd.xlane.f32.xlu0 %v3854
    %v3856 = vpop.xlane.xlu0 %3855
    %v3857 = vmul.f32 %v3853, %v59
    %v3858 = vmul.f32 %v3856, %v59
    %v3859 = vsub.f32 %v3849, %v3857
    %v3860 = vsub.f32 %v3850, %v3858
    %v3861 = vmul.f32 %v3859, %v3859
    %v3862 = vmul.f32 %v3860, %v3860
    %v3863 = vsel %vm52, %v3861, 0.0
    %3864 = vadd.xlane.f32.xlu0 %v3863
    %v3865 = vpop.xlane.xlu0 %3864
    %v3866 = vsel %vm52, %v3862, 0.0
    %3867 = vadd.xlane.f32.xlu0 %v3866
    %v3868 = vpop.xlane.xlu0 %3867
    %v3869 = vmul.f32 %v3865, %v59
    %v3870 = vmul.f32 %v3868, %v59
    %v3871 = vadd.f32 %v3869, 1e-05
    %v3872 = vadd.f32 %v3870, 1e-05
    %v3873 = vrsqrt.pop %v3871
    %v3874 = vrsqrt.pop %v3872
    %v3875 = vmul.f32 %v3859, %v3873
    %v3876 = vmul.f32 %v3860, %v3874
    %v3877 = vlaneseq
    %v3878 = vshrl.u32 %v3877, 7
    %v3879 = vsub.s32 0, %v3878
    %v3880 = vrot.slane %v164, %v3879
    %v3881 = vmul.f32 %v3875, %v3880
    %v3882 = vmul.f32 %v3876, %v3880
    %v3883 = vlaneseq
    %v3884 = vshrl.u32 %v3883, 7
    %v3885 = vsub.s32 0, %v3884
    %v3886 = vrot.slane %v165, %v3885
    %v3887 = vadd.f32 %v3881, %v3886
    %v3888 = vadd.f32 %v3882, %v3886
    %v3889 = vlaneseq
    %v3890 = vshrl.u32 %v3889, 7
    %v3891 = vsub.s32 0, %v3890
    %v3892 = vrot.slane %v173, %v3891
    %v3894 = vsel %vm52, %v3887, 0
    %v3897 = vsel %vm52, %v3888, 0
    %3899 = vmatprep.subr.mxu0 0.0
    %3900 = vmatpush1.msra.mxu0 %v169
    %3901 = vmatprep.subr.mxu0 0.0
    %3902 = vmatpush1.msra.mxu0 %v170
    %3903 = vmatprep.subr.mxu0 0.0
    %3904 = vmatpush1.msra.mxu0 %v171
    %3905 = vmatprep.subr.mxu0 0.0
    %3906 = vmatpush1.msra.mxu0 %v172
    %3907 = vmatprep.subr.mxu0 0.0
    %3908 = vmatpush1.msra.mxu0 0.0
    %3909 = vmatprep.subr.mxu0 0.0
    %3910 = vmatpush1.msra.mxu0 0.0
    %3911 = vmatprep.subr.mxu0 0.0
    %3912 = vmatpush1.msra.mxu0 0.0
    %3913 = vmatprep.subr.mxu0 0.0
    %3914 = vmatpush1.msra.mxu0 0.0
    %3915 = vmatprep.subr.mxu0 0.0
    %3916 = vmatpush1.msra.mxu0 0.0
    %3917 = vmatprep.subr.mxu0 0.0
    %3918 = vmatpush1.msra.mxu0 0.0
    %3919 = vmatprep.subr.mxu0 0.0
    %3920 = vmatpush1.msra.mxu0 0.0
    %3921 = vmatprep.subr.mxu0 0.0
    %3922 = vmatpush1.msra.mxu0 0.0
    %3923 = vmatprep.subr.mxu0 0.0
    %3924 = vmatpush1.msra.mxu0 0.0
    %3925 = vmatprep.subr.mxu0 0.0
    %3926 = vmatpush1.msra.mxu0 0.0
    %3927 = vmatprep.subr.mxu0 0.0
    %3928 = vmatpush1.msra.mxu0 0.0
    %3929 = vmatprep.subr.mxu0 0.0
    %3930 = vmatpush1.msra.mxu0 0.0
    %3931 = vmatprep.subr.mxu0 0.0
    %3932 = vmatpush1.msra.mxu0 0.0
    %3933 = vmatprep.subr.mxu0 0.0
    %3934 = vmatpush1.msra.mxu0 0.0
    %3935 = vmatprep.subr.mxu0 0.0
    %3936 = vmatpush1.msra.mxu0 0.0
    %3937 = vmatprep.subr.mxu0 0.0
    %3938 = vmatpush1.msra.mxu0 0.0
    %3939 = vmatprep.subr.mxu0 0.0
    %3940 = vmatpush1.msra.mxu0 0.0
    %3941 = vmatprep.subr.mxu0 0.0
    %3942 = vmatpush1.msra.mxu0 0.0
    %3943 = vmatprep.subr.mxu0 0.0
    %3944 = vmatpush1.msra.mxu0 0.0
    %3945 = vmatprep.subr.mxu0 0.0
    %3946 = vmatpush1.msra.mxu0 0.0
    %3947 = vmatprep.subr.mxu0 0.0
    %3948 = vmatpush1.msra.mxu0 0.0
    %3949 = vmatprep.subr.mxu0 0.0
    %3950 = vmatpush1.msra.mxu0 0.0
    %3951 = vmatprep.subr.mxu0 0.0
    %3952 = vmatpush1.msra.mxu0 0.0
    %3953 = vmatprep.subr.mxu0 0.0
    %3954 = vmatpush1.msra.mxu0 0.0
    %3955 = vmatprep.subr.mxu0 0.0
    %3956 = vmatpush1.msra.mxu0 0.0
    %3957 = vmatprep.subr.mxu0 0.0
    %3958 = vmatpush1.msra.mxu0 0.0
    %3959 = vmatprep.subr.mxu0 0.0
    %3960 = vmatpush1.msra.mxu0 0.0
    %3961 = vmatprep.subr.mxu0 0.0
    %3962 = vmatpush1.msra.mxu0 0.0
    %3963 = vmatprep.mubr.f32.mxu0 0.0
    %3964 = vmatmul.mubr.f32.gmra.mrb[0].mxu0 %v3894
    %v3965 = vpop.f32.mrb[0].mxu0
    %v3966 = vadd.f32 %v3892, %v3965
    %v3967 = vpop.f32.mrb[0].mxu0
    %3968 = vmatprep.mubr.f32.mxu0 0.0
    %3969 = vmatmul.mubr.f32.gmra.mrb[0].mxu0 %v3897
    %v3970 = vpop.f32.mrb[0].mxu0
    %v3971 = vadd.f32 %v3892, %v3970
    %v3972 = vpop.f32.mrb[0].mxu0
    %3973 = vdwg.mxu0
    %v3974 = vmul.f32 %v3966, 0.5
    %v3975 = vmul.f32 %v3971, 0.5
    %v3976 = vmul.f32 %v3966, 0.70710677
    %v3977 = vmul.f32 %v3971, 0.70710677
    %v3978 = verf.f32.pop %v3976
    %v3979 = verf.f32.pop %v3977
    %v3980 = vadd.f32 %v3978, 1.0
    %v3981 = vadd.f32 %v3979, 1.0
    %v3982 = vmul.f32 %v3974, %v3980
    %v3983 = vmul.f32 %v3975, %v3981
    %v3984 = vlaneseq
    %v3985 = vshrl.u32 %v3984, 7
    %v3986 = vsub.s32 0, %v3985
    %v3987 = vrot.slane %v166, %v3986
    %vm3988 = vcmask 523264
    %v3990 = vsel %vm3988, %v3982, 0
    %v3993 = vsel %vm3988, %v3983, 0
    %3995 = vmatprep.subr.mxu0 0.0
    %3996 = vmatpush1.msra.mxu0 %v174
    %3997 = vmatprep.subr.mxu0 0.0
    %3998 = vmatpush1.msra.mxu0 %v175
    %3999 = vmatprep.subr.mxu0 0.0
    %4000 = vmatpush1.msra.mxu0 %v176
    %4001 = vmatprep.subr.mxu0 0.0
    %4002 = vmatpush1.msra.mxu0 %v177
    %4003 = vmatprep.subr.mxu0 0.0
    %4004 = vmatpush1.msra.mxu0 %v178
    %4005 = vmatprep.subr.mxu0 0.0
    %4006 = vmatpush1.msra.mxu0 %v179
    %4007 = vmatprep.subr.mxu0 0.0
    %4008 = vmatpush1.msra.mxu0 %v180
    %4009 = vmatprep.subr.mxu0 0.0
    %4010 = vmatpush1.msra.mxu0 %v181
    %4011 = vmatprep.subr.mxu0 0.0
    %4012 = vmatpush1.msra.mxu0 0.0
    %4013 = vmatprep.subr.mxu0 0.0
    %4014 = vmatpush1.msra.mxu0 0.0
    %4015 = vmatprep.subr.mxu0 0.0
    %4016 = vmatpush1.msra.mxu0 0.0
    %4017 = vmatprep.subr.mxu0 0.0
    %4018 = vmatpush1.msra.mxu0 0.0
    %4019 = vmatprep.subr.mxu0 0.0
    %4020 = vmatpush1.msra.mxu0 0.0
    %4021 = vmatprep.subr.mxu0 0.0
    %4022 = vmatpush1.msra.mxu0 0.0
    %4023 = vmatprep.subr.mxu0 0.0
    %4024 = vmatpush1.msra.mxu0 0.0
    %4025 = vmatprep.subr.mxu0 0.0
    %4026 = vmatpush1.msra.mxu0 0.0
    %4027 = vmatprep.subr.mxu0 0.0
    %4028 = vmatpush1.msra.mxu0 0.0
    %4029 = vmatprep.subr.mxu0 0.0
    %4030 = vmatpush1.msra.mxu0 0.0
    %4031 = vmatprep.subr.mxu0 0.0
    %4032 = vmatpush1.msra.mxu0 0.0
    %4033 = vmatprep.subr.mxu0 0.0
    %4034 = vmatpush1.msra.mxu0 0.0
    %4035 = vmatprep.subr.mxu0 0.0
    %4036 = vmatpush1.msra.mxu0 0.0
    %4037 = vmatprep.subr.mxu0 0.0
    %4038 = vmatpush1.msra.mxu0 0.0
    %4039 = vmatprep.subr.mxu0 0.0
    %4040 = vmatpush1.msra.mxu0 0.0
    %4041 = vmatprep.subr.mxu0 0.0
    %4042 = vmatpush1.msra.mxu0 0.0
    %4043 = vmatprep.subr.mxu0 0.0
    %4044 = vmatpush1.msra.mxu0 0.0
    %4045 = vmatprep.subr.mxu0 0.0
    %4046 = vmatpush1.msra.mxu0 0.0
    %4047 = vmatprep.subr.mxu0 0.0
    %4048 = vmatpush1.msra.mxu0 0.0
    %4049 = vmatprep.subr.mxu0 0.0
    %4050 = vmatpush1.msra.mxu0 0.0
    %4051 = vmatprep.subr.mxu0 0.0
    %4052 = vmatpush1.msra.mxu0 0.0
    %4053 = vmatprep.subr.mxu0 0.0
    %4054 = vmatpush1.msra.mxu0 0.0
    %4055 = vmatprep.subr.mxu0 0.0
    %4056 = vmatpush1.msra.mxu0 0.0
    %4057 = vmatprep.subr.mxu0 0.0
    %4058 = vmatpush1.msra.mxu0 0.0
    %4059 = vmatprep.mubr.f32.mxu0 0.0
    %4060 = vmatmul.mubr.f32.gmra.mrb[0].mxu0 %v3990
    %v4061 = vpop.f32.mrb[0].mxu0
    %v4062 = vadd.f32 %v3987, %v4061
    %v4063 = vpop.f32.mrb[0].mxu0
    %4064 = vmatprep.mubr.f32.mxu0 0.0
    %4065 = vmatmul.mubr.f32.gmra.mrb[0].mxu0 %v3993
    %v4066 = vpop.f32.mrb[0].mxu0
    %v4067 = vadd.f32 %v3987, %v4066
    %v4068 = vpop.f32.mrb[0].mxu0
    %4069 = vdwg.mxu0
    %v4070 = vadd.f32 %v3887, %v4062
    %v4071 = vadd.f32 %v3888, %v4067
    %v4072 = vsel %vm52, %v4070, 0.0
    %4073 = vadd.xlane.f32.xlu0 %v4072
    %v4074 = vpop.xlane.xlu0 %4073
    %v4075 = vsel %vm52, %v4071, 0.0
    %4076 = vadd.xlane.f32.xlu0 %v4075
    %v4077 = vpop.xlane.xlu0 %4076
    %v4078 = vmul.f32 %v4074, %v59
    %v4079 = vmul.f32 %v4077, %v59
    %v4080 = vsub.f32 %v4070, %v4078
    %v4081 = vsub.f32 %v4071, %v4079
    %v4082 = vmul.f32 %v4080, %v4080
    %v4083 = vmul.f32 %v4081, %v4081
    %v4084 = vsel %vm52, %v4082, 0.0
    %4085 = vadd.xlane.f32.xlu0 %v4084
    %v4086 = vpop.xlane.xlu0 %4085
    %v4087 = vsel %vm52, %v4083, 0.0
    %4088 = vadd.xlane.f32.xlu0 %v4087
    %v4089 = vpop.xlane.xlu0 %4088
    %v4090 = vmul.f32 %v4086, %v59
    %v4091 = vmul.f32 %v4089, %v59
    %v4092 = vadd.f32 %v4090, 1e-05
    %v4093 = vadd.f32 %v4091, 1e-05
    %v4094 = vrsqrt.pop %v4092
    %v4095 = vrsqrt.pop %v4093
    %v4096 = vmul.f32 %v4080, %v4094
    %v4097 = vmul.f32 %v4081, %v4095
    %v4098 = vlaneseq
    %v4099 = vshrl.u32 %v4098, 7
    %v4100 = vsub.s32 0, %v4099
    %v4101 = vrot.slane %v167, %v4100
    %v4102 = vmul.f32 %v4096, %v4101
    %v4103 = vmul.f32 %v4097, %v4101
    %v4104 = vlaneseq
    %v4105 = vshrl.u32 %v4104, 7
    %v4106 = vsub.s32 0, %v4105
    %v4107 = vrot.slane %v168, %v4106
    %v4108 = vadd.f32 %v4102, %v4107
    %v4109 = vadd.f32 %v4103, %v4107
    %s4110 = scalar_lea.vmem %s3, 384
    %v4111 = vld [vmem:[%s4110] sm:$0xff]
    %v4112 = vld [vmem:[%s4110 + $0x8] sm:$0xff]
    %v4113 = vld [vmem:[%s4110 + $0x10] sm:$0xff]
    %v4114 = vld [vmem:[%s4110 + $0x18] sm:$0xff]
    %v4115 = vld [vmem:[%s4110 + $0x20] sm:$0xff]
    %v4116 = vld [vmem:[%s4110 + $0x28] sm:$0xff]
    %v4117 = vld [vmem:[%s4110 + $0x30] sm:$0xff]
    %v4118 = vld [vmem:[%s4110 + $0x38] sm:$0xff]
    %v4119 = vld [vmem:[%s4110 + $0x40] sm:$0xff]
    %v4120 = vld [vmem:[%s4110 + $0x48] sm:$0xff]
    %v4121 = vld [vmem:[%s4110 + $0x50] sm:$0xff]
    %v4122 = vld [vmem:[%s4110 + $0x58] sm:$0xff]
    %v4123 = vld [vmem:[%s4110 + $0x60] sm:$0xff]
    %v4124 = vld [vmem:[%s4110 + $0x68] sm:$0xff]
    %v4125 = vld [vmem:[%s4110 + $0x70] sm:$0xff]
    %v4126 = vld [vmem:[%s4110 + $0x78] sm:$0xff]
    %s4127 = scalar_lea.vmem %s3, 512
    %v4128 = vld [vmem:[%s4127] sm:$0xff]
    %v4129 = vld [vmem:[%s4127 + $0x8] sm:$0xff]
    %v4130 = vld [vmem:[%s4127 + $0x10] sm:$0xff]
    %v4131 = vld [vmem:[%s4127 + $0x18] sm:$0xff]
    %v4132 = vld [vmem:[%s4127 + $0x20] sm:$0xff]
    %v4133 = vld [vmem:[%s4127 + $0x28] sm:$0xff]
    %v4134 = vld [vmem:[%s4127 + $0x30] sm:$0xff]
    %v4135 = vld [vmem:[%s4127 + $0x38] sm:$0xff]
    %v4136 = vld [vmem:[%s4127 + $0x40] sm:$0xff]
    %v4137 = vld [vmem:[%s4127 + $0x48] sm:$0xff]
    %v4138 = vld [vmem:[%s4127 + $0x50] sm:$0xff]
    %v4139 = vld [vmem:[%s4127 + $0x58] sm:$0xff]
    %v4140 = vld [vmem:[%s4127 + $0x60] sm:$0xff]
    %v4141 = vld [vmem:[%s4127 + $0x68] sm:$0xff]
    %v4142 = vld [vmem:[%s4127 + $0x70] sm:$0xff]
    %v4143 = vld [vmem:[%s4127 + $0x78] sm:$0xff]
    %s4144 = scalar_lea.vmem %s3, 640
    %v4145 = vld [vmem:[%s4144] sm:$0xff]
    %v4146 = vld [vmem:[%s4144 + $0x8] sm:$0xff]
    %v4147 = vld [vmem:[%s4144 + $0x10] sm:$0xff]
    %v4148 = vld [vmem:[%s4144 + $0x18] sm:$0xff]
    %v4149 = vld [vmem:[%s4144 + $0x20] sm:$0xff]
    %v4150 = vld [vmem:[%s4144 + $0x28] sm:$0xff]
    %v4151 = vld [vmem:[%s4144 + $0x30] sm:$0xff]
    %v4152 = vld [vmem:[%s4144 + $0x38] sm:$0xff]
    %v4153 = vld [vmem:[%s4144 + $0x40] sm:$0xff]
    %v4154 = vld [vmem:[%s4144 + $0x48] sm:$0xff]
    %v4155 = vld [vmem:[%s4144 + $0x50] sm:$0xff]
    %v4156 = vld [vmem:[%s4144 + $0x58] sm:$0xff]
    %v4157 = vld [vmem:[%s4144 + $0x60] sm:$0xff]
    %v4158 = vld [vmem:[%s4144 + $0x68] sm:$0xff]
    %v4159 = vld [vmem:[%s4144 + $0x70] sm:$0xff]
    %v4160 = vld [vmem:[%s4144 + $0x78] sm:$0xff]
    %s4161 = scalar_lea.vmem %s4, 12
    %v4162 = vld [vmem:[%s4161] sm:$0x1]
    %v4163 = vld [vmem:[%s4161 + $0x1] sm:$0x1]
    %v4164 = vld [vmem:[%s4161 + $0x2] sm:$0x1]
    %v4165 = vld [vmem:[%s4161 + $0x3] sm:$0x1]
    %s4166 = scalar_lea.vmem %s4, 16
    %v4167 = vld [vmem:[%s4166] sm:$0x1]
    %v4168 = vld [vmem:[%s4166 + $0x1] sm:$0x1]
    %v4169 = vld [vmem:[%s4166 + $0x2] sm:$0x1]
    %v4170 = vld [vmem:[%s4166 + $0x3] sm:$0x1]
    %s4171 = scalar_lea.vmem %s4, 20
    %v4172 = vld [vmem:[%s4171] sm:$0x1]
    %v4173 = vld [vmem:[%s4171 + $0x1] sm:$0x1]
    %v4174 = vld [vmem:[%s4171 + $0x2] sm:$0x1]
    %v4175 = vld [vmem:[%s4171 + $0x3] sm:$0x1]
    %s4176 = scalar_lea.vmem %s5, 32
    %v4177 = vld [vmem:[%s4176] sm:$0xff]
    %v4178 = vld [vmem:[%s4176 + $0x8] sm:$0xff]
    %v4179 = vld [vmem:[%s4176 + $0x10] sm:$0xff]
    %v4180 = vld [vmem:[%s4176 + $0x18] sm:$0xff]
    %v4181 = vld [vmem:[%s9 + $0x6] sm:$0x1]
    %v4182 = vld [vmem:[%s9 + $0x7] sm:$0x1]
    %v4183 = vld [vmem:[%s9 + $0x8] sm:$0x1]
    %v4184 = vld [vmem:[%s9 + $0x9] sm:$0x1]
    %v4185 = vld [vmem:[%s9 + $0xa] sm:$0x1]
    %v4186 = vld [vmem:[%s9 + $0xb] sm:$0x1]
    %s4187 = scalar_lea.vmem %s6, 32
    %v4188 = vld [vmem:[%s4187] sm:$0xff]
    %v4189 = vld [vmem:[%s4187 + $0x8] sm:$0xff]
    %v4190 = vld [vmem:[%s4187 + $0x10] sm:$0xff]
    %v4191 = vld [vmem:[%s4187 + $0x18] sm:$0xff]
    %v4192 = vld [vmem:[%s7 + $0x1] sm:$0x1]
    %s4193 = scalar_lea.vmem %s8, 64
    %v4194 = vld [vmem:[%s4193] sm:$0xff]
    %v4195 = vld [vmem:[%s4193 + $0x8] sm:$0xff]
    %v4196 = vld [vmem:[%s4193 + $0x10] sm:$0xff]
    %v4197 = vld [vmem:[%s4193 + $0x18] sm:$0xff]
    %v4198 = vld [vmem:[%s4193 + $0x20] sm:$0xff]
    %v4199 = vld [vmem:[%s4193 + $0x28] sm:$0xff]
    %v4200 = vld [vmem:[%s4193 + $0x30] sm:$0xff]
    %v4201 = vld [vmem:[%s4193 + $0x38] sm:$0xff]
    %v4206 = vlaneseq
    %v4207 = vshrl.u32 %v4206, 7
    %v4208 = vsub.s32 0, %v4207
    %v4209 = vrot.slane %v4162, %v4208
    %v4210 = vlaneseq
    %v4211 = vshrl.u32 %v4210, 7
    %v4212 = vsub.s32 0, %v4211
    %v4213 = vrot.slane %v4163, %v4212
    %v4214 = vlaneseq
    %v4215 = vshrl.u32 %v4214, 7
    %v4216 = vsub.s32 0, %v4215
    %v4217 = vrot.slane %v4164, %v4216
    %v4218 = vlaneseq
    %v4219 = vshrl.u32 %v4218, 7
    %v4220 = vsub.s32 0, %v4219
    %v4221 = vrot.slane %v4165, %v4220
    %v4227 = vsel %vm52, %v4108, 0
    %4229 = vmatprep.subr.mxu0 0.0
    %4230 = vmatpush1.msra.mxu0 %v4111
    %4231 = vmatprep.subr.mxu0 0.0
    %4232 = vmatpush1.msra.mxu0 %v4112
    %4233 = vmatprep.subr.mxu0 0.0
    %4234 = vmatpush1.msra.mxu0 %v4113
    %4235 = vmatprep.subr.mxu0 0.0
    %4236 = vmatpush1.msra.mxu0 %v4114
    %4237 = vmatprep.subr.mxu0 0.0
    %4238 = vmatpush1.msra.mxu0 0.0
    %4239 = vmatprep.subr.mxu0 0.0
    %4240 = vmatpush1.msra.mxu0 0.0
    %4241 = vmatprep.subr.mxu0 0.0
    %4242 = vmatpush1.msra.mxu0 0.0
    %4243 = vmatprep.subr.mxu0 0.0
    %4244 = vmatpush1.msra.mxu0 0.0
    %4245 = vmatprep.subr.mxu0 0.0
    %4246 = vmatpush1.msra.mxu0 0.0
    %4247 = vmatprep.subr.mxu0 0.0
    %4248 = vmatpush1.msra.mxu0 0.0
    %4249 = vmatprep.subr.mxu0 0.0
    %4250 = vmatpush1.msra.mxu0 0.0
    %4251 = vmatprep.subr.mxu0 0.0
    %4252 = vmatpush1.msra.mxu0 0.0
    %4253 = vmatprep.subr.mxu0 0.0
    %4254 = vmatpush1.msra.mxu0 0.0
    %4255 = vmatprep.subr.mxu0 0.0
    %4256 = vmatpush1.msra.mxu0 0.0
    %4257 = vmatprep.subr.mxu0 0.0
    %4258 = vmatpush1.msra.mxu0 0.0
    %4259 = vmatprep.subr.mxu0 0.0
    %4260 = vmatpush1.msra.mxu0 0.0
    %4261 = vmatprep.subr.mxu0 0.0
    %4262 = vmatpush1.msra.mxu0 0.0
    %4263 = vmatprep.subr.mxu0 0.0
    %4264 = vmatpush1.msra.mxu0 0.0
    %4265 = vmatprep.subr.mxu0 0.0
    %4266 = vmatpush1.msra.mxu0 0.0
    %4267 = vmatprep.subr.mxu0 0.0
    %4268 = vmatpush1.msra.mxu0 0.0
    %4269 = vmatprep.subr.mxu0 0.0
    %4270 = vmatpush1.msra.mxu0 0.0
    %4271 = vmatprep.subr.mxu0 0.0
    %4272 = vmatpush1.msra.mxu0 0.0
    %4273 = vmatprep.subr.mxu0 0.0
    %4274 = vmatpush1.msra.mxu0 0.0
    %4275 = vmatprep.subr.mxu0 0.0
    %4276 = vmatpush1.msra.mxu0 0.0
    %4277 = vmatprep.subr.mxu0 0.0
    %4278 = vmatpush1.msra.mxu0 0.0
    %4279 = vmatprep.subr.mxu0 0.0
    %4280 = vmatpush1.msra.mxu0 0.0
    %4281 = vmatprep.subr.mxu0 0.0
    %4282 = vmatpush1.msra.mxu0 0.0
    %4283 = vmatprep.subr.mxu0 0.0
    %4284 = vmatpush1.msra.mxu0 0.0
    %4285 = vmatprep.subr.mxu0 0.0
    %4286 = vmatpush1.msra.mxu0 0.0
    %4287 = vmatprep.subr.mxu0 0.0
    %4288 = vmatpush1.msra.mxu0 0.0
    %4289 = vmatprep.subr.mxu0 0.0
    %4290 = vmatpush1.msra.mxu0 0.0
    %4291 = vmatprep.subr.mxu0 0.0
    %4292 = vmatpush1.msra.mxu0 0.0
    %4293 = vmatprep.mubr.f32.mxu0 0.0
    %4294 = vmatmul.mubr.f32.gmra.mrb[0].mxu0 %v4227
    %v4295 = vpop.f32.mrb[0].mxu0
    %v4296 = vadd.f32 %v4209, %v4295
    %v4297 = vpop.f32.mrb[0].mxu0
    %4298 = vdwg.mxu0
    %4299 = vmatprep.subr.mxu0 0.0
    %4300 = vmatpush1.msra.mxu0 %v4115
    %4301 = vmatprep.subr.mxu0 0.0
    %4302 = vmatpush1.msra.mxu0 %v4116
    %4303 = vmatprep.subr.mxu0 0.0
    %4304 = vmatpush1.msra.mxu0 %v4117
    %4305 = vmatprep.subr.mxu0 0.0
    %4306 = vmatpush1.msra.mxu0 %v4118
    %4307 = vmatprep.subr.mxu0 0.0
    %4308 = vmatpush1.msra.mxu0 0.0
    %4309 = vmatprep.subr.mxu0 0.0
    %4310 = vmatpush1.msra.mxu0 0.0
    %4311 = vmatprep.subr.mxu0 0.0
    %4312 = vmatpush1.msra.mxu0 0.0
    %4313 = vmatprep.subr.mxu0 0.0
    %4314 = vmatpush1.msra.mxu0 0.0
    %4315 = vmatprep.subr.mxu0 0.0
    %4316 = vmatpush1.msra.mxu0 0.0
    %4317 = vmatprep.subr.mxu0 0.0
    %4318 = vmatpush1.msra.mxu0 0.0
    %4319 = vmatprep.subr.mxu0 0.0
    %4320 = vmatpush1.msra.mxu0 0.0
    %4321 = vmatprep.subr.mxu0 0.0
    %4322 = vmatpush1.msra.mxu0 0.0
    %4323 = vmatprep.subr.mxu0 0.0
    %4324 = vmatpush1.msra.mxu0 0.0
    %4325 = vmatprep.subr.mxu0 0.0
    %4326 = vmatpush1.msra.mxu0 0.0
    %4327 = vmatprep.subr.mxu0 0.0
    %4328 = vmatpush1.msra.mxu0 0.0
    %4329 = vmatprep.subr.mxu0 0.0
    %4330 = vmatpush1.msra.mxu0 0.0
    %4331 = vmatprep.subr.mxu0 0.0
    %4332 = vmatpush1.msra.mxu0 0.0
    %4333 = vmatprep.subr.mxu0 0.0
    %4334 = vmatpush1.msra.mxu0 0.0
    %4335 = vmatprep.subr.mxu0 0.0
    %4336 = vmatpush1.msra.mxu0 0.0
    %4337 = vmatprep.subr.mxu0 0.0
    %4338 = vmatpush1.msra.mxu0 0.0
    %4339 = vmatprep.subr.mxu0 0.0
    %4340 = vmatpush1.msra.mxu0 0.0
    %4341 = vmatprep.subr.mxu0 0.0
    %4342 = vmatpush1.msra.mxu0 0.0
    %4343 = vmatprep.subr.mxu0 0.0
    %4344 = vmatpush1.msra.mxu0 0.0
    %4345 = vmatprep.subr.mxu0 0.0
    %4346 = vmatpush1.msra.mxu0 0.0
    %4347 = vmatprep.subr.mxu0 0.0
    %4348 = vmatpush1.msra.mxu0 0.0
    %4349 = vmatprep.subr.mxu0 0.0
    %4350 = vmatpush1.msra.mxu0 0.0
    %4351 = vmatprep.subr.mxu0 0.0
    %4352 = vmatpush1.msra.mxu0 0.0
    %4353 = vmatprep.subr.mxu0 0.0
    %4354 = vmatpush1.msra.mxu0 0.0
    %4355 = vmatprep.subr.mxu0 0.0
    %4356 = vmatpush1.msra.mxu0 0.0
    %4357 = vmatprep.subr.mxu0 0.0
    %4358 = vmatpush1.msra.mxu0 0.0
    %4359 = vmatprep.subr.mxu0 0.0
    %4360 = vmatpush1.msra.mxu0 0.0
    %4361 = vmatprep.subr.mxu0 0.0
    %4362 = vmatpush1.msra.mxu0 0.0
    %4363 = vmatprep.mubr.f32.mxu0 0.0
    %4364 = vmatmul.mubr.f32.gmra.mrb[0].mxu0 %v4227
    %v4365 = vpop.f32.mrb[0].mxu0
    %v4366 = vadd.f32 %v4213, %v4365
    %v4367 = vpop.f32.mrb[0].mxu0
    %4368 = vdwg.mxu0
    %4369 = vmatprep.subr.mxu0 0.0
    %4370 = vmatpush1.msra.mxu0 %v4119
    %4371 = vmatprep.subr.mxu0 0.0
    %4372 = vmatpush1.msra.mxu0 %v4120
    %4373 = vmatprep.subr.mxu0 0.0
    %4374 = vmatpush1.msra.mxu0 %v4121
    %4375 = vmatprep.subr.mxu0 0.0
    %4376 = vmatpush1.msra.mxu0 %v4122
    %4377 = vmatprep.subr.mxu0 0.0
    %4378 = vmatpush1.msra.mxu0 0.0
    %4379 = vmatprep.subr.mxu0 0.0
    %4380 = vmatpush1.msra.mxu0 0.0
    %4381 = vmatprep.subr.mxu0 0.0
    %4382 = vmatpush1.msra.mxu0 0.0
    %4383 = vmatprep.subr.mxu0 0.0
    %4384 = vmatpush1.msra.mxu0 0.0
    %4385 = vmatprep.subr.mxu0 0.0
    %4386 = vmatpush1.msra.mxu0 0.0
    %4387 = vmatprep.subr.mxu0 0.0
    %4388 = vmatpush1.msra.mxu0 0.0
    %4389 = vmatprep.subr.mxu0 0.0
    %4390 = vmatpush1.msra.mxu0 0.0
    %4391 = vmatprep.subr.mxu0 0.0
    %4392 = vmatpush1.msra.mxu0 0.0
    %4393 = vmatprep.subr.mxu0 0.0
    %4394 = vmatpush1.msra.mxu0 0.0
    %4395 = vmatprep.subr.mxu0 0.0
    %4396 = vmatpush1.msra.mxu0 0.0
    %4397 = vmatprep.subr.mxu0 0.0
    %4398 = vmatpush1.msra.mxu0 0.0
    %4399 = vmatprep.subr.mxu0 0.0
    %4400 = vmatpush1.msra.mxu0 0.0
    %4401 = vmatprep.subr.mxu0 0.0
    %4402 = vmatpush1.msra.mxu0 0.0
    %4403 = vmatprep.subr.mxu0 0.0
    %4404 = vmatpush1.msra.mxu0 0.0
    %4405 = vmatprep.subr.mxu0 0.0
    %4406 = vmatpush1.msra.mxu0 0.0
    %4407 = vmatprep.subr.mxu0 0.0
    %4408 = vmatpush1.msra.mxu0 0.0
    %4409 = vmatprep.subr.mxu0 0.0
    %4410 = vmatpush1.msra.mxu0 0.0
    %4411 = vmatprep.subr.mxu0 0.0
    %4412 = vmatpush1.msra.mxu0 0.0
    %4413 = vmatprep.subr.mxu0 0.0
    %4414 = vmatpush1.msra.mxu0 0.0
    %4415 = vmatprep.subr.mxu0 0.0
    %4416 = vmatpush1.msra.mxu0 0.0
    %4417 = vmatprep.subr.mxu0 0.0
    %4418 = vmatpush1.msra.mxu0 0.0
    %4419 = vmatprep.subr.mxu0 0.0
    %4420 = vmatpush1.msra.mxu0 0.0
    %4421 = vmatprep.subr.mxu0 0.0
    %4422 = vmatpush1.msra.mxu0 0.0
    %4423 = vmatprep.subr.mxu0 0.0
    %4424 = vmatpush1.msra.mxu0 0.0
    %4425 = vmatprep.subr.mxu0 0.0
    %4426 = vmatpush1.msra.mxu0 0.0
    %4427 = vmatprep.subr.mxu0 0.0
    %4428 = vmatpush1.msra.mxu0 0.0
    %4429 = vmatprep.subr.mxu0 0.0
    %4430 = vmatpush1.msra.mxu0 0.0
    %4431 = vmatprep.subr.mxu0 0.0
    %4432 = vmatpush1.msra.mxu0 0.0
    %4433 = vmatprep.mubr.f32.mxu0 0.0
    %4434 = vmatmul.mubr.f32.gmra.mrb[0].mxu0 %v4227
    %v4435 = vpop.f32.mrb[0].mxu0
    %v4436 = vadd.f32 %v4217, %v4435
    %v4437 = vpop.f32.mrb[0].mxu0
    %4438 = vdwg.mxu0
    %4439 = vmatprep.subr.mxu0 0.0
    %4440 = vmatpush1.msra.mxu0 %v4123
    %4441 = vmatprep.subr.mxu0 0.0
    %4442 = vmatpush1.msra.mxu0 %v4124
    %4443 = vmatprep.subr.mxu0 0.0
    %4444 = vmatpush1.msra.mxu0 %v4125
    %4445 = vmatprep.subr.mxu0 0.0
    %4446 = vmatpush1.msra.mxu0 %v4126
    %4447 = vmatprep.subr.mxu0 0.0
    %4448 = vmatpush1.msra.mxu0 0.0
    %4449 = vmatprep.subr.mxu0 0.0
    %4450 = vmatpush1.msra.mxu0 0.0
    %4451 = vmatprep.subr.mxu0 0.0
    %4452 = vmatpush1.msra.mxu0 0.0
    %4453 = vmatprep.subr.mxu0 0.0
    %4454 = vmatpush1.msra.mxu0 0.0
    %4455 = vmatprep.subr.mxu0 0.0
    %4456 = vmatpush1.msra.mxu0 0.0
    %4457 = vmatprep.subr.mxu0 0.0
    %4458 = vmatpush1.msra.mxu0 0.0
    %4459 = vmatprep.subr.mxu0 0.0
    %4460 = vmatpush1.msra.mxu0 0.0
    %4461 = vmatprep.subr.mxu0 0.0
    %4462 = vmatpush1.msra.mxu0 0.0
    %4463 = vmatprep.subr.mxu0 0.0
    %4464 = vmatpush1.msra.mxu0 0.0
    %4465 = vmatprep.subr.mxu0 0.0
    %4466 = vmatpush1.msra.mxu0 0.0
    %4467 = vmatprep.subr.mxu0 0.0
    %4468 = vmatpush1.msra.mxu0 0.0
    %4469 = vmatprep.subr.mxu0 0.0
    %4470 = vmatpush1.msra.mxu0 0.0
    %4471 = vmatprep.subr.mxu0 0.0
    %4472 = vmatpush1.msra.mxu0 0.0
    %4473 = vmatprep.subr.mxu0 0.0
    %4474 = vmatpush1.msra.mxu0 0.0
    %4475 = vmatprep.subr.mxu0 0.0
    %4476 = vmatpush1.msra.mxu0 0.0
    %4477 = vmatprep.subr.mxu0 0.0
    %4478 = vmatpush1.msra.mxu0 0.0
    %4479 = vmatprep.subr.mxu0 0.0
    %4480 = vmatpush1.msra.mxu0 0.0
    %4481 = vmatprep.subr.mxu0 0.0
    %4482 = vmatpush1.msra.mxu0 0.0
    %4483 = vmatprep.subr.mxu0 0.0
    %4484 = vmatpush1.msra.mxu0 0.0
    %4485 = vmatprep.subr.mxu0 0.0
    %4486 = vmatpush1.msra.mxu0 0.0
    %4487 = vmatprep.subr.mxu0 0.0
    %4488 = vmatpush1.msra.mxu0 0.0
    %4489 = vmatprep.subr.mxu0 0.0
    %4490 = vmatpush1.msra.mxu0 0.0
    %4491 = vmatprep.subr.mxu0 0.0
    %4492 = vmatpush1.msra.mxu0 0.0
    %4493 = vmatprep.subr.mxu0 0.0
    %4494 = vmatpush1.msra.mxu0 0.0
    %4495 = vmatprep.subr.mxu0 0.0
    %4496 = vmatpush1.msra.mxu0 0.0
    %4497 = vmatprep.subr.mxu0 0.0
    %4498 = vmatpush1.msra.mxu0 0.0
    %4499 = vmatprep.subr.mxu0 0.0
    %4500 = vmatpush1.msra.mxu0 0.0
    %4501 = vmatprep.subr.mxu0 0.0
    %4502 = vmatpush1.msra.mxu0 0.0
    %4503 = vmatprep.mubr.f32.mxu0 0.0
    %4504 = vmatmul.mubr.f32.gmra.mrb[0].mxu0 %v4227
    %v4505 = vpop.f32.mrb[0].mxu0
    %v4506 = vadd.f32 %v4221, %v4505
    %v4507 = vpop.f32.mrb[0].mxu0
    %4508 = vdwg.mxu0
    %v4513 = vlaneseq
    %v4514 = vshrl.u32 %v4513, 7
    %v4515 = vsub.s32 0, %v4514
    %v4516 = vrot.slane %v4167, %v4515
    %v4517 = vlaneseq
    %v4518 = vshrl.u32 %v4517, 7
    %v4519 = vsub.s32 0, %v4518
    %v4520 = vrot.slane %v4168, %v4519
    %v4521 = vlaneseq
    %v4522 = vshrl.u32 %v4521, 7
    %v4523 = vsub.s32 0, %v4522
    %v4524 = vrot.slane %v4169, %v4523
    %v4525 = vlaneseq
    %v4526 = vshrl.u32 %v4525, 7
    %v4527 = vsub.s32 0, %v4526
    %v4528 = vrot.slane %v4170, %v4527
    %4533 = vmatprep.subr.mxu0 0.0
    %4534 = vmatpush1.msra.mxu0 %v4128
    %4535 = vmatprep.subr.mxu0 0.0
    %4536 = vmatpush1.msra.mxu0 %v4129
    %4537 = vmatprep.subr.mxu0 0.0
    %4538 = vmatpush1.msra.mxu0 %v4130
    %4539 = vmatprep.subr.mxu0 0.0
    %4540 = vmatpush1.msra.mxu0 %v4131
    %4541 = vmatprep.subr.mxu0 0.0
    %4542 = vmatpush1.msra.mxu0 0.0
    %4543 = vmatprep.subr.mxu0 0.0
    %4544 = vmatpush1.msra.mxu0 0.0
    %4545 = vmatprep.subr.mxu0 0.0
    %4546 = vmatpush1.msra.mxu0 0.0
    %4547 = vmatprep.subr.mxu0 0.0
    %4548 = vmatpush1.msra.mxu0 0.0
    %4549 = vmatprep.subr.mxu0 0.0
    %4550 = vmatpush1.msra.mxu0 0.0
    %4551 = vmatprep.subr.mxu0 0.0
    %4552 = vmatpush1.msra.mxu0 0.0
    %4553 = vmatprep.subr.mxu0 0.0
    %4554 = vmatpush1.msra.mxu0 0.0
    %4555 = vmatprep.subr.mxu0 0.0
    %4556 = vmatpush1.msra.mxu0 0.0
    %4557 = vmatprep.subr.mxu0 0.0
    %4558 = vmatpush1.msra.mxu0 0.0
    %4559 = vmatprep.subr.mxu0 0.0
    %4560 = vmatpush1.msra.mxu0 0.0
    %4561 = vmatprep.subr.mxu0 0.0
    %4562 = vmatpush1.msra.mxu0 0.0
    %4563 = vmatprep.subr.mxu0 0.0
    %4564 = vmatpush1.msra.mxu0 0.0
    %4565 = vmatprep.subr.mxu0 0.0
    %4566 = vmatpush1.msra.mxu0 0.0
    %4567 = vmatprep.subr.mxu0 0.0
    %4568 = vmatpush1.msra.mxu0 0.0
    %4569 = vmatprep.subr.mxu0 0.0
    %4570 = vmatpush1.msra.mxu0 0.0
    %4571 = vmatprep.subr.mxu0 0.0
    %4572 = vmatpush1.msra.mxu0 0.0
    %4573 = vmatprep.subr.mxu0 0.0
    %4574 = vmatpush1.msra.mxu0 0.0
    %4575 = vmatprep.subr.mxu0 0.0
    %4576 = vmatpush1.msra.mxu0 0.0
    %4577 = vmatprep.subr.mxu0 0.0
    %4578 = vmatpush1.msra.mxu0 0.0
    %4579 = vmatprep.subr.mxu0 0.0
    %4580 = vmatpush1.msra.mxu0 0.0
    %4581 = vmatprep.subr.mxu0 0.0
    %4582 = vmatpush1.msra.mxu0 0.0
    %4583 = vmatprep.subr.mxu0 0.0
    %4584 = vmatpush1.msra.mxu0 0.0
    %4585 = vmatprep.subr.mxu0 0.0
    %4586 = vmatpush1.msra.mxu0 0.0
    %4587 = vmatprep.subr.mxu0 0.0
    %4588 = vmatpush1.msra.mxu0 0.0
    %4589 = vmatprep.subr.mxu0 0.0
    %4590 = vmatpush1.msra.mxu0 0.0
    %4591 = vmatprep.subr.mxu0 0.0
    %4592 = vmatpush1.msra.mxu0 0.0
    %4593 = vmatprep.subr.mxu0 0.0
    %4594 = vmatpush1.msra.mxu0 0.0
    %4595 = vmatprep.subr.mxu0 0.0
    %4596 = vmatpush1.msra.mxu0 0.0
    %4597 = vmatprep.mubr.f32.mxu0 0.0
    %4598 = vmatmul.mubr.f32.gmra.mrb[0].mxu0 %v4227
    %v4599 = vpop.f32.mrb[0].mxu0
    %v4600 = vadd.f32 %v4516, %v4599
    %v4601 = vpop.f32.mrb[0].mxu0
    %4602 = vdwg.mxu0
    %4603 = vmatprep.subr.mxu0 0.0
    %4604 = vmatpush1.msra.mxu0 %v4132
    %4605 = vmatprep.subr.mxu0 0.0
    %4606 = vmatpush1.msra.mxu0 %v4133
    %4607 = vmatprep.subr.mxu0 0.0
    %4608 = vmatpush1.msra.mxu0 %v4134
    %4609 = vmatprep.subr.mxu0 0.0
    %4610 = vmatpush1.msra.mxu0 %v4135
    %4611 = vmatprep.subr.mxu0 0.0
    %4612 = vmatpush1.msra.mxu0 0.0
    %4613 = vmatprep.subr.mxu0 0.0
    %4614 = vmatpush1.msra.mxu0 0.0
    %4615 = vmatprep.subr.mxu0 0.0
    %4616 = vmatpush1.msra.mxu0 0.0
    %4617 = vmatprep.subr.mxu0 0.0
    %4618 = vmatpush1.msra.mxu0 0.0
    %4619 = vmatprep.subr.mxu0 0.0
    %4620 = vmatpush1.msra.mxu0 0.0
    %4621 = vmatprep.subr.mxu0 0.0
    %4622 = vmatpush1.msra.mxu0 0.0
    %4623 = vmatprep.subr.mxu0 0.0
    %4624 = vmatpush1.msra.mxu0 0.0
    %4625 = vmatprep.subr.mxu0 0.0
    %4626 = vmatpush1.msra.mxu0 0.0
    %4627 = vmatprep.subr.mxu0 0.0
    %4628 = vmatpush1.msra.mxu0 0.0
    %4629 = vmatprep.subr.mxu0 0.0
    %4630 = vmatpush1.msra.mxu0 0.0
    %4631 = vmatprep.subr.mxu0 0.0
    %4632 = vmatpush1.msra.mxu0 0.0
    %4633 = vmatprep.subr.mxu0 0.0
    %4634 = vmatpush1.msra.mxu0 0.0
    %4635 = vmatprep.subr.mxu0 0.0
    %4636 = vmatpush1.msra.mxu0 0.0
    %4637 = vmatprep.subr.mxu0 0.0
    %4638 = vmatpush1.msra.mxu0 0.0
    %4639 = vmatprep.subr.mxu0 0.0
    %4640 = vmatpush1.msra.mxu0 0.0
    %4641 = vmatprep.subr.mxu0 0.0
    %4642 = vmatpush1.msra.mxu0 0.0
    %4643 = vmatprep.subr.mxu0 0.0
    %4644 = vmatpush1.msra.mxu0 0.0
    %4645 = vmatprep.subr.mxu0 0.0
    %4646 = vmatpush1.msra.mxu0 0.0
    %4647 = vmatprep.subr.mxu0 0.0
    %4648 = vmatpush1.msra.mxu0 0.0
    %4649 = vmatprep.subr.mxu0 0.0
    %4650 = vmatpush1.msra.mxu0 0.0
    %4651 = vmatprep.subr.mxu0 0.0
    %4652 = vmatpush1.msra.mxu0 0.0
    %4653 = vmatprep.subr.mxu0 0.0
    %4654 = vmatpush1.msra.mxu0 0.0
    %4655 = vmatprep.subr.mxu0 0.0
    %4656 = vmatpush1.msra.mxu0 0.0
    %4657 = vmatprep.subr.mxu0 0.0
    %4658 = vmatpush1.msra.mxu0 0.0
    %4659 = vmatprep.subr.mxu0 0.0
    %4660 = vmatpush1.msra.mxu0 0.0
    %4661 = vmatprep.subr.mxu0 0.0
    %4662 = vmatpush1.msra.mxu0 0.0
    %4663 = vmatprep.subr.mxu0 0.0
    %4664 = vmatpush1.msra.mxu0 0.0
    %4665 = vmatprep.subr.mxu0 0.0
    %4666 = vmatpush1.msra.mxu0 0.0
    %4667 = vmatprep.mubr.f32.mxu0 0.0
    %4668 = vmatmul.mubr.f32.gmra.mrb[0].mxu0 %v4227
    %v4669 = vpop.f32.mrb[0].mxu0
    %v4670 = vadd.f32 %v4520, %v4669
    %v4671 = vpop.f32.mrb[0].mxu0
    %4672 = vdwg.mxu0
    %4673 = vmatprep.subr.mxu0 0.0
    %4674 = vmatpush1.msra.mxu0 %v4136
    %4675 = vmatprep.subr.mxu0 0.0
    %4676 = vmatpush1.msra.mxu0 %v4137
    %4677 = vmatprep.subr.mxu0 0.0
    %4678 = vmatpush1.msra.mxu0 %v4138
    %4679 = vmatprep.subr.mxu0 0.0
    %4680 = vmatpush1.msra.mxu0 %v4139
    %4681 = vmatprep.subr.mxu0 0.0
    %4682 = vmatpush1.msra.mxu0 0.0
    %4683 = vmatprep.subr.mxu0 0.0
    %4684 = vmatpush1.msra.mxu0 0.0
    %4685 = vmatprep.subr.mxu0 0.0
    %4686 = vmatpush1.msra.mxu0 0.0
    %4687 = vmatprep.subr.mxu0 0.0
    %4688 = vmatpush1.msra.mxu0 0.0
    %4689 = vmatprep.subr.mxu0 0.0
    %4690 = vmatpush1.msra.mxu0 0.0
    %4691 = vmatprep.subr.mxu0 0.0
    %4692 = vmatpush1.msra.mxu0 0.0
    %4693 = vmatprep.subr.mxu0 0.0
    %4694 = vmatpush1.msra.mxu0 0.0
    %4695 = vmatprep.subr.mxu0 0.0
    %4696 = vmatpush1.msra.mxu0 0.0
    %4697 = vmatprep.subr.mxu0 0.0
    %4698 = vmatpush1.msra.mxu0 0.0
    %4699 = vmatprep.subr.mxu0 0.0
    %4700 = vmatpush1.msra.mxu0 0.0
    %4701 = vmatprep.subr.mxu0 0.0
    %4702 = vmatpush1.msra.mxu0 0.0
    %4703 = vmatprep.subr.mxu0 0.0
    %4704 = vmatpush1.msra.mxu0 0.0
    %4705 = vmatprep.subr.mxu0 0.0
    %4706 = vmatpush1.msra.mxu0 0.0
    %4707 = vmatprep.subr.mxu0 0.0
    %4708 = vmatpush1.msra.mxu0 0.0
    %4709 = vmatprep.subr.mxu0 0.0
    %4710 = vmatpush1.msra.mxu0 0.0
    %4711 = vmatprep.subr.mxu0 0.0
    %4712 = vmatpush1.msra.mxu0 0.0
    %4713 = vmatprep.subr.mxu0 0.0
    %4714 = vmatpush1.msra.mxu0 0.0
    %4715 = vmatprep.subr.mxu0 0.0
    %4716 = vmatpush1.msra.mxu0 0.0
    %4717 = vmatprep.subr.mxu0 0.0
    %4718 = vmatpush1.msra.mxu0 0.0
    %4719 = vmatprep.subr.mxu0 0.0
    %4720 = vmatpush1.msra.mxu0 0.0
    %4721 = vmatprep.subr.mxu0 0.0
    %4722 = vmatpush1.msra.mxu0 0.0
    %4723 = vmatprep.subr.mxu0 0.0
    %4724 = vmatpush1.msra.mxu0 0.0
    %4725 = vmatprep.subr.mxu0 0.0
    %4726 = vmatpush1.msra.mxu0 0.0
    %4727 = vmatprep.subr.mxu0 0.0
    %4728 = vmatpush1.msra.mxu0 0.0
    %4729 = vmatprep.subr.mxu0 0.0
    %4730 = vmatpush1.msra.mxu0 0.0
    %4731 = vmatprep.subr.mxu0 0.0
    %4732 = vmatpush1.msra.mxu0 0.0
    %4733 = vmatprep.subr.mxu0 0.0
    %4734 = vmatpush1.msra.mxu0 0.0
    %4735 = vmatprep.subr.mxu0 0.0
    %4736 = vmatpush1.msra.mxu0 0.0
    %4737 = vmatprep.mubr.f32.mxu0 0.0
    %4738 = vmatmul.mubr.f32.gmra.mrb[0].mxu0 %v4227
    %v4739 = vpop.f32.mrb[0].mxu0
    %v4740 = vadd.f32 %v4524, %v4739
    %v4741 = vpop.f32.mrb[0].mxu0
    %4742 = vdwg.mxu0
    %4743 = vmatprep.subr.mxu0 0.0
    %4744 = vmatpush1.msra.mxu0 %v4140
    %4745 = vmatprep.subr.mxu0 0.0
    %4746 = vmatpush1.msra.mxu0 %v4141
    %4747 = vmatprep.subr.mxu0 0.0
    %4748 = vmatpush1.msra.mxu0 %v4142
    %4749 = vmatprep.subr.mxu0 0.0
    %4750 = vmatpush1.msra.mxu0 %v4143
    %4751 = vmatprep.subr.mxu0 0.0
    %4752 = vmatpush1.msra.mxu0 0.0
    %4753 = vmatprep.subr.mxu0 0.0
    %4754 = vmatpush1.msra.mxu0 0.0
    %4755 = vmatprep.subr.mxu0 0.0
    %4756 = vmatpush1.msra.mxu0 0.0
    %4757 = vmatprep.subr.mxu0 0.0
    %4758 = vmatpush1.msra.mxu0 0.0
    %4759 = vmatprep.subr.mxu0 0.0
    %4760 = vmatpush1.msra.mxu0 0.0
    %4761 = vmatprep.subr.mxu0 0.0
    %4762 = vmatpush1.msra.mxu0 0.0
    %4763 = vmatprep.subr.mxu0 0.0
    %4764 = vmatpush1.msra.mxu0 0.0
    %4765 = vmatprep.subr.mxu0 0.0
    %4766 = vmatpush1.msra.mxu0 0.0
    %4767 = vmatprep.subr.mxu0 0.0
    %4768 = vmatpush1.msra.mxu0 0.0
    %4769 = vmatprep.subr.mxu0 0.0
    %4770 = vmatpush1.msra.mxu0 0.0
    %4771 = vmatprep.subr.mxu0 0.0
    %4772 = vmatpush1.msra.mxu0 0.0
    %4773 = vmatprep.subr.mxu0 0.0
    %4774 = vmatpush1.msra.mxu0 0.0
    %4775 = vmatprep.subr.mxu0 0.0
    %4776 = vmatpush1.msra.mxu0 0.0
    %4777 = vmatprep.subr.mxu0 0.0
    %4778 = vmatpush1.msra.mxu0 0.0
    %4779 = vmatprep.subr.mxu0 0.0
    %4780 = vmatpush1.msra.mxu0 0.0
    %4781 = vmatprep.subr.mxu0 0.0
    %4782 = vmatpush1.msra.mxu0 0.0
    %4783 = vmatprep.subr.mxu0 0.0
    %4784 = vmatpush1.msra.mxu0 0.0
    %4785 = vmatprep.subr.mxu0 0.0
    %4786 = vmatpush1.msra.mxu0 0.0
    %4787 = vmatprep.subr.mxu0 0.0
    %4788 = vmatpush1.msra.mxu0 0.0
    %4789 = vmatprep.subr.mxu0 0.0
    %4790 = vmatpush1.msra.mxu0 0.0
    %4791 = vmatprep.subr.mxu0 0.0
    %4792 = vmatpush1.msra.mxu0 0.0
    %4793 = vmatprep.subr.mxu0 0.0
    %4794 = vmatpush1.msra.mxu0 0.0
    %4795 = vmatprep.subr.mxu0 0.0
    %4796 = vmatpush1.msra.mxu0 0.0
    %4797 = vmatprep.subr.mxu0 0.0
    %4798 = vmatpush1.msra.mxu0 0.0
    %4799 = vmatprep.subr.mxu0 0.0
    %4800 = vmatpush1.msra.mxu0 0.0
    %4801 = vmatprep.subr.mxu0 0.0
    %4802 = vmatpush1.msra.mxu0 0.0
    %4803 = vmatprep.subr.mxu0 0.0
    %4804 = vmatpush1.msra.mxu0 0.0
    %4805 = vmatprep.subr.mxu0 0.0
    %4806 = vmatpush1.msra.mxu0 0.0
    %4807 = vmatprep.mubr.f32.mxu0 0.0
    %4808 = vmatmul.mubr.f32.gmra.mrb[0].mxu0 %v4227
    %v4809 = vpop.f32.mrb[0].mxu0
    %v4810 = vadd.f32 %v4528, %v4809
    %v4811 = vpop.f32.mrb[0].mxu0
    %4812 = vdwg.mxu0
    %v4817 = vlaneseq
    %v4818 = vshrl.u32 %v4817, 7
    %v4819 = vsub.s32 0, %v4818
    %v4820 = vrot.slane %v4172, %v4819
    %v4821 = vlaneseq
    %v4822 = vshrl.u32 %v4821, 7
    %v4823 = vsub.s32 0, %v4822
    %v4824 = vrot.slane %v4173, %v4823
    %v4825 = vlaneseq
    %v4826 = vshrl.u32 %v4825, 7
    %v4827 = vsub.s32 0, %v4826
    %v4828 = vrot.slane %v4174, %v4827
    %v4829 = vlaneseq
    %v4830 = vshrl.u32 %v4829, 7
    %v4831 = vsub.s32 0, %v4830
    %v4832 = vrot.slane %v4175, %v4831
    %4837 = vmatprep.subr.mxu0 0.0
    %4838 = vmatpush1.msra.mxu0 %v4145
    %4839 = vmatprep.subr.mxu0 0.0
    %4840 = vmatpush1.msra.mxu0 %v4146
    %4841 = vmatprep.subr.mxu0 0.0
    %4842 = vmatpush1.msra.mxu0 %v4147
    %4843 = vmatprep.subr.mxu0 0.0
    %4844 = vmatpush1.msra.mxu0 %v4148
    %4845 = vmatprep.subr.mxu0 0.0
    %4846 = vmatpush1.msra.mxu0 0.0
    %4847 = vmatprep.subr.mxu0 0.0
    %4848 = vmatpush1.msra.mxu0 0.0
    %4849 = vmatprep.subr.mxu0 0.0
    %4850 = vmatpush1.msra.mxu0 0.0
    %4851 = vmatprep.subr.mxu0 0.0
    %4852 = vmatpush1.msra.mxu0 0.0
    %4853 = vmatprep.subr.mxu0 0.0
    %4854 = vmatpush1.msra.mxu0 0.0
    %4855 = vmatprep.subr.mxu0 0.0
    %4856 = vmatpush1.msra.mxu0 0.0
    %4857 = vmatprep.subr.mxu0 0.0
    %4858 = vmatpush1.msra.mxu0 0.0
    %4859 = vmatprep.subr.mxu0 0.0
    %4860 = vmatpush1.msra.mxu0 0.0
    %4861 = vmatprep.subr.mxu0 0.0
    %4862 = vmatpush1.msra.mxu0 0.0
    %4863 = vmatprep.subr.mxu0 0.0
    %4864 = vmatpush1.msra.mxu0 0.0
    %4865 = vmatprep.subr.mxu0 0.0
    %4866 = vmatpush1.msra.mxu0 0.0
    %4867 = vmatprep.subr.mxu0 0.0
    %4868 = vmatpush1.msra.mxu0 0.0
    %4869 = vmatprep.subr.mxu0 0.0
    %4870 = vmatpush1.msra.mxu0 0.0
    %4871 = vmatprep.subr.mxu0 0.0
    %4872 = vmatpush1.msra.mxu0 0.0
    %4873 = vmatprep.subr.mxu0 0.0
    %4874 = vmatpush1.msra.mxu0 0.0
    %4875 = vmatprep.subr.mxu0 0.0
    %4876 = vmatpush1.msra.mxu0 0.0
    %4877 = vmatprep.subr.mxu0 0.0
    %4878 = vmatpush1.msra.mxu0 0.0
    %4879 = vmatprep.subr.mxu0 0.0
    %4880 = vmatpush1.msra.mxu0 0.0
    %4881 = vmatprep.subr.mxu0 0.0
    %4882 = vmatpush1.msra.mxu0 0.0
    %4883 = vmatprep.subr.mxu0 0.0
    %4884 = vmatpush1.msra.mxu0 0.0
    %4885 = vmatprep.subr.mxu0 0.0
    %4886 = vmatpush1.msra.mxu0 0.0
    %4887 = vmatprep.subr.mxu0 0.0
    %4888 = vmatpush1.msra.mxu0 0.0
    %4889 = vmatprep.subr.mxu0 0.0
    %4890 = vmatpush1.msra.mxu0 0.0
    %4891 = vmatprep.subr.mxu0 0.0
    %4892 = vmatpush1.msra.mxu0 0.0
    %4893 = vmatprep.subr.mxu0 0.0
    %4894 = vmatpush1.msra.mxu0 0.0
    %4895 = vmatprep.subr.mxu0 0.0
    %4896 = vmatpush1.msra.mxu0 0.0
    %4897 = vmatprep.subr.mxu0 0.0
    %4898 = vmatpush1.msra.mxu0 0.0
    %4899 = vmatprep.subr.mxu0 0.0
    %4900 = vmatpush1.msra.mxu0 0.0
    %4901 = vmatprep.mubr.f32.mxu0 0.0
    %4902 = vmatmul.mubr.f32.gmra.mrb[0].mxu0 %v4227
    %v4903 = vpop.f32.mrb[0].mxu0
    %v4904 = vadd.f32 %v4820, %v4903
    %v4905 = vpop.f32.mrb[0].mxu0
    %4906 = vdwg.mxu0
    %4907 = vmatprep.subr.mxu0 0.0
    %4908 = vmatpush1.msra.mxu0 %v4149
    %4909 = vmatprep.subr.mxu0 0.0
    %4910 = vmatpush1.msra.mxu0 %v4150
    %4911 = vmatprep.subr.mxu0 0.0
    %4912 = vmatpush1.msra.mxu0 %v4151
    %4913 = vmatprep.subr.mxu0 0.0
    %4914 = vmatpush1.msra.mxu0 %v4152
    %4915 = vmatprep.subr.mxu0 0.0
    %4916 = vmatpush1.msra.mxu0 0.0
    %4917 = vmatprep.subr.mxu0 0.0
    %4918 = vmatpush1.msra.mxu0 0.0
    %4919 = vmatprep.subr.mxu0 0.0
    %4920 = vmatpush1.msra.mxu0 0.0
    %4921 = vmatprep.subr.mxu0 0.0
    %4922 = vmatpush1.msra.mxu0 0.0
    %4923 = vmatprep.subr.mxu0 0.0
    %4924 = vmatpush1.msra.mxu0 0.0
    %4925 = vmatprep.subr.mxu0 0.0
    %4926 = vmatpush1.msra.mxu0 0.0
    %4927 = vmatprep.subr.mxu0 0.0
    %4928 = vmatpush1.msra.mxu0 0.0
    %4929 = vmatprep.subr.mxu0 0.0
    %4930 = vmatpush1.msra.mxu0 0.0
    %4931 = vmatprep.subr.mxu0 0.0
    %4932 = vmatpush1.msra.mxu0 0.0
    %4933 = vmatprep.subr.mxu0 0.0
    %4934 = vmatpush1.msra.mxu0 0.0
    %4935 = vmatprep.subr.mxu0 0.0
    %4936 = vmatpush1.msra.mxu0 0.0
    %4937 = vmatprep.subr.mxu0 0.0
    %4938 = vmatpush1.msra.mxu0 0.0
    %4939 = vmatprep.subr.mxu0 0.0
    %4940 = vmatpush1.msra.mxu0 0.0
    %4941 = vmatprep.subr.mxu0 0.0
    %4942 = vmatpush1.msra.mxu0 0.0
    %4943 = vmatprep.subr.mxu0 0.0
    %4944 = vmatpush1.msra.mxu0 0.0
    %4945 = vmatprep.subr.mxu0 0.0
    %4946 = vmatpush1.msra.mxu0 0.0
    %4947 = vmatprep.subr.mxu0 0.0
    %4948 = vmatpush1.msra.mxu0 0.0
    %4949 = vmatprep.subr.mxu0 0.0
    %4950 = vmatpush1.msra.mxu0 0.0
    %4951 = vmatprep.subr.mxu0 0.0
    %4952 = vmatpush1.msra.mxu0 0.0
    %4953 = vmatprep.subr.mxu0 0.0
    %4954 = vmatpush1.msra.mxu0 0.0
    %4955 = vmatprep.subr.mxu0 0.0
    %4956 = vmatpush1.msra.mxu0 0.0
    %4957 = vmatprep.subr.mxu0 0.0
    %4958 = vmatpush1.msra.mxu0 0.0
    %4959 = vmatprep.subr.mxu0 0.0
    %4960 = vmatpush1.msra.mxu0 0.0
    %4961 = vmatprep.subr.mxu0 0.0
    %4962 = vmatpush1.msra.mxu0 0.0
    %4963 = vmatprep.subr.mxu0 0.0
    %4964 = vmatpush1.msra.mxu0 0.0
    %4965 = vmatprep.subr.mxu0 0.0
    %4966 = vmatpush1.msra.mxu0 0.0
    %4967 = vmatprep.subr.mxu0 0.0
    %4968 = vmatpush1.msra.mxu0 0.0
    %4969 = vmatprep.subr.mxu0 0.0
    %4970 = vmatpush1.msra.mxu0 0.0
    %4971 = vmatprep.mubr.f32.mxu0 0.0
    %4972 = vmatmul.mubr.f32.gmra.mrb[0].mxu0 %v4227
    %v4973 = vpop.f32.mrb[0].mxu0
    %v4974 = vadd.f32 %v4824, %v4973
    %v4975 = vpop.f32.mrb[0].mxu0
    %4976 = vdwg.mxu0
    %4977 = vmatprep.subr.mxu0 0.0
    %4978 = vmatpush1.msra.mxu0 %v4153
    %4979 = vmatprep.subr.mxu0 0.0
    %4980 = vmatpush1.msra.mxu0 %v4154
    %4981 = vmatprep.subr.mxu0 0.0
    %4982 = vmatpush1.msra.mxu0 %v4155
    %4983 = vmatprep.subr.mxu0 0.0
    %4984 = vmatpush1.msra.mxu0 %v4156
    %4985 = vmatprep.subr.mxu0 0.0
    %4986 = vmatpush1.msra.mxu0 0.0
    %4987 = vmatprep.subr.mxu0 0.0
    %4988 = vmatpush1.msra.mxu0 0.0
    %4989 = vmatprep.subr.mxu0 0.0
    %4990 = vmatpush1.msra.mxu0 0.0
    %4991 = vmatprep.subr.mxu0 0.0
    %4992 = vmatpush1.msra.mxu0 0.0
    %4993 = vmatprep.subr.mxu0 0.0
    %4994 = vmatpush1.msra.mxu0 0.0
    %4995 = vmatprep.subr.mxu0 0.0
    %4996 = vmatpush1.msra.mxu0 0.0
    %4997 = vmatprep.subr.mxu0 0.0
    %4998 = vmatpush1.msra.mxu0 0.0
    %4999 = vmatprep.subr.mxu0 0.0
    %5000 = vmatpush1.msra.mxu0 0.0
    %5001 = vmatprep.subr.mxu0 0.0
    %5002 = vmatpush1.msra.mxu0 0.0
    %5003 = vmatprep.subr.mxu0 0.0
    %5004 = vmatpush1.msra.mxu0 0.0
    %5005 = vmatprep.subr.mxu0 0.0
    %5006 = vmatpush1.msra.mxu0 0.0
    %5007 = vmatprep.subr.mxu0 0.0
    %5008 = vmatpush1.msra.mxu0 0.0
    %5009 = vmatprep.subr.mxu0 0.0
    %5010 = vmatpush1.msra.mxu0 0.0
    %5011 = vmatprep.subr.mxu0 0.0
    %5012 = vmatpush1.msra.mxu0 0.0
    %5013 = vmatprep.subr.mxu0 0.0
    %5014 = vmatpush1.msra.mxu0 0.0
    %5015 = vmatprep.subr.mxu0 0.0
    %5016 = vmatpush1.msra.mxu0 0.0
    %5017 = vmatprep.subr.mxu0 0.0
    %5018 = vmatpush1.msra.mxu0 0.0
    %5019 = vmatprep.subr.mxu0 0.0
    %5020 = vmatpush1.msra.mxu0 0.0
    %5021 = vmatprep.subr.mxu0 0.0
    %5022 = vmatpush1.msra.mxu0 0.0
    %5023 = vmatprep.subr.mxu0 0.0
    %5024 = vmatpush1.msra.mxu0 0.0
    %5025 = vmatprep.subr.mxu0 0.0
    %5026 = vmatpush1.msra.mxu0 0.0
    %5027 = vmatprep.subr.mxu0 0.0
    %5028 = vmatpush1.msra.mxu0 0.0
    %5029 = vmatprep.subr.mxu0 0.0
    %5030 = vmatpush1.msra.mxu0 0.0
    %5031 = vmatprep.subr.mxu0 0.0
    %5032 = vmatpush1.msra.mxu0 0.0
    %5033 = vmatprep.subr.mxu0 0.0
    %5034 = vmatpush1.msra.mxu0 0.0
    %5035 = vmatprep.subr.mxu0 0.0
    %5036 = vmatpush1.msra.mxu0 0.0
    %5037 = vmatprep.subr.mxu0 0.0
    %5038 = vmatpush1.msra.mxu0 0.0
    %5039 = vmatprep.subr.mxu0 0.0
    %5040 = vmatpush1.msra.mxu0 0.0
    %5041 = vmatprep.mubr.f32.mxu0 0.0
    %5042 = vmatmul.mubr.f32.gmra.mrb[0].mxu0 %v4227
    %v5043 = vpop.f32.mrb[0].mxu0
    %v5044 = vadd.f32 %v4828, %v5043
    %v5045 = vpop.f32.mrb[0].mxu0
    %5046 = vdwg.mxu0
    %5047 = vmatprep.subr.mxu0 0.0
    %5048 = vmatpush1.msra.mxu0 %v4157
    %5049 = vmatprep.subr.mxu0 0.0
    %5050 = vmatpush1.msra.mxu0 %v4158
    %5051 = vmatprep.subr.mxu0 0.0
    %5052 = vmatpush1.msra.mxu0 %v4159
    %5053 = vmatprep.subr.mxu0 0.0
    %5054 = vmatpush1.msra.mxu0 %v4160
    %5055 = vmatprep.subr.mxu0 0.0
    %5056 = vmatpush1.msra.mxu0 0.0
    %5057 = vmatprep.subr.mxu0 0.0
    %5058 = vmatpush1.msra.mxu0 0.0
    %5059 = vmatprep.subr.mxu0 0.0
    %5060 = vmatpush1.msra.mxu0 0.0
    %5061 = vmatprep.subr.mxu0 0.0
    %5062 = vmatpush1.msra.mxu0 0.0
    %5063 = vmatprep.subr.mxu0 0.0
    %5064 = vmatpush1.msra.mxu0 0.0
    %5065 = vmatprep.subr.mxu0 0.0
    %5066 = vmatpush1.msra.mxu0 0.0
    %5067 = vmatprep.subr.mxu0 0.0
    %5068 = vmatpush1.msra.mxu0 0.0
    %5069 = vmatprep.subr.mxu0 0.0
    %5070 = vmatpush1.msra.mxu0 0.0
    %5071 = vmatprep.subr.mxu0 0.0
    %5072 = vmatpush1.msra.mxu0 0.0
    %5073 = vmatprep.subr.mxu0 0.0
    %5074 = vmatpush1.msra.mxu0 0.0
    %5075 = vmatprep.subr.mxu0 0.0
    %5076 = vmatpush1.msra.mxu0 0.0
    %5077 = vmatprep.subr.mxu0 0.0
    %5078 = vmatpush1.msra.mxu0 0.0
    %5079 = vmatprep.subr.mxu0 0.0
    %5080 = vmatpush1.msra.mxu0 0.0
    %5081 = vmatprep.subr.mxu0 0.0
    %5082 = vmatpush1.msra.mxu0 0.0
    %5083 = vmatprep.subr.mxu0 0.0
    %5084 = vmatpush1.msra.mxu0 0.0
    %5085 = vmatprep.subr.mxu0 0.0
    %5086 = vmatpush1.msra.mxu0 0.0
    %5087 = vmatprep.subr.mxu0 0.0
    %5088 = vmatpush1.msra.mxu0 0.0
    %5089 = vmatprep.subr.mxu0 0.0
    %5090 = vmatpush1.msra.mxu0 0.0
    %5091 = vmatprep.subr.mxu0 0.0
    %5092 = vmatpush1.msra.mxu0 0.0
    %5093 = vmatprep.subr.mxu0 0.0
    %5094 = vmatpush1.msra.mxu0 0.0
    %5095 = vmatprep.subr.mxu0 0.0
    %5096 = vmatpush1.msra.mxu0 0.0
    %5097 = vmatprep.subr.mxu0 0.0
    %5098 = vmatpush1.msra.mxu0 0.0
    %5099 = vmatprep.subr.mxu0 0.0
    %5100 = vmatpush1.msra.mxu0 0.0
    %5101 = vmatprep.subr.mxu0 0.0
    %5102 = vmatpush1.msra.mxu0 0.0
    %5103 = vmatprep.subr.mxu0 0.0
    %5104 = vmatpush1.msra.mxu0 0.0
    %5105 = vmatprep.subr.mxu0 0.0
    %5106 = vmatpush1.msra.mxu0 0.0
    %5107 = vmatprep.subr.mxu0 0.0
    %5108 = vmatpush1.msra.mxu0 0.0
    %5109 = vmatprep.subr.mxu0 0.0
    %5110 = vmatpush1.msra.mxu0 0.0
    %5111 = vmatprep.mubr.f32.mxu0 0.0
    %5112 = vmatmul.mubr.f32.gmra.mrb[0].mxu0 %v4227
    %v5113 = vpop.f32.mrb[0].mxu0
    %v5114 = vadd.f32 %v4832, %v5113
    %v5115 = vpop.f32.mrb[0].mxu0
    %5116 = vdwg.mxu0
    %v5118 = vsel %vm1097, %v4296, 0
    %v5121 = vsel %vm1097, %v4600, 0
    %5123 = vmatprep.subr.mxu0 0.0
    %5124 = vmatpush1.xpose.msra.mxu0 %v5121
    %5125 = vmatprep.subr.mxu0 0.0
    %5126 = vmatpush1.xpose.msra.mxu0 0.0
    %5127 = vmatprep.subr.mxu0 0.0
    %5128 = vmatpush1.xpose.msra.mxu0 0.0
    %5129 = vmatprep.subr.mxu0 0.0
    %5130 = vmatpush1.xpose.msra.mxu0 0.0
    %5131 = vmatprep.subr.mxu0 0.0
    %5132 = vmatpush1.xpose.msra.mxu0 0.0
    %5133 = vmatprep.subr.mxu0 0.0
    %5134 = vmatpush1.xpose.msra.mxu0 0.0
    %5135 = vmatprep.subr.mxu0 0.0
    %5136 = vmatpush1.xpose.msra.mxu0 0.0
    %5137 = vmatprep.subr.mxu0 0.0
    %5138 = vmatpush1.xpose.msra.mxu0 0.0
    %5139 = vmatprep.subr.mxu0 0.0
    %5140 = vmatpush1.xpose.msra.mxu0 0.0
    %5141 = vmatprep.subr.mxu0 0.0
    %5142 = vmatpush1.xpose.msra.mxu0 0.0
    %5143 = vmatprep.subr.mxu0 0.0
    %5144 = vmatpush1.xpose.msra.mxu0 0.0
    %5145 = vmatprep.subr.mxu0 0.0
    %5146 = vmatpush1.xpose.msra.mxu0 0.0
    %5147 = vmatprep.subr.mxu0 0.0
    %5148 = vmatpush1.xpose.msra.mxu0 0.0
    %5149 = vmatprep.subr.mxu0 0.0
    %5150 = vmatpush1.xpose.msra.mxu0 0.0
    %5151 = vmatprep.subr.mxu0 0.0
    %5152 = vmatpush1.xpose.msra.mxu0 0.0
    %5153 = vmatprep.subr.mxu0 0.0
    %5154 = vmatpush1.xpose.msra.mxu0 0.0
    %5155 = vmatprep.subr.mxu0 0.0
    %5156 = vmatpush1.xpose.msra.mxu0 0.0
    %5157 = vmatprep.subr.mxu0 0.0
    %5158 = vmatpush1.xpose.msra.mxu0 0.0
    %5159 = vmatprep.subr.mxu0 0.0
    %5160 = vmatpush1.xpose.msra.mxu0 0.0
    %5161 = vmatprep.subr.mxu0 0.0
    %5162 = vmatpush1.xpose.msra.mxu0 0.0
    %5163 = vmatprep.subr.mxu0 0.0
    %5164 = vmatpush1.xpose.msra.mxu0 0.0
    %5165 = vmatprep.subr.mxu0 0.0
    %5166 = vmatpush1.xpose.msra.mxu0 0.0
    %5167 = vmatprep.subr.mxu0 0.0
    %5168 = vmatpush1.xpose.msra.mxu0 0.0
    %5169 = vmatprep.subr.mxu0 0.0
    %5170 = vmatpush1.xpose.msra.mxu0 0.0
    %5171 = vmatprep.subr.mxu0 0.0
    %5172 = vmatpush1.xpose.msra.mxu0 0.0
    %5173 = vmatprep.subr.mxu0 0.0
    %5174 = vmatpush1.xpose.msra.mxu0 0.0
    %5175 = vmatprep.subr.mxu0 0.0
    %5176 = vmatpush1.xpose.msra.mxu0 0.0
    %5177 = vmatprep.subr.mxu0 0.0
    %5178 = vmatpush1.xpose.msra.mxu0 0.0
    %5179 = vmatprep.subr.mxu0 0.0
    %5180 = vmatpush1.xpose.msra.mxu0 0.0
    %5181 = vmatprep.subr.mxu0 0.0
    %5182 = vmatpush1.xpose.msra.mxu0 0.0
    %5183 = vmatprep.subr.mxu0 0.0
    %5184 = vmatpush1.xpose.msra.mxu0 0.0
    %5185 = vmatprep.subr.mxu0 0.0
    %5186 = vmatpush1.xpose.msra.mxu0 0.0
    %5187 = vmatprep.mubr.f32.mxu0 0.0
    %5188 = vmatmul.mubr.f32.gmra.mrb[0].mxu0 %v5118
    %v5189 = vpop.f32.mrb[0].mxu0
    %v5190 = vadd.f32 0.0, %v5189
    %v5191 = vpop.f32.mrb[0].mxu0
    %5192 = vdwg.mxu0
    %v5194 = vsel %vm1097, %v4366, 0
    %v5197 = vsel %vm1097, %v4670, 0
    %5199 = vmatprep.subr.mxu0 0.0
    %5200 = vmatpush1.xpose.msra.mxu0 %v5197
    %5201 = vmatprep.subr.mxu0 0.0
    %5202 = vmatpush1.xpose.msra.mxu0 0.0
    %5203 = vmatprep.subr.mxu0 0.0
    %5204 = vmatpush1.xpose.msra.mxu0 0.0
    %5205 = vmatprep.subr.mxu0 0.0
    %5206 = vmatpush1.xpose.msra.mxu0 0.0
    %5207 = vmatprep.subr.mxu0 0.0
    %5208 = vmatpush1.xpose.msra.mxu0 0.0
    %5209 = vmatprep.subr.mxu0 0.0
    %5210 = vmatpush1.xpose.msra.mxu0 0.0
    %5211 = vmatprep.subr.mxu0 0.0
    %5212 = vmatpush1.xpose.msra.mxu0 0.0
    %5213 = vmatprep.subr.mxu0 0.0
    %5214 = vmatpush1.xpose.msra.mxu0 0.0
    %5215 = vmatprep.subr.mxu0 0.0
    %5216 = vmatpush1.xpose.msra.mxu0 0.0
    %5217 = vmatprep.subr.mxu0 0.0
    %5218 = vmatpush1.xpose.msra.mxu0 0.0
    %5219 = vmatprep.subr.mxu0 0.0
    %5220 = vmatpush1.xpose.msra.mxu0 0.0
    %5221 = vmatprep.subr.mxu0 0.0
    %5222 = vmatpush1.xpose.msra.mxu0 0.0
    %5223 = vmatprep.subr.mxu0 0.0
    %5224 = vmatpush1.xpose.msra.mxu0 0.0
    %5225 = vmatprep.subr.mxu0 0.0
    %5226 = vmatpush1.xpose.msra.mxu0 0.0
    %5227 = vmatprep.subr.mxu0 0.0
    %5228 = vmatpush1.xpose.msra.mxu0 0.0
    %5229 = vmatprep.subr.mxu0 0.0
    %5230 = vmatpush1.xpose.msra.mxu0 0.0
    %5231 = vmatprep.subr.mxu0 0.0
    %5232 = vmatpush1.xpose.msra.mxu0 0.0
    %5233 = vmatprep.subr.mxu0 0.0
    %5234 = vmatpush1.xpose.msra.mxu0 0.0
    %5235 = vmatprep.subr.mxu0 0.0
    %5236 = vmatpush1.xpose.msra.mxu0 0.0
    %5237 = vmatprep.subr.mxu0 0.0
    %5238 = vmatpush1.xpose.msra.mxu0 0.0
    %5239 = vmatprep.subr.mxu0 0.0
    %5240 = vmatpush1.xpose.msra.mxu0 0.0
    %5241 = vmatprep.subr.mxu0 0.0
    %5242 = vmatpush1.xpose.msra.mxu0 0.0
    %5243 = vmatprep.subr.mxu0 0.0
    %5244 = vmatpush1.xpose.msra.mxu0 0.0
    %5245 = vmatprep.subr.mxu0 0.0
    %5246 = vmatpush1.xpose.msra.mxu0 0.0
    %5247 = vmatprep.subr.mxu0 0.0
    %5248 = vmatpush1.xpose.msra.mxu0 0.0
    %5249 = vmatprep.subr.mxu0 0.0
    %5250 = vmatpush1.xpose.msra.mxu0 0.0
    %5251 = vmatprep.subr.mxu0 0.0
    %5252 = vmatpush1.xpose.msra.mxu0 0.0
    %5253 = vmatprep.subr.mxu0 0.0
    %5254 = vmatpush1.xpose.msra.mxu0 0.0
    %5255 = vmatprep.subr.mxu0 0.0
    %5256 = vmatpush1.xpose.msra.mxu0 0.0
    %5257 = vmatprep.subr.mxu0 0.0
    %5258 = vmatpush1.xpose.msra.mxu0 0.0
    %5259 = vmatprep.subr.mxu0 0.0
    %5260 = vmatpush1.xpose.msra.mxu0 0.0
    %5261 = vmatprep.subr.mxu0 0.0
    %5262 = vmatpush1.xpose.msra.mxu0 0.0
    %5263 = vmatprep.mubr.f32.mxu0 0.0
    %5264 = vmatmul.mubr.f32.gmra.mrb[0].mxu0 %v5194
    %v5265 = vpop.f32.mrb[0].mxu0
    %v5266 = vadd.f32 0.0, %v5265
    %v5267 = vpop.f32.mrb[0].mxu0
    %5268 = vdwg.mxu0
    %v5270 = vsel %vm1097, %v4436, 0
    %v5273 = vsel %vm1097, %v4740, 0
    %5275 = vmatprep.subr.mxu0 0.0
    %5276 = vmatpush1.xpose.msra.mxu0 %v5273
    %5277 = vmatprep.subr.mxu0 0.0
    %5278 = vmatpush1.xpose.msra.mxu0 0.0
    %5279 = vmatprep.subr.mxu0 0.0
    %5280 = vmatpush1.xpose.msra.mxu0 0.0
    %5281 = vmatprep.subr.mxu0 0.0
    %5282 = vmatpush1.xpose.msra.mxu0 0.0
    %5283 = vmatprep.subr.mxu0 0.0
    %5284 = vmatpush1.xpose.msra.mxu0 0.0
    %5285 = vmatprep.subr.mxu0 0.0
    %5286 = vmatpush1.xpose.msra.mxu0 0.0
    %5287 = vmatprep.subr.mxu0 0.0
    %5288 = vmatpush1.xpose.msra.mxu0 0.0
    %5289 = vmatprep.subr.mxu0 0.0
    %5290 = vmatpush1.xpose.msra.mxu0 0.0
    %5291 = vmatprep.subr.mxu0 0.0
    %5292 = vmatpush1.xpose.msra.mxu0 0.0
    %5293 = vmatprep.subr.mxu0 0.0
    %5294 = vmatpush1.xpose.msra.mxu0 0.0
    %5295 = vmatprep.subr.mxu0 0.0
    %5296 = vmatpush1.xpose.msra.mxu0 0.0
    %5297 = vmatprep.subr.mxu0 0.0
    %5298 = vmatpush1.xpose.msra.mxu0 0.0
    %5299 = vmatprep.subr.mxu0 0.0
    %5300 = vmatpush1.xpose.msra.mxu0 0.0
    %5301 = vmatprep.subr.mxu0 0.0
    %5302 = vmatpush1.xpose.msra.mxu0 0.0
    %5303 = vmatprep.subr.mxu0 0.0
    %5304 = vmatpush1.xpose.msra.mxu0 0.0
    %5305 = vmatprep.subr.mxu0 0.0
    %5306 = vmatpush1.xpose.msra.mxu0 0.0
    %5307 = vmatprep.subr.mxu0 0.0
    %5308 = vmatpush1.xpose.msra.mxu0 0.0
    %5309 = vmatprep.subr.mxu0 0.0
    %5310 = vmatpush1.xpose.msra.mxu0 0.0
    %5311 = vmatprep.subr.mxu0 0.0
    %5312 = vmatpush1.xpose.msra.mxu0 0.0
    %5313 = vmatprep.subr.mxu0 0.0
    %5314 = vmatpush1.xpose.msra.mxu0 0.0
    %5315 = vmatprep.subr.mxu0 0.0
    %5316 = vmatpush1.xpose.msra.mxu0 0.0
    %5317 = vmatprep.subr.mxu0 0.0
    %5318 = vmatpush1.xpose.msra.mxu0 0.0
    %5319 = vmatprep.subr.mxu0 0.0
    %5320 = vmatpush1.xpose.msra.mxu0 0.0
    %5321 = vmatprep.subr.mxu0 0.0
    %5322 = vmatpush1.xpose.msra.mxu0 0.0
    %5323 = vmatprep.subr.mxu0 0.0
    %5324 = vmatpush1.xpose.msra.mxu0 0.0
    %5325 = vmatprep.subr.mxu0 0.0
    %5326 = vmatpush1.xpose.msra.mxu0 0.0
    %5327 = vmatprep.subr.mxu0 0.0
    %5328 = vmatpush1.xpose.msra.mxu0 0.0
    %5329 = vmatprep.subr.mxu0 0.0
    %5330 = vmatpush1.xpose.msra.mxu0 0.0
    %5331 = vmatprep.subr.mxu0 0.0
    %5332 = vmatpush1.xpose.msra.mxu0 0.0
    %5333 = vmatprep.subr.mxu0 0.0
    %5334 = vmatpush1.xpose.msra.mxu0 0.0
    %5335 = vmatprep.subr.mxu0 0.0
    %5336 = vmatpush1.xpose.msra.mxu0 0.0
    %5337 = vmatprep.subr.mxu0 0.0
    %5338 = vmatpush1.xpose.msra.mxu0 0.0
    %5339 = vmatprep.mubr.f32.mxu0 0.0
    %5340 = vmatmul.mubr.f32.gmra.mrb[0].mxu0 %v5270
    %v5341 = vpop.f32.mrb[0].mxu0
    %v5342 = vadd.f32 0.0, %v5341
    %v5343 = vpop.f32.mrb[0].mxu0
    %5344 = vdwg.mxu0
    %v5346 = vsel %vm1097, %v4506, 0
    %v5349 = vsel %vm1097, %v4810, 0
    %5351 = vmatprep.subr.mxu0 0.0
    %5352 = vmatpush1.xpose.msra.mxu0 %v5349
    %5353 = vmatprep.subr.mxu0 0.0
    %5354 = vmatpush1.xpose.msra.mxu0 0.0
    %5355 = vmatprep.subr.mxu0 0.0
    %5356 = vmatpush1.xpose.msra.mxu0 0.0
    %5357 = vmatprep.subr.mxu0 0.0
    %5358 = vmatpush1.xpose.msra.mxu0 0.0
    %5359 = vmatprep.subr.mxu0 0.0
    %5360 = vmatpush1.xpose.msra.mxu0 0.0
    %5361 = vmatprep.subr.mxu0 0.0
    %5362 = vmatpush1.xpose.msra.mxu0 0.0
    %5363 = vmatprep.subr.mxu0 0.0
    %5364 = vmatpush1.xpose.msra.mxu0 0.0
    %5365 = vmatprep.subr.mxu0 0.0
    %5366 = vmatpush1.xpose.msra.mxu0 0.0
    %5367 = vmatprep.subr.mxu0 0.0
    %5368 = vmatpush1.xpose.msra.mxu0 0.0
    %5369 = vmatprep.subr.mxu0 0.0
    %5370 = vmatpush1.xpose.msra.mxu0 0.0
    %5371 = vmatprep.subr.mxu0 0.0
    %5372 = vmatpush1.xpose.msra.mxu0 0.0
    %5373 = vmatprep.subr.mxu0 0.0
    %5374 = vmatpush1.xpose.msra.mxu0 0.0
    %5375 = vmatprep.subr.mxu0 0.0
    %5376 = vmatpush1.xpose.msra.mxu0 0.0
    %5377 = vmatprep.subr.mxu0 0.0
    %5378 = vmatpush1.xpose.msra.mxu0 0.0
    %5379 = vmatprep.subr.mxu0 0.0
    %5380 = vmatpush1.xpose.msra.mxu0 0.0
    %5381 = vmatprep.subr.mxu0 0.0
    %5382 = vmatpush1.xpose.msra.mxu0 0.0
    %5383 = vmatprep.subr.mxu0 0.0
    %5384 = vmatpush1.xpose.msra.mxu0 0.0
    %5385 = vmatprep.subr.mxu0 0.0
    %5386 = vmatpush1.xpose.msra.mxu0 0.0
    %5387 = vmatprep.subr.mxu0 0.0
    %5388 = vmatpush1.xpose.msra.mxu0 0.0
    %5389 = vmatprep.subr.mxu0 0.0
    %5390 = vmatpush1.xpose.msra.mxu0 0.0
    %5391 = vmatprep.subr.mxu0 0.0
    %5392 = vmatpush1.xpose.msra.mxu0 0.0
    %5393 = vmatprep.subr.mxu0 0.0
    %5394 = vmatpush1.xpose.msra.mxu0 0.0
    %5395 = vmatprep.subr.mxu0 0.0
    %5396 = vmatpush1.xpose.msra.mxu0 0.0
    %5397 = vmatprep.subr.mxu0 0.0
    %5398 = vmatpush1.xpose.msra.mxu0 0.0
    %5399 = vmatprep.subr.mxu0 0.0
    %5400 = vmatpush1.xpose.msra.mxu0 0.0
    %5401 = vmatprep.subr.mxu0 0.0
    %5402 = vmatpush1.xpose.msra.mxu0 0.0
    %5403 = vmatprep.subr.mxu0 0.0
    %5404 = vmatpush1.xpose.msra.mxu0 0.0
    %5405 = vmatprep.subr.mxu0 0.0
    %5406 = vmatpush1.xpose.msra.mxu0 0.0
    %5407 = vmatprep.subr.mxu0 0.0
    %5408 = vmatpush1.xpose.msra.mxu0 0.0
    %5409 = vmatprep.subr.mxu0 0.0
    %5410 = vmatpush1.xpose.msra.mxu0 0.0
    %5411 = vmatprep.subr.mxu0 0.0
    %5412 = vmatpush1.xpose.msra.mxu0 0.0
    %5413 = vmatprep.subr.mxu0 0.0
    %5414 = vmatpush1.xpose.msra.mxu0 0.0
    %5415 = vmatprep.mubr.f32.mxu0 0.0
    %5416 = vmatmul.mubr.f32.gmra.mrb[0].mxu0 %v5346
    %v5417 = vpop.f32.mrb[0].mxu0
    %v5418 = vadd.f32 0.0, %v5417
    %v5419 = vpop.f32.mrb[0].mxu0
    %5420 = vdwg.mxu0
    %v5421 = vmul.f32 %v5190, 0.35355338
    %v5422 = vmul.f32 %v5266, 0.35355338
    %v5423 = vmul.f32 %v5342, 0.35355338
    %v5424 = vmul.f32 %v5418, 0.35355338
    %v5425 = vadd.f32 %v5421, %v1409
    %v5426 = vadd.f32 %v5422, %v1409
    %v5427 = vadd.f32 %v5423, %v1409
    %v5428 = vadd.f32 %v5424, %v1409
    %v5429 = vsel %vm1097, %v5425, -inf
    %5430 = vmax.xlane.f32.xlu0 %v5429
    %v5431 = vpop.xlane.xlu0 %5430
    %v5432 = vsel %vm1097, %v5426, -inf
    %5433 = vmax.xlane.f32.xlu0 %v5432
    %v5434 = vpop.xlane.xlu0 %5433
    %v5435 = vsel %vm1097, %v5427, -inf
    %5436 = vmax.xlane.f32.xlu0 %v5435
    %v5437 = vpop.xlane.xlu0 %5436
    %v5438 = vsel %vm1097, %v5428, -inf
    %5439 = vmax.xlane.f32.xlu0 %v5438
    %v5440 = vpop.xlane.xlu0 %5439
    %v5441 = vsub.f32 %v5425, %v5431
    %v5442 = vsub.f32 %v5426, %v5434
    %v5443 = vsub.f32 %v5427, %v5437
    %v5444 = vsub.f32 %v5428, %v5440
    %v5445 = vmul.f32 %v5441, 1.442695
    %v5446 = vpow.pop %v5445
    %v5447 = vmul.f32 %v5442, 1.442695
    %v5448 = vpow.pop %v5447
    %v5449 = vmul.f32 %v5443, 1.442695
    %v5450 = vpow.pop %v5449
    %v5451 = vmul.f32 %v5444, 1.442695
    %v5452 = vpow.pop %v5451
    %v5453 = vsel %vm1097, %v5446, 0.0
    %5454 = vadd.xlane.f32.xlu0 %v5453
    %v5455 = vpop.xlane.xlu0 %5454
    %v5456 = vsel %vm1097, %v5448, 0.0
    %5457 = vadd.xlane.f32.xlu0 %v5456
    %v5458 = vpop.xlane.xlu0 %5457
    %v5459 = vsel %vm1097, %v5450, 0.0
    %5460 = vadd.xlane.f32.xlu0 %v5459
    %v5461 = vpop.xlane.xlu0 %5460
    %v5462 = vsel %vm1097, %v5452, 0.0
    %5463 = vadd.xlane.f32.xlu0 %v5462
    %v5464 = vpop.xlane.xlu0 %5463
    %v5465 = vrcp.pop %v5455
    %v5466 = vrcp.pop %v5458
    %v5467 = vrcp.pop %v5461
    %v5468 = vrcp.pop %v5464
    %v5469 = vmul.f32 %v5446, %v5465
    %v5470 = vmul.f32 %v5448, %v5466
    %v5471 = vmul.f32 %v5450, %v5467
    %v5472 = vmul.f32 %v5452, %v5468
    %v5474 = vsel %vm1097, %v5469, 0
    %5476 = vmatprep.subr.mxu0 0.0
    %5477 = vmatpush1.msra.mxu0 %v4904
    %5478 = vmatprep.subr.mxu0 0.0
    %5479 = vmatpush1.msra.mxu0 0.0
    %5480 = vmatprep.subr.mxu0 0.0
    %5481 = vmatpush1.msra.mxu0 0.0
    %5482 = vmatprep.subr.mxu0 0.0
    %5483 = vmatpush1.msra.mxu0 0.0
    %5484 = vmatprep.subr.mxu0 0.0
    %5485 = vmatpush1.msra.mxu0 0.0
    %5486 = vmatprep.subr.mxu0 0.0
    %5487 = vmatpush1.msra.mxu0 0.0
    %5488 = vmatprep.subr.mxu0 0.0
    %5489 = vmatpush1.msra.mxu0 0.0
    %5490 = vmatprep.subr.mxu0 0.0
    %5491 = vmatpush1.msra.mxu0 0.0
    %5492 = vmatprep.subr.mxu0 0.0
    %5493 = vmatpush1.msra.mxu0 0.0
    %5494 = vmatprep.subr.mxu0 0.0
    %5495 = vmatpush1.msra.mxu0 0.0
    %5496 = vmatprep.subr.mxu0 0.0
    %5497 = vmatpush1.msra.mxu0 0.0
    %5498 = vmatprep.subr.mxu0 0.0
    %5499 = vmatpush1.msra.mxu0 0.0
    %5500 = vmatprep.subr.mxu0 0.0
    %5501 = vmatpush1.msra.mxu0 0.0
    %5502 = vmatprep.subr.mxu0 0.0
    %5503 = vmatpush1.msra.mxu0 0.0
    %5504 = vmatprep.subr.mxu0 0.0
    %5505 = vmatpush1.msra.mxu0 0.0
    %5506 = vmatprep.subr.mxu0 0.0
    %5507 = vmatpush1.msra.mxu0 0.0
    %5508 = vmatprep.subr.mxu0 0.0
    %5509 = vmatpush1.msra.mxu0 0.0
    %5510 = vmatprep.subr.mxu0 0.0
    %5511 = vmatpush1.msra.mxu0 0.0
    %5512 = vmatprep.subr.mxu0 0.0
    %5513 = vmatpush1.msra.mxu0 0.0
    %5514 = vmatprep.subr.mxu0 0.0
    %5515 = vmatpush1.msra.mxu0 0.0
    %5516 = vmatprep.subr.mxu0 0.0
    %5517 = vmatpush1.msra.mxu0 0.0
    %5518 = vmatprep.subr.mxu0 0.0
    %5519 = vmatpush1.msra.mxu0 0.0
    %5520 = vmatprep.subr.mxu0 0.0
    %5521 = vmatpush1.msra.mxu0 0.0
    %5522 = vmatprep.subr.mxu0 0.0
    %5523 = vmatpush1.msra.mxu0 0.0
    %5524 = vmatprep.subr.mxu0 0.0
    %5525 = vmatpush1.msra.mxu0 0.0
    %5526 = vmatprep.subr.mxu0 0.0
    %5527 = vmatpush1.msra.mxu0 0.0
    %5528 = vmatprep.subr.mxu0 0.0
    %5529 = vmatpush1.msra.mxu0 0.0
    %5530 = vmatprep.subr.mxu0 0.0
    %5531 = vmatpush1.msra.mxu0 0.0
    %5532 = vmatprep.subr.mxu0 0.0
    %5533 = vmatpush1.msra.mxu0 0.0
    %5534 = vmatprep.subr.mxu0 0.0
    %5535 = vmatpush1.msra.mxu0 0.0
    %5536 = vmatprep.subr.mxu0 0.0
    %5537 = vmatpush1.msra.mxu0 0.0
    %5538 = vmatprep.subr.mxu0 0.0
    %5539 = vmatpush1.msra.mxu0 0.0
    %5540 = vmatprep.mubr.f32.mxu0 0.0
    %5541 = vmatmul.mubr.f32.gmra.mrb[0].mxu0 %v5474
    %v5542 = vpop.f32.mrb[0].mxu0
    %v5543 = vadd.f32 0.0, %v5542
    %v5544 = vpop.f32.mrb[0].mxu0
    %5545 = vdwg.mxu0
    %v5547 = vsel %vm1097, %v5470, 0
    %5549 = vmatprep.subr.mxu0 0.0
    %5550 = vmatpush1.msra.mxu0 %v4974
    %5551 = vmatprep.subr.mxu0 0.0
    %5552 = vmatpush1.msra.mxu0 0.0
    %5553 = vmatprep.subr.mxu0 0.0
    %5554 = vmatpush1.msra.mxu0 0.0
    %5555 = vmatprep.subr.mxu0 0.0
    %5556 = vmatpush1.msra.mxu0 0.0
    %5557 = vmatprep.subr.mxu0 0.0
    %5558 = vmatpush1.msra.mxu0 0.0
    %5559 = vmatprep.subr.mxu0 0.0
    %5560 = vmatpush1.msra.mxu0 0.0
    %5561 = vmatprep.subr.mxu0 0.0
    %5562 = vmatpush1.msra.mxu0 0.0
    %5563 = vmatprep.subr.mxu0 0.0
    %5564 = vmatpush1.msra.mxu0 0.0
    %5565 = vmatprep.subr.mxu0 0.0
    %5566 = vmatpush1.msra.mxu0 0.0
    %5567 = vmatprep.subr.mxu0 0.0
    %5568 = vmatpush1.msra.mxu0 0.0
    %5569 = vmatprep.subr.mxu0 0.0
    %5570 = vmatpush1.msra.mxu0 0.0
    %5571 = vmatprep.subr.mxu0 0.0
    %5572 = vmatpush1.msra.mxu0 0.0
    %5573 = vmatprep.subr.mxu0 0.0
    %5574 = vmatpush1.msra.mxu0 0.0
    %5575 = vmatprep.subr.mxu0 0.0
    %5576 = vmatpush1.msra.mxu0 0.0
    %5577 = vmatprep.subr.mxu0 0.0
    %5578 = vmatpush1.msra.mxu0 0.0
    %5579 = vmatprep.subr.mxu0 0.0
    %5580 = vmatpush1.msra.mxu0 0.0
    %5581 = vmatprep.subr.mxu0 0.0
    %5582 = vmatpush1.msra.mxu0 0.0
    %5583 = vmatprep.subr.mxu0 0.0
    %5584 = vmatpush1.msra.mxu0 0.0
    %5585 = vmatprep.subr.mxu0 0.0
    %5586 = vmatpush1.msra.mxu0 0.0
    %5587 = vmatprep.subr.mxu0 0.0
    %5588 = vmatpush1.msra.mxu0 0.0
    %5589 = vmatprep.subr.mxu0 0.0
    %5590 = vmatpush1.msra.mxu0 0.0
    %5591 = vmatprep.subr.mxu0 0.0
    %5592 = vmatpush1.msra.mxu0 0.0
    %5593 = vmatprep.subr.mxu0 0.0
    %5594 = vmatpush1.msra.mxu0 0.0
    %5595 = vmatprep.subr.mxu0 0.0
    %5596 = vmatpush1.msra.mxu0 0.0
    %5597 = vmatprep.subr.mxu0 0.0
    %5598 = vmatpush1.msra.mxu0 0.0
    %5599 = vmatprep.subr.mxu0 0.0
    %5600 = vmatpush1.msra.mxu0 0.0
    %5601 = vmatprep.subr.mxu0 0.0
    %5602 = vmatpush1.msra.mxu0 0.0
    %5603 = vmatprep.subr.mxu0 0.0
    %5604 = vmatpush1.msra.mxu0 0.0
    %5605 = vmatprep.subr.mxu0 0.0
    %5606 = vmatpush1.msra.mxu0 0.0
    %5607 = vmatprep.subr.mxu0 0.0
    %5608 = vmatpush1.msra.mxu0 0.0
    %5609 = vmatprep.subr.mxu0 0.0
    %5610 = vmatpush1.msra.mxu0 0.0
    %5611 = vmatprep.subr.mxu0 0.0
    %5612 = vmatpush1.msra.mxu0 0.0
    %5613 = vmatprep.mubr.f32.mxu0 0.0
    %5614 = vmatmul.mubr.f32.gmra.mrb[0].mxu0 %v5547
    %v5615 = vpop.f32.mrb[0].mxu0
    %v5616 = vadd.f32 0.0, %v5615
    %v5617 = vpop.f32.mrb[0].mxu0
    %5618 = vdwg.mxu0
    %v5620 = vsel %vm1097, %v5471, 0
    %5622 = vmatprep.subr.mxu0 0.0
    %5623 = vmatpush1.msra.mxu0 %v5044
    %5624 = vmatprep.subr.mxu0 0.0
    %5625 = vmatpush1.msra.mxu0 0.0
    %5626 = vmatprep.subr.mxu0 0.0
    %5627 = vmatpush1.msra.mxu0 0.0
    %5628 = vmatprep.subr.mxu0 0.0
    %5629 = vmatpush1.msra.mxu0 0.0
    %5630 = vmatprep.subr.mxu0 0.0
    %5631 = vmatpush1.msra.mxu0 0.0
    %5632 = vmatprep.subr.mxu0 0.0
    %5633 = vmatpush1.msra.mxu0 0.0
    %5634 = vmatprep.subr.mxu0 0.0
    %5635 = vmatpush1.msra.mxu0 0.0
    %5636 = vmatprep.subr.mxu0 0.0
    %5637 = vmatpush1.msra.mxu0 0.0
    %5638 = vmatprep.subr.mxu0 0.0
    %5639 = vmatpush1.msra.mxu0 0.0
    %5640 = vmatprep.subr.mxu0 0.0
    %5641 = vmatpush1.msra.mxu0 0.0
    %5642 = vmatprep.subr.mxu0 0.0
    %5643 = vmatpush1.msra.mxu0 0.0
    %5644 = vmatprep.subr.mxu0 0.0
    %5645 = vmatpush1.msra.mxu0 0.0
    %5646 = vmatprep.subr.mxu0 0.0
    %5647 = vmatpush1.msra.mxu0 0.0
    %5648 = vmatprep.subr.mxu0 0.0
    %5649 = vmatpush1.msra.mxu0 0.0
    %5650 = vmatprep.subr.mxu0 0.0
    %5651 = vmatpush1.msra.mxu0 0.0
    %5652 = vmatprep.subr.mxu0 0.0
    %5653 = vmatpush1.msra.mxu0 0.0
    %5654 = vmatprep.subr.mxu0 0.0
    %5655 = vmatpush1.msra.mxu0 0.0
    %5656 = vmatprep.subr.mxu0 0.0
    %5657 = vmatpush1.msra.mxu0 0.0
    %5658 = vmatprep.subr.mxu0 0.0
    %5659 = vmatpush1.msra.mxu0 0.0
    %5660 = vmatprep.subr.mxu0 0.0
    %5661 = vmatpush1.msra.mxu0 0.0
    %5662 = vmatprep.subr.mxu0 0.0
    %5663 = vmatpush1.msra.mxu0 0.0
    %5664 = vmatprep.subr.mxu0 0.0
    %5665 = vmatpush1.msra.mxu0 0.0
    %5666 = vmatprep.subr.mxu0 0.0
    %5667 = vmatpush1.msra.mxu0 0.0
    %5668 = vmatprep.subr.mxu0 0.0
    %5669 = vmatpush1.msra.mxu0 0.0
    %5670 = vmatprep.subr.mxu0 0.0
    %5671 = vmatpush1.msra.mxu0 0.0
    %5672 = vmatprep.subr.mxu0 0.0
    %5673 = vmatpush1.msra.mxu0 0.0
    %5674 = vmatprep.subr.mxu0 0.0
    %5675 = vmatpush1.msra.mxu0 0.0
    %5676 = vmatprep.subr.mxu0 0.0
    %5677 = vmatpush1.msra.mxu0 0.0
    %5678 = vmatprep.subr.mxu0 0.0
    %5679 = vmatpush1.msra.mxu0 0.0
    %5680 = vmatprep.subr.mxu0 0.0
    %5681 = vmatpush1.msra.mxu0 0.0
    %5682 = vmatprep.subr.mxu0 0.0
    %5683 = vmatpush1.msra.mxu0 0.0
    %5684 = vmatprep.subr.mxu0 0.0
    %5685 = vmatpush1.msra.mxu0 0.0
    %5686 = vmatprep.mubr.f32.mxu0 0.0
    %5687 = vmatmul.mubr.f32.gmra.mrb[0].mxu0 %v5620
    %v5688 = vpop.f32.mrb[0].mxu0
    %v5689 = vadd.f32 0.0, %v5688
    %v5690 = vpop.f32.mrb[0].mxu0
    %5691 = vdwg.mxu0
    %v5693 = vsel %vm1097, %v5472, 0
    %5695 = vmatprep.subr.mxu0 0.0
    %5696 = vmatpush1.msra.mxu0 %v5114
    %5697 = vmatprep.subr.mxu0 0.0
    %5698 = vmatpush1.msra.mxu0 0.0
    %5699 = vmatprep.subr.mxu0 0.0
    %5700 = vmatpush1.msra.mxu0 0.0
    %5701 = vmatprep.subr.mxu0 0.0
    %5702 = vmatpush1.msra.mxu0 0.0
    %5703 = vmatprep.subr.mxu0 0.0
    %5704 = vmatpush1.msra.mxu0 0.0
    %5705 = vmatprep.subr.mxu0 0.0
    %5706 = vmatpush1.msra.mxu0 0.0
    %5707 = vmatprep.subr.mxu0 0.0
    %5708 = vmatpush1.msra.mxu0 0.0
    %5709 = vmatprep.subr.mxu0 0.0
    %5710 = vmatpush1.msra.mxu0 0.0
    %5711 = vmatprep.subr.mxu0 0.0
    %5712 = vmatpush1.msra.mxu0 0.0
    %5713 = vmatprep.subr.mxu0 0.0
    %5714 = vmatpush1.msra.mxu0 0.0
    %5715 = vmatprep.subr.mxu0 0.0
    %5716 = vmatpush1.msra.mxu0 0.0
    %5717 = vmatprep.subr.mxu0 0.0
    %5718 = vmatpush1.msra.mxu0 0.0
    %5719 = vmatprep.subr.mxu0 0.0
    %5720 = vmatpush1.msra.mxu0 0.0
    %5721 = vmatprep.subr.mxu0 0.0
    %5722 = vmatpush1.msra.mxu0 0.0
    %5723 = vmatprep.subr.mxu0 0.0
    %5724 = vmatpush1.msra.mxu0 0.0
    %5725 = vmatprep.subr.mxu0 0.0
    %5726 = vmatpush1.msra.mxu0 0.0
    %5727 = vmatprep.subr.mxu0 0.0
    %5728 = vmatpush1.msra.mxu0 0.0
    %5729 = vmatprep.subr.mxu0 0.0
    %5730 = vmatpush1.msra.mxu0 0.0
    %5731 = vmatprep.subr.mxu0 0.0
    %5732 = vmatpush1.msra.mxu0 0.0
    %5733 = vmatprep.subr.mxu0 0.0
    %5734 = vmatpush1.msra.mxu0 0.0
    %5735 = vmatprep.subr.mxu0 0.0
    %5736 = vmatpush1.msra.mxu0 0.0
    %5737 = vmatprep.subr.mxu0 0.0
    %5738 = vmatpush1.msra.mxu0 0.0
    %5739 = vmatprep.subr.mxu0 0.0
    %5740 = vmatpush1.msra.mxu0 0.0
    %5741 = vmatprep.subr.mxu0 0.0
    %5742 = vmatpush1.msra.mxu0 0.0
    %5743 = vmatprep.subr.mxu0 0.0
    %5744 = vmatpush1.msra.mxu0 0.0
    %5745 = vmatprep.subr.mxu0 0.0
    %5746 = vmatpush1.msra.mxu0 0.0
    %5747 = vmatprep.subr.mxu0 0.0
    %5748 = vmatpush1.msra.mxu0 0.0
    %5749 = vmatprep.subr.mxu0 0.0
    %5750 = vmatpush1.msra.mxu0 0.0
    %5751 = vmatprep.subr.mxu0 0.0
    %5752 = vmatpush1.msra.mxu0 0.0
    %5753 = vmatprep.subr.mxu0 0.0
    %5754 = vmatpush1.msra.mxu0 0.0
    %5755 = vmatprep.subr.mxu0 0.0
    %5756 = vmatpush1.msra.mxu0 0.0
    %5757 = vmatprep.subr.mxu0 0.0
    %5758 = vmatpush1.msra.mxu0 0.0
    %5759 = vmatprep.mubr.f32.mxu0 0.0
    %5760 = vmatmul.mubr.f32.gmra.mrb[0].mxu0 %v5693
    %v5761 = vpop.f32.mrb[0].mxu0
    %v5762 = vadd.f32 0.0, %v5761
    %v5763 = vpop.f32.mrb[0].mxu0
    %5764 = vdwg.mxu0
    %v5766 = vsel %vm1097, %v5543, 0
    %5768 = vmatprep.subr.mxu0 0.0
    %5769 = vmatpush1.msra.mxu0 %v4177
    %5770 = vmatprep.subr.mxu0 0.0
    %5771 = vmatpush1.msra.mxu0 0.0
    %5772 = vmatprep.subr.mxu0 0.0
    %5773 = vmatpush1.msra.mxu0 0.0
    %5774 = vmatprep.subr.mxu0 0.0
    %5775 = vmatpush1.msra.mxu0 0.0
    %5776 = vmatprep.subr.mxu0 0.0
    %5777 = vmatpush1.msra.mxu0 0.0
    %5778 = vmatprep.subr.mxu0 0.0
    %5779 = vmatpush1.msra.mxu0 0.0
    %5780 = vmatprep.subr.mxu0 0.0
    %5781 = vmatpush1.msra.mxu0 0.0
    %5782 = vmatprep.subr.mxu0 0.0
    %5783 = vmatpush1.msra.mxu0 0.0
    %5784 = vmatprep.subr.mxu0 0.0
    %5785 = vmatpush1.msra.mxu0 0.0
    %5786 = vmatprep.subr.mxu0 0.0
    %5787 = vmatpush1.msra.mxu0 0.0
    %5788 = vmatprep.subr.mxu0 0.0
    %5789 = vmatpush1.msra.mxu0 0.0
    %5790 = vmatprep.subr.mxu0 0.0
    %5791 = vmatpush1.msra.mxu0 0.0
    %5792 = vmatprep.subr.mxu0 0.0
    %5793 = vmatpush1.msra.mxu0 0.0
    %5794 = vmatprep.subr.mxu0 0.0
    %5795 = vmatpush1.msra.mxu0 0.0
    %5796 = vmatprep.subr.mxu0 0.0
    %5797 = vmatpush1.msra.mxu0 0.0
    %5798 = vmatprep.subr.mxu0 0.0
    %5799 = vmatpush1.msra.mxu0 0.0
    %5800 = vmatprep.subr.mxu0 0.0
    %5801 = vmatpush1.msra.mxu0 0.0
    %5802 = vmatprep.subr.mxu0 0.0
    %5803 = vmatpush1.msra.mxu0 0.0
    %5804 = vmatprep.subr.mxu0 0.0
    %5805 = vmatpush1.msra.mxu0 0.0
    %5806 = vmatprep.subr.mxu0 0.0
    %5807 = vmatpush1.msra.mxu0 0.0
    %5808 = vmatprep.subr.mxu0 0.0
    %5809 = vmatpush1.msra.mxu0 0.0
    %5810 = vmatprep.subr.mxu0 0.0
    %5811 = vmatpush1.msra.mxu0 0.0
    %5812 = vmatprep.subr.mxu0 0.0
    %5813 = vmatpush1.msra.mxu0 0.0
    %5814 = vmatprep.subr.mxu0 0.0
    %5815 = vmatpush1.msra.mxu0 0.0
    %5816 = vmatprep.subr.mxu0 0.0
    %5817 = vmatpush1.msra.mxu0 0.0
    %5818 = vmatprep.subr.mxu0 0.0
    %5819 = vmatpush1.msra.mxu0 0.0
    %5820 = vmatprep.subr.mxu0 0.0
    %5821 = vmatpush1.msra.mxu0 0.0
    %5822 = vmatprep.subr.mxu0 0.0
    %5823 = vmatpush1.msra.mxu0 0.0
    %5824 = vmatprep.subr.mxu0 0.0
    %5825 = vmatpush1.msra.mxu0 0.0
    %5826 = vmatprep.subr.mxu0 0.0
    %5827 = vmatpush1.msra.mxu0 0.0
    %5828 = vmatprep.subr.mxu0 0.0
    %5829 = vmatpush1.msra.mxu0 0.0
    %5830 = vmatprep.subr.mxu0 0.0
    %5831 = vmatpush1.msra.mxu0 0.0
    %5832 = vmatprep.mubr.f32.mxu0 0.0
    %5833 = vmatmul.mubr.f32.gmra.mrb[0].mxu0 %v5766
    %v5834 = vpop.f32.mrb[0].mxu0
    %v5835 = vadd.f32 0.0, %v5834
    %v5836 = vpop.f32.mrb[0].mxu0
    %5837 = vdwg.mxu0
    %v5839 = vsel %vm1097, %v5616, 0
    %5841 = vmatprep.subr.mxu0 0.0
    %5842 = vmatpush1.msra.mxu0 %v4178
    %5843 = vmatprep.subr.mxu0 0.0
    %5844 = vmatpush1.msra.mxu0 0.0
    %5845 = vmatprep.subr.mxu0 0.0
    %5846 = vmatpush1.msra.mxu0 0.0
    %5847 = vmatprep.subr.mxu0 0.0
    %5848 = vmatpush1.msra.mxu0 0.0
    %5849 = vmatprep.subr.mxu0 0.0
    %5850 = vmatpush1.msra.mxu0 0.0
    %5851 = vmatprep.subr.mxu0 0.0
    %5852 = vmatpush1.msra.mxu0 0.0
    %5853 = vmatprep.subr.mxu0 0.0
    %5854 = vmatpush1.msra.mxu0 0.0
    %5855 = vmatprep.subr.mxu0 0.0
    %5856 = vmatpush1.msra.mxu0 0.0
    %5857 = vmatprep.subr.mxu0 0.0
    %5858 = vmatpush1.msra.mxu0 0.0
    %5859 = vmatprep.subr.mxu0 0.0
    %5860 = vmatpush1.msra.mxu0 0.0
    %5861 = vmatprep.subr.mxu0 0.0
    %5862 = vmatpush1.msra.mxu0 0.0
    %5863 = vmatprep.subr.mxu0 0.0
    %5864 = vmatpush1.msra.mxu0 0.0
    %5865 = vmatprep.subr.mxu0 0.0
    %5866 = vmatpush1.msra.mxu0 0.0
    %5867 = vmatprep.subr.mxu0 0.0
    %5868 = vmatpush1.msra.mxu0 0.0
    %5869 = vmatprep.subr.mxu0 0.0
    %5870 = vmatpush1.msra.mxu0 0.0
    %5871 = vmatprep.subr.mxu0 0.0
    %5872 = vmatpush1.msra.mxu0 0.0
    %5873 = vmatprep.subr.mxu0 0.0
    %5874 = vmatpush1.msra.mxu0 0.0
    %5875 = vmatprep.subr.mxu0 0.0
    %5876 = vmatpush1.msra.mxu0 0.0
    %5877 = vmatprep.subr.mxu0 0.0
    %5878 = vmatpush1.msra.mxu0 0.0
    %5879 = vmatprep.subr.mxu0 0.0
    %5880 = vmatpush1.msra.mxu0 0.0
    %5881 = vmatprep.subr.mxu0 0.0
    %5882 = vmatpush1.msra.mxu0 0.0
    %5883 = vmatprep.subr.mxu0 0.0
    %5884 = vmatpush1.msra.mxu0 0.0
    %5885 = vmatprep.subr.mxu0 0.0
    %5886 = vmatpush1.msra.mxu0 0.0
    %5887 = vmatprep.subr.mxu0 0.0
    %5888 = vmatpush1.msra.mxu0 0.0
    %5889 = vmatprep.subr.mxu0 0.0
    %5890 = vmatpush1.msra.mxu0 0.0
    %5891 = vmatprep.subr.mxu0 0.0
    %5892 = vmatpush1.msra.mxu0 0.0
    %5893 = vmatprep.subr.mxu0 0.0
    %5894 = vmatpush1.msra.mxu0 0.0
    %5895 = vmatprep.subr.mxu0 0.0
    %5896 = vmatpush1.msra.mxu0 0.0
    %5897 = vmatprep.subr.mxu0 0.0
    %5898 = vmatpush1.msra.mxu0 0.0
    %5899 = vmatprep.subr.mxu0 0.0
    %5900 = vmatpush1.msra.mxu0 0.0
    %5901 = vmatprep.subr.mxu0 0.0
    %5902 = vmatpush1.msra.mxu0 0.0
    %5903 = vmatprep.subr.mxu0 0.0
    %5904 = vmatpush1.msra.mxu0 0.0
    %5905 = vmatprep.mubr.f32.mxu0 0.0
    %5906 = vmatmul.mubr.f32.gmra.mrb[0].mxu0 %v5839
    %v5907 = vpop.f32.mrb[0].mxu0
    %v5908 = vadd.f32 0.0, %v5907
    %v5909 = vpop.f32.mrb[0].mxu0
    %5910 = vdwg.mxu0
    %v5912 = vsel %vm1097, %v5689, 0
    %5914 = vmatprep.subr.mxu0 0.0
    %5915 = vmatpush1.msra.mxu0 %v4179
    %5916 = vmatprep.subr.mxu0 0.0
    %5917 = vmatpush1.msra.mxu0 0.0
    %5918 = vmatprep.subr.mxu0 0.0
    %5919 = vmatpush1.msra.mxu0 0.0
    %5920 = vmatprep.subr.mxu0 0.0
    %5921 = vmatpush1.msra.mxu0 0.0
    %5922 = vmatprep.subr.mxu0 0.0
    %5923 = vmatpush1.msra.mxu0 0.0
    %5924 = vmatprep.subr.mxu0 0.0
    %5925 = vmatpush1.msra.mxu0 0.0
    %5926 = vmatprep.subr.mxu0 0.0
    %5927 = vmatpush1.msra.mxu0 0.0
    %5928 = vmatprep.subr.mxu0 0.0
    %5929 = vmatpush1.msra.mxu0 0.0
    %5930 = vmatprep.subr.mxu0 0.0
    %5931 = vmatpush1.msra.mxu0 0.0
    %5932 = vmatprep.subr.mxu0 0.0
    %5933 = vmatpush1.msra.mxu0 0.0
    %5934 = vmatprep.subr.mxu0 0.0
    %5935 = vmatpush1.msra.mxu0 0.0
    %5936 = vmatprep.subr.mxu0 0.0
    %5937 = vmatpush1.msra.mxu0 0.0
    %5938 = vmatprep.subr.mxu0 0.0
    %5939 = vmatpush1.msra.mxu0 0.0
    %5940 = vmatprep.subr.mxu0 0.0
    %5941 = vmatpush1.msra.mxu0 0.0
    %5942 = vmatprep.subr.mxu0 0.0
    %5943 = vmatpush1.msra.mxu0 0.0
    %5944 = vmatprep.subr.mxu0 0.0
    %5945 = vmatpush1.msra.mxu0 0.0
    %5946 = vmatprep.subr.mxu0 0.0
    %5947 = vmatpush1.msra.mxu0 0.0
    %5948 = vmatprep.subr.mxu0 0.0
    %5949 = vmatpush1.msra.mxu0 0.0
    %5950 = vmatprep.subr.mxu0 0.0
    %5951 = vmatpush1.msra.mxu0 0.0
    %5952 = vmatprep.subr.mxu0 0.0
    %5953 = vmatpush1.msra.mxu0 0.0
    %5954 = vmatprep.subr.mxu0 0.0
    %5955 = vmatpush1.msra.mxu0 0.0
    %5956 = vmatprep.subr.mxu0 0.0
    %5957 = vmatpush1.msra.mxu0 0.0
    %5958 = vmatprep.subr.mxu0 0.0
    %5959 = vmatpush1.msra.mxu0 0.0
    %5960 = vmatprep.subr.mxu0 0.0
    %5961 = vmatpush1.msra.mxu0 0.0
    %5962 = vmatprep.subr.mxu0 0.0
    %5963 = vmatpush1.msra.mxu0 0.0
    %5964 = vmatprep.subr.mxu0 0.0
    %5965 = vmatpush1.msra.mxu0 0.0
    %5966 = vmatprep.subr.mxu0 0.0
    %5967 = vmatpush1.msra.mxu0 0.0
    %5968 = vmatprep.subr.mxu0 0.0
    %5969 = vmatpush1.msra.mxu0 0.0
    %5970 = vmatprep.subr.mxu0 0.0
    %5971 = vmatpush1.msra.mxu0 0.0
    %5972 = vmatprep.subr.mxu0 0.0
    %5973 = vmatpush1.msra.mxu0 0.0
    %5974 = vmatprep.subr.mxu0 0.0
    %5975 = vmatpush1.msra.mxu0 0.0
    %5976 = vmatprep.subr.mxu0 0.0
    %5977 = vmatpush1.msra.mxu0 0.0
    %5978 = vmatprep.mubr.f32.mxu0 0.0
    %5979 = vmatmul.mubr.f32.gmra.mrb[0].mxu0 %v5912
    %v5980 = vpop.f32.mrb[0].mxu0
    %v5981 = vadd.f32 0.0, %v5980
    %v5982 = vpop.f32.mrb[0].mxu0
    %5983 = vdwg.mxu0
    %v5985 = vsel %vm1097, %v5762, 0
    %5987 = vmatprep.subr.mxu0 0.0
    %5988 = vmatpush1.msra.mxu0 %v4180
    %5989 = vmatprep.subr.mxu0 0.0
    %5990 = vmatpush1.msra.mxu0 0.0
    %5991 = vmatprep.subr.mxu0 0.0
    %5992 = vmatpush1.msra.mxu0 0.0
    %5993 = vmatprep.subr.mxu0 0.0
    %5994 = vmatpush1.msra.mxu0 0.0
    %5995 = vmatprep.subr.mxu0 0.0
    %5996 = vmatpush1.msra.mxu0 0.0
    %5997 = vmatprep.subr.mxu0 0.0
    %5998 = vmatpush1.msra.mxu0 0.0
    %5999 = vmatprep.subr.mxu0 0.0
    %6000 = vmatpush1.msra.mxu0 0.0
    %6001 = vmatprep.subr.mxu0 0.0
    %6002 = vmatpush1.msra.mxu0 0.0
    %6003 = vmatprep.subr.mxu0 0.0
    %6004 = vmatpush1.msra.mxu0 0.0
    %6005 = vmatprep.subr.mxu0 0.0
    %6006 = vmatpush1.msra.mxu0 0.0
    %6007 = vmatprep.subr.mxu0 0.0
    %6008 = vmatpush1.msra.mxu0 0.0
    %6009 = vmatprep.subr.mxu0 0.0
    %6010 = vmatpush1.msra.mxu0 0.0
    %6011 = vmatprep.subr.mxu0 0.0
    %6012 = vmatpush1.msra.mxu0 0.0
    %6013 = vmatprep.subr.mxu0 0.0
    %6014 = vmatpush1.msra.mxu0 0.0
    %6015 = vmatprep.subr.mxu0 0.0
    %6016 = vmatpush1.msra.mxu0 0.0
    %6017 = vmatprep.subr.mxu0 0.0
    %6018 = vmatpush1.msra.mxu0 0.0
    %6019 = vmatprep.subr.mxu0 0.0
    %6020 = vmatpush1.msra.mxu0 0.0
    %6021 = vmatprep.subr.mxu0 0.0
    %6022 = vmatpush1.msra.mxu0 0.0
    %6023 = vmatprep.subr.mxu0 0.0
    %6024 = vmatpush1.msra.mxu0 0.0
    %6025 = vmatprep.subr.mxu0 0.0
    %6026 = vmatpush1.msra.mxu0 0.0
    %6027 = vmatprep.subr.mxu0 0.0
    %6028 = vmatpush1.msra.mxu0 0.0
    %6029 = vmatprep.subr.mxu0 0.0
    %6030 = vmatpush1.msra.mxu0 0.0
    %6031 = vmatprep.subr.mxu0 0.0
    %6032 = vmatpush1.msra.mxu0 0.0
    %6033 = vmatprep.subr.mxu0 0.0
    %6034 = vmatpush1.msra.mxu0 0.0
    %6035 = vmatprep.subr.mxu0 0.0
    %6036 = vmatpush1.msra.mxu0 0.0
    %6037 = vmatprep.subr.mxu0 0.0
    %6038 = vmatpush1.msra.mxu0 0.0
    %6039 = vmatprep.subr.mxu0 0.0
    %6040 = vmatpush1.msra.mxu0 0.0
    %6041 = vmatprep.subr.mxu0 0.0
    %6042 = vmatpush1.msra.mxu0 0.0
    %6043 = vmatprep.subr.mxu0 0.0
    %6044 = vmatpush1.msra.mxu0 0.0
    %6045 = vmatprep.subr.mxu0 0.0
    %6046 = vmatpush1.msra.mxu0 0.0
    %6047 = vmatprep.subr.mxu0 0.0
    %6048 = vmatpush1.msra.mxu0 0.0
    %6049 = vmatprep.subr.mxu0 0.0
    %6050 = vmatpush1.msra.mxu0 0.0
    %6051 = vmatprep.mubr.f32.mxu0 0.0
    %6052 = vmatmul.mubr.f32.gmra.mrb[0].mxu0 %v5985
    %v6053 = vpop.f32.mrb[0].mxu0
    %v6054 = vadd.f32 0.0, %v6053
    %v6055 = vpop.f32.mrb[0].mxu0
    %6056 = vdwg.mxu0
    %v6057 = vsel %vm52, %v5835, 0.0
    %v6058 = vsel %vm52, %v5908, 0.0
    %v6059 = vadd.f32 %v6057, %v6058
    %v6060 = vsel %vm52, %v5981, 0.0
    %v6061 = vadd.f32 %v6059, %v6060
    %v6062 = vsel %vm52, %v6054, 0.0
    %v6063 = vadd.f32 %v6061, %v6062
    %v6065 = vsel %vm52, %v4109, 0
    %6067 = vmatprep.subr.mxu0 0.0
    %6068 = vmatpush1.msra.mxu0 %v4111
    %6069 = vmatprep.subr.mxu0 0.0
    %6070 = vmatpush1.msra.mxu0 %v4112
    %6071 = vmatprep.subr.mxu0 0.0
    %6072 = vmatpush1.msra.mxu0 %v4113
    %6073 = vmatprep.subr.mxu0 0.0
    %6074 = vmatpush1.msra.mxu0 %v4114
    %6075 = vmatprep.subr.mxu0 0.0
    %6076 = vmatpush1.msra.mxu0 0.0
    %6077 = vmatprep.subr.mxu0 0.0
    %6078 = vmatpush1.msra.mxu0 0.0
    %6079 = vmatprep.subr.mxu0 0.0
    %6080 = vmatpush1.msra.mxu0 0.0
    %6081 = vmatprep.subr.mxu0 0.0
    %6082 = vmatpush1.msra.mxu0 0.0
    %6083 = vmatprep.subr.mxu0 0.0
    %6084 = vmatpush1.msra.mxu0 0.0
    %6085 = vmatprep.subr.mxu0 0.0
    %6086 = vmatpush1.msra.mxu0 0.0
    %6087 = vmatprep.subr.mxu0 0.0
    %6088 = vmatpush1.msra.mxu0 0.0
    %6089 = vmatprep.subr.mxu0 0.0
    %6090 = vmatpush1.msra.mxu0 0.0
    %6091 = vmatprep.subr.mxu0 0.0
    %6092 = vmatpush1.msra.mxu0 0.0
    %6093 = vmatprep.subr.mxu0 0.0
    %6094 = vmatpush1.msra.mxu0 0.0
    %6095 = vmatprep.subr.mxu0 0.0
    %6096 = vmatpush1.msra.mxu0 0.0
    %6097 = vmatprep.subr.mxu0 0.0
    %6098 = vmatpush1.msra.mxu0 0.0
    %6099 = vmatprep.subr.mxu0 0.0
    %6100 = vmatpush1.msra.mxu0 0.0
    %6101 = vmatprep.subr.mxu0 0.0
    %6102 = vmatpush1.msra.mxu0 0.0
    %6103 = vmatprep.subr.mxu0 0.0
    %6104 = vmatpush1.msra.mxu0 0.0
    %6105 = vmatprep.subr.mxu0 0.0
    %6106 = vmatpush1.msra.mxu0 0.0
    %6107 = vmatprep.subr.mxu0 0.0
    %6108 = vmatpush1.msra.mxu0 0.0
    %6109 = vmatprep.subr.mxu0 0.0
    %6110 = vmatpush1.msra.mxu0 0.0
    %6111 = vmatprep.subr.mxu0 0.0
    %6112 = vmatpush1.msra.mxu0 0.0
    %6113 = vmatprep.subr.mxu0 0.0
    %6114 = vmatpush1.msra.mxu0 0.0
    %6115 = vmatprep.subr.mxu0 0.0
    %6116 = vmatpush1.msra.mxu0 0.0
    %6117 = vmatprep.subr.mxu0 0.0
    %6118 = vmatpush1.msra.mxu0 0.0
    %6119 = vmatprep.subr.mxu0 0.0
    %6120 = vmatpush1.msra.mxu0 0.0
    %6121 = vmatprep.subr.mxu0 0.0
    %6122 = vmatpush1.msra.mxu0 0.0
    %6123 = vmatprep.subr.mxu0 0.0
    %6124 = vmatpush1.msra.mxu0 0.0
    %6125 = vmatprep.subr.mxu0 0.0
    %6126 = vmatpush1.msra.mxu0 0.0
    %6127 = vmatprep.subr.mxu0 0.0
    %6128 = vmatpush1.msra.mxu0 0.0
    %6129 = vmatprep.subr.mxu0 0.0
    %6130 = vmatpush1.msra.mxu0 0.0
    %6131 = vmatprep.mubr.f32.mxu0 0.0
    %6132 = vmatmul.mubr.f32.gmra.mrb[0].mxu0 %v6065
    %v6133 = vpop.f32.mrb[0].mxu0
    %v6134 = vadd.f32 %v4209, %v6133
    %v6135 = vpop.f32.mrb[0].mxu0
    %6136 = vdwg.mxu0
    %6137 = vmatprep.subr.mxu0 0.0
    %6138 = vmatpush1.msra.mxu0 %v4115
    %6139 = vmatprep.subr.mxu0 0.0
    %6140 = vmatpush1.msra.mxu0 %v4116
    %6141 = vmatprep.subr.mxu0 0.0
    %6142 = vmatpush1.msra.mxu0 %v4117
    %6143 = vmatprep.subr.mxu0 0.0
    %6144 = vmatpush1.msra.mxu0 %v4118
    %6145 = vmatprep.subr.mxu0 0.0
    %6146 = vmatpush1.msra.mxu0 0.0
    %6147 = vmatprep.subr.mxu0 0.0
    %6148 = vmatpush1.msra.mxu0 0.0
    %6149 = vmatprep.subr.mxu0 0.0
    %6150 = vmatpush1.msra.mxu0 0.0
    %6151 = vmatprep.subr.mxu0 0.0
    %6152 = vmatpush1.msra.mxu0 0.0
    %6153 = vmatprep.subr.mxu0 0.0
    %6154 = vmatpush1.msra.mxu0 0.0
    %6155 = vmatprep.subr.mxu0 0.0
    %6156 = vmatpush1.msra.mxu0 0.0
    %6157 = vmatprep.subr.mxu0 0.0
    %6158 = vmatpush1.msra.mxu0 0.0
    %6159 = vmatprep.subr.mxu0 0.0
    %6160 = vmatpush1.msra.mxu0 0.0
    %6161 = vmatprep.subr.mxu0 0.0
    %6162 = vmatpush1.msra.mxu0 0.0
    %6163 = vmatprep.subr.mxu0 0.0
    %6164 = vmatpush1.msra.mxu0 0.0
    %6165 = vmatprep.subr.mxu0 0.0
    %6166 = vmatpush1.msra.mxu0 0.0
    %6167 = vmatprep.subr.mxu0 0.0
    %6168 = vmatpush1.msra.mxu0 0.0
    %6169 = vmatprep.subr.mxu0 0.0
    %6170 = vmatpush1.msra.mxu0 0.0
    %6171 = vmatprep.subr.mxu0 0.0
    %6172 = vmatpush1.msra.mxu0 0.0
    %6173 = vmatprep.subr.mxu0 0.0
    %6174 = vmatpush1.msra.mxu0 0.0
    %6175 = vmatprep.subr.mxu0 0.0
    %6176 = vmatpush1.msra.mxu0 0.0
    %6177 = vmatprep.subr.mxu0 0.0
    %6178 = vmatpush1.msra.mxu0 0.0
    %6179 = vmatprep.subr.mxu0 0.0
    %6180 = vmatpush1.msra.mxu0 0.0
    %6181 = vmatprep.subr.mxu0 0.0
    %6182 = vmatpush1.msra.mxu0 0.0
    %6183 = vmatprep.subr.mxu0 0.0
    %6184 = vmatpush1.msra.mxu0 0.0
    %6185 = vmatprep.subr.mxu0 0.0
    %6186 = vmatpush1.msra.mxu0 0.0
    %6187 = vmatprep.subr.mxu0 0.0
    %6188 = vmatpush1.msra.mxu0 0.0
    %6189 = vmatprep.subr.mxu0 0.0
    %6190 = vmatpush1.msra.mxu0 0.0
    %6191 = vmatprep.subr.mxu0 0.0
    %6192 = vmatpush1.msra.mxu0 0.0
    %6193 = vmatprep.subr.mxu0 0.0
    %6194 = vmatpush1.msra.mxu0 0.0
    %6195 = vmatprep.subr.mxu0 0.0
    %6196 = vmatpush1.msra.mxu0 0.0
    %6197 = vmatprep.subr.mxu0 0.0
    %6198 = vmatpush1.msra.mxu0 0.0
    %6199 = vmatprep.subr.mxu0 0.0
    %6200 = vmatpush1.msra.mxu0 0.0
    %6201 = vmatprep.mubr.f32.mxu0 0.0
    %6202 = vmatmul.mubr.f32.gmra.mrb[0].mxu0 %v6065
    %v6203 = vpop.f32.mrb[0].mxu0
    %v6204 = vadd.f32 %v4213, %v6203
    %v6205 = vpop.f32.mrb[0].mxu0
    %6206 = vdwg.mxu0
    %6207 = vmatprep.subr.mxu0 0.0
    %6208 = vmatpush1.msra.mxu0 %v4119
    %6209 = vmatprep.subr.mxu0 0.0
    %6210 = vmatpush1.msra.mxu0 %v4120
    %6211 = vmatprep.subr.mxu0 0.0
    %6212 = vmatpush1.msra.mxu0 %v4121
    %6213 = vmatprep.subr.mxu0 0.0
    %6214 = vmatpush1.msra.mxu0 %v4122
    %6215 = vmatprep.subr.mxu0 0.0
    %6216 = vmatpush1.msra.mxu0 0.0
    %6217 = vmatprep.subr.mxu0 0.0
    %6218 = vmatpush1.msra.mxu0 0.0
    %6219 = vmatprep.subr.mxu0 0.0
    %6220 = vmatpush1.msra.mxu0 0.0
    %6221 = vmatprep.subr.mxu0 0.0
    %6222 = vmatpush1.msra.mxu0 0.0
    %6223 = vmatprep.subr.mxu0 0.0
    %6224 = vmatpush1.msra.mxu0 0.0
    %6225 = vmatprep.subr.mxu0 0.0
    %6226 = vmatpush1.msra.mxu0 0.0
    %6227 = vmatprep.subr.mxu0 0.0
    %6228 = vmatpush1.msra.mxu0 0.0
    %6229 = vmatprep.subr.mxu0 0.0
    %6230 = vmatpush1.msra.mxu0 0.0
    %6231 = vmatprep.subr.mxu0 0.0
    %6232 = vmatpush1.msra.mxu0 0.0
    %6233 = vmatprep.subr.mxu0 0.0
    %6234 = vmatpush1.msra.mxu0 0.0
    %6235 = vmatprep.subr.mxu0 0.0
    %6236 = vmatpush1.msra.mxu0 0.0
    %6237 = vmatprep.subr.mxu0 0.0
    %6238 = vmatpush1.msra.mxu0 0.0
    %6239 = vmatprep.subr.mxu0 0.0
    %6240 = vmatpush1.msra.mxu0 0.0
    %6241 = vmatprep.subr.mxu0 0.0
    %6242 = vmatpush1.msra.mxu0 0.0
    %6243 = vmatprep.subr.mxu0 0.0
    %6244 = vmatpush1.msra.mxu0 0.0
    %6245 = vmatprep.subr.mxu0 0.0
    %6246 = vmatpush1.msra.mxu0 0.0
    %6247 = vmatprep.subr.mxu0 0.0
    %6248 = vmatpush1.msra.mxu0 0.0
    %6249 = vmatprep.subr.mxu0 0.0
    %6250 = vmatpush1.msra.mxu0 0.0
    %6251 = vmatprep.subr.mxu0 0.0
    %6252 = vmatpush1.msra.mxu0 0.0
    %6253 = vmatprep.subr.mxu0 0.0
    %6254 = vmatpush1.msra.mxu0 0.0
    %6255 = vmatprep.subr.mxu0 0.0
    %6256 = vmatpush1.msra.mxu0 0.0
    %6257 = vmatprep.subr.mxu0 0.0
    %6258 = vmatpush1.msra.mxu0 0.0
    %6259 = vmatprep.subr.mxu0 0.0
    %6260 = vmatpush1.msra.mxu0 0.0
    %6261 = vmatprep.subr.mxu0 0.0
    %6262 = vmatpush1.msra.mxu0 0.0
    %6263 = vmatprep.subr.mxu0 0.0
    %6264 = vmatpush1.msra.mxu0 0.0
    %6265 = vmatprep.subr.mxu0 0.0
    %6266 = vmatpush1.msra.mxu0 0.0
    %6267 = vmatprep.subr.mxu0 0.0
    %6268 = vmatpush1.msra.mxu0 0.0
    %6269 = vmatprep.subr.mxu0 0.0
    %6270 = vmatpush1.msra.mxu0 0.0
    %6271 = vmatprep.mubr.f32.mxu0 0.0
    %6272 = vmatmul.mubr.f32.gmra.mrb[0].mxu0 %v6065
    %v6273 = vpop.f32.mrb[0].mxu0
    %v6274 = vadd.f32 %v4217, %v6273
    %v6275 = vpop.f32.mrb[0].mxu0
    %6276 = vdwg.mxu0
    %6277 = vmatprep.subr.mxu0 0.0
    %6278 = vmatpush1.msra.mxu0 %v4123
    %6279 = vmatprep.subr.mxu0 0.0
    %6280 = vmatpush1.msra.mxu0 %v4124
    %6281 = vmatprep.subr.mxu0 0.0
    %6282 = vmatpush1.msra.mxu0 %v4125
    %6283 = vmatprep.subr.mxu0 0.0
    %6284 = vmatpush1.msra.mxu0 %v4126
    %6285 = vmatprep.subr.mxu0 0.0
    %6286 = vmatpush1.msra.mxu0 0.0
    %6287 = vmatprep.subr.mxu0 0.0
    %6288 = vmatpush1.msra.mxu0 0.0
    %6289 = vmatprep.subr.mxu0 0.0
    %6290 = vmatpush1.msra.mxu0 0.0
    %6291 = vmatprep.subr.mxu0 0.0
    %6292 = vmatpush1.msra.mxu0 0.0
    %6293 = vmatprep.subr.mxu0 0.0
    %6294 = vmatpush1.msra.mxu0 0.0
    %6295 = vmatprep.subr.mxu0 0.0
    %6296 = vmatpush1.msra.mxu0 0.0
    %6297 = vmatprep.subr.mxu0 0.0
    %6298 = vmatpush1.msra.mxu0 0.0
    %6299 = vmatprep.subr.mxu0 0.0
    %6300 = vmatpush1.msra.mxu0 0.0
    %6301 = vmatprep.subr.mxu0 0.0
    %6302 = vmatpush1.msra.mxu0 0.0
    %6303 = vmatprep.subr.mxu0 0.0
    %6304 = vmatpush1.msra.mxu0 0.0
    %6305 = vmatprep.subr.mxu0 0.0
    %6306 = vmatpush1.msra.mxu0 0.0
    %6307 = vmatprep.subr.mxu0 0.0
    %6308 = vmatpush1.msra.mxu0 0.0
    %6309 = vmatprep.subr.mxu0 0.0
    %6310 = vmatpush1.msra.mxu0 0.0
    %6311 = vmatprep.subr.mxu0 0.0
    %6312 = vmatpush1.msra.mxu0 0.0
    %6313 = vmatprep.subr.mxu0 0.0
    %6314 = vmatpush1.msra.mxu0 0.0
    %6315 = vmatprep.subr.mxu0 0.0
    %6316 = vmatpush1.msra.mxu0 0.0
    %6317 = vmatprep.subr.mxu0 0.0
    %6318 = vmatpush1.msra.mxu0 0.0
    %6319 = vmatprep.subr.mxu0 0.0
    %6320 = vmatpush1.msra.mxu0 0.0
    %6321 = vmatprep.subr.mxu0 0.0
    %6322 = vmatpush1.msra.mxu0 0.0
    %6323 = vmatprep.subr.mxu0 0.0
    %6324 = vmatpush1.msra.mxu0 0.0
    %6325 = vmatprep.subr.mxu0 0.0
    %6326 = vmatpush1.msra.mxu0 0.0
    %6327 = vmatprep.subr.mxu0 0.0
    %6328 = vmatpush1.msra.mxu0 0.0
    %6329 = vmatprep.subr.mxu0 0.0
    %6330 = vmatpush1.msra.mxu0 0.0
    %6331 = vmatprep.subr.mxu0 0.0
    %6332 = vmatpush1.msra.mxu0 0.0
    %6333 = vmatprep.subr.mxu0 0.0
    %6334 = vmatpush1.msra.mxu0 0.0
    %6335 = vmatprep.subr.mxu0 0.0
    %6336 = vmatpush1.msra.mxu0 0.0
    %6337 = vmatprep.subr.mxu0 0.0
    %6338 = vmatpush1.msra.mxu0 0.0
    %6339 = vmatprep.subr.mxu0 0.0
    %6340 = vmatpush1.msra.mxu0 0.0
    %6341 = vmatprep.mubr.f32.mxu0 0.0
    %6342 = vmatmul.mubr.f32.gmra.mrb[0].mxu0 %v6065
    %v6343 = vpop.f32.mrb[0].mxu0
    %v6344 = vadd.f32 %v4221, %v6343
    %v6345 = vpop.f32.mrb[0].mxu0
    %6346 = vdwg.mxu0
    %6347 = vmatprep.subr.mxu0 0.0
    %6348 = vmatpush1.msra.mxu0 %v4128
    %6349 = vmatprep.subr.mxu0 0.0
    %6350 = vmatpush1.msra.mxu0 %v4129
    %6351 = vmatprep.subr.mxu0 0.0
    %6352 = vmatpush1.msra.mxu0 %v4130
    %6353 = vmatprep.subr.mxu0 0.0
    %6354 = vmatpush1.msra.mxu0 %v4131
    %6355 = vmatprep.subr.mxu0 0.0
    %6356 = vmatpush1.msra.mxu0 0.0
    %6357 = vmatprep.subr.mxu0 0.0
    %6358 = vmatpush1.msra.mxu0 0.0
    %6359 = vmatprep.subr.mxu0 0.0
    %6360 = vmatpush1.msra.mxu0 0.0
    %6361 = vmatprep.subr.mxu0 0.0
    %6362 = vmatpush1.msra.mxu0 0.0
    %6363 = vmatprep.subr.mxu0 0.0
    %6364 = vmatpush1.msra.mxu0 0.0
    %6365 = vmatprep.subr.mxu0 0.0
    %6366 = vmatpush1.msra.mxu0 0.0
    %6367 = vmatprep.subr.mxu0 0.0
    %6368 = vmatpush1.msra.mxu0 0.0
    %6369 = vmatprep.subr.mxu0 0.0
    %6370 = vmatpush1.msra.mxu0 0.0
    %6371 = vmatprep.subr.mxu0 0.0
    %6372 = vmatpush1.msra.mxu0 0.0
    %6373 = vmatprep.subr.mxu0 0.0
    %6374 = vmatpush1.msra.mxu0 0.0
    %6375 = vmatprep.subr.mxu0 0.0
    %6376 = vmatpush1.msra.mxu0 0.0
    %6377 = vmatprep.subr.mxu0 0.0
    %6378 = vmatpush1.msra.mxu0 0.0
    %6379 = vmatprep.subr.mxu0 0.0
    %6380 = vmatpush1.msra.mxu0 0.0
    %6381 = vmatprep.subr.mxu0 0.0
    %6382 = vmatpush1.msra.mxu0 0.0
    %6383 = vmatprep.subr.mxu0 0.0
    %6384 = vmatpush1.msra.mxu0 0.0
    %6385 = vmatprep.subr.mxu0 0.0
    %6386 = vmatpush1.msra.mxu0 0.0
    %6387 = vmatprep.subr.mxu0 0.0
    %6388 = vmatpush1.msra.mxu0 0.0
    %6389 = vmatprep.subr.mxu0 0.0
    %6390 = vmatpush1.msra.mxu0 0.0
    %6391 = vmatprep.subr.mxu0 0.0
    %6392 = vmatpush1.msra.mxu0 0.0
    %6393 = vmatprep.subr.mxu0 0.0
    %6394 = vmatpush1.msra.mxu0 0.0
    %6395 = vmatprep.subr.mxu0 0.0
    %6396 = vmatpush1.msra.mxu0 0.0
    %6397 = vmatprep.subr.mxu0 0.0
    %6398 = vmatpush1.msra.mxu0 0.0
    %6399 = vmatprep.subr.mxu0 0.0
    %6400 = vmatpush1.msra.mxu0 0.0
    %6401 = vmatprep.subr.mxu0 0.0
    %6402 = vmatpush1.msra.mxu0 0.0
    %6403 = vmatprep.subr.mxu0 0.0
    %6404 = vmatpush1.msra.mxu0 0.0
    %6405 = vmatprep.subr.mxu0 0.0
    %6406 = vmatpush1.msra.mxu0 0.0
    %6407 = vmatprep.subr.mxu0 0.0
    %6408 = vmatpush1.msra.mxu0 0.0
    %6409 = vmatprep.subr.mxu0 0.0
    %6410 = vmatpush1.msra.mxu0 0.0
    %6411 = vmatprep.mubr.f32.mxu0 0.0
    %6412 = vmatmul.mubr.f32.gmra.mrb[0].mxu0 %v6065
    %v6413 = vpop.f32.mrb[0].mxu0
    %v6414 = vadd.f32 %v4516, %v6413
    %v6415 = vpop.f32.mrb[0].mxu0
    %6416 = vdwg.mxu0
    %6417 = vmatprep.subr.mxu0 0.0
    %6418 = vmatpush1.msra.mxu0 %v4132
    %6419 = vmatprep.subr.mxu0 0.0
    %6420 = vmatpush1.msra.mxu0 %v4133
    %6421 = vmatprep.subr.mxu0 0.0
    %6422 = vmatpush1.msra.mxu0 %v4134
    %6423 = vmatprep.subr.mxu0 0.0
    %6424 = vmatpush1.msra.mxu0 %v4135
    %6425 = vmatprep.subr.mxu0 0.0
    %6426 = vmatpush1.msra.mxu0 0.0
    %6427 = vmatprep.subr.mxu0 0.0
    %6428 = vmatpush1.msra.mxu0 0.0
    %6429 = vmatprep.subr.mxu0 0.0
    %6430 = vmatpush1.msra.mxu0 0.0
    %6431 = vmatprep.subr.mxu0 0.0
    %6432 = vmatpush1.msra.mxu0 0.0
    %6433 = vmatprep.subr.mxu0 0.0
    %6434 = vmatpush1.msra.mxu0 0.0
    %6435 = vmatprep.subr.mxu0 0.0
    %6436 = vmatpush1.msra.mxu0 0.0
    %6437 = vmatprep.subr.mxu0 0.0
    %6438 = vmatpush1.msra.mxu0 0.0
    %6439 = vmatprep.subr.mxu0 0.0
    %6440 = vmatpush1.msra.mxu0 0.0
    %6441 = vmatprep.subr.mxu0 0.0
    %6442 = vmatpush1.msra.mxu0 0.0
    %6443 = vmatprep.subr.mxu0 0.0
    %6444 = vmatpush1.msra.mxu0 0.0
    %6445 = vmatprep.subr.mxu0 0.0
    %6446 = vmatpush1.msra.mxu0 0.0
    %6447 = vmatprep.subr.mxu0 0.0
    %6448 = vmatpush1.msra.mxu0 0.0
    %6449 = vmatprep.subr.mxu0 0.0
    %6450 = vmatpush1.msra.mxu0 0.0
    %6451 = vmatprep.subr.mxu0 0.0
    %6452 = vmatpush1.msra.mxu0 0.0
    %6453 = vmatprep.subr.mxu0 0.0
    %6454 = vmatpush1.msra.mxu0 0.0
    %6455 = vmatprep.subr.mxu0 0.0
    %6456 = vmatpush1.msra.mxu0 0.0
    %6457 = vmatprep.subr.mxu0 0.0
    %6458 = vmatpush1.msra.mxu0 0.0
    %6459 = vmatprep.subr.mxu0 0.0
    %6460 = vmatpush1.msra.mxu0 0.0
    %6461 = vmatprep.subr.mxu0 0.0
    %6462 = vmatpush1.msra.mxu0 0.0
    %6463 = vmatprep.subr.mxu0 0.0
    %6464 = vmatpush1.msra.mxu0 0.0
    %6465 = vmatprep.subr.mxu0 0.0
    %6466 = vmatpush1.msra.mxu0 0.0
    %6467 = vmatprep.subr.mxu0 0.0
    %6468 = vmatpush1.msra.mxu0 0.0
    %6469 = vmatprep.subr.mxu0 0.0
    %6470 = vmatpush1.msra.mxu0 0.0
    %6471 = vmatprep.subr.mxu0 0.0
    %6472 = vmatpush1.msra.mxu0 0.0
    %6473 = vmatprep.subr.mxu0 0.0
    %6474 = vmatpush1.msra.mxu0 0.0
    %6475 = vmatprep.subr.mxu0 0.0
    %6476 = vmatpush1.msra.mxu0 0.0
    %6477 = vmatprep.subr.mxu0 0.0
    %6478 = vmatpush1.msra.mxu0 0.0
    %6479 = vmatprep.subr.mxu0 0.0
    %6480 = vmatpush1.msra.mxu0 0.0
    %6481 = vmatprep.mubr.f32.mxu0 0.0
    %6482 = vmatmul.mubr.f32.gmra.mrb[0].mxu0 %v6065
    %v6483 = vpop.f32.mrb[0].mxu0
    %v6484 = vadd.f32 %v4520, %v6483
    %v6485 = vpop.f32.mrb[0].mxu0
    %6486 = vdwg.mxu0
    %6487 = vmatprep.subr.mxu0 0.0
    %6488 = vmatpush1.msra.mxu0 %v4136
    %6489 = vmatprep.subr.mxu0 0.0
    %6490 = vmatpush1.msra.mxu0 %v4137
    %6491 = vmatprep.subr.mxu0 0.0
    %6492 = vmatpush1.msra.mxu0 %v4138
    %6493 = vmatprep.subr.mxu0 0.0
    %6494 = vmatpush1.msra.mxu0 %v4139
    %6495 = vmatprep.subr.mxu0 0.0
    %6496 = vmatpush1.msra.mxu0 0.0
    %6497 = vmatprep.subr.mxu0 0.0
    %6498 = vmatpush1.msra.mxu0 0.0
    %6499 = vmatprep.subr.mxu0 0.0
    %6500 = vmatpush1.msra.mxu0 0.0
    %6501 = vmatprep.subr.mxu0 0.0
    %6502 = vmatpush1.msra.mxu0 0.0
    %6503 = vmatprep.subr.mxu0 0.0
    %6504 = vmatpush1.msra.mxu0 0.0
    %6505 = vmatprep.subr.mxu0 0.0
    %6506 = vmatpush1.msra.mxu0 0.0
    %6507 = vmatprep.subr.mxu0 0.0
    %6508 = vmatpush1.msra.mxu0 0.0
    %6509 = vmatprep.subr.mxu0 0.0
    %6510 = vmatpush1.msra.mxu0 0.0
    %6511 = vmatprep.subr.mxu0 0.0
    %6512 = vmatpush1.msra.mxu0 0.0
    %6513 = vmatprep.subr.mxu0 0.0
    %6514 = vmatpush1.msra.mxu0 0.0
    %6515 = vmatprep.subr.mxu0 0.0
    %6516 = vmatpush1.msra.mxu0 0.0
    %6517 = vmatprep.subr.mxu0 0.0
    %6518 = vmatpush1.msra.mxu0 0.0
    %6519 = vmatprep.subr.mxu0 0.0
    %6520 = vmatpush1.msra.mxu0 0.0
    %6521 = vmatprep.subr.mxu0 0.0
    %6522 = vmatpush1.msra.mxu0 0.0
    %6523 = vmatprep.subr.mxu0 0.0
    %6524 = vmatpush1.msra.mxu0 0.0
    %6525 = vmatprep.subr.mxu0 0.0
    %6526 = vmatpush1.msra.mxu0 0.0
    %6527 = vmatprep.subr.mxu0 0.0
    %6528 = vmatpush1.msra.mxu0 0.0
    %6529 = vmatprep.subr.mxu0 0.0
    %6530 = vmatpush1.msra.mxu0 0.0
    %6531 = vmatprep.subr.mxu0 0.0
    %6532 = vmatpush1.msra.mxu0 0.0
    %6533 = vmatprep.subr.mxu0 0.0
    %6534 = vmatpush1.msra.mxu0 0.0
    %6535 = vmatprep.subr.mxu0 0.0
    %6536 = vmatpush1.msra.mxu0 0.0
    %6537 = vmatprep.subr.mxu0 0.0
    %6538 = vmatpush1.msra.mxu0 0.0
    %6539 = vmatprep.subr.mxu0 0.0
    %6540 = vmatpush1.msra.mxu0 0.0
    %6541 = vmatprep.subr.mxu0 0.0
    %6542 = vmatpush1.msra.mxu0 0.0
    %6543 = vmatprep.subr.mxu0 0.0
    %6544 = vmatpush1.msra.mxu0 0.0
    %6545 = vmatprep.subr.mxu0 0.0
    %6546 = vmatpush1.msra.mxu0 0.0
    %6547 = vmatprep.subr.mxu0 0.0
    %6548 = vmatpush1.msra.mxu0 0.0
    %6549 = vmatprep.subr.mxu0 0.0
    %6550 = vmatpush1.msra.mxu0 0.0
    %6551 = vmatprep.mubr.f32.mxu0 0.0
    %6552 = vmatmul.mubr.f32.gmra.mrb[0].mxu0 %v6065
    %v6553 = vpop.f32.mrb[0].mxu0
    %v6554 = vadd.f32 %v4524, %v6553
    %v6555 = vpop.f32.mrb[0].mxu0
    %6556 = vdwg.mxu0
    %6557 = vmatprep.subr.mxu0 0.0
    %6558 = vmatpush1.msra.mxu0 %v4140
    %6559 = vmatprep.subr.mxu0 0.0
    %6560 = vmatpush1.msra.mxu0 %v4141
    %6561 = vmatprep.subr.mxu0 0.0
    %6562 = vmatpush1.msra.mxu0 %v4142
    %6563 = vmatprep.subr.mxu0 0.0
    %6564 = vmatpush1.msra.mxu0 %v4143
    %6565 = vmatprep.subr.mxu0 0.0
    %6566 = vmatpush1.msra.mxu0 0.0
    %6567 = vmatprep.subr.mxu0 0.0
    %6568 = vmatpush1.msra.mxu0 0.0
    %6569 = vmatprep.subr.mxu0 0.0
    %6570 = vmatpush1.msra.mxu0 0.0
    %6571 = vmatprep.subr.mxu0 0.0
    %6572 = vmatpush1.msra.mxu0 0.0
    %6573 = vmatprep.subr.mxu0 0.0
    %6574 = vmatpush1.msra.mxu0 0.0
    %6575 = vmatprep.subr.mxu0 0.0
    %6576 = vmatpush1.msra.mxu0 0.0
    %6577 = vmatprep.subr.mxu0 0.0
    %6578 = vmatpush1.msra.mxu0 0.0
    %6579 = vmatprep.subr.mxu0 0.0
    %6580 = vmatpush1.msra.mxu0 0.0
    %6581 = vmatprep.subr.mxu0 0.0
    %6582 = vmatpush1.msra.mxu0 0.0
    %6583 = vmatprep.subr.mxu0 0.0
    %6584 = vmatpush1.msra.mxu0 0.0
    %6585 = vmatprep.subr.mxu0 0.0
    %6586 = vmatpush1.msra.mxu0 0.0
    %6587 = vmatprep.subr.mxu0 0.0
    %6588 = vmatpush1.msra.mxu0 0.0
    %6589 = vmatprep.subr.mxu0 0.0
    %6590 = vmatpush1.msra.mxu0 0.0
    %6591 = vmatprep.subr.mxu0 0.0
    %6592 = vmatpush1.msra.mxu0 0.0
    %6593 = vmatprep.subr.mxu0 0.0
    %6594 = vmatpush1.msra.mxu0 0.0
    %6595 = vmatprep.subr.mxu0 0.0
    %6596 = vmatpush1.msra.mxu0 0.0
    %6597 = vmatprep.subr.mxu0 0.0
    %6598 = vmatpush1.msra.mxu0 0.0
    %6599 = vmatprep.subr.mxu0 0.0
    %6600 = vmatpush1.msra.mxu0 0.0
    %6601 = vmatprep.subr.mxu0 0.0
    %6602 = vmatpush1.msra.mxu0 0.0
    %6603 = vmatprep.subr.mxu0 0.0
    %6604 = vmatpush1.msra.mxu0 0.0
    %6605 = vmatprep.subr.mxu0 0.0
    %6606 = vmatpush1.msra.mxu0 0.0
    %6607 = vmatprep.subr.mxu0 0.0
    %6608 = vmatpush1.msra.mxu0 0.0
    %6609 = vmatprep.subr.mxu0 0.0
    %6610 = vmatpush1.msra.mxu0 0.0
    %6611 = vmatprep.subr.mxu0 0.0
    %6612 = vmatpush1.msra.mxu0 0.0
    %6613 = vmatprep.subr.mxu0 0.0
    %6614 = vmatpush1.msra.mxu0 0.0
    %6615 = vmatprep.subr.mxu0 0.0
    %6616 = vmatpush1.msra.mxu0 0.0
    %6617 = vmatprep.subr.mxu0 0.0
    %6618 = vmatpush1.msra.mxu0 0.0
    %6619 = vmatprep.subr.mxu0 0.0
    %6620 = vmatpush1.msra.mxu0 0.0
    %6621 = vmatprep.mubr.f32.mxu0 0.0
    %6622 = vmatmul.mubr.f32.gmra.mrb[0].mxu0 %v6065
    %v6623 = vpop.f32.mrb[0].mxu0
    %v6624 = vadd.f32 %v4528, %v6623
    %v6625 = vpop.f32.mrb[0].mxu0
    %6626 = vdwg.mxu0
    %6627 = vmatprep.subr.mxu0 0.0
    %6628 = vmatpush1.msra.mxu0 %v4145
    %6629 = vmatprep.subr.mxu0 0.0
    %6630 = vmatpush1.msra.mxu0 %v4146
    %6631 = vmatprep.subr.mxu0 0.0
    %6632 = vmatpush1.msra.mxu0 %v4147
    %6633 = vmatprep.subr.mxu0 0.0
    %6634 = vmatpush1.msra.mxu0 %v4148
    %6635 = vmatprep.subr.mxu0 0.0
    %6636 = vmatpush1.msra.mxu0 0.0
    %6637 = vmatprep.subr.mxu0 0.0
    %6638 = vmatpush1.msra.mxu0 0.0
    %6639 = vmatprep.subr.mxu0 0.0
    %6640 = vmatpush1.msra.mxu0 0.0
    %6641 = vmatprep.subr.mxu0 0.0
    %6642 = vmatpush1.msra.mxu0 0.0
    %6643 = vmatprep.subr.mxu0 0.0
    %6644 = vmatpush1.msra.mxu0 0.0
    %6645 = vmatprep.subr.mxu0 0.0
    %6646 = vmatpush1.msra.mxu0 0.0
    %6647 = vmatprep.subr.mxu0 0.0
    %6648 = vmatpush1.msra.mxu0 0.0
    %6649 = vmatprep.subr.mxu0 0.0
    %6650 = vmatpush1.msra.mxu0 0.0
    %6651 = vmatprep.subr.mxu0 0.0
    %6652 = vmatpush1.msra.mxu0 0.0
    %6653 = vmatprep.subr.mxu0 0.0
    %6654 = vmatpush1.msra.mxu0 0.0
    %6655 = vmatprep.subr.mxu0 0.0
    %6656 = vmatpush1.msra.mxu0 0.0
    %6657 = vmatprep.subr.mxu0 0.0
    %6658 = vmatpush1.msra.mxu0 0.0
    %6659 = vmatprep.subr.mxu0 0.0
    %6660 = vmatpush1.msra.mxu0 0.0
    %6661 = vmatprep.subr.mxu0 0.0
    %6662 = vmatpush1.msra.mxu0 0.0
    %6663 = vmatprep.subr.mxu0 0.0
    %6664 = vmatpush1.msra.mxu0 0.0
    %6665 = vmatprep.subr.mxu0 0.0
    %6666 = vmatpush1.msra.mxu0 0.0
    %6667 = vmatprep.subr.mxu0 0.0
    %6668 = vmatpush1.msra.mxu0 0.0
    %6669 = vmatprep.subr.mxu0 0.0
    %6670 = vmatpush1.msra.mxu0 0.0
    %6671 = vmatprep.subr.mxu0 0.0
    %6672 = vmatpush1.msra.mxu0 0.0
    %6673 = vmatprep.subr.mxu0 0.0
    %6674 = vmatpush1.msra.mxu0 0.0
    %6675 = vmatprep.subr.mxu0 0.0
    %6676 = vmatpush1.msra.mxu0 0.0
    %6677 = vmatprep.subr.mxu0 0.0
    %6678 = vmatpush1.msra.mxu0 0.0
    %6679 = vmatprep.subr.mxu0 0.0
    %6680 = vmatpush1.msra.mxu0 0.0
    %6681 = vmatprep.subr.mxu0 0.0
    %6682 = vmatpush1.msra.mxu0 0.0
    %6683 = vmatprep.subr.mxu0 0.0
    %6684 = vmatpush1.msra.mxu0 0.0
    %6685 = vmatprep.subr.mxu0 0.0
    %6686 = vmatpush1.msra.mxu0 0.0
    %6687 = vmatprep.subr.mxu0 0.0
    %6688 = vmatpush1.msra.mxu0 0.0
    %6689 = vmatprep.subr.mxu0 0.0
    %6690 = vmatpush1.msra.mxu0 0.0
    %6691 = vmatprep.mubr.f32.mxu0 0.0
    %6692 = vmatmul.mubr.f32.gmra.mrb[0].mxu0 %v6065
    %v6693 = vpop.f32.mrb[0].mxu0
    %v6694 = vadd.f32 %v4820, %v6693
    %v6695 = vpop.f32.mrb[0].mxu0
    %6696 = vdwg.mxu0
    %6697 = vmatprep.subr.mxu0 0.0
    %6698 = vmatpush1.msra.mxu0 %v4149
    %6699 = vmatprep.subr.mxu0 0.0
    %6700 = vmatpush1.msra.mxu0 %v4150
    %6701 = vmatprep.subr.mxu0 0.0
    %6702 = vmatpush1.msra.mxu0 %v4151
    %6703 = vmatprep.subr.mxu0 0.0
    %6704 = vmatpush1.msra.mxu0 %v4152
    %6705 = vmatprep.subr.mxu0 0.0
    %6706 = vmatpush1.msra.mxu0 0.0
    %6707 = vmatprep.subr.mxu0 0.0
    %6708 = vmatpush1.msra.mxu0 0.0
    %6709 = vmatprep.subr.mxu0 0.0
    %6710 = vmatpush1.msra.mxu0 0.0
    %6711 = vmatprep.subr.mxu0 0.0
    %6712 = vmatpush1.msra.mxu0 0.0
    %6713 = vmatprep.subr.mxu0 0.0
    %6714 = vmatpush1.msra.mxu0 0.0
    %6715 = vmatprep.subr.mxu0 0.0
    %6716 = vmatpush1.msra.mxu0 0.0
    %6717 = vmatprep.subr.mxu0 0.0
    %6718 = vmatpush1.msra.mxu0 0.0
    %6719 = vmatprep.subr.mxu0 0.0
    %6720 = vmatpush1.msra.mxu0 0.0
    %6721 = vmatprep.subr.mxu0 0.0
    %6722 = vmatpush1.msra.mxu0 0.0
    %6723 = vmatprep.subr.mxu0 0.0
    %6724 = vmatpush1.msra.mxu0 0.0
    %6725 = vmatprep.subr.mxu0 0.0
    %6726 = vmatpush1.msra.mxu0 0.0
    %6727 = vmatprep.subr.mxu0 0.0
    %6728 = vmatpush1.msra.mxu0 0.0
    %6729 = vmatprep.subr.mxu0 0.0
    %6730 = vmatpush1.msra.mxu0 0.0
    %6731 = vmatprep.subr.mxu0 0.0
    %6732 = vmatpush1.msra.mxu0 0.0
    %6733 = vmatprep.subr.mxu0 0.0
    %6734 = vmatpush1.msra.mxu0 0.0
    %6735 = vmatprep.subr.mxu0 0.0
    %6736 = vmatpush1.msra.mxu0 0.0
    %6737 = vmatprep.subr.mxu0 0.0
    %6738 = vmatpush1.msra.mxu0 0.0
    %6739 = vmatprep.subr.mxu0 0.0
    %6740 = vmatpush1.msra.mxu0 0.0
    %6741 = vmatprep.subr.mxu0 0.0
    %6742 = vmatpush1.msra.mxu0 0.0
    %6743 = vmatprep.subr.mxu0 0.0
    %6744 = vmatpush1.msra.mxu0 0.0
    %6745 = vmatprep.subr.mxu0 0.0
    %6746 = vmatpush1.msra.mxu0 0.0
    %6747 = vmatprep.subr.mxu0 0.0
    %6748 = vmatpush1.msra.mxu0 0.0
    %6749 = vmatprep.subr.mxu0 0.0
    %6750 = vmatpush1.msra.mxu0 0.0
    %6751 = vmatprep.subr.mxu0 0.0
    %6752 = vmatpush1.msra.mxu0 0.0
    %6753 = vmatprep.subr.mxu0 0.0
    %6754 = vmatpush1.msra.mxu0 0.0
    %6755 = vmatprep.subr.mxu0 0.0
    %6756 = vmatpush1.msra.mxu0 0.0
    %6757 = vmatprep.subr.mxu0 0.0
    %6758 = vmatpush1.msra.mxu0 0.0
    %6759 = vmatprep.subr.mxu0 0.0
    %6760 = vmatpush1.msra.mxu0 0.0
    %6761 = vmatprep.mubr.f32.mxu0 0.0
    %6762 = vmatmul.mubr.f32.gmra.mrb[0].mxu0 %v6065
    %v6763 = vpop.f32.mrb[0].mxu0
    %v6764 = vadd.f32 %v4824, %v6763
    %v6765 = vpop.f32.mrb[0].mxu0
    %6766 = vdwg.mxu0
    %6767 = vmatprep.subr.mxu0 0.0
    %6768 = vmatpush1.msra.mxu0 %v4153
    %6769 = vmatprep.subr.mxu0 0.0
    %6770 = vmatpush1.msra.mxu0 %v4154
    %6771 = vmatprep.subr.mxu0 0.0
    %6772 = vmatpush1.msra.mxu0 %v4155
    %6773 = vmatprep.subr.mxu0 0.0
    %6774 = vmatpush1.msra.mxu0 %v4156
    %6775 = vmatprep.subr.mxu0 0.0
    %6776 = vmatpush1.msra.mxu0 0.0
    %6777 = vmatprep.subr.mxu0 0.0
    %6778 = vmatpush1.msra.mxu0 0.0
    %6779 = vmatprep.subr.mxu0 0.0
    %6780 = vmatpush1.msra.mxu0 0.0
    %6781 = vmatprep.subr.mxu0 0.0
    %6782 = vmatpush1.msra.mxu0 0.0
    %6783 = vmatprep.subr.mxu0 0.0
    %6784 = vmatpush1.msra.mxu0 0.0
    %6785 = vmatprep.subr.mxu0 0.0
    %6786 = vmatpush1.msra.mxu0 0.0
    %6787 = vmatprep.subr.mxu0 0.0
    %6788 = vmatpush1.msra.mxu0 0.0
    %6789 = vmatprep.subr.mxu0 0.0
    %6790 = vmatpush1.msra.mxu0 0.0
    %6791 = vmatprep.subr.mxu0 0.0
    %6792 = vmatpush1.msra.mxu0 0.0
    %6793 = vmatprep.subr.mxu0 0.0
    %6794 = vmatpush1.msra.mxu0 0.0
    %6795 = vmatprep.subr.mxu0 0.0
    %6796 = vmatpush1.msra.mxu0 0.0
    %6797 = vmatprep.subr.mxu0 0.0
    %6798 = vmatpush1.msra.mxu0 0.0
    %6799 = vmatprep.subr.mxu0 0.0
    %6800 = vmatpush1.msra.mxu0 0.0
    %6801 = vmatprep.subr.mxu0 0.0
    %6802 = vmatpush1.msra.mxu0 0.0
    %6803 = vmatprep.subr.mxu0 0.0
    %6804 = vmatpush1.msra.mxu0 0.0
    %6805 = vmatprep.subr.mxu0 0.0
    %6806 = vmatpush1.msra.mxu0 0.0
    %6807 = vmatprep.subr.mxu0 0.0
    %6808 = vmatpush1.msra.mxu0 0.0
    %6809 = vmatprep.subr.mxu0 0.0
    %6810 = vmatpush1.msra.mxu0 0.0
    %6811 = vmatprep.subr.mxu0 0.0
    %6812 = vmatpush1.msra.mxu0 0.0
    %6813 = vmatprep.subr.mxu0 0.0
    %6814 = vmatpush1.msra.mxu0 0.0
    %6815 = vmatprep.subr.mxu0 0.0
    %6816 = vmatpush1.msra.mxu0 0.0
    %6817 = vmatprep.subr.mxu0 0.0
    %6818 = vmatpush1.msra.mxu0 0.0
    %6819 = vmatprep.subr.mxu0 0.0
    %6820 = vmatpush1.msra.mxu0 0.0
    %6821 = vmatprep.subr.mxu0 0.0
    %6822 = vmatpush1.msra.mxu0 0.0
    %6823 = vmatprep.subr.mxu0 0.0
    %6824 = vmatpush1.msra.mxu0 0.0
    %6825 = vmatprep.subr.mxu0 0.0
    %6826 = vmatpush1.msra.mxu0 0.0
    %6827 = vmatprep.subr.mxu0 0.0
    %6828 = vmatpush1.msra.mxu0 0.0
    %6829 = vmatprep.subr.mxu0 0.0
    %6830 = vmatpush1.msra.mxu0 0.0
    %6831 = vmatprep.mubr.f32.mxu0 0.0
    %6832 = vmatmul.mubr.f32.gmra.mrb[0].mxu0 %v6065
    %v6833 = vpop.f32.mrb[0].mxu0
    %v6834 = vadd.f32 %v4828, %v6833
    %v6835 = vpop.f32.mrb[0].mxu0
    %6836 = vdwg.mxu0
    %6837 = vmatprep.subr.mxu0 0.0
    %6838 = vmatpush1.msra.mxu0 %v4157
    %6839 = vmatprep.subr.mxu0 0.0
    %6840 = vmatpush1.msra.mxu0 %v4158
    %6841 = vmatprep.subr.mxu0 0.0
    %6842 = vmatpush1.msra.mxu0 %v4159
    %6843 = vmatprep.subr.mxu0 0.0
    %6844 = vmatpush1.msra.mxu0 %v4160
    %6845 = vmatprep.subr.mxu0 0.0
    %6846 = vmatpush1.msra.mxu0 0.0
    %6847 = vmatprep.subr.mxu0 0.0
    %6848 = vmatpush1.msra.mxu0 0.0
    %6849 = vmatprep.subr.mxu0 0.0
    %6850 = vmatpush1.msra.mxu0 0.0
    %6851 = vmatprep.subr.mxu0 0.0
    %6852 = vmatpush1.msra.mxu0 0.0
    %6853 = vmatprep.subr.mxu0 0.0
    %6854 = vmatpush1.msra.mxu0 0.0
    %6855 = vmatprep.subr.mxu0 0.0
    %6856 = vmatpush1.msra.mxu0 0.0
    %6857 = vmatprep.subr.mxu0 0.0
    %6858 = vmatpush1.msra.mxu0 0.0
    %6859 = vmatprep.subr.mxu0 0.0
    %6860 = vmatpush1.msra.mxu0 0.0
    %6861 = vmatprep.subr.mxu0 0.0
    %6862 = vmatpush1.msra.mxu0 0.0
    %6863 = vmatprep.subr.mxu0 0.0
    %6864 = vmatpush1.msra.mxu0 0.0
    %6865 = vmatprep.subr.mxu0 0.0
    %6866 = vmatpush1.msra.mxu0 0.0
    %6867 = vmatprep.subr.mxu0 0.0
    %6868 = vmatpush1.msra.mxu0 0.0
    %6869 = vmatprep.subr.mxu0 0.0
    %6870 = vmatpush1.msra.mxu0 0.0
    %6871 = vmatprep.subr.mxu0 0.0
    %6872 = vmatpush1.msra.mxu0 0.0
    %6873 = vmatprep.subr.mxu0 0.0
    %6874 = vmatpush1.msra.mxu0 0.0
    %6875 = vmatprep.subr.mxu0 0.0
    %6876 = vmatpush1.msra.mxu0 0.0
    %6877 = vmatprep.subr.mxu0 0.0
    %6878 = vmatpush1.msra.mxu0 0.0
    %6879 = vmatprep.subr.mxu0 0.0
    %6880 = vmatpush1.msra.mxu0 0.0
    %6881 = vmatprep.subr.mxu0 0.0
    %6882 = vmatpush1.msra.mxu0 0.0
    %6883 = vmatprep.subr.mxu0 0.0
    %6884 = vmatpush1.msra.mxu0 0.0
    %6885 = vmatprep.subr.mxu0 0.0
    %6886 = vmatpush1.msra.mxu0 0.0
    %6887 = vmatprep.subr.mxu0 0.0
    %6888 = vmatpush1.msra.mxu0 0.0
    %6889 = vmatprep.subr.mxu0 0.0
    %6890 = vmatpush1.msra.mxu0 0.0
    %6891 = vmatprep.subr.mxu0 0.0
    %6892 = vmatpush1.msra.mxu0 0.0
    %6893 = vmatprep.subr.mxu0 0.0
    %6894 = vmatpush1.msra.mxu0 0.0
    %6895 = vmatprep.subr.mxu0 0.0
    %6896 = vmatpush1.msra.mxu0 0.0
    %6897 = vmatprep.subr.mxu0 0.0
    %6898 = vmatpush1.msra.mxu0 0.0
    %6899 = vmatprep.subr.mxu0 0.0
    %6900 = vmatpush1.msra.mxu0 0.0
    %6901 = vmatprep.mubr.f32.mxu0 0.0
    %6902 = vmatmul.mubr.f32.gmra.mrb[0].mxu0 %v6065
    %v6903 = vpop.f32.mrb[0].mxu0
    %v6904 = vadd.f32 %v4832, %v6903
    %v6905 = vpop.f32.mrb[0].mxu0
    %6906 = vdwg.mxu0
    %v6908 = vsel %vm1097, %v6134, 0
    %v6911 = vsel %vm1097, %v6414, 0
    %6913 = vmatprep.subr.mxu0 0.0
    %6914 = vmatpush1.xpose.msra.mxu0 %v6911
    %6915 = vmatprep.subr.mxu0 0.0
    %6916 = vmatpush1.xpose.msra.mxu0 0.0
    %6917 = vmatprep.subr.mxu0 0.0
    %6918 = vmatpush1.xpose.msra.mxu0 0.0
    %6919 = vmatprep.subr.mxu0 0.0
    %6920 = vmatpush1.xpose.msra.mxu0 0.0
    %6921 = vmatprep.subr.mxu0 0.0
    %6922 = vmatpush1.xpose.msra.mxu0 0.0
    %6923 = vmatprep.subr.mxu0 0.0
    %6924 = vmatpush1.xpose.msra.mxu0 0.0
    %6925 = vmatprep.subr.mxu0 0.0
    %6926 = vmatpush1.xpose.msra.mxu0 0.0
    %6927 = vmatprep.subr.mxu0 0.0
    %6928 = vmatpush1.xpose.msra.mxu0 0.0
    %6929 = vmatprep.subr.mxu0 0.0
    %6930 = vmatpush1.xpose.msra.mxu0 0.0
    %6931 = vmatprep.subr.mxu0 0.0
    %6932 = vmatpush1.xpose.msra.mxu0 0.0
    %6933 = vmatprep.subr.mxu0 0.0
    %6934 = vmatpush1.xpose.msra.mxu0 0.0
    %6935 = vmatprep.subr.mxu0 0.0
    %6936 = vmatpush1.xpose.msra.mxu0 0.0
    %6937 = vmatprep.subr.mxu0 0.0
    %6938 = vmatpush1.xpose.msra.mxu0 0.0
    %6939 = vmatprep.subr.mxu0 0.0
    %6940 = vmatpush1.xpose.msra.mxu0 0.0
    %6941 = vmatprep.subr.mxu0 0.0
    %6942 = vmatpush1.xpose.msra.mxu0 0.0
    %6943 = vmatprep.subr.mxu0 0.0
    %6944 = vmatpush1.xpose.msra.mxu0 0.0
    %6945 = vmatprep.subr.mxu0 0.0
    %6946 = vmatpush1.xpose.msra.mxu0 0.0
    %6947 = vmatprep.subr.mxu0 0.0
    %6948 = vmatpush1.xpose.msra.mxu0 0.0
    %6949 = vmatprep.subr.mxu0 0.0
    %6950 = vmatpush1.xpose.msra.mxu0 0.0
    %6951 = vmatprep.subr.mxu0 0.0
    %6952 = vmatpush1.xpose.msra.mxu0 0.0
    %6953 = vmatprep.subr.mxu0 0.0
    %6954 = vmatpush1.xpose.msra.mxu0 0.0
    %6955 = vmatprep.subr.mxu0 0.0
    %6956 = vmatpush1.xpose.msra.mxu0 0.0
    %6957 = vmatprep.subr.mxu0 0.0
    %6958 = vmatpush1.xpose.msra.mxu0 0.0
    %6959 = vmatprep.subr.mxu0 0.0
    %6960 = vmatpush1.xpose.msra.mxu0 0.0
    %6961 = vmatprep.subr.mxu0 0.0
    %6962 = vmatpush1.xpose.msra.mxu0 0.0
    %6963 = vmatprep.subr.mxu0 0.0
    %6964 = vmatpush1.xpose.msra.mxu0 0.0
    %6965 = vmatprep.subr.mxu0 0.0
    %6966 = vmatpush1.xpose.msra.mxu0 0.0
    %6967 = vmatprep.subr.mxu0 0.0
    %6968 = vmatpush1.xpose.msra.mxu0 0.0
    %6969 = vmatprep.subr.mxu0 0.0
    %6970 = vmatpush1.xpose.msra.mxu0 0.0
    %6971 = vmatprep.subr.mxu0 0.0
    %6972 = vmatpush1.xpose.msra.mxu0 0.0
    %6973 = vmatprep.subr.mxu0 0.0
    %6974 = vmatpush1.xpose.msra.mxu0 0.0
    %6975 = vmatprep.subr.mxu0 0.0
    %6976 = vmatpush1.xpose.msra.mxu0 0.0
    %6977 = vmatprep.mubr.f32.mxu0 0.0
    %6978 = vmatmul.mubr.f32.gmra.mrb[0].mxu0 %v6908
    %v6979 = vpop.f32.mrb[0].mxu0
    %v6980 = vadd.f32 0.0, %v6979
    %v6981 = vpop.f32.mrb[0].mxu0
    %6982 = vdwg.mxu0
    %v6984 = vsel %vm1097, %v6204, 0
    %v6987 = vsel %vm1097, %v6484, 0
    %6989 = vmatprep.subr.mxu0 0.0
    %6990 = vmatpush1.xpose.msra.mxu0 %v6987
    %6991 = vmatprep.subr.mxu0 0.0
    %6992 = vmatpush1.xpose.msra.mxu0 0.0
    %6993 = vmatprep.subr.mxu0 0.0
    %6994 = vmatpush1.xpose.msra.mxu0 0.0
    %6995 = vmatprep.subr.mxu0 0.0
    %6996 = vmatpush1.xpose.msra.mxu0 0.0
    %6997 = vmatprep.subr.mxu0 0.0
    %6998 = vmatpush1.xpose.msra.mxu0 0.0
    %6999 = vmatprep.subr.mxu0 0.0
    %7000 = vmatpush1.xpose.msra.mxu0 0.0
    %7001 = vmatprep.subr.mxu0 0.0
    %7002 = vmatpush1.xpose.msra.mxu0 0.0
    %7003 = vmatprep.subr.mxu0 0.0
    %7004 = vmatpush1.xpose.msra.mxu0 0.0
    %7005 = vmatprep.subr.mxu0 0.0
    %7006 = vmatpush1.xpose.msra.mxu0 0.0
    %7007 = vmatprep.subr.mxu0 0.0
    %7008 = vmatpush1.xpose.msra.mxu0 0.0
    %7009 = vmatprep.subr.mxu0 0.0
    %7010 = vmatpush1.xpose.msra.mxu0 0.0
    %7011 = vmatprep.subr.mxu0 0.0
    %7012 = vmatpush1.xpose.msra.mxu0 0.0
    %7013 = vmatprep.subr.mxu0 0.0
    %7014 = vmatpush1.xpose.msra.mxu0 0.0
    %7015 = vmatprep.subr.mxu0 0.0
    %7016 = vmatpush1.xpose.msra.mxu0 0.0
    %7017 = vmatprep.subr.mxu0 0.0
    %7018 = vmatpush1.xpose.msra.mxu0 0.0
    %7019 = vmatprep.subr.mxu0 0.0
    %7020 = vmatpush1.xpose.msra.mxu0 0.0
    %7021 = vmatprep.subr.mxu0 0.0
    %7022 = vmatpush1.xpose.msra.mxu0 0.0
    %7023 = vmatprep.subr.mxu0 0.0
    %7024 = vmatpush1.xpose.msra.mxu0 0.0
    %7025 = vmatprep.subr.mxu0 0.0
    %7026 = vmatpush1.xpose.msra.mxu0 0.0
    %7027 = vmatprep.subr.mxu0 0.0
    %7028 = vmatpush1.xpose.msra.mxu0 0.0
    %7029 = vmatprep.subr.mxu0 0.0
    %7030 = vmatpush1.xpose.msra.mxu0 0.0
    %7031 = vmatprep.subr.mxu0 0.0
    %7032 = vmatpush1.xpose.msra.mxu0 0.0
    %7033 = vmatprep.subr.mxu0 0.0
    %7034 = vmatpush1.xpose.msra.mxu0 0.0
    %7035 = vmatprep.subr.mxu0 0.0
    %7036 = vmatpush1.xpose.msra.mxu0 0.0
    %7037 = vmatprep.subr.mxu0 0.0
    %7038 = vmatpush1.xpose.msra.mxu0 0.0
    %7039 = vmatprep.subr.mxu0 0.0
    %7040 = vmatpush1.xpose.msra.mxu0 0.0
    %7041 = vmatprep.subr.mxu0 0.0
    %7042 = vmatpush1.xpose.msra.mxu0 0.0
    %7043 = vmatprep.subr.mxu0 0.0
    %7044 = vmatpush1.xpose.msra.mxu0 0.0
    %7045 = vmatprep.subr.mxu0 0.0
    %7046 = vmatpush1.xpose.msra.mxu0 0.0
    %7047 = vmatprep.subr.mxu0 0.0
    %7048 = vmatpush1.xpose.msra.mxu0 0.0
    %7049 = vmatprep.subr.mxu0 0.0
    %7050 = vmatpush1.xpose.msra.mxu0 0.0
    %7051 = vmatprep.subr.mxu0 0.0
    %7052 = vmatpush1.xpose.msra.mxu0 0.0
    %7053 = vmatprep.mubr.f32.mxu0 0.0
    %7054 = vmatmul.mubr.f32.gmra.mrb[0].mxu0 %v6984
    %v7055 = vpop.f32.mrb[0].mxu0
    %v7056 = vadd.f32 0.0, %v7055
    %v7057 = vpop.f32.mrb[0].mxu0
    %7058 = vdwg.mxu0
    %v7060 = vsel %vm1097, %v6274, 0
    %v7063 = vsel %vm1097, %v6554, 0
    %7065 = vmatprep.subr.mxu0 0.0
    %7066 = vmatpush1.xpose.msra.mxu0 %v7063
    %7067 = vmatprep.subr.mxu0 0.0
    %7068 = vmatpush1.xpose.msra.mxu0 0.0
    %7069 = vmatprep.subr.mxu0 0.0
    %7070 = vmatpush1.xpose.msra.mxu0 0.0
    %7071 = vmatprep.subr.mxu0 0.0
    %7072 = vmatpush1.xpose.msra.mxu0 0.0
    %7073 = vmatprep.subr.mxu0 0.0
    %7074 = vmatpush1.xpose.msra.mxu0 0.0
    %7075 = vmatprep.subr.mxu0 0.0
    %7076 = vmatpush1.xpose.msra.mxu0 0.0
    %7077 = vmatprep.subr.mxu0 0.0
    %7078 = vmatpush1.xpose.msra.mxu0 0.0
    %7079 = vmatprep.subr.mxu0 0.0
    %7080 = vmatpush1.xpose.msra.mxu0 0.0
    %7081 = vmatprep.subr.mxu0 0.0
    %7082 = vmatpush1.xpose.msra.mxu0 0.0
    %7083 = vmatprep.subr.mxu0 0.0
    %7084 = vmatpush1.xpose.msra.mxu0 0.0
    %7085 = vmatprep.subr.mxu0 0.0
    %7086 = vmatpush1.xpose.msra.mxu0 0.0
    %7087 = vmatprep.subr.mxu0 0.0
    %7088 = vmatpush1.xpose.msra.mxu0 0.0
    %7089 = vmatprep.subr.mxu0 0.0
    %7090 = vmatpush1.xpose.msra.mxu0 0.0
    %7091 = vmatprep.subr.mxu0 0.0
    %7092 = vmatpush1.xpose.msra.mxu0 0.0
    %7093 = vmatprep.subr.mxu0 0.0
    %7094 = vmatpush1.xpose.msra.mxu0 0.0
    %7095 = vmatprep.subr.mxu0 0.0
    %7096 = vmatpush1.xpose.msra.mxu0 0.0
    %7097 = vmatprep.subr.mxu0 0.0
    %7098 = vmatpush1.xpose.msra.mxu0 0.0
    %7099 = vmatprep.subr.mxu0 0.0
    %7100 = vmatpush1.xpose.msra.mxu0 0.0
    %7101 = vmatprep.subr.mxu0 0.0
    %7102 = vmatpush1.xpose.msra.mxu0 0.0
    %7103 = vmatprep.subr.mxu0 0.0
    %7104 = vmatpush1.xpose.msra.mxu0 0.0
    %7105 = vmatprep.subr.mxu0 0.0
    %7106 = vmatpush1.xpose.msra.mxu0 0.0
    %7107 = vmatprep.subr.mxu0 0.0
    %7108 = vmatpush1.xpose.msra.mxu0 0.0
    %7109 = vmatprep.subr.mxu0 0.0
    %7110 = vmatpush1.xpose.msra.mxu0 0.0
    %7111 = vmatprep.subr.mxu0 0.0
    %7112 = vmatpush1.xpose.msra.mxu0 0.0
    %7113 = vmatprep.subr.mxu0 0.0
    %7114 = vmatpush1.xpose.msra.mxu0 0.0
    %7115 = vmatprep.subr.mxu0 0.0
    %7116 = vmatpush1.xpose.msra.mxu0 0.0
    %7117 = vmatprep.subr.mxu0 0.0
    %7118 = vmatpush1.xpose.msra.mxu0 0.0
    %7119 = vmatprep.subr.mxu0 0.0
    %7120 = vmatpush1.xpose.msra.mxu0 0.0
    %7121 = vmatprep.subr.mxu0 0.0
    %7122 = vmatpush1.xpose.msra.mxu0 0.0
    %7123 = vmatprep.subr.mxu0 0.0
    %7124 = vmatpush1.xpose.msra.mxu0 0.0
    %7125 = vmatprep.subr.mxu0 0.0
    %7126 = vmatpush1.xpose.msra.mxu0 0.0
    %7127 = vmatprep.subr.mxu0 0.0
    %7128 = vmatpush1.xpose.msra.mxu0 0.0
    %7129 = vmatprep.mubr.f32.mxu0 0.0
    %7130 = vmatmul.mubr.f32.gmra.mrb[0].mxu0 %v7060
    %v7131 = vpop.f32.mrb[0].mxu0
    %v7132 = vadd.f32 0.0, %v7131
    %v7133 = vpop.f32.mrb[0].mxu0
    %7134 = vdwg.mxu0
    %v7136 = vsel %vm1097, %v6344, 0
    %v7139 = vsel %vm1097, %v6624, 0
    %7141 = vmatprep.subr.mxu0 0.0
    %7142 = vmatpush1.xpose.msra.mxu0 %v7139
    %7143 = vmatprep.subr.mxu0 0.0
    %7144 = vmatpush1.xpose.msra.mxu0 0.0
    %7145 = vmatprep.subr.mxu0 0.0
    %7146 = vmatpush1.xpose.msra.mxu0 0.0
    %7147 = vmatprep.subr.mxu0 0.0
    %7148 = vmatpush1.xpose.msra.mxu0 0.0
    %7149 = vmatprep.subr.mxu0 0.0
    %7150 = vmatpush1.xpose.msra.mxu0 0.0
    %7151 = vmatprep.subr.mxu0 0.0
    %7152 = vmatpush1.xpose.msra.mxu0 0.0
    %7153 = vmatprep.subr.mxu0 0.0
    %7154 = vmatpush1.xpose.msra.mxu0 0.0
    %7155 = vmatprep.subr.mxu0 0.0
    %7156 = vmatpush1.xpose.msra.mxu0 0.0
    %7157 = vmatprep.subr.mxu0 0.0
    %7158 = vmatpush1.xpose.msra.mxu0 0.0
    %7159 = vmatprep.subr.mxu0 0.0
    %7160 = vmatpush1.xpose.msra.mxu0 0.0
    %7161 = vmatprep.subr.mxu0 0.0
    %7162 = vmatpush1.xpose.msra.mxu0 0.0
    %7163 = vmatprep.subr.mxu0 0.0
    %7164 = vmatpush1.xpose.msra.mxu0 0.0
    %7165 = vmatprep.subr.mxu0 0.0
    %7166 = vmatpush1.xpose.msra.mxu0 0.0
    %7167 = vmatprep.subr.mxu0 0.0
    %7168 = vmatpush1.xpose.msra.mxu0 0.0
    %7169 = vmatprep.subr.mxu0 0.0
    %7170 = vmatpush1.xpose.msra.mxu0 0.0
    %7171 = vmatprep.subr.mxu0 0.0
    %7172 = vmatpush1.xpose.msra.mxu0 0.0
    %7173 = vmatprep.subr.mxu0 0.0
    %7174 = vmatpush1.xpose.msra.mxu0 0.0
    %7175 = vmatprep.subr.mxu0 0.0
    %7176 = vmatpush1.xpose.msra.mxu0 0.0
    %7177 = vmatprep.subr.mxu0 0.0
    %7178 = vmatpush1.xpose.msra.mxu0 0.0
    %7179 = vmatprep.subr.mxu0 0.0
    %7180 = vmatpush1.xpose.msra.mxu0 0.0
    %7181 = vmatprep.subr.mxu0 0.0
    %7182 = vmatpush1.xpose.msra.mxu0 0.0
    %7183 = vmatprep.subr.mxu0 0.0
    %7184 = vmatpush1.xpose.msra.mxu0 0.0
    %7185 = vmatprep.subr.mxu0 0.0
    %7186 = vmatpush1.xpose.msra.mxu0 0.0
    %7187 = vmatprep.subr.mxu0 0.0
    %7188 = vmatpush1.xpose.msra.mxu0 0.0
    %7189 = vmatprep.subr.mxu0 0.0
    %7190 = vmatpush1.xpose.msra.mxu0 0.0
    %7191 = vmatprep.subr.mxu0 0.0
    %7192 = vmatpush1.xpose.msra.mxu0 0.0
    %7193 = vmatprep.subr.mxu0 0.0
    %7194 = vmatpush1.xpose.msra.mxu0 0.0
    %7195 = vmatprep.subr.mxu0 0.0
    %7196 = vmatpush1.xpose.msra.mxu0 0.0
    %7197 = vmatprep.subr.mxu0 0.0
    %7198 = vmatpush1.xpose.msra.mxu0 0.0
    %7199 = vmatprep.subr.mxu0 0.0
    %7200 = vmatpush1.xpose.msra.mxu0 0.0
    %7201 = vmatprep.subr.mxu0 0.0
    %7202 = vmatpush1.xpose.msra.mxu0 0.0
    %7203 = vmatprep.subr.mxu0 0.0
    %7204 = vmatpush1.xpose.msra.mxu0 0.0
    %7205 = vmatprep.mubr.f32.mxu0 0.0
    %7206 = vmatmul.mubr.f32.gmra.mrb[0].mxu0 %v7136
    %v7207 = vpop.f32.mrb[0].mxu0
    %v7208 = vadd.f32 0.0, %v7207
    %v7209 = vpop.f32.mrb[0].mxu0
    %7210 = vdwg.mxu0
    %v7211 = vmul.f32 %v6980, 0.35355338
    %v7212 = vmul.f32 %v7056, 0.35355338
    %v7213 = vmul.f32 %v7132, 0.35355338
    %v7214 = vmul.f32 %v7208, 0.35355338
    %v7215 = vadd.f32 %v7211, %v3203
    %v7216 = vadd.f32 %v7212, %v3203
    %v7217 = vadd.f32 %v7213, %v3203
    %v7218 = vadd.f32 %v7214, %v3203
    %v7219 = vsel %vm1097, %v7215, -inf
    %7220 = vmax.xlane.f32.xlu0 %v7219
    %v7221 = vpop.xlane.xlu0 %7220
    %v7222 = vsel %vm1097, %v7216, -inf
    %7223 = vmax.xlane.f32.xlu0 %v7222
    %v7224 = vpop.xlane.xlu0 %7223
    %v7225 = vsel %vm1097, %v7217, -inf
    %7226 = vmax.xlane.f32.xlu0 %v7225
    %v7227 = vpop.xlane.xlu0 %7226
    %v7228 = vsel %vm1097, %v7218, -inf
    %7229 = vmax.xlane.f32.xlu0 %v7228
    %v7230 = vpop.xlane.xlu0 %7229
    %v7231 = vsub.f32 %v7215, %v7221
    %v7232 = vsub.f32 %v7216, %v7224
    %v7233 = vsub.f32 %v7217, %v7227
    %v7234 = vsub.f32 %v7218, %v7230
    %v7235 = vmul.f32 %v7231, 1.442695
    %v7236 = vpow.pop %v7235
    %v7237 = vmul.f32 %v7232, 1.442695
    %v7238 = vpow.pop %v7237
    %v7239 = vmul.f32 %v7233, 1.442695
    %v7240 = vpow.pop %v7239
    %v7241 = vmul.f32 %v7234, 1.442695
    %v7242 = vpow.pop %v7241
    %v7243 = vsel %vm1097, %v7236, 0.0
    %7244 = vadd.xlane.f32.xlu0 %v7243
    %v7245 = vpop.xlane.xlu0 %7244
    %v7246 = vsel %vm1097, %v7238, 0.0
    %7247 = vadd.xlane.f32.xlu0 %v7246
    %v7248 = vpop.xlane.xlu0 %7247
    %v7249 = vsel %vm1097, %v7240, 0.0
    %7250 = vadd.xlane.f32.xlu0 %v7249
    %v7251 = vpop.xlane.xlu0 %7250
    %v7252 = vsel %vm1097, %v7242, 0.0
    %7253 = vadd.xlane.f32.xlu0 %v7252
    %v7254 = vpop.xlane.xlu0 %7253
    %v7255 = vrcp.pop %v7245
    %v7256 = vrcp.pop %v7248
    %v7257 = vrcp.pop %v7251
    %v7258 = vrcp.pop %v7254
    %v7259 = vmul.f32 %v7236, %v7255
    %v7260 = vmul.f32 %v7238, %v7256
    %v7261 = vmul.f32 %v7240, %v7257
    %v7262 = vmul.f32 %v7242, %v7258
    %v7264 = vsel %vm1097, %v7259, 0
    %7266 = vmatprep.subr.mxu0 0.0
    %7267 = vmatpush1.msra.mxu0 %v6694
    %7268 = vmatprep.subr.mxu0 0.0
    %7269 = vmatpush1.msra.mxu0 0.0
    %7270 = vmatprep.subr.mxu0 0.0
    %7271 = vmatpush1.msra.mxu0 0.0
    %7272 = vmatprep.subr.mxu0 0.0
    %7273 = vmatpush1.msra.mxu0 0.0
    %7274 = vmatprep.subr.mxu0 0.0
    %7275 = vmatpush1.msra.mxu0 0.0
    %7276 = vmatprep.subr.mxu0 0.0
    %7277 = vmatpush1.msra.mxu0 0.0
    %7278 = vmatprep.subr.mxu0 0.0
    %7279 = vmatpush1.msra.mxu0 0.0
    %7280 = vmatprep.subr.mxu0 0.0
    %7281 = vmatpush1.msra.mxu0 0.0
    %7282 = vmatprep.subr.mxu0 0.0
    %7283 = vmatpush1.msra.mxu0 0.0
    %7284 = vmatprep.subr.mxu0 0.0
    %7285 = vmatpush1.msra.mxu0 0.0
    %7286 = vmatprep.subr.mxu0 0.0
    %7287 = vmatpush1.msra.mxu0 0.0
    %7288 = vmatprep.subr.mxu0 0.0
    %7289 = vmatpush1.msra.mxu0 0.0
    %7290 = vmatprep.subr.mxu0 0.0
    %7291 = vmatpush1.msra.mxu0 0.0
    %7292 = vmatprep.subr.mxu0 0.0
    %7293 = vmatpush1.msra.mxu0 0.0
    %7294 = vmatprep.subr.mxu0 0.0
    %7295 = vmatpush1.msra.mxu0 0.0
    %7296 = vmatprep.subr.mxu0 0.0
    %7297 = vmatpush1.msra.mxu0 0.0
    %7298 = vmatprep.subr.mxu0 0.0
    %7299 = vmatpush1.msra.mxu0 0.0
    %7300 = vmatprep.subr.mxu0 0.0
    %7301 = vmatpush1.msra.mxu0 0.0
    %7302 = vmatprep.subr.mxu0 0.0
    %7303 = vmatpush1.msra.mxu0 0.0
    %7304 = vmatprep.subr.mxu0 0.0
    %7305 = vmatpush1.msra.mxu0 0.0
    %7306 = vmatprep.subr.mxu0 0.0
    %7307 = vmatpush1.msra.mxu0 0.0
    %7308 = vmatprep.subr.mxu0 0.0
    %7309 = vmatpush1.msra.mxu0 0.0
    %7310 = vmatprep.subr.mxu0 0.0
    %7311 = vmatpush1.msra.mxu0 0.0
    %7312 = vmatprep.subr.mxu0 0.0
    %7313 = vmatpush1.msra.mxu0 0.0
    %7314 = vmatprep.subr.mxu0 0.0
    %7315 = vmatpush1.msra.mxu0 0.0
    %7316 = vmatprep.subr.mxu0 0.0
    %7317 = vmatpush1.msra.mxu0 0.0
    %7318 = vmatprep.subr.mxu0 0.0
    %7319 = vmatpush1.msra.mxu0 0.0
    %7320 = vmatprep.subr.mxu0 0.0
    %7321 = vmatpush1.msra.mxu0 0.0
    %7322 = vmatprep.subr.mxu0 0.0
    %7323 = vmatpush1.msra.mxu0 0.0
    %7324 = vmatprep.subr.mxu0 0.0
    %7325 = vmatpush1.msra.mxu0 0.0
    %7326 = vmatprep.subr.mxu0 0.0
    %7327 = vmatpush1.msra.mxu0 0.0
    %7328 = vmatprep.subr.mxu0 0.0
    %7329 = vmatpush1.msra.mxu0 0.0
    %7330 = vmatprep.mubr.f32.mxu0 0.0
    %7331 = vmatmul.mubr.f32.gmra.mrb[0].mxu0 %v7264
    %v7332 = vpop.f32.mrb[0].mxu0
    %v7333 = vadd.f32 0.0, %v7332
    %v7334 = vpop.f32.mrb[0].mxu0
    %7335 = vdwg.mxu0
    %v7337 = vsel %vm1097, %v7260, 0
    %7339 = vmatprep.subr.mxu0 0.0
    %7340 = vmatpush1.msra.mxu0 %v6764
    %7341 = vmatprep.subr.mxu0 0.0
    %7342 = vmatpush1.msra.mxu0 0.0
    %7343 = vmatprep.subr.mxu0 0.0
    %7344 = vmatpush1.msra.mxu0 0.0
    %7345 = vmatprep.subr.mxu0 0.0
    %7346 = vmatpush1.msra.mxu0 0.0
    %7347 = vmatprep.subr.mxu0 0.0
    %7348 = vmatpush1.msra.mxu0 0.0
    %7349 = vmatprep.subr.mxu0 0.0
    %7350 = vmatpush1.msra.mxu0 0.0
    %7351 = vmatprep.subr.mxu0 0.0
    %7352 = vmatpush1.msra.mxu0 0.0
    %7353 = vmatprep.subr.mxu0 0.0
    %7354 = vmatpush1.msra.mxu0 0.0
    %7355 = vmatprep.subr.mxu0 0.0
    %7356 = vmatpush1.msra.mxu0 0.0
    %7357 = vmatprep.subr.mxu0 0.0
    %7358 = vmatpush1.msra.mxu0 0.0
    %7359 = vmatprep.subr.mxu0 0.0
    %7360 = vmatpush1.msra.mxu0 0.0
    %7361 = vmatprep.subr.mxu0 0.0
    %7362 = vmatpush1.msra.mxu0 0.0
    %7363 = vmatprep.subr.mxu0 0.0
    %7364 = vmatpush1.msra.mxu0 0.0
    %7365 = vmatprep.subr.mxu0 0.0
    %7366 = vmatpush1.msra.mxu0 0.0
    %7367 = vmatprep.subr.mxu0 0.0
    %7368 = vmatpush1.msra.mxu0 0.0
    %7369 = vmatprep.subr.mxu0 0.0
    %7370 = vmatpush1.msra.mxu0 0.0
    %7371 = vmatprep.subr.mxu0 0.0
    %7372 = vmatpush1.msra.mxu0 0.0
    %7373 = vmatprep.subr.mxu0 0.0
    %7374 = vmatpush1.msra.mxu0 0.0
    %7375 = vmatprep.subr.mxu0 0.0
    %7376 = vmatpush1.msra.mxu0 0.0
    %7377 = vmatprep.subr.mxu0 0.0
    %7378 = vmatpush1.msra.mxu0 0.0
    %7379 = vmatprep.subr.mxu0 0.0
    %7380 = vmatpush1.msra.mxu0 0.0
    %7381 = vmatprep.subr.mxu0 0.0
    %7382 = vmatpush1.msra.mxu0 0.0
    %7383 = vmatprep.subr.mxu0 0.0
    %7384 = vmatpush1.msra.mxu0 0.0
    %7385 = vmatprep.subr.mxu0 0.0
    %7386 = vmatpush1.msra.mxu0 0.0
    %7387 = vmatprep.subr.mxu0 0.0
    %7388 = vmatpush1.msra.mxu0 0.0
    %7389 = vmatprep.subr.mxu0 0.0
    %7390 = vmatpush1.msra.mxu0 0.0
    %7391 = vmatprep.subr.mxu0 0.0
    %7392 = vmatpush1.msra.mxu0 0.0
    %7393 = vmatprep.subr.mxu0 0.0
    %7394 = vmatpush1.msra.mxu0 0.0
    %7395 = vmatprep.subr.mxu0 0.0
    %7396 = vmatpush1.msra.mxu0 0.0
    %7397 = vmatprep.subr.mxu0 0.0
    %7398 = vmatpush1.msra.mxu0 0.0
    %7399 = vmatprep.subr.mxu0 0.0
    %7400 = vmatpush1.msra.mxu0 0.0
    %7401 = vmatprep.subr.mxu0 0.0
    %7402 = vmatpush1.msra.mxu0 0.0
    %7403 = vmatprep.mubr.f32.mxu0 0.0
    %7404 = vmatmul.mubr.f32.gmra.mrb[0].mxu0 %v7337
    %v7405 = vpop.f32.mrb[0].mxu0
    %v7406 = vadd.f32 0.0, %v7405
    %v7407 = vpop.f32.mrb[0].mxu0
    %7408 = vdwg.mxu0
    %v7410 = vsel %vm1097, %v7261, 0
    %7412 = vmatprep.subr.mxu0 0.0
    %7413 = vmatpush1.msra.mxu0 %v6834
    %7414 = vmatprep.subr.mxu0 0.0
    %7415 = vmatpush1.msra.mxu0 0.0
    %7416 = vmatprep.subr.mxu0 0.0
    %7417 = vmatpush1.msra.mxu0 0.0
    %7418 = vmatprep.subr.mxu0 0.0
    %7419 = vmatpush1.msra.mxu0 0.0
    %7420 = vmatprep.subr.mxu0 0.0
    %7421 = vmatpush1.msra.mxu0 0.0
    %7422 = vmatprep.subr.mxu0 0.0
    %7423 = vmatpush1.msra.mxu0 0.0
    %7424 = vmatprep.subr.mxu0 0.0
    %7425 = vmatpush1.msra.mxu0 0.0
    %7426 = vmatprep.subr.mxu0 0.0
    %7427 = vmatpush1.msra.mxu0 0.0
    %7428 = vmatprep.subr.mxu0 0.0
    %7429 = vmatpush1.msra.mxu0 0.0
    %7430 = vmatprep.subr.mxu0 0.0
    %7431 = vmatpush1.msra.mxu0 0.0
    %7432 = vmatprep.subr.mxu0 0.0
    %7433 = vmatpush1.msra.mxu0 0.0
    %7434 = vmatprep.subr.mxu0 0.0
    %7435 = vmatpush1.msra.mxu0 0.0
    %7436 = vmatprep.subr.mxu0 0.0
    %7437 = vmatpush1.msra.mxu0 0.0
    %7438 = vmatprep.subr.mxu0 0.0
    %7439 = vmatpush1.msra.mxu0 0.0
    %7440 = vmatprep.subr.mxu0 0.0
    %7441 = vmatpush1.msra.mxu0 0.0
    %7442 = vmatprep.subr.mxu0 0.0
    %7443 = vmatpush1.msra.mxu0 0.0
    %7444 = vmatprep.subr.mxu0 0.0
    %7445 = vmatpush1.msra.mxu0 0.0
    %7446 = vmatprep.subr.mxu0 0.0
    %7447 = vmatpush1.msra.mxu0 0.0
    %7448 = vmatprep.subr.mxu0 0.0
    %7449 = vmatpush1.msra.mxu0 0.0
    %7450 = vmatprep.subr.mxu0 0.0
    %7451 = vmatpush1.msra.mxu0 0.0
    %7452 = vmatprep.subr.mxu0 0.0
    %7453 = vmatpush1.msra.mxu0 0.0
    %7454 = vmatprep.subr.mxu0 0.0
    %7455 = vmatpush1.msra.mxu0 0.0
    %7456 = vmatprep.subr.mxu0 0.0
    %7457 = vmatpush1.msra.mxu0 0.0
    %7458 = vmatprep.subr.mxu0 0.0
    %7459 = vmatpush1.msra.mxu0 0.0
    %7460 = vmatprep.subr.mxu0 0.0
    %7461 = vmatpush1.msra.mxu0 0.0
    %7462 = vmatprep.subr.mxu0 0.0
    %7463 = vmatpush1.msra.mxu0 0.0
    %7464 = vmatprep.subr.mxu0 0.0
    %7465 = vmatpush1.msra.mxu0 0.0
    %7466 = vmatprep.subr.mxu0 0.0
    %7467 = vmatpush1.msra.mxu0 0.0
    %7468 = vmatprep.subr.mxu0 0.0
    %7469 = vmatpush1.msra.mxu0 0.0
    %7470 = vmatprep.subr.mxu0 0.0
    %7471 = vmatpush1.msra.mxu0 0.0
    %7472 = vmatprep.subr.mxu0 0.0
    %7473 = vmatpush1.msra.mxu0 0.0
    %7474 = vmatprep.subr.mxu0 0.0
    %7475 = vmatpush1.msra.mxu0 0.0
    %7476 = vmatprep.mubr.f32.mxu0 0.0
    %7477 = vmatmul.mubr.f32.gmra.mrb[0].mxu0 %v7410
    %v7478 = vpop.f32.mrb[0].mxu0
    %v7479 = vadd.f32 0.0, %v7478
    %v7480 = vpop.f32.mrb[0].mxu0
    %7481 = vdwg.mxu0
    %v7483 = vsel %vm1097, %v7262, 0
    %7485 = vmatprep.subr.mxu0 0.0
    %7486 = vmatpush1.msra.mxu0 %v6904
    %7487 = vmatprep.subr.mxu0 0.0
    %7488 = vmatpush1.msra.mxu0 0.0
    %7489 = vmatprep.subr.mxu0 0.0
    %7490 = vmatpush1.msra.mxu0 0.0
    %7491 = vmatprep.subr.mxu0 0.0
    %7492 = vmatpush1.msra.mxu0 0.0
    %7493 = vmatprep.subr.mxu0 0.0
    %7494 = vmatpush1.msra.mxu0 0.0
    %7495 = vmatprep.subr.mxu0 0.0
    %7496 = vmatpush1.msra.mxu0 0.0
    %7497 = vmatprep.subr.mxu0 0.0
    %7498 = vmatpush1.msra.mxu0 0.0
    %7499 = vmatprep.subr.mxu0 0.0
    %7500 = vmatpush1.msra.mxu0 0.0
    %7501 = vmatprep.subr.mxu0 0.0
    %7502 = vmatpush1.msra.mxu0 0.0
    %7503 = vmatprep.subr.mxu0 0.0
    %7504 = vmatpush1.msra.mxu0 0.0
    %7505 = vmatprep.subr.mxu0 0.0
    %7506 = vmatpush1.msra.mxu0 0.0
    %7507 = vmatprep.subr.mxu0 0.0
    %7508 = vmatpush1.msra.mxu0 0.0
    %7509 = vmatprep.subr.mxu0 0.0
    %7510 = vmatpush1.msra.mxu0 0.0
    %7511 = vmatprep.subr.mxu0 0.0
    %7512 = vmatpush1.msra.mxu0 0.0
    %7513 = vmatprep.subr.mxu0 0.0
    %7514 = vmatpush1.msra.mxu0 0.0
    %7515 = vmatprep.subr.mxu0 0.0
    %7516 = vmatpush1.msra.mxu0 0.0
    %7517 = vmatprep.subr.mxu0 0.0
    %7518 = vmatpush1.msra.mxu0 0.0
    %7519 = vmatprep.subr.mxu0 0.0
    %7520 = vmatpush1.msra.mxu0 0.0
    %7521 = vmatprep.subr.mxu0 0.0
    %7522 = vmatpush1.msra.mxu0 0.0
    %7523 = vmatprep.subr.mxu0 0.0
    %7524 = vmatpush1.msra.mxu0 0.0
    %7525 = vmatprep.subr.mxu0 0.0
    %7526 = vmatpush1.msra.mxu0 0.0
    %7527 = vmatprep.subr.mxu0 0.0
    %7528 = vmatpush1.msra.mxu0 0.0
    %7529 = vmatprep.subr.mxu0 0.0
    %7530 = vmatpush1.msra.mxu0 0.0
    %7531 = vmatprep.subr.mxu0 0.0
    %7532 = vmatpush1.msra.mxu0 0.0
    %7533 = vmatprep.subr.mxu0 0.0
    %7534 = vmatpush1.msra.mxu0 0.0
    %7535 = vmatprep.subr.mxu0 0.0
    %7536 = vmatpush1.msra.mxu0 0.0
    %7537 = vmatprep.subr.mxu0 0.0
    %7538 = vmatpush1.msra.mxu0 0.0
    %7539 = vmatprep.subr.mxu0 0.0
    %7540 = vmatpush1.msra.mxu0 0.0
    %7541 = vmatprep.subr.mxu0 0.0
    %7542 = vmatpush1.msra.mxu0 0.0
    %7543 = vmatprep.subr.mxu0 0.0
    %7544 = vmatpush1.msra.mxu0 0.0
    %7545 = vmatprep.subr.mxu0 0.0
    %7546 = vmatpush1.msra.mxu0 0.0
    %7547 = vmatprep.subr.mxu0 0.0
    %7548 = vmatpush1.msra.mxu0 0.0
    %7549 = vmatprep.mubr.f32.mxu0 0.0
    %7550 = vmatmul.mubr.f32.gmra.mrb[0].mxu0 %v7483
    %v7551 = vpop.f32.mrb[0].mxu0
    %v7552 = vadd.f32 0.0, %v7551
    %v7553 = vpop.f32.mrb[0].mxu0
    %7554 = vdwg.mxu0
    %v7556 = vsel %vm1097, %v7333, 0
    %7558 = vmatprep.subr.mxu0 0.0
    %7559 = vmatpush1.msra.mxu0 %v4177
    %7560 = vmatprep.subr.mxu0 0.0
    %7561 = vmatpush1.msra.mxu0 0.0
    %7562 = vmatprep.subr.mxu0 0.0
    %7563 = vmatpush1.msra.mxu0 0.0
    %7564 = vmatprep.subr.mxu0 0.0
    %7565 = vmatpush1.msra.mxu0 0.0
    %7566 = vmatprep.subr.mxu0 0.0
    %7567 = vmatpush1.msra.mxu0 0.0
    %7568 = vmatprep.subr.mxu0 0.0
    %7569 = vmatpush1.msra.mxu0 0.0
    %7570 = vmatprep.subr.mxu0 0.0
    %7571 = vmatpush1.msra.mxu0 0.0
    %7572 = vmatprep.subr.mxu0 0.0
    %7573 = vmatpush1.msra.mxu0 0.0
    %7574 = vmatprep.subr.mxu0 0.0
    %7575 = vmatpush1.msra.mxu0 0.0
    %7576 = vmatprep.subr.mxu0 0.0
    %7577 = vmatpush1.msra.mxu0 0.0
    %7578 = vmatprep.subr.mxu0 0.0
    %7579 = vmatpush1.msra.mxu0 0.0
    %7580 = vmatprep.subr.mxu0 0.0
    %7581 = vmatpush1.msra.mxu0 0.0
    %7582 = vmatprep.subr.mxu0 0.0
    %7583 = vmatpush1.msra.mxu0 0.0
    %7584 = vmatprep.subr.mxu0 0.0
    %7585 = vmatpush1.msra.mxu0 0.0
    %7586 = vmatprep.subr.mxu0 0.0
    %7587 = vmatpush1.msra.mxu0 0.0
    %7588 = vmatprep.subr.mxu0 0.0
    %7589 = vmatpush1.msra.mxu0 0.0
    %7590 = vmatprep.subr.mxu0 0.0
    %7591 = vmatpush1.msra.mxu0 0.0
    %7592 = vmatprep.subr.mxu0 0.0
    %7593 = vmatpush1.msra.mxu0 0.0
    %7594 = vmatprep.subr.mxu0 0.0
    %7595 = vmatpush1.msra.mxu0 0.0
    %7596 = vmatprep.subr.mxu0 0.0
    %7597 = vmatpush1.msra.mxu0 0.0
    %7598 = vmatprep.subr.mxu0 0.0
    %7599 = vmatpush1.msra.mxu0 0.0
    %7600 = vmatprep.subr.mxu0 0.0
    %7601 = vmatpush1.msra.mxu0 0.0
    %7602 = vmatprep.subr.mxu0 0.0
    %7603 = vmatpush1.msra.mxu0 0.0
    %7604 = vmatprep.subr.mxu0 0.0
    %7605 = vmatpush1.msra.mxu0 0.0
    %7606 = vmatprep.subr.mxu0 0.0
    %7607 = vmatpush1.msra.mxu0 0.0
    %7608 = vmatprep.subr.mxu0 0.0
    %7609 = vmatpush1.msra.mxu0 0.0
    %7610 = vmatprep.subr.mxu0 0.0
    %7611 = vmatpush1.msra.mxu0 0.0
    %7612 = vmatprep.subr.mxu0 0.0
    %7613 = vmatpush1.msra.mxu0 0.0
    %7614 = vmatprep.subr.mxu0 0.0
    %7615 = vmatpush1.msra.mxu0 0.0
    %7616 = vmatprep.subr.mxu0 0.0
    %7617 = vmatpush1.msra.mxu0 0.0
    %7618 = vmatprep.subr.mxu0 0.0
    %7619 = vmatpush1.msra.mxu0 0.0
    %7620 = vmatprep.subr.mxu0 0.0
    %7621 = vmatpush1.msra.mxu0 0.0
    %7622 = vmatprep.mubr.f32.mxu0 0.0
    %7623 = vmatmul.mubr.f32.gmra.mrb[0].mxu0 %v7556
    %v7624 = vpop.f32.mrb[0].mxu0
    %v7625 = vadd.f32 0.0, %v7624
    %v7626 = vpop.f32.mrb[0].mxu0
    %7627 = vdwg.mxu0
    %v7629 = vsel %vm1097, %v7406, 0
    %7631 = vmatprep.subr.mxu0 0.0
    %7632 = vmatpush1.msra.mxu0 %v4178
    %7633 = vmatprep.subr.mxu0 0.0
    %7634 = vmatpush1.msra.mxu0 0.0
    %7635 = vmatprep.subr.mxu0 0.0
    %7636 = vmatpush1.msra.mxu0 0.0
    %7637 = vmatprep.subr.mxu0 0.0
    %7638 = vmatpush1.msra.mxu0 0.0
    %7639 = vmatprep.subr.mxu0 0.0
    %7640 = vmatpush1.msra.mxu0 0.0
    %7641 = vmatprep.subr.mxu0 0.0
    %7642 = vmatpush1.msra.mxu0 0.0
    %7643 = vmatprep.subr.mxu0 0.0
    %7644 = vmatpush1.msra.mxu0 0.0
    %7645 = vmatprep.subr.mxu0 0.0
    %7646 = vmatpush1.msra.mxu0 0.0
    %7647 = vmatprep.subr.mxu0 0.0
    %7648 = vmatpush1.msra.mxu0 0.0
    %7649 = vmatprep.subr.mxu0 0.0
    %7650 = vmatpush1.msra.mxu0 0.0
    %7651 = vmatprep.subr.mxu0 0.0
    %7652 = vmatpush1.msra.mxu0 0.0
    %7653 = vmatprep.subr.mxu0 0.0
    %7654 = vmatpush1.msra.mxu0 0.0
    %7655 = vmatprep.subr.mxu0 0.0
    %7656 = vmatpush1.msra.mxu0 0.0
    %7657 = vmatprep.subr.mxu0 0.0
    %7658 = vmatpush1.msra.mxu0 0.0
    %7659 = vmatprep.subr.mxu0 0.0
    %7660 = vmatpush1.msra.mxu0 0.0
    %7661 = vmatprep.subr.mxu0 0.0
    %7662 = vmatpush1.msra.mxu0 0.0
    %7663 = vmatprep.subr.mxu0 0.0
    %7664 = vmatpush1.msra.mxu0 0.0
    %7665 = vmatprep.subr.mxu0 0.0
    %7666 = vmatpush1.msra.mxu0 0.0
    %7667 = vmatprep.subr.mxu0 0.0
    %7668 = vmatpush1.msra.mxu0 0.0
    %7669 = vmatprep.subr.mxu0 0.0
    %7670 = vmatpush1.msra.mxu0 0.0
    %7671 = vmatprep.subr.mxu0 0.0
    %7672 = vmatpush1.msra.mxu0 0.0
    %7673 = vmatprep.subr.mxu0 0.0
    %7674 = vmatpush1.msra.mxu0 0.0
    %7675 = vmatprep.subr.mxu0 0.0
    %7676 = vmatpush1.msra.mxu0 0.0
    %7677 = vmatprep.subr.mxu0 0.0
    %7678 = vmatpush1.msra.mxu0 0.0
    %7679 = vmatprep.subr.mxu0 0.0
    %7680 = vmatpush1.msra.mxu0 0.0
    %7681 = vmatprep.subr.mxu0 0.0
    %7682 = vmatpush1.msra.mxu0 0.0
    %7683 = vmatprep.subr.mxu0 0.0
    %7684 = vmatpush1.msra.mxu0 0.0
    %7685 = vmatprep.subr.mxu0 0.0
    %7686 = vmatpush1.msra.mxu0 0.0
    %7687 = vmatprep.subr.mxu0 0.0
    %7688 = vmatpush1.msra.mxu0 0.0
    %7689 = vmatprep.subr.mxu0 0.0
    %7690 = vmatpush1.msra.mxu0 0.0
    %7691 = vmatprep.subr.mxu0 0.0
    %7692 = vmatpush1.msra.mxu0 0.0
    %7693 = vmatprep.subr.mxu0 0.0
    %7694 = vmatpush1.msra.mxu0 0.0
    %7695 = vmatprep.mubr.f32.mxu0 0.0
    %7696 = vmatmul.mubr.f32.gmra.mrb[0].mxu0 %v7629
    %v7697 = vpop.f32.mrb[0].mxu0
    %v7698 = vadd.f32 0.0, %v7697
    %v7699 = vpop.f32.mrb[0].mxu0
    %7700 = vdwg.mxu0
    %v7702 = vsel %vm1097, %v7479, 0
    %7704 = vmatprep.subr.mxu0 0.0
    %7705 = vmatpush1.msra.mxu0 %v4179
    %7706 = vmatprep.subr.mxu0 0.0
    %7707 = vmatpush1.msra.mxu0 0.0
    %7708 = vmatprep.subr.mxu0 0.0
    %7709 = vmatpush1.msra.mxu0 0.0
    %7710 = vmatprep.subr.mxu0 0.0
    %7711 = vmatpush1.msra.mxu0 0.0
    %7712 = vmatprep.subr.mxu0 0.0
    %7713 = vmatpush1.msra.mxu0 0.0
    %7714 = vmatprep.subr.mxu0 0.0
    %7715 = vmatpush1.msra.mxu0 0.0
    %7716 = vmatprep.subr.mxu0 0.0
    %7717 = vmatpush1.msra.mxu0 0.0
    %7718 = vmatprep.subr.mxu0 0.0
    %7719 = vmatpush1.msra.mxu0 0.0
    %7720 = vmatprep.subr.mxu0 0.0
    %7721 = vmatpush1.msra.mxu0 0.0
    %7722 = vmatprep.subr.mxu0 0.0
    %7723 = vmatpush1.msra.mxu0 0.0
    %7724 = vmatprep.subr.mxu0 0.0
    %7725 = vmatpush1.msra.mxu0 0.0
    %7726 = vmatprep.subr.mxu0 0.0
    %7727 = vmatpush1.msra.mxu0 0.0
    %7728 = vmatprep.subr.mxu0 0.0
    %7729 = vmatpush1.msra.mxu0 0.0
    %7730 = vmatprep.subr.mxu0 0.0
    %7731 = vmatpush1.msra.mxu0 0.0
    %7732 = vmatprep.subr.mxu0 0.0
    %7733 = vmatpush1.msra.mxu0 0.0
    %7734 = vmatprep.subr.mxu0 0.0
    %7735 = vmatpush1.msra.mxu0 0.0
    %7736 = vmatprep.subr.mxu0 0.0
    %7737 = vmatpush1.msra.mxu0 0.0
    %7738 = vmatprep.subr.mxu0 0.0
    %7739 = vmatpush1.msra.mxu0 0.0
    %7740 = vmatprep.subr.mxu0 0.0
    %7741 = vmatpush1.msra.mxu0 0.0
    %7742 = vmatprep.subr.mxu0 0.0
    %7743 = vmatpush1.msra.mxu0 0.0
    %7744 = vmatprep.subr.mxu0 0.0
    %7745 = vmatpush1.msra.mxu0 0.0
    %7746 = vmatprep.subr.mxu0 0.0
    %7747 = vmatpush1.msra.mxu0 0.0
    %7748 = vmatprep.subr.mxu0 0.0
    %7749 = vmatpush1.msra.mxu0 0.0
    %7750 = vmatprep.subr.mxu0 0.0
    %7751 = vmatpush1.msra.mxu0 0.0
    %7752 = vmatprep.subr.mxu0 0.0
    %7753 = vmatpush1.msra.mxu0 0.0
    %7754 = vmatprep.subr.mxu0 0.0
    %7755 = vmatpush1.msra.mxu0 0.0
    %7756 = vmatprep.subr.mxu0 0.0
    %7757 = vmatpush1.msra.mxu0 0.0
    %7758 = vmatprep.subr.mxu0 0.0
    %7759 = vmatpush1.msra.mxu0 0.0
    %7760 = vmatprep.subr.mxu0 0.0
    %7761 = vmatpush1.msra.mxu0 0.0
    %7762 = vmatprep.subr.mxu0 0.0
    %7763 = vmatpush1.msra.mxu0 0.0
    %7764 = vmatprep.subr.mxu0 0.0
    %7765 = vmatpush1.msra.mxu0 0.0
    %7766 = vmatprep.subr.mxu0 0.0
    %7767 = vmatpush1.msra.mxu0 0.0
    %7768 = vmatprep.mubr.f32.mxu0 0.0
    %7769 = vmatmul.mubr.f32.gmra.mrb[0].mxu0 %v7702
    %v7770 = vpop.f32.mrb[0].mxu0
    %v7771 = vadd.f32 0.0, %v7770
    %v7772 = vpop.f32.mrb[0].mxu0
    %7773 = vdwg.mxu0
    %v7775 = vsel %vm1097, %v7552, 0
    %7777 = vmatprep.subr.mxu0 0.0
    %7778 = vmatpush1.msra.mxu0 %v4180
    %7779 = vmatprep.subr.mxu0 0.0
    %7780 = vmatpush1.msra.mxu0 0.0
    %7781 = vmatprep.subr.mxu0 0.0
    %7782 = vmatpush1.msra.mxu0 0.0
    %7783 = vmatprep.subr.mxu0 0.0
    %7784 = vmatpush1.msra.mxu0 0.0
    %7785 = vmatprep.subr.mxu0 0.0
    %7786 = vmatpush1.msra.mxu0 0.0
    %7787 = vmatprep.subr.mxu0 0.0
    %7788 = vmatpush1.msra.mxu0 0.0
    %7789 = vmatprep.subr.mxu0 0.0
    %7790 = vmatpush1.msra.mxu0 0.0
    %7791 = vmatprep.subr.mxu0 0.0
    %7792 = vmatpush1.msra.mxu0 0.0
    %7793 = vmatprep.subr.mxu0 0.0
    %7794 = vmatpush1.msra.mxu0 0.0
    %7795 = vmatprep.subr.mxu0 0.0
    %7796 = vmatpush1.msra.mxu0 0.0
    %7797 = vmatprep.subr.mxu0 0.0
    %7798 = vmatpush1.msra.mxu0 0.0
    %7799 = vmatprep.subr.mxu0 0.0
    %7800 = vmatpush1.msra.mxu0 0.0
    %7801 = vmatprep.subr.mxu0 0.0
    %7802 = vmatpush1.msra.mxu0 0.0
    %7803 = vmatprep.subr.mxu0 0.0
    %7804 = vmatpush1.msra.mxu0 0.0
    %7805 = vmatprep.subr.mxu0 0.0
    %7806 = vmatpush1.msra.mxu0 0.0
    %7807 = vmatprep.subr.mxu0 0.0
    %7808 = vmatpush1.msra.mxu0 0.0
    %7809 = vmatprep.subr.mxu0 0.0
    %7810 = vmatpush1.msra.mxu0 0.0
    %7811 = vmatprep.subr.mxu0 0.0
    %7812 = vmatpush1.msra.mxu0 0.0
    %7813 = vmatprep.subr.mxu0 0.0
    %7814 = vmatpush1.msra.mxu0 0.0
    %7815 = vmatprep.subr.mxu0 0.0
    %7816 = vmatpush1.msra.mxu0 0.0
    %7817 = vmatprep.subr.mxu0 0.0
    %7818 = vmatpush1.msra.mxu0 0.0
    %7819 = vmatprep.subr.mxu0 0.0
    %7820 = vmatpush1.msra.mxu0 0.0
    %7821 = vmatprep.subr.mxu0 0.0
    %7822 = vmatpush1.msra.mxu0 0.0
    %7823 = vmatprep.subr.mxu0 0.0
    %7824 = vmatpush1.msra.mxu0 0.0
    %7825 = vmatprep.subr.mxu0 0.0
    %7826 = vmatpush1.msra.mxu0 0.0
    %7827 = vmatprep.subr.mxu0 0.0
    %7828 = vmatpush1.msra.mxu0 0.0
    %7829 = vmatprep.subr.mxu0 0.0
    %7830 = vmatpush1.msra.mxu0 0.0
    %7831 = vmatprep.subr.mxu0 0.0
    %7832 = vmatpush1.msra.mxu0 0.0
    %7833 = vmatprep.subr.mxu0 0.0
    %7834 = vmatpush1.msra.mxu0 0.0
    %7835 = vmatprep.subr.mxu0 0.0
    %7836 = vmatpush1.msra.mxu0 0.0
    %7837 = vmatprep.subr.mxu0 0.0
    %7838 = vmatpush1.msra.mxu0 0.0
    %7839 = vmatprep.subr.mxu0 0.0
    %7840 = vmatpush1.msra.mxu0 0.0
    %7841 = vmatprep.mubr.f32.mxu0 0.0
    %7842 = vmatmul.mubr.f32.gmra.mrb[0].mxu0 %v7775
    %v7843 = vpop.f32.mrb[0].mxu0
    %v7844 = vadd.f32 0.0, %v7843
    %v7845 = vpop.f32.mrb[0].mxu0
    %7846 = vdwg.mxu0
    %v7847 = vsel %vm52, %v7625, 0.0
    %v7848 = vsel %vm52, %v7698, 0.0
    %v7849 = vadd.f32 %v7847, %v7848
    %v7850 = vsel %vm52, %v7771, 0.0
    %v7851 = vadd.f32 %v7849, %v7850
    %v7852 = vsel %vm52, %v7844, 0.0
    %v7853 = vadd.f32 %v7851, %v7852
    %v7854 = vlaneseq
    %v7855 = vshrl.u32 %v7854, 7
    %v7856 = vsub.s32 0, %v7855
    %v7857 = vrot.slane %v4181, %v7856
    %v7858 = vadd.f32 %v6063, %v7857
    %v7859 = vadd.f32 %v7853, %v7857
    %v7860 = vadd.f32 %v4108, %v7858
    %v7861 = vadd.f32 %v4109, %v7859
    %v7862 = vsel %vm52, %v7860, 0.0
    %7863 = vadd.xlane.f32.xlu0 %v7862
    %v7864 = vpop.xlane.xlu0 %7863
    %v7865 = vsel %vm52, %v7861, 0.0
    %7866 = vadd.xlane.f32.xlu0 %v7865
    %v7867 = vpop.xlane.xlu0 %7866
    %v7868 = vmul.f32 %v7864, %v59
    %v7869 = vmul.f32 %v7867, %v59
    %v7870 = vsub.f32 %v7860, %v7868
    %v7871 = vsub.f32 %v7861, %v7869
    %v7872 = vmul.f32 %v7870, %v7870
    %v7873 = vmul.f32 %v7871, %v7871
    %v7874 = vsel %vm52, %v7872, 0.0
    %7875 = vadd.xlane.f32.xlu0 %v7874
    %v7876 = vpop.xlane.xlu0 %7875
    %v7877 = vsel %vm52, %v7873, 0.0
    %7878 = vadd.xlane.f32.xlu0 %v7877
    %v7879 = vpop.xlane.xlu0 %7878
    %v7880 = vmul.f32 %v7876, %v59
    %v7881 = vmul.f32 %v7879, %v59
    %v7882 = vadd.f32 %v7880, 1e-05
    %v7883 = vadd.f32 %v7881, 1e-05
    %v7884 = vrsqrt.pop %v7882
    %v7885 = vrsqrt.pop %v7883
    %v7886 = vmul.f32 %v7870, %v7884
    %v7887 = vmul.f32 %v7871, %v7885
    %v7888 = vlaneseq
    %v7889 = vshrl.u32 %v7888, 7
    %v7890 = vsub.s32 0, %v7889
    %v7891 = vrot.slane %v4182, %v7890
    %v7892 = vmul.f32 %v7886, %v7891
    %v7893 = vmul.f32 %v7887, %v7891
    %v7894 = vlaneseq
    %v7895 = vshrl.u32 %v7894, 7
    %v7896 = vsub.s32 0, %v7895
    %v7897 = vrot.slane %v4183, %v7896
    %v7898 = vadd.f32 %v7892, %v7897
    %v7899 = vadd.f32 %v7893, %v7897
    %v7900 = vlaneseq
    %v7901 = vshrl.u32 %v7900, 7
    %v7902 = vsub.s32 0, %v7901
    %v7903 = vrot.slane %v4192, %v7902
    %v7905 = vsel %vm52, %v7898, 0
    %v7908 = vsel %vm52, %v7899, 0
    %7910 = vmatprep.subr.mxu0 0.0
    %7911 = vmatpush1.msra.mxu0 %v4188
    %7912 = vmatprep.subr.mxu0 0.0
    %7913 = vmatpush1.msra.mxu0 %v4189
    %7914 = vmatprep.subr.mxu0 0.0
    %7915 = vmatpush1.msra.mxu0 %v4190
    %7916 = vmatprep.subr.mxu0 0.0
    %7917 = vmatpush1.msra.mxu0 %v4191
    %7918 = vmatprep.subr.mxu0 0.0
    %7919 = vmatpush1.msra.mxu0 0.0
    %7920 = vmatprep.subr.mxu0 0.0
    %7921 = vmatpush1.msra.mxu0 0.0
    %7922 = vmatprep.subr.mxu0 0.0
    %7923 = vmatpush1.msra.mxu0 0.0
    %7924 = vmatprep.subr.mxu0 0.0
    %7925 = vmatpush1.msra.mxu0 0.0
    %7926 = vmatprep.subr.mxu0 0.0
    %7927 = vmatpush1.msra.mxu0 0.0
    %7928 = vmatprep.subr.mxu0 0.0
    %7929 = vmatpush1.msra.mxu0 0.0
    %7930 = vmatprep.subr.mxu0 0.0
    %7931 = vmatpush1.msra.mxu0 0.0
    %7932 = vmatprep.subr.mxu0 0.0
    %7933 = vmatpush1.msra.mxu0 0.0
    %7934 = vmatprep.subr.mxu0 0.0
    %7935 = vmatpush1.msra.mxu0 0.0
    %7936 = vmatprep.subr.mxu0 0.0
    %7937 = vmatpush1.msra.mxu0 0.0
    %7938 = vmatprep.subr.mxu0 0.0
    %7939 = vmatpush1.msra.mxu0 0.0
    %7940 = vmatprep.subr.mxu0 0.0
    %7941 = vmatpush1.msra.mxu0 0.0
    %7942 = vmatprep.subr.mxu0 0.0
    %7943 = vmatpush1.msra.mxu0 0.0
    %7944 = vmatprep.subr.mxu0 0.0
    %7945 = vmatpush1.msra.mxu0 0.0
    %7946 = vmatprep.subr.mxu0 0.0
    %7947 = vmatpush1.msra.mxu0 0.0
    %7948 = vmatprep.subr.mxu0 0.0
    %7949 = vmatpush1.msra.mxu0 0.0
    %7950 = vmatprep.subr.mxu0 0.0
    %7951 = vmatpush1.msra.mxu0 0.0
    %7952 = vmatprep.subr.mxu0 0.0
    %7953 = vmatpush1.msra.mxu0 0.0
    %7954 = vmatprep.subr.mxu0 0.0
    %7955 = vmatpush1.msra.mxu0 0.0
    %7956 = vmatprep.subr.mxu0 0.0
    %7957 = vmatpush1.msra.mxu0 0.0
    %7958 = vmatprep.subr.mxu0 0.0
    %7959 = vmatpush1.msra.mxu0 0.0
    %7960 = vmatprep.subr.mxu0 0.0
    %7961 = vmatpush1.msra.mxu0 0.0
    %7962 = vmatprep.subr.mxu0 0.0
    %7963 = vmatpush1.msra.mxu0 0.0
    %7964 = vmatprep.subr.mxu0 0.0
    %7965 = vmatpush1.msra.mxu0 0.0
    %7966 = vmatprep.subr.mxu0 0.0
    %7967 = vmatpush1.msra.mxu0 0.0
    %7968 = vmatprep.subr.mxu0 0.0
    %7969 = vmatpush1.msra.mxu0 0.0
    %7970 = vmatprep.subr.mxu0 0.0
    %7971 = vmatpush1.msra.mxu0 0.0
    %7972 = vmatprep.subr.mxu0 0.0
    %7973 = vmatpush1.msra.mxu0 0.0
    %7974 = vmatprep.mubr.f32.mxu0 0.0
    %7975 = vmatmul.mubr.f32.gmra.mrb[0].mxu0 %v7905
    %v7976 = vpop.f32.mrb[0].mxu0
    %v7977 = vadd.f32 %v7903, %v7976
    %v7978 = vpop.f32.mrb[0].mxu0
    %7979 = vmatprep.mubr.f32.mxu0 0.0
    %7980 = vmatmul.mubr.f32.gmra.mrb[0].mxu0 %v7908
    %v7981 = vpop.f32.mrb[0].mxu0
    %v7982 = vadd.f32 %v7903, %v7981
    %v7983 = vpop.f32.mrb[0].mxu0
    %7984 = vdwg.mxu0
    %v7985 = vmul.f32 %v7977, 0.5
    %v7986 = vmul.f32 %v7982, 0.5
    %v7987 = vmul.f32 %v7977, 0.70710677
    %v7988 = vmul.f32 %v7982, 0.70710677
    %v7989 = verf.f32.pop %v7987
    %v7990 = verf.f32.pop %v7988
    %v7991 = vadd.f32 %v7989, 1.0
    %v7992 = vadd.f32 %v7990, 1.0
    %v7993 = vmul.f32 %v7985, %v7991
    %v7994 = vmul.f32 %v7986, %v7992
    %v7995 = vlaneseq
    %v7996 = vshrl.u32 %v7995, 7
    %v7997 = vsub.s32 0, %v7996
    %v7998 = vrot.slane %v4184, %v7997
    %v8000 = vsel %vm3988, %v7993, 0
    %v8003 = vsel %vm3988, %v7994, 0
    %8005 = vmatprep.subr.mxu0 0.0
    %8006 = vmatpush1.msra.mxu0 %v4194
    %8007 = vmatprep.subr.mxu0 0.0
    %8008 = vmatpush1.msra.mxu0 %v4195
    %8009 = vmatprep.subr.mxu0 0.0
    %8010 = vmatpush1.msra.mxu0 %v4196
    %8011 = vmatprep.subr.mxu0 0.0
    %8012 = vmatpush1.msra.mxu0 %v4197
    %8013 = vmatprep.subr.mxu0 0.0
    %8014 = vmatpush1.msra.mxu0 %v4198
    %8015 = vmatprep.subr.mxu0 0.0
    %8016 = vmatpush1.msra.mxu0 %v4199
    %8017 = vmatprep.subr.mxu0 0.0
    %8018 = vmatpush1.msra.mxu0 %v4200
    %8019 = vmatprep.subr.mxu0 0.0
    %8020 = vmatpush1.msra.mxu0 %v4201
    %8021 = vmatprep.subr.mxu0 0.0
    %8022 = vmatpush1.msra.mxu0 0.0
    %8023 = vmatprep.subr.mxu0 0.0
    %8024 = vmatpush1.msra.mxu0 0.0
    %8025 = vmatprep.subr.mxu0 0.0
    %8026 = vmatpush1.msra.mxu0 0.0
    %8027 = vmatprep.subr.mxu0 0.0
    %8028 = vmatpush1.msra.mxu0 0.0
    %8029 = vmatprep.subr.mxu0 0.0
    %8030 = vmatpush1.msra.mxu0 0.0
    %8031 = vmatprep.subr.mxu0 0.0
    %8032 = vmatpush1.msra.mxu0 0.0
    %8033 = vmatprep.subr.mxu0 0.0
    %8034 = vmatpush1.msra.mxu0 0.0
    %8035 = vmatprep.subr.mxu0 0.0
    %8036 = vmatpush1.msra.mxu0 0.0
    %8037 = vmatprep.subr.mxu0 0.0
    %8038 = vmatpush1.msra.mxu0 0.0
    %8039 = vmatprep.subr.mxu0 0.0
    %8040 = vmatpush1.msra.mxu0 0.0
    %8041 = vmatprep.subr.mxu0 0.0
    %8042 = vmatpush1.msra.mxu0 0.0
    %8043 = vmatprep.subr.mxu0 0.0
    %8044 = vmatpush1.msra.mxu0 0.0
    %8045 = vmatprep.subr.mxu0 0.0
    %8046 = vmatpush1.msra.mxu0 0.0
    %8047 = vmatprep.subr.mxu0 0.0
    %8048 = vmatpush1.msra.mxu0 0.0
    %8049 = vmatprep.subr.mxu0 0.0
    %8050 = vmatpush1.msra.mxu0 0.0
    %8051 = vmatprep.subr.mxu0 0.0
    %8052 = vmatpush1.msra.mxu0 0.0
    %8053 = vmatprep.subr.mxu0 0.0
    %8054 = vmatpush1.msra.mxu0 0.0
    %8055 = vmatprep.subr.mxu0 0.0
    %8056 = vmatpush1.msra.mxu0 0.0
    %8057 = vmatprep.subr.mxu0 0.0
    %8058 = vmatpush1.msra.mxu0 0.0
    %8059 = vmatprep.subr.mxu0 0.0
    %8060 = vmatpush1.msra.mxu0 0.0
    %8061 = vmatprep.subr.mxu0 0.0
    %8062 = vmatpush1.msra.mxu0 0.0
    %8063 = vmatprep.subr.mxu0 0.0
    %8064 = vmatpush1.msra.mxu0 0.0
    %8065 = vmatprep.subr.mxu0 0.0
    %8066 = vmatpush1.msra.mxu0 0.0
    %8067 = vmatprep.subr.mxu0 0.0
    %8068 = vmatpush1.msra.mxu0 0.0
    %8069 = vmatprep.mubr.f32.mxu0 0.0
    %8070 = vmatmul.mubr.f32.gmra.mrb[0].mxu0 %v8000
    %v8071 = vpop.f32.mrb[0].mxu0
    %v8072 = vadd.f32 %v7998, %v8071
    %v8073 = vpop.f32.mrb[0].mxu0
    %8074 = vmatprep.mubr.f32.mxu0 0.0
    %8075 = vmatmul.mubr.f32.gmra.mrb[0].mxu0 %v8003
    %v8076 = vpop.f32.mrb[0].mxu0
    %v8077 = vadd.f32 %v7998, %v8076
    %v8078 = vpop.f32.mrb[0].mxu0
    %8079 = vdwg.mxu0
    %v8080 = vadd.f32 %v7898, %v8072
    %v8081 = vadd.f32 %v7899, %v8077
    %v8082 = vsel %vm52, %v8080, 0.0
    %8083 = vadd.xlane.f32.xlu0 %v8082
    %v8084 = vpop.xlane.xlu0 %8083
    %v8085 = vsel %vm52, %v8081, 0.0
    %8086 = vadd.xlane.f32.xlu0 %v8085
    %v8087 = vpop.xlane.xlu0 %8086
    %v8088 = vmul.f32 %v8084, %v59
    %v8089 = vmul.f32 %v8087, %v59
    %v8090 = vsub.f32 %v8080, %v8088
    %v8091 = vsub.f32 %v8081, %v8089
    %v8092 = vmul.f32 %v8090, %v8090
    %v8093 = vmul.f32 %v8091, %v8091
    %v8094 = vsel %vm52, %v8092, 0.0
    %8095 = vadd.xlane.f32.xlu0 %v8094
    %v8096 = vpop.xlane.xlu0 %8095
    %v8097 = vsel %vm52, %v8093, 0.0
    %8098 = vadd.xlane.f32.xlu0 %v8097
    %v8099 = vpop.xlane.xlu0 %8098
    %v8100 = vmul.f32 %v8096, %v59
    %v8101 = vmul.f32 %v8099, %v59
    %v8102 = vadd.f32 %v8100, 1e-05
    %v8103 = vadd.f32 %v8101, 1e-05
    %v8104 = vrsqrt.pop %v8102
    %v8105 = vrsqrt.pop %v8103
    %v8106 = vmul.f32 %v8090, %v8104
    %v8107 = vmul.f32 %v8091, %v8105
    %v8108 = vlaneseq
    %v8109 = vshrl.u32 %v8108, 7
    %v8110 = vsub.s32 0, %v8109
    %v8111 = vrot.slane %v4185, %v8110
    %v8112 = vmul.f32 %v8106, %v8111
    %v8113 = vmul.f32 %v8107, %v8111
    %v8114 = vlaneseq
    %v8115 = vshrl.u32 %v8114, 7
    %v8116 = vsub.s32 0, %v8115
    %v8117 = vrot.slane %v4186, %v8116
    %v8118 = vadd.f32 %v8112, %v8117
    %v8119 = vadd.f32 %v8113, %v8117
    %v8121 = vrot.slane %v8119, 7
    %vm8123 = vcmask 1040384
    %v8124 = vsel %vm8123, %v8118, %v8121
    %v8125 = vld [vmem:[%s10] sm:$0xff]
    %v8126 = vld [vmem:[%s10 + $0x8] sm:$0xff]
    %v8127 = vld [vmem:[%s10 + $0x10] sm:$0xff]
    %v8128 = vld [vmem:[%s10 + $0x18] sm:$0xff]
    %v8129 = vld [vmem:[%s11] sm:$0x1]
    %v8131 = vlaneseq
    %v8132 = vshrl.u32 %v8131, 7
    %v8133 = vsub.s32 0, %v8132
    %v8134 = vrot.slane %v8129, %v8133
    %v8137 = vsel %vm52, %v8124, 0
    %8139 = vmatprep.subr.mxu0 0.0
    %8140 = vmatpush1.msra.mxu0 %v8125
    %8141 = vmatprep.subr.mxu0 0.0
    %8142 = vmatpush1.msra.mxu0 %v8126
    %8143 = vmatprep.subr.mxu0 0.0
    %8144 = vmatpush1.msra.mxu0 %v8127
    %8145 = vmatprep.subr.mxu0 0.0
    %8146 = vmatpush1.msra.mxu0 %v8128
    %8147 = vmatprep.subr.mxu0 0.0
    %8148 = vmatpush1.msra.mxu0 0.0
    %8149 = vmatprep.subr.mxu0 0.0
    %8150 = vmatpush1.msra.mxu0 0.0
    %8151 = vmatprep.subr.mxu0 0.0
    %8152 = vmatpush1.msra.mxu0 0.0
    %8153 = vmatprep.subr.mxu0 0.0
    %8154 = vmatpush1.msra.mxu0 0.0
    %8155 = vmatprep.subr.mxu0 0.0
    %8156 = vmatpush1.msra.mxu0 0.0
    %8157 = vmatprep.subr.mxu0 0.0
    %8158 = vmatpush1.msra.mxu0 0.0
    %8159 = vmatprep.subr.mxu0 0.0
    %8160 = vmatpush1.msra.mxu0 0.0
    %8161 = vmatprep.subr.mxu0 0.0
    %8162 = vmatpush1.msra.mxu0 0.0
    %8163 = vmatprep.subr.mxu0 0.0
    %8164 = vmatpush1.msra.mxu0 0.0
    %8165 = vmatprep.subr.mxu0 0.0
    %8166 = vmatpush1.msra.mxu0 0.0
    %8167 = vmatprep.subr.mxu0 0.0
    %8168 = vmatpush1.msra.mxu0 0.0
    %8169 = vmatprep.subr.mxu0 0.0
    %8170 = vmatpush1.msra.mxu0 0.0
    %8171 = vmatprep.subr.mxu0 0.0
    %8172 = vmatpush1.msra.mxu0 0.0
    %8173 = vmatprep.subr.mxu0 0.0
    %8174 = vmatpush1.msra.mxu0 0.0
    %8175 = vmatprep.subr.mxu0 0.0
    %8176 = vmatpush1.msra.mxu0 0.0
    %8177 = vmatprep.subr.mxu0 0.0
    %8178 = vmatpush1.msra.mxu0 0.0
    %8179 = vmatprep.subr.mxu0 0.0
    %8180 = vmatpush1.msra.mxu0 0.0
    %8181 = vmatprep.subr.mxu0 0.0
    %8182 = vmatpush1.msra.mxu0 0.0
    %8183 = vmatprep.subr.mxu0 0.0
    %8184 = vmatpush1.msra.mxu0 0.0
    %8185 = vmatprep.subr.mxu0 0.0
    %8186 = vmatpush1.msra.mxu0 0.0
    %8187 = vmatprep.subr.mxu0 0.0
    %8188 = vmatpush1.msra.mxu0 0.0
    %8189 = vmatprep.subr.mxu0 0.0
    %8190 = vmatpush1.msra.mxu0 0.0
    %8191 = vmatprep.subr.mxu0 0.0
    %8192 = vmatpush1.msra.mxu0 0.0
    %8193 = vmatprep.subr.mxu0 0.0
    %8194 = vmatpush1.msra.mxu0 0.0
    %8195 = vmatprep.subr.mxu0 0.0
    %8196 = vmatpush1.msra.mxu0 0.0
    %8197 = vmatprep.subr.mxu0 0.0
    %8198 = vmatpush1.msra.mxu0 0.0
    %8199 = vmatprep.subr.mxu0 0.0
    %8200 = vmatpush1.msra.mxu0 0.0
    %8201 = vmatprep.subr.mxu0 0.0
    %8202 = vmatpush1.msra.mxu0 0.0
    %8203 = vmatprep.mubr.f32.mxu0 0.0
    %8204 = vmatmul.mubr.f32.gmra.mrb[0].mxu0 %v8137
    %v8205 = vpop.f32.mrb[0].mxu0
    %v8206 = vadd.f32 %v8134, %v8205
    %v8207 = vpop.f32.mrb[0].mxu0
    %8208 = vdwg.mxu0
    %v8209 = vtanh.pop %v8206
    %v8210 = vld [vmem:[%s12] sm:$0xff]
    %v8211 = vld [vmem:[%s12 + $0x8] sm:$0xff]
    %v8212 = vld [vmem:[%s12 + $0x10] sm:$0xff]
    %v8213 = vld [vmem:[%s12 + $0x18] sm:$0xff]
    %v8214 = vld [vmem:[%s13] sm:$0x1]
    %v8216 = vlaneseq
    %v8217 = vshrl.u32 %v8216, 7
    %v8218 = vsub.s32 0, %v8217
    %v8219 = vrot.slane %v8214, %v8218
    %v8222 = vsel %vm52, %v8209, 0
    %8224 = vmatprep.subr.mxu0 0.0
    %8225 = vmatpush1.msra.mxu0 %v8210
    %8226 = vmatprep.subr.mxu0 0.0
    %8227 = vmatpush1.msra.mxu0 %v8211
    %8228 = vmatprep.subr.mxu0 0.0
    %8229 = vmatpush1.msra.mxu0 %v8212
    %8230 = vmatprep.subr.mxu0 0.0
    %8231 = vmatpush1.msra.mxu0 %v8213
    %8232 = vmatprep.subr.mxu0 0.0
    %8233 = vmatpush1.msra.mxu0 0.0
    %8234 = vmatprep.subr.mxu0 0.0
    %8235 = vmatpush1.msra.mxu0 0.0
    %8236 = vmatprep.subr.mxu0 0.0
    %8237 = vmatpush1.msra.mxu0 0.0
    %8238 = vmatprep.subr.mxu0 0.0
    %8239 = vmatpush1.msra.mxu0 0.0
    %8240 = vmatprep.subr.mxu0 0.0
    %8241 = vmatpush1.msra.mxu0 0.0
    %8242 = vmatprep.subr.mxu0 0.0
    %8243 = vmatpush1.msra.mxu0 0.0
    %8244 = vmatprep.subr.mxu0 0.0
    %8245 = vmatpush1.msra.mxu0 0.0
    %8246 = vmatprep.subr.mxu0 0.0
    %8247 = vmatpush1.msra.mxu0 0.0
    %8248 = vmatprep.subr.mxu0 0.0
    %8249 = vmatpush1.msra.mxu0 0.0
    %8250 = vmatprep.subr.mxu0 0.0
    %8251 = vmatpush1.msra.mxu0 0.0
    %8252 = vmatprep.subr.mxu0 0.0
    %8253 = vmatpush1.msra.mxu0 0.0
    %8254 = vmatprep.subr.mxu0 0.0
    %8255 = vmatpush1.msra.mxu0 0.0
    %8256 = vmatprep.subr.mxu0 0.0
    %8257 = vmatpush1.msra.mxu0 0.0
    %8258 = vmatprep.subr.mxu0 0.0
    %8259 = vmatpush1.msra.mxu0 0.0
    %8260 = vmatprep.subr.mxu0 0.0
    %8261 = vmatpush1.msra.mxu0 0.0
    %8262 = vmatprep.subr.mxu0 0.0
    %8263 = vmatpush1.msra.mxu0 0.0
    %8264 = vmatprep.subr.mxu0 0.0
    %8265 = vmatpush1.msra.mxu0 0.0
    %8266 = vmatprep.subr.mxu0 0.0
    %8267 = vmatpush1.msra.mxu0 0.0
    %8268 = vmatprep.subr.mxu0 0.0
    %8269 = vmatpush1.msra.mxu0 0.0
    %8270 = vmatprep.subr.mxu0 0.0
    %8271 = vmatpush1.msra.mxu0 0.0
    %8272 = vmatprep.subr.mxu0 0.0
    %8273 = vmatpush1.msra.mxu0 0.0
    %8274 = vmatprep.subr.mxu0 0.0
    %8275 = vmatpush1.msra.mxu0 0.0
    %8276 = vmatprep.subr.mxu0 0.0
    %8277 = vmatpush1.msra.mxu0 0.0
    %8278 = vmatprep.subr.mxu0 0.0
    %8279 = vmatpush1.msra.mxu0 0.0
    %8280 = vmatprep.subr.mxu0 0.0
    %8281 = vmatpush1.msra.mxu0 0.0
    %8282 = vmatprep.subr.mxu0 0.0
    %8283 = vmatpush1.msra.mxu0 0.0
    %8284 = vmatprep.subr.mxu0 0.0
    %8285 = vmatpush1.msra.mxu0 0.0
    %8286 = vmatprep.subr.mxu0 0.0
    %8287 = vmatpush1.msra.mxu0 0.0
    %8288 = vmatprep.mubr.f32.mxu0 0.0
    %8289 = vmatmul.mubr.f32.gmra.mrb[0].mxu0 %v8222
    %v8290 = vpop.f32.mrb[0].mxu0
    %v8291 = vadd.f32 %v8219, %v8290
    %v8292 = vpop.f32.mrb[0].mxu0
    %8293 = vdwg.mxu0
    %vm8294 = vcmask 9216
    %8295 = vst.msk [vmem:[#allocation2] sm:$0x3] %vm8294, %v8291
    // Predicated region
    $region58: #{student_cross_encoder_forward.1} parent=1 // pred_check
      _
    $region59: #{student_cross_encoder_forward.1} parent=1 // pred_check_branch
      %8297 = sbr.rel (0) target = $region61
    $region60: #{student_cross_encoder_forward.1} parent=1 // pred_region
      %s8299 = ssub.s32 32, 32
      %8300 = vsyncadd [#allocation3], %s8299
      %s8302 = sshll.u32 [#allocation2], 4
      %s8303 = int_to_ptr.vmem [resolvable:$true] %s8302
      %8305 = dma.vmem_to_hbm [thread:$0]  %s8303, 32, %s14, [#allocation3]
    $region61: #{student_cross_encoder_forward.1} parent=1 // pred_fallthru
      _
    // Predicated region
    $region62: #{student_cross_encoder_forward.1} parent=1 // pred_check
      _
    $region63: #{student_cross_encoder_forward.1} parent=1 // pred_check_branch
      %8307 = sbr.rel (0) target = $region65
    $region64: #{student_cross_encoder_forward.1} parent=1 // pred_region
      %8308 = dma.done [#allocation3], 32
    $region65: #{student_cross_encoder_forward.1} parent=1 // pred_fallthru
      _
    %8309 = vsyncpa [#allocation3], 1

</llo_original>
